<compile_context>
chip_gen: v7x
topology: tpu7x:2x2x1
jax: 0.10.0
libtpu: 0.0.40
codegen_flags: <defaults>
</compile_context>

<pallas_src>
import functools
import math

import jax
import jax.numpy as jnp
from jax.experimental import pallas as pl
from jax.experimental.pallas import tpu as pltpu

D_MODEL = 16          # my_model_option.mulhead_num_query
SEQ = D_MODEL         # sequence length (== d_model so fc_mul in-dims match)
BATCH = 8
NUM_QUERIES = 3
NUM_MODULES = 3       # eeg / ecg / video attention modules
BN_EPS = 1e-5
FEAT = NUM_MODULES * SEQ * D_MODEL   # 768
MAIN_SLOT = (1, 0, 2)  # per module (eeg, ecg, video): which stacked input is "main"
INV_SCALE = 1.0 / math.sqrt(D_MODEL)


# ---------------------------------------------------------------------------
# Fused Pallas kernel: 3x MultiQueryCrossModalAttention + fc_mul MLP
# ---------------------------------------------------------------------------
def fused_kernel(alphas_ref, xcat_ref, neg_ref, wpm_ref, bpm_ref,
                 w1_ref, b1_ref, s1_ref, t1_ref,
                 w2_ref, b2_ref, s2_ref, t2_ref,
                 w3_ref, b3_ref, s3_ref, t3_ref,
                 w4_ref, b4_ref,
                 out_ref, feat_ref, *, batch, seq, d_model):
    f32 = jnp.float32
    bf16 = jnp.bfloat16
    d = d_model
    bs = batch * seq

    for m in range(NUM_MODULES):
        # One fused projection matmul per module:
        #   columns [0:3D)  -> the 3 query heads (already scaled by 1/sqrt(d)),
        #   columns [3D:4D) -> K,  [4D:5D) -> V (main-modality rows only).
        pm = jnp.dot(xcat_ref[...], wpm_ref[m],
                     preferred_element_type=f32) + bpm_ref[m]          # (B*S, 5D)
        km = pm[:, 3 * d:4 * d]                                        # (B*S, D)
        vm = pm[:, 4 * d:5 * d]                                        # (B*S, D)

        # Per-head online accumulation of the alpha-weighted softmax.  The
        # cross-batch scores are masked with an additive -1e30 block mask so a
        # plain 2-D (B*S, B*S) matmul replaces a batched (unrolled) einsum;
        # masked entries become exactly 0 after exp().
        final = jnp.zeros((bs, bs), f32)
        for i in range(NUM_QUERIES):
            qi = pm[:, i * d:(i + 1) * d]                              # (B*S, D)
            sc = jnp.einsum('md,nd->mn', qi, km,
                            preferred_element_type=f32) + neg_ref[...]
            sc = sc - jnp.max(sc, axis=-1, keepdims=True)
            e = jnp.exp(sc)
            p = e * pl.reciprocal(jnp.sum(e, axis=-1, keepdims=True),
                                  approx=False)
            final = final + alphas_ref[m * NUM_QUERIES + i] * p

        out_m = jnp.dot(final, vm, preferred_element_type=f32)         # (B*S, D)
        out_m = out_m.reshape(batch, seq, d)                           # leading split

        # TODO(synk): flatten (B,S,D)->(B,S*D) is done with per-row stores into
        # the lane-dense feature slab (Mosaic-safe); a value-level trailing-dim
        # reshape would remove these narrow stores once supported.
        base = m * seq * d
        for s_i in range(seq):
            feat_ref[:, base + s_i * d: base + (s_i + 1) * d] = out_m[:, s_i, :]

    # ---- fc_mul: Linear -> BN(eval scale/shift) -> LeakyReLU(0.2) (x3) -> Linear
    def lrelu(h):
        return jnp.where(h >= 0, h, 0.2 * h)

    x = feat_ref[...]                                                  # (B, 768)
    h = jnp.dot(x.astype(bf16), w1_ref[...],
                preferred_element_type=f32) + b1_ref[...]
    h = lrelu(h * s1_ref[...] + t1_ref[...])
    # TODO(synk): Dropout(0.4) layers are identity here (inference semantics).
    h = jnp.dot(h.astype(bf16), w2_ref[...],
                preferred_element_type=f32) + b2_ref[...]
    h = lrelu(h * s2_ref[...] + t2_ref[...])
    h = jnp.dot(h.astype(bf16), w3_ref[...],
                preferred_element_type=f32) + b3_ref[...]
    h = lrelu(h * s3_ref[...] + t3_ref[...])
    out = jnp.dot(h.astype(bf16), w4_ref[...],
                  preferred_element_type=f32) + b4_ref[...]
    out_ref[...] = out.astype(out_ref.dtype)


# ---------------------------------------------------------------------------
# Wrapper: packs the per-module projection weights and calls the kernel
# ---------------------------------------------------------------------------
def _pack_attention(params):
    """Per module: one (3D, 5D) weight = [q0|q1|q2|K|V], q pre-scaled by 1/sqrt(d)."""
    order = ("attn_eeg", "attn_ecg", "attn_video")
    d = D_MODEL
    wpm, bpm, alphas = [], [], []
    for m, name in enumerate(order):
        p = params[name]
        W = jnp.zeros((3 * d, 5 * d), jnp.float32)
        for i in range(NUM_QUERIES):
            W = W.at[i * d:(i + 1) * d, i * d:(i + 1) * d].set(p["wq"][i] * INV_SCALE)
        ms = MAIN_SLOT[m]
        W = W.at[ms * d:(ms + 1) * d, 3 * d:4 * d].set(p["wk"])
        W = W.at[ms * d:(ms + 1) * d, 4 * d:5 * d].set(p["wv"])
        b = jnp.concatenate([p["bq"][0] * INV_SCALE, p["bq"][1] * INV_SCALE,
                             p["bq"][2] * INV_SCALE, p["bk"], p["bv"]], axis=1)
        wpm.append(W)
        bpm.append(b)
        alphas.append(jax.nn.softmax(p["alphas"]))
    return jnp.stack(wpm), jnp.stack(bpm), jnp.concatenate(alphas)


def att_my_multiquery_video_forward(params, x_ecg, x_eeg, x_video):
    b, s, d = x_ecg.shape
    assert s == d, "fc_mul in-features (3*d_model**2) require seq == d_model"
    bs = b * s

    wpm, bpm, alphas = _pack_attention(params)

    # Stack the three query modalities along features: (B*S, 3D).
    xcat = jnp.concatenate([x_ecg, x_eeg, x_video], axis=-1).reshape(bs, 3 * d)

    # Additive block-diagonal mask: 0 inside own-batch block, -1e30 elsewhere.
    bid = jnp.arange(bs, dtype=jnp.int32) // s
    neg = jnp.where(bid[:, None] == bid[None, :], 0.0, -1e30).astype(jnp.float32)

    (w1, b1), (w2, b2), (w3, b3), (w4, b4) = params["fc_lin"]
    (s1, t1), (s2, t2), (s3, t3) = params["fc_bn"]

    args = (alphas, xcat, neg, wpm, bpm,
            w1, b1, s1, t1, w2, b2, s2, t2, w3, b3, s3, t3, w4, b4)

    vmem = pl.BlockSpec(memory_space=pltpu.MemorySpace.VMEM)
    in_specs = [pl.BlockSpec(memory_space=pltpu.MemorySpace.SMEM)]  # softmaxed alphas
    in_specs += [vmem] * (len(args) - 1)

    return pl.pallas_call(
        functools.partial(fused_kernel, batch=b, seq=s, d_model=d),
        out_shape=jax.ShapeDtypeStruct((b, 2), jnp.float32),
        in_specs=in_specs,
        out_specs=pl.BlockSpec(memory_space=pltpu.MemorySpace.VMEM),
        scratch_shapes=[pltpu.VMEM((b, NUM_MODULES * s * d), jnp.float32)],
    )(*args)


# ---------------------------------------------------------------------------
# Deterministic parameter init (mirrors torch.nn.Linear default init shapes)
# ---------------------------------------------------------------------------
def init_linear(key, din, dout):
    kw, kb = jax.random.split(key)
    bound = 1.0 / jnp.sqrt(jnp.float32(din))
    w = jax.random.uniform(kw, (din, dout), jnp.float32, -bound, bound)
    b = jax.random.uniform(kb, (1, dout), jnp.float32, -bound, bound)
    return w, b


def init_attn_module(key, d):
    keys = jax.random.split(key, 7)
    wqs, bqs = zip(*[init_linear(keys[i], d, d) for i in range(NUM_QUERIES)])
    wk, bk = init_linear(keys[3], d, d)
    wv, bv = init_linear(keys[4], d, d)
    alphas = jnp.ones((NUM_QUERIES,), jnp.float32) + \
        0.1 * jax.random.normal(keys[5], (NUM_QUERIES,), jnp.float32)
    return {
        "wq": jnp.stack(wqs),                       # (3, D, D)  (in, out)
        "bq": jnp.stack(bqs),                       # (3, 1, D)
        "wk": wk, "bk": bk, "wv": wv, "bv": bv,
        "alphas": alphas,
    }


def init_fc(key):
    dims = [FEAT, 1024, 512, 128, 2]
    keys = jax.random.split(key, 4)
    lin = []
    for i in range(4):
        w, b = init_linear(keys[i], dims[i], dims[i + 1])
        lin.append((w.astype(jnp.bfloat16), b))     # weights stored bf16, bias f32
    bn = []
    for dd in (1024, 512, 128):
        gamma = jnp.ones((1, dd), jnp.float32)
        beta = jnp.zeros((1, dd), jnp.float32)
        mean = jnp.zeros((1, dd), jnp.float32)
        var = jnp.ones((1, dd), jnp.float32)
        scale = gamma / jnp.sqrt(var + BN_EPS)
        shift = beta - mean * scale
        bn.append((scale, shift))
    return lin, bn


# ---------------------------------------------------------------------------
# Pure-JAX reference (f32 math, same bf16-stored fc weights)
# ---------------------------------------------------------------------------
def reference_forward(params, x_ecg, x_eeg, x_video):
    queries = [x_ecg, x_eeg, x_video]

    def attn_ref(p, main):
        k = main @ p["wk"] + p["bk"][0]
        v = main @ p["wv"] + p["bv"][0]
        a = jax.nn.softmax(p["alphas"])
        fin = 0.0
        for i in range(NUM_QUERIES):
            q = queries[i] @ p["wq"][i] + p["bq"][i, 0]
            sc = jnp.einsum("bmd,bnd->bmn", q, k) / jnp.sqrt(jnp.float32(D_MODEL))
            fin = fin + a[i] * jax.nn.softmax(sc, axis=-1)
        return jnp.einsum("bmn,bnd->bmd", fin, v)

    batch = x_ecg.shape[0]
    x_all = attn_ref(params["attn_eeg"], x_eeg)
    x_ecg_att = attn_ref(params["attn_ecg"], x_ecg)
    x_vid_att = attn_ref(params["attn_video"], x_video)
    h = jnp.concatenate([x_all.reshape(batch, -1),
                         x_ecg_att.reshape(batch, -1),
                         x_vid_att.reshape(batch, -1)], axis=1)

    (w1, b1), (w2, b2), (w3, b3), (w4, b4) = params["fc_lin"]
    (s1, t1), (s2, t2), (s3, t3) = params["fc_bn"]

    def lrelu(x):
        return jnp.where(x >= 0, x, 0.2 * x)

    f32 = jnp.float32
    h = lrelu((h @ w1.astype(f32) + b1) * s1 + t1)
    h = lrelu((h @ w2.astype(f32) + b2) * s2 + t2)
    h = lrelu((h @ w3.astype(f32) + b3) * s3 + t3)
    return h @ w4.astype(f32) + b4


# ---------------------------------------------------------------------------
if __name__ == "__main__":
    root = jax.random.PRNGKey(0)
    k_eeg, k_ecg, k_vid, k_fc, k_x1, k_x2, k_x3 = jax.random.split(root, 7)

    fc_lin, fc_bn = init_fc(k_fc)
    params = {
        "attn_eeg": init_attn_module(k_eeg, D_MODEL),
        "attn_ecg": init_attn_module(k_ecg, D_MODEL),
        "attn_video": init_attn_module(k_vid, D_MODEL),
        "fc_lin": fc_lin,
        "fc_bn": fc_bn,
    }

    x_ecg = jax.random.normal(k_x1, (BATCH, SEQ, D_MODEL), jnp.float32)
    x_eeg = jax.random.normal(k_x2, (BATCH, SEQ, D_MODEL), jnp.float32)
    x_video = jax.random.normal(k_x3, (BATCH, SEQ, D_MODEL), jnp.float32)

    fwd = jax.jit(att_my_multiquery_video_forward)
    out = jax.block_until_ready(fwd(params, x_ecg, x_eeg, x_video))

    with jax.default_matmul_precision("highest"):
        ref = jax.block_until_ready(reference_forward(params, x_ecg, x_eeg, x_video))

    assert out.shape == (BATCH, 2), out.shape
    assert jnp.allclose(out, ref, rtol=1e-2, atol=1e-2), (
        "mismatch", float(jnp.max(jnp.abs(out - ref))))
    print("KERNEL_OK")
</pallas_src>

<mosaic_0001>
module attributes {stable_mosaic.version = 11 : i64} {
  func.func @fused_kernel(%arg0: memref<9xf32, #tpu.memory_space<smem>>, %arg1: memref<128x48xf32, #tpu.memory_space<vmem>>, %arg2: memref<128x128xf32, #tpu.memory_space<vmem>>, %arg3: memref<3x48x80xf32, #tpu.memory_space<vmem>>, %arg4: memref<3x1x80xf32, #tpu.memory_space<vmem>>, %arg5: memref<768x1024xbf16, #tpu.memory_space<vmem>>, %arg6: memref<1x1024xf32, #tpu.memory_space<vmem>>, %arg7: memref<1x1024xf32, #tpu.memory_space<vmem>>, %arg8: memref<1x1024xf32, #tpu.memory_space<vmem>>, %arg9: memref<1024x512xbf16, #tpu.memory_space<vmem>>, %arg10: memref<1x512xf32, #tpu.memory_space<vmem>>, %arg11: memref<1x512xf32, #tpu.memory_space<vmem>>, %arg12: memref<1x512xf32, #tpu.memory_space<vmem>>, %arg13: memref<512x128xbf16, #tpu.memory_space<vmem>>, %arg14: memref<1x128xf32, #tpu.memory_space<vmem>>, %arg15: memref<1x128xf32, #tpu.memory_space<vmem>>, %arg16: memref<1x128xf32, #tpu.memory_space<vmem>>, %arg17: memref<128x2xbf16, #tpu.memory_space<vmem>>, %arg18: memref<1x2xf32, #tpu.memory_space<vmem>>, %arg19: memref<8x2xf32, #tpu.memory_space<vmem>>, %arg20: memref<8x768xf32, #tpu.memory_space<vmem>>) attributes {dimension_semantics = [], scalar_prefetch = 0 : i64, scratch_operands = 1 : i64, tpu.core_type = #tpu.core_type<tc>} {
    %c0 = arith.constant 0 : index
    %c0_0 = arith.constant 0 : index
    %0 = vector.load %arg1[%c0, %c0_0] : memref<128x48xf32, #tpu.memory_space<vmem>>, vector<128x48xf32>
    %c0_1 = arith.constant 0 : index
    %c0_2 = arith.constant 0 : index
    %c0_3 = arith.constant 0 : index
    %1 = vector.load %arg3[%c0_1, %c0_2, %c0_3] : memref<3x48x80xf32, #tpu.memory_space<vmem>>, vector<1x48x80xf32>
    %2 = vector.shape_cast %1 : vector<1x48x80xf32> to vector<48x80xf32>
    %cst = arith.constant dense<0.000000e+00> : vector<128x80xf32>
    %3 = tpu.matmul %0, %2, %cst {dimension_numbers = #tpu.dot_dimension_numbers<[1], [0], [0], [1], [0, 0, 1, 1], [], []>} : vector<128x48xf32>, vector<48x80xf32>, vector<128x80xf32> -> vector<128x80xf32>
    %c0_4 = arith.constant 0 : index
    %c0_5 = arith.constant 0 : index
    %c0_6 = arith.constant 0 : index
    %4 = vector.load %arg4[%c0_4, %c0_5, %c0_6] : memref<3x1x80xf32, #tpu.memory_space<vmem>>, vector<1x1x80xf32>
    %5 = vector.shape_cast %4 : vector<1x1x80xf32> to vector<1x80xf32>
    %6 = vector.broadcast %5 : vector<1x80xf32> to vector<128x80xf32>
    %7 = arith.addf %3, %6 : vector<128x80xf32>
    %8 = vector.extract_strided_slice %7 {offsets = [0, 48], sizes = [128, 16], strides = [1, 1]} : vector<128x80xf32> to vector<128x16xf32>
    %9 = vector.extract_strided_slice %7 {offsets = [0, 64], sizes = [128, 16], strides = [1, 1]} : vector<128x80xf32> to vector<128x16xf32>
    %cst_7 = arith.constant 0.000000e+00 : f32
    %10 = vector.broadcast %cst_7 : f32 to vector<128x128xf32>
    %11 = vector.extract_strided_slice %7 {offsets = [0, 0], sizes = [128, 16], strides = [1, 1]} : vector<128x80xf32> to vector<128x16xf32>
    "tpu.trace_start"() <{level = 10 : i32, message = "md,nd->mn"}> : () -> ()
    %cst_8 = arith.constant dense<0.000000e+00> : vector<128x128xf32>
    %12 = tpu.matmul %11, %8, %cst_8 {dimension_numbers = #tpu.dot_dimension_numbers<[1], [1], [0], [0], [0, 0, 1, 0], [], []>} : vector<128x16xf32>, vector<128x16xf32>, vector<128x128xf32> -> vector<128x128xf32>
    "tpu.trace_stop"() : () -> ()
    %c0_9 = arith.constant 0 : index
    %c0_10 = arith.constant 0 : index
    %13 = vector.load %arg2[%c0_9, %c0_10] : memref<128x128xf32, #tpu.memory_space<vmem>>, vector<128x128xf32>
    %14 = arith.addf %12, %13 : vector<128x128xf32>
    %cst_11 = arith.constant dense<0xFF800000> : vector<128xf32>
    %15 = vector.multi_reduction <maximumf>, %14, %cst_11 [1] : vector<128x128xf32> to vector<128xf32>
    %16 = vector.shape_cast %15 : vector<128xf32> to vector<128x1xf32>
    %17 = vector.broadcast %16 : vector<128x1xf32> to vector<128x128xf32>
    %18 = arith.subf %14, %17 : vector<128x128xf32>
    %19 = math.exp %18 : vector<128x128xf32>
    %cst_12 = arith.constant dense<0.000000e+00> : vector<128xf32>
    %20 = vector.multi_reduction <add>, %19, %cst_12 [1] : vector<128x128xf32> to vector<128xf32>
    %21 = vector.shape_cast %20 : vector<128xf32> to vector<128x1xf32>
    %22 = tpu.reciprocal %21 : vector<128x1xf32> -> vector<128x1xf32>
    %23 = vector.broadcast %22 : vector<128x1xf32> to vector<128x128xf32>
    %24 = arith.mulf %19, %23 : vector<128x128xf32>
    %c0_13 = arith.constant 0 : index
    %25 = memref.load %arg0[%c0_13] : memref<9xf32, #tpu.memory_space<smem>>
    %26 = vector.broadcast %25 : f32 to vector<128x128xf32>
    %27 = arith.mulf %26, %24 : vector<128x128xf32>
    %28 = arith.addf %10, %27 : vector<128x128xf32>
    %29 = vector.extract_strided_slice %7 {offsets = [0, 16], sizes = [128, 16], strides = [1, 1]} : vector<128x80xf32> to vector<128x16xf32>
    "tpu.trace_start"() <{level = 10 : i32, message = "md,nd->mn"}> : () -> ()
    %cst_14 = arith.constant dense<0.000000e+00> : vector<128x128xf32>
    %30 = tpu.matmul %29, %8, %cst_14 {dimension_numbers = #tpu.dot_dimension_numbers<[1], [1], [0], [0], [0, 0, 1, 0], [], []>} : vector<128x16xf32>, vector<128x16xf32>, vector<128x128xf32> -> vector<128x128xf32>
    "tpu.trace_stop"() : () -> ()
    %c0_15 = arith.constant 0 : index
    %c0_16 = arith.constant 0 : index
    %31 = vector.load %arg2[%c0_15, %c0_16] : memref<128x128xf32, #tpu.memory_space<vmem>>, vector<128x128xf32>
    %32 = arith.addf %30, %31 : vector<128x128xf32>
    %cst_17 = arith.constant dense<0xFF800000> : vector<128xf32>
    %33 = vector.multi_reduction <maximumf>, %32, %cst_17 [1] : vector<128x128xf32> to vector<128xf32>
    %34 = vector.shape_cast %33 : vector<128xf32> to vector<128x1xf32>
    %35 = vector.broadcast %34 : vector<128x1xf32> to vector<128x128xf32>
    %36 = arith.subf %32, %35 : vector<128x128xf32>
    %37 = math.exp %36 : vector<128x128xf32>
    %cst_18 = arith.constant dense<0.000000e+00> : vector<128xf32>
    %38 = vector.multi_reduction <add>, %37, %cst_18 [1] : vector<128x128xf32> to vector<128xf32>
    %39 = vector.shape_cast %38 : vector<128xf32> to vector<128x1xf32>
    %40 = tpu.reciprocal %39 : vector<128x1xf32> -> vector<128x1xf32>
    %41 = vector.broadcast %40 : vector<128x1xf32> to vector<128x128xf32>
    %42 = arith.mulf %37, %41 : vector<128x128xf32>
    %c1 = arith.constant 1 : index
    %43 = memref.load %arg0[%c1] : memref<9xf32, #tpu.memory_space<smem>>
    %44 = vector.broadcast %43 : f32 to vector<128x128xf32>
    %45 = arith.mulf %44, %42 : vector<128x128xf32>
    %46 = arith.addf %28, %45 : vector<128x128xf32>
    %47 = vector.extract_strided_slice %7 {offsets = [0, 32], sizes = [128, 16], strides = [1, 1]} : vector<128x80xf32> to vector<128x16xf32>
    "tpu.trace_start"() <{level = 10 : i32, message = "md,nd->mn"}> : () -> ()
    %cst_19 = arith.constant dense<0.000000e+00> : vector<128x128xf32>
    %48 = tpu.matmul %47, %8, %cst_19 {dimension_numbers = #tpu.dot_dimension_numbers<[1], [1], [0], [0], [0, 0, 1, 0], [], []>} : vector<128x16xf32>, vector<128x16xf32>, vector<128x128xf32> -> vector<128x128xf32>
    "tpu.trace_stop"() : () -> ()
    %c0_20 = arith.constant 0 : index
    %c0_21 = arith.constant 0 : index
    %49 = vector.load %arg2[%c0_20, %c0_21] : memref<128x128xf32, #tpu.memory_space<vmem>>, vector<128x128xf32>
    %50 = arith.addf %48, %49 : vector<128x128xf32>
    %cst_22 = arith.constant dense<0xFF800000> : vector<128xf32>
    %51 = vector.multi_reduction <maximumf>, %50, %cst_22 [1] : vector<128x128xf32> to vector<128xf32>
    %52 = vector.shape_cast %51 : vector<128xf32> to vector<128x1xf32>
    %53 = vector.broadcast %52 : vector<128x1xf32> to vector<128x128xf32>
    %54 = arith.subf %50, %53 : vector<128x128xf32>
    %55 = math.exp %54 : vector<128x128xf32>
    %cst_23 = arith.constant dense<0.000000e+00> : vector<128xf32>
    %56 = vector.multi_reduction <add>, %55, %cst_23 [1] : vector<128x128xf32> to vector<128xf32>
    %57 = vector.shape_cast %56 : vector<128xf32> to vector<128x1xf32>
    %58 = tpu.reciprocal %57 : vector<128x1xf32> -> vector<128x1xf32>
    %59 = vector.broadcast %58 : vector<128x1xf32> to vector<128x128xf32>
    %60 = arith.mulf %55, %59 : vector<128x128xf32>
    %c2 = arith.constant 2 : index
    %61 = memref.load %arg0[%c2] : memref<9xf32, #tpu.memory_space<smem>>
    %62 = vector.broadcast %61 : f32 to vector<128x128xf32>
    %63 = arith.mulf %62, %60 : vector<128x128xf32>
    %64 = arith.addf %46, %63 : vector<128x128xf32>
    %cst_24 = arith.constant dense<0.000000e+00> : vector<128x16xf32>
    %65 = tpu.matmul %64, %9, %cst_24 {dimension_numbers = #tpu.dot_dimension_numbers<[1], [0], [0], [1], [0, 0, 1, 1], [], []>} : vector<128x128xf32>, vector<128x16xf32>, vector<128x16xf32> -> vector<128x16xf32>
    %66 = vector.shape_cast %65 : vector<128x16xf32> to vector<8x16x16xf32>
    %67 = vector.extract_strided_slice %66 {offsets = [0, 0, 0], sizes = [8, 1, 16], strides = [1, 1, 1]} : vector<8x16x16xf32> to vector<8x1x16xf32>
    %68 = vector.shape_cast %67 : vector<8x1x16xf32> to vector<8x16xf32>
    %c0_25 = arith.constant 0 : index
    %c0_26 = arith.constant 0 : index
    %69 = vector.load %arg20[%c0_25, %c0_26] : memref<8x768xf32, #tpu.memory_space<vmem>>, vector<8x16xf32>
    tpu.vector_store %arg20[%c0_25, %c0_26], %68 {strides = array<i32>} : memref<8x768xf32, #tpu.memory_space<vmem>>, vector<8x16xf32>,
    %70 = vector.extract_strided_slice %66 {offsets = [0, 1, 0], sizes = [8, 1, 16], strides = [1, 1, 1]} : vector<8x16x16xf32> to vector<8x1x16xf32>
    %71 = vector.shape_cast %70 : vector<8x1x16xf32> to vector<8x16xf32>
    %c0_27 = arith.constant 0 : index
    %c16 = arith.constant 16 : index
    %72 = vector.load %arg20[%c0_27, %c16] : memref<8x768xf32, #tpu.memory_space<vmem>>, vector<8x16xf32>
    tpu.vector_store %arg20[%c0_27, %c16], %71 {strides = array<i32>} : memref<8x768xf32, #tpu.memory_space<vmem>>, vector<8x16xf32>,
    %73 = vector.extract_strided_slice %66 {offsets = [0, 2, 0], sizes = [8, 1, 16], strides = [1, 1, 1]} : vector<8x16x16xf32> to vector<8x1x16xf32>
    %74 = vector.shape_cast %73 : vector<8x1x16xf32> to vector<8x16xf32>
    %c0_28 = arith.constant 0 : index
    %c32 = arith.constant 32 : index
    %75 = vector.load %arg20[%c0_28, %c32] : memref<8x768xf32, #tpu.memory_space<vmem>>, vector<8x16xf32>
    tpu.vector_store %arg20[%c0_28, %c32], %74 {strides = array<i32>} : memref<8x768xf32, #tpu.memory_space<vmem>>, vector<8x16xf32>,
    %76 = vector.extract_strided_slice %66 {offsets = [0, 3, 0], sizes = [8, 1, 16], strides = [1, 1, 1]} : vector<8x16x16xf32> to vector<8x1x16xf32>
    %77 = vector.shape_cast %76 : vector<8x1x16xf32> to vector<8x16xf32>
    %c0_29 = arith.constant 0 : index
    %c48 = arith.constant 48 : index
    %78 = vector.load %arg20[%c0_29, %c48] : memref<8x768xf32, #tpu.memory_space<vmem>>, vector<8x16xf32>
    tpu.vector_store %arg20[%c0_29, %c48], %77 {strides = array<i32>} : memref<8x768xf32, #tpu.memory_space<vmem>>, vector<8x16xf32>,
    %79 = vector.extract_strided_slice %66 {offsets = [0, 4, 0], sizes = [8, 1, 16], strides = [1, 1, 1]} : vector<8x16x16xf32> to vector<8x1x16xf32>
    %80 = vector.shape_cast %79 : vector<8x1x16xf32> to vector<8x16xf32>
    %c0_30 = arith.constant 0 : index
    %c64 = arith.constant 64 : index
    %81 = vector.load %arg20[%c0_30, %c64] : memref<8x768xf32, #tpu.memory_space<vmem>>, vector<8x16xf32>
    tpu.vector_store %arg20[%c0_30, %c64], %80 {strides = array<i32>} : memref<8x768xf32, #tpu.memory_space<vmem>>, vector<8x16xf32>,
    %82 = vector.extract_strided_slice %66 {offsets = [0, 5, 0], sizes = [8, 1, 16], strides = [1, 1, 1]} : vector<8x16x16xf32> to vector<8x1x16xf32>
    %83 = vector.shape_cast %82 : vector<8x1x16xf32> to vector<8x16xf32>
    %c0_31 = arith.constant 0 : index
    %c80 = arith.constant 80 : index
    %84 = vector.load %arg20[%c0_31, %c80] : memref<8x768xf32, #tpu.memory_space<vmem>>, vector<8x16xf32>
    tpu.vector_store %arg20[%c0_31, %c80], %83 {strides = array<i32>} : memref<8x768xf32, #tpu.memory_space<vmem>>, vector<8x16xf32>,
    %85 = vector.extract_strided_slice %66 {offsets = [0, 6, 0], sizes = [8, 1, 16], strides = [1, 1, 1]} : vector<8x16x16xf32> to vector<8x1x16xf32>
    %86 = vector.shape_cast %85 : vector<8x1x16xf32> to vector<8x16xf32>
    %c0_32 = arith.constant 0 : index
    %c96 = arith.constant 96 : index
    %87 = vector.load %arg20[%c0_32, %c96] : memref<8x768xf32, #tpu.memory_space<vmem>>, vector<8x16xf32>
    tpu.vector_store %arg20[%c0_32, %c96], %86 {strides = array<i32>} : memref<8x768xf32, #tpu.memory_space<vmem>>, vector<8x16xf32>,
    %88 = vector.extract_strided_slice %66 {offsets = [0, 7, 0], sizes = [8, 1, 16], strides = [1, 1, 1]} : vector<8x16x16xf32> to vector<8x1x16xf32>
    %89 = vector.shape_cast %88 : vector<8x1x16xf32> to vector<8x16xf32>
    %c0_33 = arith.constant 0 : index
    %c112 = arith.constant 112 : index
    %90 = vector.load %arg20[%c0_33, %c112] : memref<8x768xf32, #tpu.memory_space<vmem>>, vector<8x16xf32>
    tpu.vector_store %arg20[%c0_33, %c112], %89 {strides = array<i32>} : memref<8x768xf32, #tpu.memory_space<vmem>>, vector<8x16xf32>,
    %91 = vector.extract_strided_slice %66 {offsets = [0, 8, 0], sizes = [8, 1, 16], strides = [1, 1, 1]} : vector<8x16x16xf32> to vector<8x1x16xf32>
    %92 = vector.shape_cast %91 : vector<8x1x16xf32> to vector<8x16xf32>
    %c0_34 = arith.constant 0 : index
    %c128 = arith.constant 128 : index
    %93 = vector.load %arg20[%c0_34, %c128] : memref<8x768xf32, #tpu.memory_space<vmem>>, vector<8x16xf32>
    tpu.vector_store %arg20[%c0_34, %c128], %92 {strides = array<i32>} : memref<8x768xf32, #tpu.memory_space<vmem>>, vector<8x16xf32>,
    %94 = vector.extract_strided_slice %66 {offsets = [0, 9, 0], sizes = [8, 1, 16], strides = [1, 1, 1]} : vector<8x16x16xf32> to vector<8x1x16xf32>
    %95 = vector.shape_cast %94 : vector<8x1x16xf32> to vector<8x16xf32>
    %c0_35 = arith.constant 0 : index
    %c144 = arith.constant 144 : index
    %96 = vector.load %arg20[%c0_35, %c144] : memref<8x768xf32, #tpu.memory_space<vmem>>, vector<8x16xf32>
    tpu.vector_store %arg20[%c0_35, %c144], %95 {strides = array<i32>} : memref<8x768xf32, #tpu.memory_space<vmem>>, vector<8x16xf32>,
    %97 = vector.extract_strided_slice %66 {offsets = [0, 10, 0], sizes = [8, 1, 16], strides = [1, 1, 1]} : vector<8x16x16xf32> to vector<8x1x16xf32>
    %98 = vector.shape_cast %97 : vector<8x1x16xf32> to vector<8x16xf32>
    %c0_36 = arith.constant 0 : index
    %c160 = arith.constant 160 : index
    %99 = vector.load %arg20[%c0_36, %c160] : memref<8x768xf32, #tpu.memory_space<vmem>>, vector<8x16xf32>
    tpu.vector_store %arg20[%c0_36, %c160], %98 {strides = array<i32>} : memref<8x768xf32, #tpu.memory_space<vmem>>, vector<8x16xf32>,
    %100 = vector.extract_strided_slice %66 {offsets = [0, 11, 0], sizes = [8, 1, 16], strides = [1, 1, 1]} : vector<8x16x16xf32> to vector<8x1x16xf32>
    %101 = vector.shape_cast %100 : vector<8x1x16xf32> to vector<8x16xf32>
    %c0_37 = arith.constant 0 : index
    %c176 = arith.constant 176 : index
    %102 = vector.load %arg20[%c0_37, %c176] : memref<8x768xf32, #tpu.memory_space<vmem>>, vector<8x16xf32>
    tpu.vector_store %arg20[%c0_37, %c176], %101 {strides = array<i32>} : memref<8x768xf32, #tpu.memory_space<vmem>>, vector<8x16xf32>,
    %103 = vector.extract_strided_slice %66 {offsets = [0, 12, 0], sizes = [8, 1, 16], strides = [1, 1, 1]} : vector<8x16x16xf32> to vector<8x1x16xf32>
    %104 = vector.shape_cast %103 : vector<8x1x16xf32> to vector<8x16xf32>
    %c0_38 = arith.constant 0 : index
    %c192 = arith.constant 192 : index
    %105 = vector.load %arg20[%c0_38, %c192] : memref<8x768xf32, #tpu.memory_space<vmem>>, vector<8x16xf32>
    tpu.vector_store %arg20[%c0_38, %c192], %104 {strides = array<i32>} : memref<8x768xf32, #tpu.memory_space<vmem>>, vector<8x16xf32>,
    %106 = vector.extract_strided_slice %66 {offsets = [0, 13, 0], sizes = [8, 1, 16], strides = [1, 1, 1]} : vector<8x16x16xf32> to vector<8x1x16xf32>
    %107 = vector.shape_cast %106 : vector<8x1x16xf32> to vector<8x16xf32>
    %c0_39 = arith.constant 0 : index
    %c208 = arith.constant 208 : index
    %108 = vector.load %arg20[%c0_39, %c208] : memref<8x768xf32, #tpu.memory_space<vmem>>, vector<8x16xf32>
    tpu.vector_store %arg20[%c0_39, %c208], %107 {strides = array<i32>} : memref<8x768xf32, #tpu.memory_space<vmem>>, vector<8x16xf32>,
    %109 = vector.extract_strided_slice %66 {offsets = [0, 14, 0], sizes = [8, 1, 16], strides = [1, 1, 1]} : vector<8x16x16xf32> to vector<8x1x16xf32>
    %110 = vector.shape_cast %109 : vector<8x1x16xf32> to vector<8x16xf32>
    %c0_40 = arith.constant 0 : index
    %c224 = arith.constant 224 : index
    %111 = vector.load %arg20[%c0_40, %c224] : memref<8x768xf32, #tpu.memory_space<vmem>>, vector<8x16xf32>
    tpu.vector_store %arg20[%c0_40, %c224], %110 {strides = array<i32>} : memref<8x768xf32, #tpu.memory_space<vmem>>, vector<8x16xf32>,
    %112 = vector.extract_strided_slice %66 {offsets = [0, 15, 0], sizes = [8, 1, 16], strides = [1, 1, 1]} : vector<8x16x16xf32> to vector<8x1x16xf32>
    %113 = vector.shape_cast %112 : vector<8x1x16xf32> to vector<8x16xf32>
    %c0_41 = arith.constant 0 : index
    %c240 = arith.constant 240 : index
    %114 = vector.load %arg20[%c0_41, %c240] : memref<8x768xf32, #tpu.memory_space<vmem>>, vector<8x16xf32>
    tpu.vector_store %arg20[%c0_41, %c240], %113 {strides = array<i32>} : memref<8x768xf32, #tpu.memory_space<vmem>>, vector<8x16xf32>,
    %c0_42 = arith.constant 0 : index
    %c0_43 = arith.constant 0 : index
    %115 = vector.load %arg1[%c0_42, %c0_43] : memref<128x48xf32, #tpu.memory_space<vmem>>, vector<128x48xf32>
    %c1_44 = arith.constant 1 : index
    %c0_45 = arith.constant 0 : index
    %c0_46 = arith.constant 0 : index
    %116 = vector.load %arg3[%c1_44, %c0_45, %c0_46] : memref<3x48x80xf32, #tpu.memory_space<vmem>>, vector<1x48x80xf32>
    %117 = vector.shape_cast %116 : vector<1x48x80xf32> to vector<48x80xf32>
    %cst_47 = arith.constant dense<0.000000e+00> : vector<128x80xf32>
    %118 = tpu.matmul %115, %117, %cst_47 {dimension_numbers = #tpu.dot_dimension_numbers<[1], [0], [0], [1], [0, 0, 1, 1], [], []>} : vector<128x48xf32>, vector<48x80xf32>, vector<128x80xf32> -> vector<128x80xf32>
    %c1_48 = arith.constant 1 : index
    %c0_49 = arith.constant 0 : index
    %c0_50 = arith.constant 0 : index
    %119 = vector.load %arg4[%c1_48, %c0_49, %c0_50] : memref<3x1x80xf32, #tpu.memory_space<vmem>>, vector<1x1x80xf32>
    %120 = vector.shape_cast %119 : vector<1x1x80xf32> to vector<1x80xf32>
    %121 = vector.broadcast %120 : vector<1x80xf32> to vector<128x80xf32>
    %122 = arith.addf %118, %121 : vector<128x80xf32>
    %123 = vector.extract_strided_slice %122 {offsets = [0, 48], sizes = [128, 16], strides = [1, 1]} : vector<128x80xf32> to vector<128x16xf32>
    %124 = vector.extract_strided_slice %122 {offsets = [0, 64], sizes = [128, 16], strides = [1, 1]} : vector<128x80xf32> to vector<128x16xf32>
    %cst_51 = arith.constant 0.000000e+00 : f32
    %125 = vector.broadcast %cst_51 : f32 to vector<128x128xf32>
    %126 = vector.extract_strided_slice %122 {offsets = [0, 0], sizes = [128, 16], strides = [1, 1]} : vector<128x80xf32> to vector<128x16xf32>
    "tpu.trace_start"() <{level = 10 : i32, message = "md,nd->mn"}> : () -> ()
    %cst_52 = arith.constant dense<0.000000e+00> : vector<128x128xf32>
    %127 = tpu.matmul %126, %123, %cst_52 {dimension_numbers = #tpu.dot_dimension_numbers<[1], [1], [0], [0], [0, 0, 1, 0], [], []>} : vector<128x16xf32>, vector<128x16xf32>, vector<128x128xf32> -> vector<128x128xf32>
    "tpu.trace_stop"() : () -> ()
    %c0_53 = arith.constant 0 : index
    %c0_54 = arith.constant 0 : index
    %128 = vector.load %arg2[%c0_53, %c0_54] : memref<128x128xf32, #tpu.memory_space<vmem>>, vector<128x128xf32>
    %129 = arith.addf %127, %128 : vector<128x128xf32>
    %cst_55 = arith.constant dense<0xFF800000> : vector<128xf32>
    %130 = vector.multi_reduction <maximumf>, %129, %cst_55 [1] : vector<128x128xf32> to vector<128xf32>
    %131 = vector.shape_cast %130 : vector<128xf32> to vector<128x1xf32>
    %132 = vector.broadcast %131 : vector<128x1xf32> to vector<128x128xf32>
    %133 = arith.subf %129, %132 : vector<128x128xf32>
    %134 = math.exp %133 : vector<128x128xf32>
    %cst_56 = arith.constant dense<0.000000e+00> : vector<128xf32>
    %135 = vector.multi_reduction <add>, %134, %cst_56 [1] : vector<128x128xf32> to vector<128xf32>
    %136 = vector.shape_cast %135 : vector<128xf32> to vector<128x1xf32>
    %137 = tpu.reciprocal %136 : vector<128x1xf32> -> vector<128x1xf32>
    %138 = vector.broadcast %137 : vector<128x1xf32> to vector<128x128xf32>
    %139 = arith.mulf %134, %138 : vector<128x128xf32>
    %c3 = arith.constant 3 : index
    %140 = memref.load %arg0[%c3] : memref<9xf32, #tpu.memory_space<smem>>
    %141 = vector.broadcast %140 : f32 to vector<128x128xf32>
    %142 = arith.mulf %141, %139 : vector<128x128xf32>
    %143 = arith.addf %125, %142 : vector<128x128xf32>
    %144 = vector.extract_strided_slice %122 {offsets = [0, 16], sizes = [128, 16], strides = [1, 1]} : vector<128x80xf32> to vector<128x16xf32>
    "tpu.trace_start"() <{level = 10 : i32, message = "md,nd->mn"}> : () -> ()
    %cst_57 = arith.constant dense<0.000000e+00> : vector<128x128xf32>
    %145 = tpu.matmul %144, %123, %cst_57 {dimension_numbers = #tpu.dot_dimension_numbers<[1], [1], [0], [0], [0, 0, 1, 0], [], []>} : vector<128x16xf32>, vector<128x16xf32>, vector<128x128xf32> -> vector<128x128xf32>
    "tpu.trace_stop"() : () -> ()
    %c0_58 = arith.constant 0 : index
    %c0_59 = arith.constant 0 : index
    %146 = vector.load %arg2[%c0_58, %c0_59] : memref<128x128xf32, #tpu.memory_space<vmem>>, vector<128x128xf32>
    %147 = arith.addf %145, %146 : vector<128x128xf32>
    %cst_60 = arith.constant dense<0xFF800000> : vector<128xf32>
    %148 = vector.multi_reduction <maximumf>, %147, %cst_60 [1] : vector<128x128xf32> to vector<128xf32>
    %149 = vector.shape_cast %148 : vector<128xf32> to vector<128x1xf32>
    %150 = vector.broadcast %149 : vector<128x1xf32> to vector<128x128xf32>
    %151 = arith.subf %147, %150 : vector<128x128xf32>
    %152 = math.exp %151 : vector<128x128xf32>
    %cst_61 = arith.constant dense<0.000000e+00> : vector<128xf32>
    %153 = vector.multi_reduction <add>, %152, %cst_61 [1] : vector<128x128xf32> to vector<128xf32>
    %154 = vector.shape_cast %153 : vector<128xf32> to vector<128x1xf32>
    %155 = tpu.reciprocal %154 : vector<128x1xf32> -> vector<128x1xf32>
    %156 = vector.broadcast %155 : vector<128x1xf32> to vector<128x128xf32>
    %157 = arith.mulf %152, %156 : vector<128x128xf32>
    %c4 = arith.constant 4 : index
    %158 = memref.load %arg0[%c4] : memref<9xf32, #tpu.memory_space<smem>>
    %159 = vector.broadcast %158 : f32 to vector<128x128xf32>
    %160 = arith.mulf %159, %157 : vector<128x128xf32>
    %161 = arith.addf %143, %160 : vector<128x128xf32>
    %162 = vector.extract_strided_slice %122 {offsets = [0, 32], sizes = [128, 16], strides = [1, 1]} : vector<128x80xf32> to vector<128x16xf32>
    "tpu.trace_start"() <{level = 10 : i32, message = "md,nd->mn"}> : () -> ()
    %cst_62 = arith.constant dense<0.000000e+00> : vector<128x128xf32>
    %163 = tpu.matmul %162, %123, %cst_62 {dimension_numbers = #tpu.dot_dimension_numbers<[1], [1], [0], [0], [0, 0, 1, 0], [], []>} : vector<128x16xf32>, vector<128x16xf32>, vector<128x128xf32> -> vector<128x128xf32>
    "tpu.trace_stop"() : () -> ()
    %c0_63 = arith.constant 0 : index
    %c0_64 = arith.constant 0 : index
    %164 = vector.load %arg2[%c0_63, %c0_64] : memref<128x128xf32, #tpu.memory_space<vmem>>, vector<128x128xf32>
    %165 = arith.addf %163, %164 : vector<128x128xf32>
    %cst_65 = arith.constant dense<0xFF800000> : vector<128xf32>
    %166 = vector.multi_reduction <maximumf>, %165, %cst_65 [1] : vector<128x128xf32> to vector<128xf32>
    %167 = vector.shape_cast %166 : vector<128xf32> to vector<128x1xf32>
    %168 = vector.broadcast %167 : vector<128x1xf32> to vector<128x128xf32>
    %169 = arith.subf %165, %168 : vector<128x128xf32>
    %170 = math.exp %169 : vector<128x128xf32>
    %cst_66 = arith.constant dense<0.000000e+00> : vector<128xf32>
    %171 = vector.multi_reduction <add>, %170, %cst_66 [1] : vector<128x128xf32> to vector<128xf32>
    %172 = vector.shape_cast %171 : vector<128xf32> to vector<128x1xf32>
    %173 = tpu.reciprocal %172 : vector<128x1xf32> -> vector<128x1xf32>
    %174 = vector.broadcast %173 : vector<128x1xf32> to vector<128x128xf32>
    %175 = arith.mulf %170, %174 : vector<128x128xf32>
    %c5 = arith.constant 5 : index
    %176 = memref.load %arg0[%c5] : memref<9xf32, #tpu.memory_space<smem>>
    %177 = vector.broadcast %176 : f32 to vector<128x128xf32>
    %178 = arith.mulf %177, %175 : vector<128x128xf32>
    %179 = arith.addf %161, %178 : vector<128x128xf32>
    %cst_67 = arith.constant dense<0.000000e+00> : vector<128x16xf32>
    %180 = tpu.matmul %179, %124, %cst_67 {dimension_numbers = #tpu.dot_dimension_numbers<[1], [0], [0], [1], [0, 0, 1, 1], [], []>} : vector<128x128xf32>, vector<128x16xf32>, vector<128x16xf32> -> vector<128x16xf32>
    %181 = vector.shape_cast %180 : vector<128x16xf32> to vector<8x16x16xf32>
    %182 = vector.extract_strided_slice %181 {offsets = [0, 0, 0], sizes = [8, 1, 16], strides = [1, 1, 1]} : vector<8x16x16xf32> to vector<8x1x16xf32>
    %183 = vector.shape_cast %182 : vector<8x1x16xf32> to vector<8x16xf32>
    %c0_68 = arith.constant 0 : index
    %c256 = arith.constant 256 : index
    %184 = vector.load %arg20[%c0_68, %c256] : memref<8x768xf32, #tpu.memory_space<vmem>>, vector<8x16xf32>
    tpu.vector_store %arg20[%c0_68, %c256], %183 {strides = array<i32>} : memref<8x768xf32, #tpu.memory_space<vmem>>, vector<8x16xf32>,
    %185 = vector.extract_strided_slice %181 {offsets = [0, 1, 0], sizes = [8, 1, 16], strides = [1, 1, 1]} : vector<8x16x16xf32> to vector<8x1x16xf32>
    %186 = vector.shape_cast %185 : vector<8x1x16xf32> to vector<8x16xf32>
    %c0_69 = arith.constant 0 : index
    %c272 = arith.constant 272 : index
    %187 = vector.load %arg20[%c0_69, %c272] : memref<8x768xf32, #tpu.memory_space<vmem>>, vector<8x16xf32>
    tpu.vector_store %arg20[%c0_69, %c272], %186 {strides = array<i32>} : memref<8x768xf32, #tpu.memory_space<vmem>>, vector<8x16xf32>,
    %188 = vector.extract_strided_slice %181 {offsets = [0, 2, 0], sizes = [8, 1, 16], strides = [1, 1, 1]} : vector<8x16x16xf32> to vector<8x1x16xf32>
    %189 = vector.shape_cast %188 : vector<8x1x16xf32> to vector<8x16xf32>
    %c0_70 = arith.constant 0 : index
    %c288 = arith.constant 288 : index
    %190 = vector.load %arg20[%c0_70, %c288] : memref<8x768xf32, #tpu.memory_space<vmem>>, vector<8x16xf32>
    tpu.vector_store %arg20[%c0_70, %c288], %189 {strides = array<i32>} : memref<8x768xf32, #tpu.memory_space<vmem>>, vector<8x16xf32>,
    %191 = vector.extract_strided_slice %181 {offsets = [0, 3, 0], sizes = [8, 1, 16], strides = [1, 1, 1]} : vector<8x16x16xf32> to vector<8x1x16xf32>
    %192 = vector.shape_cast %191 : vector<8x1x16xf32> to vector<8x16xf32>
    %c0_71 = arith.constant 0 : index
    %c304 = arith.constant 304 : index
    %193 = vector.load %arg20[%c0_71, %c304] : memref<8x768xf32, #tpu.memory_space<vmem>>, vector<8x16xf32>
    tpu.vector_store %arg20[%c0_71, %c304], %192 {strides = array<i32>} : memref<8x768xf32, #tpu.memory_space<vmem>>, vector<8x16xf32>,
    %194 = vector.extract_strided_slice %181 {offsets = [0, 4, 0], sizes = [8, 1, 16], strides = [1, 1, 1]} : vector<8x16x16xf32> to vector<8x1x16xf32>
    %195 = vector.shape_cast %194 : vector<8x1x16xf32> to vector<8x16xf32>
    %c0_72 = arith.constant 0 : index
    %c320 = arith.constant 320 : index
    %196 = vector.load %arg20[%c0_72, %c320] : memref<8x768xf32, #tpu.memory_space<vmem>>, vector<8x16xf32>
    tpu.vector_store %arg20[%c0_72, %c320], %195 {strides = array<i32>} : memref<8x768xf32, #tpu.memory_space<vmem>>, vector<8x16xf32>,
    %197 = vector.extract_strided_slice %181 {offsets = [0, 5, 0], sizes = [8, 1, 16], strides = [1, 1, 1]} : vector<8x16x16xf32> to vector<8x1x16xf32>
    %198 = vector.shape_cast %197 : vector<8x1x16xf32> to vector<8x16xf32>
    %c0_73 = arith.constant 0 : index
    %c336 = arith.constant 336 : index
    %199 = vector.load %arg20[%c0_73, %c336] : memref<8x768xf32, #tpu.memory_space<vmem>>, vector<8x16xf32>
    tpu.vector_store %arg20[%c0_73, %c336], %198 {strides = array<i32>} : memref<8x768xf32, #tpu.memory_space<vmem>>, vector<8x16xf32>,
    %200 = vector.extract_strided_slice %181 {offsets = [0, 6, 0], sizes = [8, 1, 16], strides = [1, 1, 1]} : vector<8x16x16xf32> to vector<8x1x16xf32>
    %201 = vector.shape_cast %200 : vector<8x1x16xf32> to vector<8x16xf32>
    %c0_74 = arith.constant 0 : index
    %c352 = arith.constant 352 : index
    %202 = vector.load %arg20[%c0_74, %c352] : memref<8x768xf32, #tpu.memory_space<vmem>>, vector<8x16xf32>
    tpu.vector_store %arg20[%c0_74, %c352], %201 {strides = array<i32>} : memref<8x768xf32, #tpu.memory_space<vmem>>, vector<8x16xf32>,
    %203 = vector.extract_strided_slice %181 {offsets = [0, 7, 0], sizes = [8, 1, 16], strides = [1, 1, 1]} : vector<8x16x16xf32> to vector<8x1x16xf32>
    %204 = vector.shape_cast %203 : vector<8x1x16xf32> to vector<8x16xf32>
    %c0_75 = arith.constant 0 : index
    %c368 = arith.constant 368 : index
    %205 = vector.load %arg20[%c0_75, %c368] : memref<8x768xf32, #tpu.memory_space<vmem>>, vector<8x16xf32>
    tpu.vector_store %arg20[%c0_75, %c368], %204 {strides = array<i32>} : memref<8x768xf32, #tpu.memory_space<vmem>>, vector<8x16xf32>,
    %206 = vector.extract_strided_slice %181 {offsets = [0, 8, 0], sizes = [8, 1, 16], strides = [1, 1, 1]} : vector<8x16x16xf32> to vector<8x1x16xf32>
    %207 = vector.shape_cast %206 : vector<8x1x16xf32> to vector<8x16xf32>
    %c0_76 = arith.constant 0 : index
    %c384 = arith.constant 384 : index
    %208 = vector.load %arg20[%c0_76, %c384] : memref<8x768xf32, #tpu.memory_space<vmem>>, vector<8x16xf32>
    tpu.vector_store %arg20[%c0_76, %c384], %207 {strides = array<i32>} : memref<8x768xf32, #tpu.memory_space<vmem>>, vector<8x16xf32>,
    %209 = vector.extract_strided_slice %181 {offsets = [0, 9, 0], sizes = [8, 1, 16], strides = [1, 1, 1]} : vector<8x16x16xf32> to vector<8x1x16xf32>
    %210 = vector.shape_cast %209 : vector<8x1x16xf32> to vector<8x16xf32>
    %c0_77 = arith.constant 0 : index
    %c400 = arith.constant 400 : index
    %211 = vector.load %arg20[%c0_77, %c400] : memref<8x768xf32, #tpu.memory_space<vmem>>, vector<8x16xf32>
    tpu.vector_store %arg20[%c0_77, %c400], %210 {strides = array<i32>} : memref<8x768xf32, #tpu.memory_space<vmem>>, vector<8x16xf32>,
    %212 = vector.extract_strided_slice %181 {offsets = [0, 10, 0], sizes = [8, 1, 16], strides = [1, 1, 1]} : vector<8x16x16xf32> to vector<8x1x16xf32>
    %213 = vector.shape_cast %212 : vector<8x1x16xf32> to vector<8x16xf32>
    %c0_78 = arith.constant 0 : index
    %c416 = arith.constant 416 : index
    %214 = vector.load %arg20[%c0_78, %c416] : memref<8x768xf32, #tpu.memory_space<vmem>>, vector<8x16xf32>
    tpu.vector_store %arg20[%c0_78, %c416], %213 {strides = array<i32>} : memref<8x768xf32, #tpu.memory_space<vmem>>, vector<8x16xf32>,
    %215 = vector.extract_strided_slice %181 {offsets = [0, 11, 0], sizes = [8, 1, 16], strides = [1, 1, 1]} : vector<8x16x16xf32> to vector<8x1x16xf32>
    %216 = vector.shape_cast %215 : vector<8x1x16xf32> to vector<8x16xf32>
    %c0_79 = arith.constant 0 : index
    %c432 = arith.constant 432 : index
    %217 = vector.load %arg20[%c0_79, %c432] : memref<8x768xf32, #tpu.memory_space<vmem>>, vector<8x16xf32>
    tpu.vector_store %arg20[%c0_79, %c432], %216 {strides = array<i32>} : memref<8x768xf32, #tpu.memory_space<vmem>>, vector<8x16xf32>,
    %218 = vector.extract_strided_slice %181 {offsets = [0, 12, 0], sizes = [8, 1, 16], strides = [1, 1, 1]} : vector<8x16x16xf32> to vector<8x1x16xf32>
    %219 = vector.shape_cast %218 : vector<8x1x16xf32> to vector<8x16xf32>
    %c0_80 = arith.constant 0 : index
    %c448 = arith.constant 448 : index
    %220 = vector.load %arg20[%c0_80, %c448] : memref<8x768xf32, #tpu.memory_space<vmem>>, vector<8x16xf32>
    tpu.vector_store %arg20[%c0_80, %c448], %219 {strides = array<i32>} : memref<8x768xf32, #tpu.memory_space<vmem>>, vector<8x16xf32>,
    %221 = vector.extract_strided_slice %181 {offsets = [0, 13, 0], sizes = [8, 1, 16], strides = [1, 1, 1]} : vector<8x16x16xf32> to vector<8x1x16xf32>
    %222 = vector.shape_cast %221 : vector<8x1x16xf32> to vector<8x16xf32>
    %c0_81 = arith.constant 0 : index
    %c464 = arith.constant 464 : index
    %223 = vector.load %arg20[%c0_81, %c464] : memref<8x768xf32, #tpu.memory_space<vmem>>, vector<8x16xf32>
    tpu.vector_store %arg20[%c0_81, %c464], %222 {strides = array<i32>} : memref<8x768xf32, #tpu.memory_space<vmem>>, vector<8x16xf32>,
    %224 = vector.extract_strided_slice %181 {offsets = [0, 14, 0], sizes = [8, 1, 16], strides = [1, 1, 1]} : vector<8x16x16xf32> to vector<8x1x16xf32>
    %225 = vector.shape_cast %224 : vector<8x1x16xf32> to vector<8x16xf32>
    %c0_82 = arith.constant 0 : index
    %c480 = arith.constant 480 : index
    %226 = vector.load %arg20[%c0_82, %c480] : memref<8x768xf32, #tpu.memory_space<vmem>>, vector<8x16xf32>
    tpu.vector_store %arg20[%c0_82, %c480], %225 {strides = array<i32>} : memref<8x768xf32, #tpu.memory_space<vmem>>, vector<8x16xf32>,
    %227 = vector.extract_strided_slice %181 {offsets = [0, 15, 0], sizes = [8, 1, 16], strides = [1, 1, 1]} : vector<8x16x16xf32> to vector<8x1x16xf32>
    %228 = vector.shape_cast %227 : vector<8x1x16xf32> to vector<8x16xf32>
    %c0_83 = arith.constant 0 : index
    %c496 = arith.constant 496 : index
    %229 = vector.load %arg20[%c0_83, %c496] : memref<8x768xf32, #tpu.memory_space<vmem>>, vector<8x16xf32>
    tpu.vector_store %arg20[%c0_83, %c496], %228 {strides = array<i32>} : memref<8x768xf32, #tpu.memory_space<vmem>>, vector<8x16xf32>,
    %c0_84 = arith.constant 0 : index
    %c0_85 = arith.constant 0 : index
    %230 = vector.load %arg1[%c0_84, %c0_85] : memref<128x48xf32, #tpu.memory_space<vmem>>, vector<128x48xf32>
    %c2_86 = arith.constant 2 : index
    %c0_87 = arith.constant 0 : index
    %c0_88 = arith.constant 0 : index
    %231 = vector.load %arg3[%c2_86, %c0_87, %c0_88] : memref<3x48x80xf32, #tpu.memory_space<vmem>>, vector<1x48x80xf32>
    %232 = vector.shape_cast %231 : vector<1x48x80xf32> to vector<48x80xf32>
    %cst_89 = arith.constant dense<0.000000e+00> : vector<128x80xf32>
    %233 = tpu.matmul %230, %232, %cst_89 {dimension_numbers = #tpu.dot_dimension_numbers<[1], [0], [0], [1], [0, 0, 1, 1], [], []>} : vector<128x48xf32>, vector<48x80xf32>, vector<128x80xf32> -> vector<128x80xf32>
    %c2_90 = arith.constant 2 : index
    %c0_91 = arith.constant 0 : index
    %c0_92 = arith.constant 0 : index
    %234 = vector.load %arg4[%c2_90, %c0_91, %c0_92] : memref<3x1x80xf32, #tpu.memory_space<vmem>>, vector<1x1x80xf32>
    %235 = vector.shape_cast %234 : vector<1x1x80xf32> to vector<1x80xf32>
    %236 = vector.broadcast %235 : vector<1x80xf32> to vector<128x80xf32>
    %237 = arith.addf %233, %236 : vector<128x80xf32>
    %238 = vector.extract_strided_slice %237 {offsets = [0, 48], sizes = [128, 16], strides = [1, 1]} : vector<128x80xf32> to vector<128x16xf32>
    %239 = vector.extract_strided_slice %237 {offsets = [0, 64], sizes = [128, 16], strides = [1, 1]} : vector<128x80xf32> to vector<128x16xf32>
    %cst_93 = arith.constant 0.000000e+00 : f32
    %240 = vector.broadcast %cst_93 : f32 to vector<128x128xf32>
    %241 = vector.extract_strided_slice %237 {offsets = [0, 0], sizes = [128, 16], strides = [1, 1]} : vector<128x80xf32> to vector<128x16xf32>
    "tpu.trace_start"() <{level = 10 : i32, message = "md,nd->mn"}> : () -> ()
    %cst_94 = arith.constant dense<0.000000e+00> : vector<128x128xf32>
    %242 = tpu.matmul %241, %238, %cst_94 {dimension_numbers = #tpu.dot_dimension_numbers<[1], [1], [0], [0], [0, 0, 1, 0], [], []>} : vector<128x16xf32>, vector<128x16xf32>, vector<128x128xf32> -> vector<128x128xf32>
    "tpu.trace_stop"() : () -> ()
    %c0_95 = arith.constant 0 : index
    %c0_96 = arith.constant 0 : index
    %243 = vector.load %arg2[%c0_95, %c0_96] : memref<128x128xf32, #tpu.memory_space<vmem>>, vector<128x128xf32>
    %244 = arith.addf %242, %243 : vector<128x128xf32>
    %cst_97 = arith.constant dense<0xFF800000> : vector<128xf32>
    %245 = vector.multi_reduction <maximumf>, %244, %cst_97 [1] : vector<128x128xf32> to vector<128xf32>
    %246 = vector.shape_cast %245 : vector<128xf32> to vector<128x1xf32>
    %247 = vector.broadcast %246 : vector<128x1xf32> to vector<128x128xf32>
    %248 = arith.subf %244, %247 : vector<128x128xf32>
    %249 = math.exp %248 : vector<128x128xf32>
    %cst_98 = arith.constant dense<0.000000e+00> : vector<128xf32>
    %250 = vector.multi_reduction <add>, %249, %cst_98 [1] : vector<128x128xf32> to vector<128xf32>
    %251 = vector.shape_cast %250 : vector<128xf32> to vector<128x1xf32>
    %252 = tpu.reciprocal %251 : vector<128x1xf32> -> vector<128x1xf32>
    %253 = vector.broadcast %252 : vector<128x1xf32> to vector<128x128xf32>
    %254 = arith.mulf %249, %253 : vector<128x128xf32>
    %c6 = arith.constant 6 : index
    %255 = memref.load %arg0[%c6] : memref<9xf32, #tpu.memory_space<smem>>
    %256 = vector.broadcast %255 : f32 to vector<128x128xf32>
    %257 = arith.mulf %256, %254 : vector<128x128xf32>
    %258 = arith.addf %240, %257 : vector<128x128xf32>
    %259 = vector.extract_strided_slice %237 {offsets = [0, 16], sizes = [128, 16], strides = [1, 1]} : vector<128x80xf32> to vector<128x16xf32>
    "tpu.trace_start"() <{level = 10 : i32, message = "md,nd->mn"}> : () -> ()
    %cst_99 = arith.constant dense<0.000000e+00> : vector<128x128xf32>
    %260 = tpu.matmul %259, %238, %cst_99 {dimension_numbers = #tpu.dot_dimension_numbers<[1], [1], [0], [0], [0, 0, 1, 0], [], []>} : vector<128x16xf32>, vector<128x16xf32>, vector<128x128xf32> -> vector<128x128xf32>
    "tpu.trace_stop"() : () -> ()
    %c0_100 = arith.constant 0 : index
    %c0_101 = arith.constant 0 : index
    %261 = vector.load %arg2[%c0_100, %c0_101] : memref<128x128xf32, #tpu.memory_space<vmem>>, vector<128x128xf32>
    %262 = arith.addf %260, %261 : vector<128x128xf32>
    %cst_102 = arith.constant dense<0xFF800000> : vector<128xf32>
    %263 = vector.multi_reduction <maximumf>, %262, %cst_102 [1] : vector<128x128xf32> to vector<128xf32>
    %264 = vector.shape_cast %263 : vector<128xf32> to vector<128x1xf32>
    %265 = vector.broadcast %264 : vector<128x1xf32> to vector<128x128xf32>
    %266 = arith.subf %262, %265 : vector<128x128xf32>
    %267 = math.exp %266 : vector<128x128xf32>
    %cst_103 = arith.constant dense<0.000000e+00> : vector<128xf32>
    %268 = vector.multi_reduction <add>, %267, %cst_103 [1] : vector<128x128xf32> to vector<128xf32>
    %269 = vector.shape_cast %268 : vector<128xf32> to vector<128x1xf32>
    %270 = tpu.reciprocal %269 : vector<128x1xf32> -> vector<128x1xf32>
    %271 = vector.broadcast %270 : vector<128x1xf32> to vector<128x128xf32>
    %272 = arith.mulf %267, %271 : vector<128x128xf32>
    %c7 = arith.constant 7 : index
    %273 = memref.load %arg0[%c7] : memref<9xf32, #tpu.memory_space<smem>>
    %274 = vector.broadcast %273 : f32 to vector<128x128xf32>
    %275 = arith.mulf %274, %272 : vector<128x128xf32>
    %276 = arith.addf %258, %275 : vector<128x128xf32>
    %277 = vector.extract_strided_slice %237 {offsets = [0, 32], sizes = [128, 16], strides = [1, 1]} : vector<128x80xf32> to vector<128x16xf32>
    "tpu.trace_start"() <{level = 10 : i32, message = "md,nd->mn"}> : () -> ()
    %cst_104 = arith.constant dense<0.000000e+00> : vector<128x128xf32>
    %278 = tpu.matmul %277, %238, %cst_104 {dimension_numbers = #tpu.dot_dimension_numbers<[1], [1], [0], [0], [0, 0, 1, 0], [], []>} : vector<128x16xf32>, vector<128x16xf32>, vector<128x128xf32> -> vector<128x128xf32>
    "tpu.trace_stop"() : () -> ()
    %c0_105 = arith.constant 0 : index
    %c0_106 = arith.constant 0 : index
    %279 = vector.load %arg2[%c0_105, %c0_106] : memref<128x128xf32, #tpu.memory_space<vmem>>, vector<128x128xf32>
    %280 = arith.addf %278, %279 : vector<128x128xf32>
    %cst_107 = arith.constant dense<0xFF800000> : vector<128xf32>
    %281 = vector.multi_reduction <maximumf>, %280, %cst_107 [1] : vector<128x128xf32> to vector<128xf32>
    %282 = vector.shape_cast %281 : vector<128xf32> to vector<128x1xf32>
    %283 = vector.broadcast %282 : vector<128x1xf32> to vector<128x128xf32>
    %284 = arith.subf %280, %283 : vector<128x128xf32>
    %285 = math.exp %284 : vector<128x128xf32>
    %cst_108 = arith.constant dense<0.000000e+00> : vector<128xf32>
    %286 = vector.multi_reduction <add>, %285, %cst_108 [1] : vector<128x128xf32> to vector<128xf32>
    %287 = vector.shape_cast %286 : vector<128xf32> to vector<128x1xf32>
    %288 = tpu.reciprocal %287 : vector<128x1xf32> -> vector<128x1xf32>
    %289 = vector.broadcast %288 : vector<128x1xf32> to vector<128x128xf32>
    %290 = arith.mulf %285, %289 : vector<128x128xf32>
    %c8 = arith.constant 8 : index
    %291 = memref.load %arg0[%c8] : memref<9xf32, #tpu.memory_space<smem>>
    %292 = vector.broadcast %291 : f32 to vector<128x128xf32>
    %293 = arith.mulf %292, %290 : vector<128x128xf32>
    %294 = arith.addf %276, %293 : vector<128x128xf32>
    %cst_109 = arith.constant dense<0.000000e+00> : vector<128x16xf32>
    %295 = tpu.matmul %294, %239, %cst_109 {dimension_numbers = #tpu.dot_dimension_numbers<[1], [0], [0], [1], [0, 0, 1, 1], [], []>} : vector<128x128xf32>, vector<128x16xf32>, vector<128x16xf32> -> vector<128x16xf32>
    %296 = vector.shape_cast %295 : vector<128x16xf32> to vector<8x16x16xf32>
    %297 = vector.extract_strided_slice %296 {offsets = [0, 0, 0], sizes = [8, 1, 16], strides = [1, 1, 1]} : vector<8x16x16xf32> to vector<8x1x16xf32>
    %298 = vector.shape_cast %297 : vector<8x1x16xf32> to vector<8x16xf32>
    %c0_110 = arith.constant 0 : index
    %c512 = arith.constant 512 : index
    %299 = vector.load %arg20[%c0_110, %c512] : memref<8x768xf32, #tpu.memory_space<vmem>>, vector<8x16xf32>
    tpu.vector_store %arg20[%c0_110, %c512], %298 {strides = array<i32>} : memref<8x768xf32, #tpu.memory_space<vmem>>, vector<8x16xf32>,
    %300 = vector.extract_strided_slice %296 {offsets = [0, 1, 0], sizes = [8, 1, 16], strides = [1, 1, 1]} : vector<8x16x16xf32> to vector<8x1x16xf32>
    %301 = vector.shape_cast %300 : vector<8x1x16xf32> to vector<8x16xf32>
    %c0_111 = arith.constant 0 : index
    %c528 = arith.constant 528 : index
    %302 = vector.load %arg20[%c0_111, %c528] : memref<8x768xf32, #tpu.memory_space<vmem>>, vector<8x16xf32>
    tpu.vector_store %arg20[%c0_111, %c528], %301 {strides = array<i32>} : memref<8x768xf32, #tpu.memory_space<vmem>>, vector<8x16xf32>,
    %303 = vector.extract_strided_slice %296 {offsets = [0, 2, 0], sizes = [8, 1, 16], strides = [1, 1, 1]} : vector<8x16x16xf32> to vector<8x1x16xf32>
    %304 = vector.shape_cast %303 : vector<8x1x16xf32> to vector<8x16xf32>
    %c0_112 = arith.constant 0 : index
    %c544 = arith.constant 544 : index
    %305 = vector.load %arg20[%c0_112, %c544] : memref<8x768xf32, #tpu.memory_space<vmem>>, vector<8x16xf32>
    tpu.vector_store %arg20[%c0_112, %c544], %304 {strides = array<i32>} : memref<8x768xf32, #tpu.memory_space<vmem>>, vector<8x16xf32>,
    %306 = vector.extract_strided_slice %296 {offsets = [0, 3, 0], sizes = [8, 1, 16], strides = [1, 1, 1]} : vector<8x16x16xf32> to vector<8x1x16xf32>
    %307 = vector.shape_cast %306 : vector<8x1x16xf32> to vector<8x16xf32>
    %c0_113 = arith.constant 0 : index
    %c560 = arith.constant 560 : index
    %308 = vector.load %arg20[%c0_113, %c560] : memref<8x768xf32, #tpu.memory_space<vmem>>, vector<8x16xf32>
    tpu.vector_store %arg20[%c0_113, %c560], %307 {strides = array<i32>} : memref<8x768xf32, #tpu.memory_space<vmem>>, vector<8x16xf32>,
    %309 = vector.extract_strided_slice %296 {offsets = [0, 4, 0], sizes = [8, 1, 16], strides = [1, 1, 1]} : vector<8x16x16xf32> to vector<8x1x16xf32>
    %310 = vector.shape_cast %309 : vector<8x1x16xf32> to vector<8x16xf32>
    %c0_114 = arith.constant 0 : index
    %c576 = arith.constant 576 : index
    %311 = vector.load %arg20[%c0_114, %c576] : memref<8x768xf32, #tpu.memory_space<vmem>>, vector<8x16xf32>
    tpu.vector_store %arg20[%c0_114, %c576], %310 {strides = array<i32>} : memref<8x768xf32, #tpu.memory_space<vmem>>, vector<8x16xf32>,
    %312 = vector.extract_strided_slice %296 {offsets = [0, 5, 0], sizes = [8, 1, 16], strides = [1, 1, 1]} : vector<8x16x16xf32> to vector<8x1x16xf32>
    %313 = vector.shape_cast %312 : vector<8x1x16xf32> to vector<8x16xf32>
    %c0_115 = arith.constant 0 : index
    %c592 = arith.constant 592 : index
    %314 = vector.load %arg20[%c0_115, %c592] : memref<8x768xf32, #tpu.memory_space<vmem>>, vector<8x16xf32>
    tpu.vector_store %arg20[%c0_115, %c592], %313 {strides = array<i32>} : memref<8x768xf32, #tpu.memory_space<vmem>>, vector<8x16xf32>,
    %315 = vector.extract_strided_slice %296 {offsets = [0, 6, 0], sizes = [8, 1, 16], strides = [1, 1, 1]} : vector<8x16x16xf32> to vector<8x1x16xf32>
    %316 = vector.shape_cast %315 : vector<8x1x16xf32> to vector<8x16xf32>
    %c0_116 = arith.constant 0 : index
    %c608 = arith.constant 608 : index
    %317 = vector.load %arg20[%c0_116, %c608] : memref<8x768xf32, #tpu.memory_space<vmem>>, vector<8x16xf32>
    tpu.vector_store %arg20[%c0_116, %c608], %316 {strides = array<i32>} : memref<8x768xf32, #tpu.memory_space<vmem>>, vector<8x16xf32>,
    %318 = vector.extract_strided_slice %296 {offsets = [0, 7, 0], sizes = [8, 1, 16], strides = [1, 1, 1]} : vector<8x16x16xf32> to vector<8x1x16xf32>
    %319 = vector.shape_cast %318 : vector<8x1x16xf32> to vector<8x16xf32>
    %c0_117 = arith.constant 0 : index
    %c624 = arith.constant 624 : index
    %320 = vector.load %arg20[%c0_117, %c624] : memref<8x768xf32, #tpu.memory_space<vmem>>, vector<8x16xf32>
    tpu.vector_store %arg20[%c0_117, %c624], %319 {strides = array<i32>} : memref<8x768xf32, #tpu.memory_space<vmem>>, vector<8x16xf32>,
    %321 = vector.extract_strided_slice %296 {offsets = [0, 8, 0], sizes = [8, 1, 16], strides = [1, 1, 1]} : vector<8x16x16xf32> to vector<8x1x16xf32>
    %322 = vector.shape_cast %321 : vector<8x1x16xf32> to vector<8x16xf32>
    %c0_118 = arith.constant 0 : index
    %c640 = arith.constant 640 : index
    %323 = vector.load %arg20[%c0_118, %c640] : memref<8x768xf32, #tpu.memory_space<vmem>>, vector<8x16xf32>
    tpu.vector_store %arg20[%c0_118, %c640], %322 {strides = array<i32>} : memref<8x768xf32, #tpu.memory_space<vmem>>, vector<8x16xf32>,
    %324 = vector.extract_strided_slice %296 {offsets = [0, 9, 0], sizes = [8, 1, 16], strides = [1, 1, 1]} : vector<8x16x16xf32> to vector<8x1x16xf32>
    %325 = vector.shape_cast %324 : vector<8x1x16xf32> to vector<8x16xf32>
    %c0_119 = arith.constant 0 : index
    %c656 = arith.constant 656 : index
    %326 = vector.load %arg20[%c0_119, %c656] : memref<8x768xf32, #tpu.memory_space<vmem>>, vector<8x16xf32>
    tpu.vector_store %arg20[%c0_119, %c656], %325 {strides = array<i32>} : memref<8x768xf32, #tpu.memory_space<vmem>>, vector<8x16xf32>,
    %327 = vector.extract_strided_slice %296 {offsets = [0, 10, 0], sizes = [8, 1, 16], strides = [1, 1, 1]} : vector<8x16x16xf32> to vector<8x1x16xf32>
    %328 = vector.shape_cast %327 : vector<8x1x16xf32> to vector<8x16xf32>
    %c0_120 = arith.constant 0 : index
    %c672 = arith.constant 672 : index
    %329 = vector.load %arg20[%c0_120, %c672] : memref<8x768xf32, #tpu.memory_space<vmem>>, vector<8x16xf32>
    tpu.vector_store %arg20[%c0_120, %c672], %328 {strides = array<i32>} : memref<8x768xf32, #tpu.memory_space<vmem>>, vector<8x16xf32>,
    %330 = vector.extract_strided_slice %296 {offsets = [0, 11, 0], sizes = [8, 1, 16], strides = [1, 1, 1]} : vector<8x16x16xf32> to vector<8x1x16xf32>
    %331 = vector.shape_cast %330 : vector<8x1x16xf32> to vector<8x16xf32>
    %c0_121 = arith.constant 0 : index
    %c688 = arith.constant 688 : index
    %332 = vector.load %arg20[%c0_121, %c688] : memref<8x768xf32, #tpu.memory_space<vmem>>, vector<8x16xf32>
    tpu.vector_store %arg20[%c0_121, %c688], %331 {strides = array<i32>} : memref<8x768xf32, #tpu.memory_space<vmem>>, vector<8x16xf32>,
    %333 = vector.extract_strided_slice %296 {offsets = [0, 12, 0], sizes = [8, 1, 16], strides = [1, 1, 1]} : vector<8x16x16xf32> to vector<8x1x16xf32>
    %334 = vector.shape_cast %333 : vector<8x1x16xf32> to vector<8x16xf32>
    %c0_122 = arith.constant 0 : index
    %c704 = arith.constant 704 : index
    %335 = vector.load %arg20[%c0_122, %c704] : memref<8x768xf32, #tpu.memory_space<vmem>>, vector<8x16xf32>
    tpu.vector_store %arg20[%c0_122, %c704], %334 {strides = array<i32>} : memref<8x768xf32, #tpu.memory_space<vmem>>, vector<8x16xf32>,
    %336 = vector.extract_strided_slice %296 {offsets = [0, 13, 0], sizes = [8, 1, 16], strides = [1, 1, 1]} : vector<8x16x16xf32> to vector<8x1x16xf32>
    %337 = vector.shape_cast %336 : vector<8x1x16xf32> to vector<8x16xf32>
    %c0_123 = arith.constant 0 : index
    %c720 = arith.constant 720 : index
    %338 = vector.load %arg20[%c0_123, %c720] : memref<8x768xf32, #tpu.memory_space<vmem>>, vector<8x16xf32>
    tpu.vector_store %arg20[%c0_123, %c720], %337 {strides = array<i32>} : memref<8x768xf32, #tpu.memory_space<vmem>>, vector<8x16xf32>,
    %339 = vector.extract_strided_slice %296 {offsets = [0, 14, 0], sizes = [8, 1, 16], strides = [1, 1, 1]} : vector<8x16x16xf32> to vector<8x1x16xf32>
    %340 = vector.shape_cast %339 : vector<8x1x16xf32> to vector<8x16xf32>
    %c0_124 = arith.constant 0 : index
    %c736 = arith.constant 736 : index
    %341 = vector.load %arg20[%c0_124, %c736] : memref<8x768xf32, #tpu.memory_space<vmem>>, vector<8x16xf32>
    tpu.vector_store %arg20[%c0_124, %c736], %340 {strides = array<i32>} : memref<8x768xf32, #tpu.memory_space<vmem>>, vector<8x16xf32>,
    %342 = vector.extract_strided_slice %296 {offsets = [0, 15, 0], sizes = [8, 1, 16], strides = [1, 1, 1]} : vector<8x16x16xf32> to vector<8x1x16xf32>
    %343 = vector.shape_cast %342 : vector<8x1x16xf32> to vector<8x16xf32>
    %c0_125 = arith.constant 0 : index
    %c752 = arith.constant 752 : index
    %344 = vector.load %arg20[%c0_125, %c752] : memref<8x768xf32, #tpu.memory_space<vmem>>, vector<8x16xf32>
    tpu.vector_store %arg20[%c0_125, %c752], %343 {strides = array<i32>} : memref<8x768xf32, #tpu.memory_space<vmem>>, vector<8x16xf32>,
    %c0_126 = arith.constant 0 : index
    %c0_127 = arith.constant 0 : index
    %345 = vector.load %arg20[%c0_126, %c0_127] : memref<8x768xf32, #tpu.memory_space<vmem>>, vector<8x768xf32>
    %346 = arith.truncf %345 : vector<8x768xf32> to vector<8x768xbf16>
    %c0_128 = arith.constant 0 : index
    %c0_129 = arith.constant 0 : index
    %347 = vector.load %arg5[%c0_128, %c0_129] : memref<768x1024xbf16, #tpu.memory_space<vmem>>, vector<768x1024xbf16>
    %cst_130 = arith.constant dense<0.000000e+00> : vector<8x1024xf32>
    %348 = tpu.matmul %346, %347, %cst_130 {dimension_numbers = #tpu.dot_dimension_numbers<[1], [0], [0], [1], [0, 0, 1, 1], [], []>} : vector<8x768xbf16>, vector<768x1024xbf16>, vector<8x1024xf32> -> vector<8x1024xf32>
    %c0_131 = arith.constant 0 : index
    %c0_132 = arith.constant 0 : index
    %349 = vector.load %arg6[%c0_131, %c0_132] : memref<1x1024xf32, #tpu.memory_space<vmem>>, vector<1x1024xf32>
    %350 = vector.broadcast %349 : vector<1x1024xf32> to vector<8x1024xf32>
    %351 = arith.addf %348, %350 : vector<8x1024xf32>
    %c0_133 = arith.constant 0 : index
    %c0_134 = arith.constant 0 : index
    %352 = vector.load %arg7[%c0_133, %c0_134] : memref<1x1024xf32, #tpu.memory_space<vmem>>, vector<1x1024xf32>
    %353 = vector.broadcast %352 : vector<1x1024xf32> to vector<8x1024xf32>
    %354 = arith.mulf %351, %353 : vector<8x1024xf32>
    %c0_135 = arith.constant 0 : index
    %c0_136 = arith.constant 0 : index
    %355 = vector.load %arg8[%c0_135, %c0_136] : memref<1x1024xf32, #tpu.memory_space<vmem>>, vector<1x1024xf32>
    %356 = vector.broadcast %355 : vector<1x1024xf32> to vector<8x1024xf32>
    %357 = arith.addf %354, %356 : vector<8x1024xf32>
    %cst_137 = arith.constant 0.000000e+00 : f32
    %358 = vector.broadcast %cst_137 : f32 to vector<8x1024xf32>
    %359 = arith.cmpf oge, %357, %358 : vector<8x1024xf32>
    %cst_138 = arith.constant 2.000000e-01 : f32
    %360 = vector.broadcast %cst_138 : f32 to vector<8x1024xf32>
    %361 = arith.mulf %360, %357 : vector<8x1024xf32>
    %362 = arith.select %359, %357, %361 : vector<8x1024xi1>, vector<8x1024xf32>
    %363 = arith.truncf %362 : vector<8x1024xf32> to vector<8x1024xbf16>
    %c0_139 = arith.constant 0 : index
    %c0_140 = arith.constant 0 : index
    %364 = vector.load %arg9[%c0_139, %c0_140] : memref<1024x512xbf16, #tpu.memory_space<vmem>>, vector<1024x512xbf16>
    %cst_141 = arith.constant dense<0.000000e+00> : vector<8x512xf32>
    %365 = tpu.matmul %363, %364, %cst_141 {dimension_numbers = #tpu.dot_dimension_numbers<[1], [0], [0], [1], [0, 0, 1, 1], [], []>} : vector<8x1024xbf16>, vector<1024x512xbf16>, vector<8x512xf32> -> vector<8x512xf32>
    %c0_142 = arith.constant 0 : index
    %c0_143 = arith.constant 0 : index
    %366 = vector.load %arg10[%c0_142, %c0_143] : memref<1x512xf32, #tpu.memory_space<vmem>>, vector<1x512xf32>
    %367 = vector.broadcast %366 : vector<1x512xf32> to vector<8x512xf32>
    %368 = arith.addf %365, %367 : vector<8x512xf32>
    %c0_144 = arith.constant 0 : index
    %c0_145 = arith.constant 0 : index
    %369 = vector.load %arg11[%c0_144, %c0_145] : memref<1x512xf32, #tpu.memory_space<vmem>>, vector<1x512xf32>
    %370 = vector.broadcast %369 : vector<1x512xf32> to vector<8x512xf32>
    %371 = arith.mulf %368, %370 : vector<8x512xf32>
    %c0_146 = arith.constant 0 : index
    %c0_147 = arith.constant 0 : index
    %372 = vector.load %arg12[%c0_146, %c0_147] : memref<1x512xf32, #tpu.memory_space<vmem>>, vector<1x512xf32>
    %373 = vector.broadcast %372 : vector<1x512xf32> to vector<8x512xf32>
    %374 = arith.addf %371, %373 : vector<8x512xf32>
    %cst_148 = arith.constant 0.000000e+00 : f32
    %375 = vector.broadcast %cst_148 : f32 to vector<8x512xf32>
    %376 = arith.cmpf oge, %374, %375 : vector<8x512xf32>
    %cst_149 = arith.constant 2.000000e-01 : f32
    %377 = vector.broadcast %cst_149 : f32 to vector<8x512xf32>
    %378 = arith.mulf %377, %374 : vector<8x512xf32>
    %379 = arith.select %376, %374, %378 : vector<8x512xi1>, vector<8x512xf32>
    %380 = arith.truncf %379 : vector<8x512xf32> to vector<8x512xbf16>
    %c0_150 = arith.constant 0 : index
    %c0_151 = arith.constant 0 : index
    %381 = vector.load %arg13[%c0_150, %c0_151] : memref<512x128xbf16, #tpu.memory_space<vmem>>, vector<512x128xbf16>
    %cst_152 = arith.constant dense<0.000000e+00> : vector<8x128xf32>
    %382 = tpu.matmul %380, %381, %cst_152 {dimension_numbers = #tpu.dot_dimension_numbers<[1], [0], [0], [1], [0, 0, 1, 1], [], []>} : vector<8x512xbf16>, vector<512x128xbf16>, vector<8x128xf32> -> vector<8x128xf32>
    %c0_153 = arith.constant 0 : index
    %c0_154 = arith.constant 0 : index
    %383 = vector.load %arg14[%c0_153, %c0_154] : memref<1x128xf32, #tpu.memory_space<vmem>>, vector<1x128xf32>
    %384 = vector.broadcast %383 : vector<1x128xf32> to vector<8x128xf32>
    %385 = arith.addf %382, %384 : vector<8x128xf32>
    %c0_155 = arith.constant 0 : index
    %c0_156 = arith.constant 0 : index
    %386 = vector.load %arg15[%c0_155, %c0_156] : memref<1x128xf32, #tpu.memory_space<vmem>>, vector<1x128xf32>
    %387 = vector.broadcast %386 : vector<1x128xf32> to vector<8x128xf32>
    %388 = arith.mulf %385, %387 : vector<8x128xf32>
    %c0_157 = arith.constant 0 : index
    %c0_158 = arith.constant 0 : index
    %389 = vector.load %arg16[%c0_157, %c0_158] : memref<1x128xf32, #tpu.memory_space<vmem>>, vector<1x128xf32>
    %390 = vector.broadcast %389 : vector<1x128xf32> to vector<8x128xf32>
    %391 = arith.addf %388, %390 : vector<8x128xf32>
    %cst_159 = arith.constant 0.000000e+00 : f32
    %392 = vector.broadcast %cst_159 : f32 to vector<8x128xf32>
    %393 = arith.cmpf oge, %391, %392 : vector<8x128xf32>
    %cst_160 = arith.constant 2.000000e-01 : f32
    %394 = vector.broadcast %cst_160 : f32 to vector<8x128xf32>
    %395 = arith.mulf %394, %391 : vector<8x128xf32>
    %396 = arith.select %393, %391, %395 : vector<8x128xi1>, vector<8x128xf32>
    %397 = arith.truncf %396 : vector<8x128xf32> to vector<8x128xbf16>
    %c0_161 = arith.constant 0 : index
    %c0_162 = arith.constant 0 : index
    %398 = vector.load %arg17[%c0_161, %c0_162] : memref<128x2xbf16, #tpu.memory_space<vmem>>, vector<128x2xbf16>
    %cst_163 = arith.constant dense<0.000000e+00> : vector<8x2xf32>
    %399 = tpu.matmul %397, %398, %cst_163 {dimension_numbers = #tpu.dot_dimension_numbers<[1], [0], [0], [1], [0, 0, 1, 1], [], []>} : vector<8x128xbf16>, vector<128x2xbf16>, vector<8x2xf32> -> vector<8x2xf32>
    %c0_164 = arith.constant 0 : index
    %c0_165 = arith.constant 0 : index
    %400 = vector.load %arg18[%c0_164, %c0_165] : memref<1x2xf32, #tpu.memory_space<vmem>>, vector<1x2xf32>
    %401 = vector.broadcast %400 : vector<1x2xf32> to vector<8x2xf32>
    %402 = arith.addf %399, %401 : vector<8x2xf32>
    %c0_166 = arith.constant 0 : index
    %c0_167 = arith.constant 0 : index
    %403 = vector.load %arg19[%c0_166, %c0_167] : memref<8x2xf32, #tpu.memory_space<vmem>>, vector<8x2xf32>
    tpu.vector_store %arg19[%c0_166, %c0_167], %402 {strides = array<i32>} : memref<8x2xf32, #tpu.memory_space<vmem>>, vector<8x2xf32>,
    return
  }
}

</mosaic_0001>

<llo_original>
// kernel: att_my_multiquery_video_forward.1
$region0: #{att_my_multiquery_video_forward.1}
  #allocation0 [shape = 'u32[]', space=smem, size = 0x4, offset = 0x4, fixed_abs, tag = 'smem constant byte address 0x4 - core index']
  #allocation1 [shape = 'u32[144,128]{1,0:T(1,128)}', space=vmem, size = 0x12000, scoped, tag = 'internal scratch']
  #allocation2 [shape = 'f32[8,768]{1,0:T(8,128)}', space=vmem, size = 0x6000, scoped, tag = 'scratch operand']
  %s0 = inlined_call_operand.vmem [shape: f32[9], index: 0, kind: input, shape index: {}]
  %s1 = inlined_call_operand.vmem [shape: f32[128,48], index: 1, kind: input, shape index: {}]
  %s2 = inlined_call_operand.vmem [shape: f32[128,128], index: 2, kind: input, shape index: {}]
  %s3 = inlined_call_operand.vmem [shape: f32[3,48,80], index: 3, kind: input, shape index: {}]
  %s4 = inlined_call_operand.vmem [shape: f32[3,1,80], index: 4, kind: input, shape index: {}]
  %s5 = inlined_call_operand.hbm [shape: bf16[768,1024], index: 5, kind: input, shape index: {}]
  %s6 = inlined_call_operand.hbm [shape: f32[1,1024], index: 6, kind: input, shape index: {}]
  %s7 = inlined_call_operand.hbm [shape: f32[1,1024], index: 7, kind: input, shape index: {}]
  %s8 = inlined_call_operand.hbm [shape: f32[1,1024], index: 8, kind: input, shape index: {}]
  %s9 = inlined_call_operand.vmem [shape: bf16[1024,512], index: 9, kind: input, shape index: {}]
  %s10 = inlined_call_operand.hbm [shape: f32[1,512], index: 10, kind: input, shape index: {}]
  %s11 = inlined_call_operand.hbm [shape: f32[1,512], index: 11, kind: input, shape index: {}]
  %s12 = inlined_call_operand.hbm [shape: f32[1,512], index: 12, kind: input, shape index: {}]
  %s13 = inlined_call_operand.hbm [shape: bf16[512,128], index: 13, kind: input, shape index: {}]
  %s14 = inlined_call_operand.hbm [shape: f32[1,128], index: 14, kind: input, shape index: {}]
  %s15 = inlined_call_operand.hbm [shape: f32[1,128], index: 15, kind: input, shape index: {}]
  %s16 = inlined_call_operand.hbm [shape: f32[1,128], index: 16, kind: input, shape index: {}]
  %s17 = inlined_call_operand.vmem [shape: bf16[128,2], index: 17, kind: input, shape index: {}]
  %s18 = inlined_call_operand.hbm [shape: f32[1,2], index: 18, kind: input, shape index: {}]
  %s19 = inlined_call_operand.vmem [shape: f32[8,2], index: 19, kind: output, shape index: {}]
  %s20 = sld [smem:[#allocation0]]
  $region138: #{att_my_multiquery_video_forward.1} parent=0
    _
  %s22 = ssub.s32 1, %s20
  %s23 = scalar_select 0, %s22, %s20
  $region1: #{att_my_multiquery_video_forward.1} parent=0
    #allocation3 [shape = 'u8[512]{0}', space=smem, size = 0x200, scoped, tag = 'input window, operand 0, single buffered']
    #allocation4 [shape = 's32[1]{0}', space=sflag, size = 0x4, scoped, tag = 'scoped memory for att_my_multiquery_video_forward.1']
    #allocation5 [shape = 's32[1]{0}', space=sflag, size = 0x4, scoped, tag = 'scoped memory for att_my_multiquery_video_forward.1']
    #allocation6 [shape = 'u8[1572864]{0}', space=vmem, size = 0x180000, scoped, tag = 'input window, operand 5, single buffered']
    #allocation7 [shape = 'u8[4096]{0}', space=vmem, size = 0x1000, scoped, tag = 'input window, operand 6, single buffered']
    #allocation8 [shape = 's32[1]{0}', space=sflag, size = 0x4, scoped, tag = 'scoped memory for att_my_multiquery_video_forward.1']
    #allocation9 [shape = 'u8[4096]{0}', space=vmem, size = 0x1000, scoped, tag = 'input window, operand 7, single buffered']
    #allocation10 [shape = 'u8[4096]{0}', space=vmem, size = 0x1000, scoped, tag = 'input window, operand 8, single buffered']
    #allocation11 [shape = 's32[1]{0}', space=sflag, size = 0x4, scoped, tag = 'scoped memory for att_my_multiquery_video_forward.1']
    #allocation12 [shape = 'u8[2048]{0}', space=vmem, size = 0x800, scoped, tag = 'input window, operand 10, single buffered']
    #allocation13 [shape = 'u8[2048]{0}', space=vmem, size = 0x800, scoped, tag = 'input window, operand 11, single buffered']
    #allocation14 [shape = 's32[1]{0}', space=sflag, size = 0x4, scoped, tag = 'scoped memory for att_my_multiquery_video_forward.1']
    #allocation15 [shape = 'u8[2048]{0}', space=vmem, size = 0x800, scoped, tag = 'input window, operand 12, single buffered']
    #allocation16 [shape = 'u8[131072]{0}', space=vmem, size = 0x20000, scoped, tag = 'input window, operand 13, single buffered']
    #allocation17 [shape = 's32[1]{0}', space=sflag, size = 0x4, scoped, tag = 'scoped memory for att_my_multiquery_video_forward.1']
    #allocation18 [shape = 'u8[512]{0}', space=vmem, size = 0x400, scoped, tag = 'input window, operand 14, single buffered']
    #allocation19 [shape = 'u8[512]{0}', space=vmem, size = 0x400, scoped, tag = 'input window, operand 15, single buffered']
    #allocation20 [shape = 's32[1]{0}', space=sflag, size = 0x4, scoped, tag = 'scoped memory for att_my_multiquery_video_forward.1']
    #allocation21 [shape = 'u8[512]{0}', space=vmem, size = 0x400, scoped, tag = 'input window, operand 16, single buffered']
    #allocation22 [shape = 'u8[512]{0}', space=vmem, size = 0x400, scoped, tag = 'input window, operand 18, single buffered']
    #allocation23 [shape = 's32[1]{0}', space=sflag, size = 0x4, scoped, tag = 'scoped memory for att_my_multiquery_video_forward.1']
    %24 = vsyncpa [#allocation5], 0
    %25 = vsyncpa [#allocation4], 0
    %26 = vsyncpa [#allocation8], 0
    %27 = vsyncpa [#allocation11], 0
    %28 = vsyncpa [#allocation14], 0
    %29 = vsyncpa [#allocation17], 0
    %30 = vsyncpa [#allocation20], 0
    %31 = vsyncpa [#allocation23], 0
    // Predicated region
    $region2: #{att_my_multiquery_video_forward.1} parent=1 // pred_check
      _
    $region3: #{att_my_multiquery_video_forward.1} parent=1 // pred_check_branch
      %33 = sbr.rel (0) target = $region5
    $region4: #{att_my_multiquery_video_forward.1} parent=1 // pred_region
      %s35 = ssub.s32 16, 16
      %36 = vsyncadd [#allocation5], %s35
      %s38 = sshll.u32 %s0, 4
      %s39 = int_to_ptr.vmem [resolvable:$true] %s38
      %41 = dma.vmem_to_smem %s39, 16, [#allocation3], [#allocation5]
    $region5: #{att_my_multiquery_video_forward.1} parent=1 // pred_fallthru
      _
    // Predicated region
    $region6: #{att_my_multiquery_video_forward.1} parent=1 // pred_check
      _
    $region7: #{att_my_multiquery_video_forward.1} parent=1 // pred_check_branch
      %43 = sbr.rel (0) target = $region9
    $region8: #{att_my_multiquery_video_forward.1} parent=1 // pred_region
      _
    $region9: #{att_my_multiquery_video_forward.1} parent=1 // pred_fallthru
      _
    // Predicated region
    $region10: #{att_my_multiquery_video_forward.1} parent=1 // pred_check
      _
    $region11: #{att_my_multiquery_video_forward.1} parent=1 // pred_check_branch
      %45 = sbr.rel (0) target = $region13
    $region12: #{att_my_multiquery_video_forward.1} parent=1 // pred_region
      _
    $region13: #{att_my_multiquery_video_forward.1} parent=1 // pred_fallthru
      _
    // Predicated region
    $region14: #{att_my_multiquery_video_forward.1} parent=1 // pred_check
      _
    $region15: #{att_my_multiquery_video_forward.1} parent=1 // pred_check_branch
      %47 = sbr.rel (0) target = $region17
    $region16: #{att_my_multiquery_video_forward.1} parent=1 // pred_region
      _
    $region17: #{att_my_multiquery_video_forward.1} parent=1 // pred_fallthru
      _
    // Predicated region
    $region18: #{att_my_multiquery_video_forward.1} parent=1 // pred_check
      _
    $region19: #{att_my_multiquery_video_forward.1} parent=1 // pred_check_branch
      %49 = sbr.rel (0) target = $region21
    $region20: #{att_my_multiquery_video_forward.1} parent=1 // pred_region
      _
    $region21: #{att_my_multiquery_video_forward.1} parent=1 // pred_fallthru
      _
    // Predicated region
    $region22: #{att_my_multiquery_video_forward.1} parent=1 // pred_check
      _
    $region23: #{att_my_multiquery_video_forward.1} parent=1 // pred_check_branch
      %51 = sbr.rel (0) target = $region25
    $region24: #{att_my_multiquery_video_forward.1} parent=1 // pred_region
      %s53 = ssub.s32 49152, 49152
      %54 = vsyncadd [#allocation4], %s53
      %s55 = sshll.u32 [#allocation6], 4
      %s56 = int_to_ptr.vmem [resolvable:$true] %s55
      %61 = dma.hbm_to_vmem [thread:$0]  %s5, 49152, %s56, [#allocation4], 512, 512, 32
    $region25: #{att_my_multiquery_video_forward.1} parent=1 // pred_fallthru
      _
    // Predicated region
    $region26: #{att_my_multiquery_video_forward.1} parent=1 // pred_check
      _
    $region27: #{att_my_multiquery_video_forward.1} parent=1 // pred_check_branch
      %63 = sbr.rel (0) target = $region29
    $region28: #{att_my_multiquery_video_forward.1} parent=1 // pred_region
      %s65 = ssub.s32 128, 128
      %66 = vsyncadd [#allocation8], %s65
      %s68 = sshll.u32 [#allocation7], 4
      %s69 = int_to_ptr.vmem [resolvable:$true] %s68
      %71 = dma.hbm_to_vmem [thread:$0]  %s6, 128, %s69, [#allocation8]
    $region29: #{att_my_multiquery_video_forward.1} parent=1 // pred_fallthru
      _
    // Predicated region
    $region30: #{att_my_multiquery_video_forward.1} parent=1 // pred_check
      _
    $region31: #{att_my_multiquery_video_forward.1} parent=1 // pred_check_branch
      %73 = sbr.rel (0) target = $region33
    $region32: #{att_my_multiquery_video_forward.1} parent=1 // pred_region
      %s75 = ssub.s32 128, 128
      %76 = vsyncadd [#allocation8], %s75
      %s78 = sshll.u32 [#allocation9], 4
      %s79 = int_to_ptr.vmem [resolvable:$true] %s78
      %81 = dma.hbm_to_vmem [thread:$0]  %s7, 128, %s79, [#allocation8]
    $region33: #{att_my_multiquery_video_forward.1} parent=1 // pred_fallthru
      _
    // Predicated region
    $region34: #{att_my_multiquery_video_forward.1} parent=1 // pred_check
      _
    $region35: #{att_my_multiquery_video_forward.1} parent=1 // pred_check_branch
      %83 = sbr.rel (0) target = $region37
    $region36: #{att_my_multiquery_video_forward.1} parent=1 // pred_region
      %s85 = ssub.s32 128, 128
      %86 = vsyncadd [#allocation11], %s85
      %s88 = sshll.u32 [#allocation10], 4
      %s89 = int_to_ptr.vmem [resolvable:$true] %s88
      %91 = dma.hbm_to_vmem [thread:$0]  %s8, 128, %s89, [#allocation11]
    $region37: #{att_my_multiquery_video_forward.1} parent=1 // pred_fallthru
      _
    // Predicated region
    $region38: #{att_my_multiquery_video_forward.1} parent=1 // pred_check
      _
    $region39: #{att_my_multiquery_video_forward.1} parent=1 // pred_check_branch
      %93 = sbr.rel (0) target = $region41
    $region40: #{att_my_multiquery_video_forward.1} parent=1 // pred_region
      _
    $region41: #{att_my_multiquery_video_forward.1} parent=1 // pred_fallthru
      _
    // Predicated region
    $region42: #{att_my_multiquery_video_forward.1} parent=1 // pred_check
      _
    $region43: #{att_my_multiquery_video_forward.1} parent=1 // pred_check_branch
      %95 = sbr.rel (0) target = $region45
    $region44: #{att_my_multiquery_video_forward.1} parent=1 // pred_region
      %s97 = ssub.s32 64, 64
      %98 = vsyncadd [#allocation11], %s97
      %s100 = sshll.u32 [#allocation12], 4
      %s101 = int_to_ptr.vmem [resolvable:$true] %s100
      %103 = dma.hbm_to_vmem [thread:$0]  %s10, 64, %s101, [#allocation11]
    $region45: #{att_my_multiquery_video_forward.1} parent=1 // pred_fallthru
      _
    // Predicated region
    $region46: #{att_my_multiquery_video_forward.1} parent=1 // pred_check
      _
    $region47: #{att_my_multiquery_video_forward.1} parent=1 // pred_check_branch
      %105 = sbr.rel (0) target = $region49
    $region48: #{att_my_multiquery_video_forward.1} parent=1 // pred_region
      %s107 = ssub.s32 64, 64
      %108 = vsyncadd [#allocation14], %s107
      %s110 = sshll.u32 [#allocation13], 4
      %s111 = int_to_ptr.vmem [resolvable:$true] %s110
      %113 = dma.hbm_to_vmem [thread:$0]  %s11, 64, %s111, [#allocation14]
    $region49: #{att_my_multiquery_video_forward.1} parent=1 // pred_fallthru
      _
    // Predicated region
    $region50: #{att_my_multiquery_video_forward.1} parent=1 // pred_check
      _
    $region51: #{att_my_multiquery_video_forward.1} parent=1 // pred_check_branch
      %115 = sbr.rel (0) target = $region53
    $region52: #{att_my_multiquery_video_forward.1} parent=1 // pred_region
      %s117 = ssub.s32 64, 64
      %118 = vsyncadd [#allocation14], %s117
      %s120 = sshll.u32 [#allocation15], 4
      %s121 = int_to_ptr.vmem [resolvable:$true] %s120
      %123 = dma.hbm_to_vmem [thread:$0]  %s12, 64, %s121, [#allocation14]
    $region53: #{att_my_multiquery_video_forward.1} parent=1 // pred_fallthru
      _
    // Predicated region
    $region54: #{att_my_multiquery_video_forward.1} parent=1 // pred_check
      _
    $region55: #{att_my_multiquery_video_forward.1} parent=1 // pred_check_branch
      %125 = sbr.rel (0) target = $region57
    $region56: #{att_my_multiquery_video_forward.1} parent=1 // pred_region
      %s127 = ssub.s32 4096, 4096
      %128 = vsyncadd [#allocation17], %s127
      %s129 = sshll.u32 [#allocation16], 4
      %s130 = int_to_ptr.vmem [resolvable:$true] %s129
      %135 = dma.hbm_to_vmem [thread:$0]  %s13, 4096, %s130, [#allocation17], 64, 64, 4
    $region57: #{att_my_multiquery_video_forward.1} parent=1 // pred_fallthru
      _
    // Predicated region
    $region58: #{att_my_multiquery_video_forward.1} parent=1 // pred_check
      _
    $region59: #{att_my_multiquery_video_forward.1} parent=1 // pred_check_branch
      %137 = sbr.rel (0) target = $region61
    $region60: #{att_my_multiquery_video_forward.1} parent=1 // pred_region
      %s139 = ssub.s32 16, 16
      %140 = vsyncadd [#allocation17], %s139
      %s142 = sshll.u32 [#allocation18], 4
      %s143 = int_to_ptr.vmem [resolvable:$true] %s142
      %145 = dma.hbm_to_vmem [thread:$0]  %s14, 16, %s143, [#allocation17]
    $region61: #{att_my_multiquery_video_forward.1} parent=1 // pred_fallthru
      _
    // Predicated region
    $region62: #{att_my_multiquery_video_forward.1} parent=1 // pred_check
      _
    $region63: #{att_my_multiquery_video_forward.1} parent=1 // pred_check_branch
      %147 = sbr.rel (0) target = $region65
    $region64: #{att_my_multiquery_video_forward.1} parent=1 // pred_region
      %s149 = ssub.s32 16, 16
      %150 = vsyncadd [#allocation20], %s149
      %s152 = sshll.u32 [#allocation19], 4
      %s153 = int_to_ptr.vmem [resolvable:$true] %s152
      %155 = dma.hbm_to_vmem [thread:$0]  %s15, 16, %s153, [#allocation20]
    $region65: #{att_my_multiquery_video_forward.1} parent=1 // pred_fallthru
      _
    // Predicated region
    $region66: #{att_my_multiquery_video_forward.1} parent=1 // pred_check
      _
    $region67: #{att_my_multiquery_video_forward.1} parent=1 // pred_check_branch
      %157 = sbr.rel (0) target = $region69
    $region68: #{att_my_multiquery_video_forward.1} parent=1 // pred_region
      %s159 = ssub.s32 16, 16
      %160 = vsyncadd [#allocation20], %s159
      %s162 = sshll.u32 [#allocation21], 4
      %s163 = int_to_ptr.vmem [resolvable:$true] %s162
      %165 = dma.hbm_to_vmem [thread:$0]  %s16, 16, %s163, [#allocation20]
    $region69: #{att_my_multiquery_video_forward.1} parent=1 // pred_fallthru
      _
    // Predicated region
    $region70: #{att_my_multiquery_video_forward.1} parent=1 // pred_check
      _
    $region71: #{att_my_multiquery_video_forward.1} parent=1 // pred_check_branch
      %167 = sbr.rel (0) target = $region73
    $region72: #{att_my_multiquery_video_forward.1} parent=1 // pred_region
      _
    $region73: #{att_my_multiquery_video_forward.1} parent=1 // pred_fallthru
      _
    // Predicated region
    $region74: #{att_my_multiquery_video_forward.1} parent=1 // pred_check
      _
    $region75: #{att_my_multiquery_video_forward.1} parent=1 // pred_check_branch
      %169 = sbr.rel (0) target = $region77
    $region76: #{att_my_multiquery_video_forward.1} parent=1 // pred_region
      %s171 = ssub.s32 16, 16
      %172 = vsyncadd [#allocation23], %s171
      %s174 = sshll.u32 [#allocation22], 4
      %s175 = int_to_ptr.vmem [resolvable:$true] %s174
      %177 = dma.hbm_to_vmem [thread:$0]  %s18, 16, %s175, [#allocation23]
    $region77: #{att_my_multiquery_video_forward.1} parent=1 // pred_fallthru
      _
    // Predicated region
    $region78: #{att_my_multiquery_video_forward.1} parent=1 // pred_check
      _
    $region79: #{att_my_multiquery_video_forward.1} parent=1 // pred_check_branch
      %179 = sbr.rel (0) target = $region81
    $region80: #{att_my_multiquery_video_forward.1} parent=1 // pred_region
      %180 = dma.done [#allocation5], 16
    $region81: #{att_my_multiquery_video_forward.1} parent=1 // pred_fallthru
      _
    // Predicated region
    $region82: #{att_my_multiquery_video_forward.1} parent=1 // pred_check
      _
    $region83: #{att_my_multiquery_video_forward.1} parent=1 // pred_check_branch
      %182 = sbr.rel (0) target = $region85
    $region84: #{att_my_multiquery_video_forward.1} parent=1 // pred_region
      %183 = dma.done [#allocation4], 49152
    $region85: #{att_my_multiquery_video_forward.1} parent=1 // pred_fallthru
      _
    // Predicated region
    $region86: #{att_my_multiquery_video_forward.1} parent=1 // pred_check
      _
    $region87: #{att_my_multiquery_video_forward.1} parent=1 // pred_check_branch
      %185 = sbr.rel (0) target = $region89
    $region88: #{att_my_multiquery_video_forward.1} parent=1 // pred_region
      %186 = dma.done [#allocation8], 128
    $region89: #{att_my_multiquery_video_forward.1} parent=1 // pred_fallthru
      _
    // Predicated region
    $region90: #{att_my_multiquery_video_forward.1} parent=1 // pred_check
      _
    $region91: #{att_my_multiquery_video_forward.1} parent=1 // pred_check_branch
      %188 = sbr.rel (0) target = $region93
    $region92: #{att_my_multiquery_video_forward.1} parent=1 // pred_region
      %189 = dma.done [#allocation8], 128
    $region93: #{att_my_multiquery_video_forward.1} parent=1 // pred_fallthru
      _
    // Predicated region
    $region94: #{att_my_multiquery_video_forward.1} parent=1 // pred_check
      _
    $region95: #{att_my_multiquery_video_forward.1} parent=1 // pred_check_branch
      %191 = sbr.rel (0) target = $region97
    $region96: #{att_my_multiquery_video_forward.1} parent=1 // pred_region
      %192 = dma.done [#allocation11], 128
    $region97: #{att_my_multiquery_video_forward.1} parent=1 // pred_fallthru
      _
    // Predicated region
    $region98: #{att_my_multiquery_video_forward.1} parent=1 // pred_check
      _
    $region99: #{att_my_multiquery_video_forward.1} parent=1 // pred_check_branch
      %194 = sbr.rel (0) target = $region101
    $region100: #{att_my_multiquery_video_forward.1} parent=1 // pred_region
      %195 = dma.done [#allocation11], 64
    $region101: #{att_my_multiquery_video_forward.1} parent=1 // pred_fallthru
      _
    // Predicated region
    $region102: #{att_my_multiquery_video_forward.1} parent=1 // pred_check
      _
    $region103: #{att_my_multiquery_video_forward.1} parent=1 // pred_check_branch
      %197 = sbr.rel (0) target = $region105
    $region104: #{att_my_multiquery_video_forward.1} parent=1 // pred_region
      %198 = dma.done [#allocation14], 64
    $region105: #{att_my_multiquery_video_forward.1} parent=1 // pred_fallthru
      _
    // Predicated region
    $region106: #{att_my_multiquery_video_forward.1} parent=1 // pred_check
      _
    $region107: #{att_my_multiquery_video_forward.1} parent=1 // pred_check_branch
      %200 = sbr.rel (0) target = $region109
    $region108: #{att_my_multiquery_video_forward.1} parent=1 // pred_region
      %201 = dma.done [#allocation14], 64
    $region109: #{att_my_multiquery_video_forward.1} parent=1 // pred_fallthru
      _
    // Predicated region
    $region110: #{att_my_multiquery_video_forward.1} parent=1 // pred_check
      _
    $region111: #{att_my_multiquery_video_forward.1} parent=1 // pred_check_branch
      %203 = sbr.rel (0) target = $region113
    $region112: #{att_my_multiquery_video_forward.1} parent=1 // pred_region
      %204 = dma.done [#allocation17], 4096
    $region113: #{att_my_multiquery_video_forward.1} parent=1 // pred_fallthru
      _
    // Predicated region
    $region114: #{att_my_multiquery_video_forward.1} parent=1 // pred_check
      _
    $region115: #{att_my_multiquery_video_forward.1} parent=1 // pred_check_branch
      %206 = sbr.rel (0) target = $region117
    $region116: #{att_my_multiquery_video_forward.1} parent=1 // pred_region
      %207 = dma.done [#allocation17], 16
    $region117: #{att_my_multiquery_video_forward.1} parent=1 // pred_fallthru
      _
    // Predicated region
    $region118: #{att_my_multiquery_video_forward.1} parent=1 // pred_check
      _
    $region119: #{att_my_multiquery_video_forward.1} parent=1 // pred_check_branch
      %209 = sbr.rel (0) target = $region121
    $region120: #{att_my_multiquery_video_forward.1} parent=1 // pred_region
      %210 = dma.done [#allocation20], 16
    $region121: #{att_my_multiquery_video_forward.1} parent=1 // pred_fallthru
      _
    // Predicated region
    $region122: #{att_my_multiquery_video_forward.1} parent=1 // pred_check
      _
    $region123: #{att_my_multiquery_video_forward.1} parent=1 // pred_check_branch
      %212 = sbr.rel (0) target = $region125
    $region124: #{att_my_multiquery_video_forward.1} parent=1 // pred_region
      %213 = dma.done [#allocation20], 16
    $region125: #{att_my_multiquery_video_forward.1} parent=1 // pred_fallthru
      _
    // Predicated region
    $region126: #{att_my_multiquery_video_forward.1} parent=1 // pred_check
      _
    $region127: #{att_my_multiquery_video_forward.1} parent=1 // pred_check_branch
      %215 = sbr.rel (0) target = $region129
    $region128: #{att_my_multiquery_video_forward.1} parent=1 // pred_region
      %216 = dma.done [#allocation23], 16
    $region129: #{att_my_multiquery_video_forward.1} parent=1 // pred_fallthru
      _
    %217 = sfence
    %v219 = vld [vmem:[%s1] sm:$0xff]
    %v220 = vld [vmem:[%s1 + $0x8] sm:$0xff]
    %v221 = vld [vmem:[%s1 + $0x10] sm:$0xff]
    %v222 = vld [vmem:[%s1 + $0x18] sm:$0xff]
    %v223 = vld [vmem:[%s1 + $0x20] sm:$0xff]
    %v224 = vld [vmem:[%s1 + $0x28] sm:$0xff]
    %v225 = vld [vmem:[%s1 + $0x30] sm:$0xff]
    %v226 = vld [vmem:[%s1 + $0x38] sm:$0xff]
    %v227 = vld [vmem:[%s1 + $0x40] sm:$0xff]
    %v228 = vld [vmem:[%s1 + $0x48] sm:$0xff]
    %v229 = vld [vmem:[%s1 + $0x50] sm:$0xff]
    %v230 = vld [vmem:[%s1 + $0x58] sm:$0xff]
    %v231 = vld [vmem:[%s1 + $0x60] sm:$0xff]
    %v232 = vld [vmem:[%s1 + $0x68] sm:$0xff]
    %v233 = vld [vmem:[%s1 + $0x70] sm:$0xff]
    %v234 = vld [vmem:[%s1 + $0x78] sm:$0xff]
    %v235 = vld [vmem:[%s3] sm:$0xff]
    %v236 = vld [vmem:[%s3 + $0x8] sm:$0xff]
    %v237 = vld [vmem:[%s3 + $0x10] sm:$0xff]
    %v238 = vld [vmem:[%s3 + $0x18] sm:$0xff]
    %v239 = vld [vmem:[%s3 + $0x20] sm:$0xff]
    %v240 = vld [vmem:[%s3 + $0x28] sm:$0xff]
    %v241 = vld [vmem:[%s4] sm:$0x1]
    %v243 = vlaneseq
    %v244 = vshrl.u32 %v243, 7
    %v245 = vsub.s32 0, %v244
    %v246 = vrot.slane %v241, %v245
    %vm248 = vcmask 392192
    %v250 = vsel %vm248, %v219, 0
    %v253 = vsel %vm248, %v220, 0
    %v256 = vsel %vm248, %v221, 0
    %v259 = vsel %vm248, %v222, 0
    %v262 = vsel %vm248, %v223, 0
    %v265 = vsel %vm248, %v224, 0
    %v268 = vsel %vm248, %v225, 0
    %v271 = vsel %vm248, %v226, 0
    %v274 = vsel %vm248, %v227, 0
    %v277 = vsel %vm248, %v228, 0
    %v280 = vsel %vm248, %v229, 0
    %v283 = vsel %vm248, %v230, 0
    %v286 = vsel %vm248, %v231, 0
    %v289 = vsel %vm248, %v232, 0
    %v292 = vsel %vm248, %v233, 0
    %v295 = vsel %vm248, %v234, 0
    %297 = vmatprep.subr.mxu0 0.0
    %298 = vmatpush1.msra.mxu0 %v235
    %299 = vmatprep.subr.mxu0 0.0
    %300 = vmatpush1.msra.mxu0 %v236
    %301 = vmatprep.subr.mxu0 0.0
    %302 = vmatpush1.msra.mxu0 %v237
    %303 = vmatprep.subr.mxu0 0.0
    %304 = vmatpush1.msra.mxu0 %v238
    %305 = vmatprep.subr.mxu0 0.0
    %306 = vmatpush1.msra.mxu0 %v239
    %307 = vmatprep.subr.mxu0 0.0
    %308 = vmatpush1.msra.mxu0 %v240
    %309 = vmatprep.subr.mxu0 0.0
    %310 = vmatpush1.msra.mxu0 0.0
    %311 = vmatprep.subr.mxu0 0.0
    %312 = vmatpush1.msra.mxu0 0.0
    %313 = vmatprep.subr.mxu0 0.0
    %314 = vmatpush1.msra.mxu0 0.0
    %315 = vmatprep.subr.mxu0 0.0
    %316 = vmatpush1.msra.mxu0 0.0
    %317 = vmatprep.subr.mxu0 0.0
    %318 = vmatpush1.msra.mxu0 0.0
    %319 = vmatprep.subr.mxu0 0.0
    %320 = vmatpush1.msra.mxu0 0.0
    %321 = vmatprep.subr.mxu0 0.0
    %322 = vmatpush1.msra.mxu0 0.0
    %323 = vmatprep.subr.mxu0 0.0
    %324 = vmatpush1.msra.mxu0 0.0
    %325 = vmatprep.subr.mxu0 0.0
    %326 = vmatpush1.msra.mxu0 0.0
    %327 = vmatprep.subr.mxu0 0.0
    %328 = vmatpush1.msra.mxu0 0.0
    %329 = vmatprep.subr.mxu0 0.0
    %330 = vmatpush1.msra.mxu0 0.0
    %331 = vmatprep.subr.mxu0 0.0
    %332 = vmatpush1.msra.mxu0 0.0
    %333 = vmatprep.subr.mxu0 0.0
    %334 = vmatpush1.msra.mxu0 0.0
    %335 = vmatprep.subr.mxu0 0.0
    %336 = vmatpush1.msra.mxu0 0.0
    %337 = vmatprep.subr.mxu0 0.0
    %338 = vmatpush1.msra.mxu0 0.0
    %339 = vmatprep.subr.mxu0 0.0
    %340 = vmatpush1.msra.mxu0 0.0
    %341 = vmatprep.subr.mxu0 0.0
    %342 = vmatpush1.msra.mxu0 0.0
    %343 = vmatprep.subr.mxu0 0.0
    %344 = vmatpush1.msra.mxu0 0.0
    %345 = vmatprep.subr.mxu0 0.0
    %346 = vmatpush1.msra.mxu0 0.0
    %347 = vmatprep.subr.mxu0 0.0
    %348 = vmatpush1.msra.mxu0 0.0
    %349 = vmatprep.subr.mxu0 0.0
    %350 = vmatpush1.msra.mxu0 0.0
    %351 = vmatprep.subr.mxu0 0.0
    %352 = vmatpush1.msra.mxu0 0.0
    %353 = vmatprep.subr.mxu0 0.0
    %354 = vmatpush1.msra.mxu0 0.0
    %355 = vmatprep.subr.mxu0 0.0
    %356 = vmatpush1.msra.mxu0 0.0
    %357 = vmatprep.subr.mxu0 0.0
    %358 = vmatpush1.msra.mxu0 0.0
    %359 = vmatprep.subr.mxu0 0.0
    %360 = vmatpush1.msra.mxu0 0.0
    %361 = vmatprep.mubr.f32.mxu0 0.0
    %362 = vmatmul.mubr.f32.gmra.mrb[0].mxu0 %v250
    %v363 = vpop.f32.mrb[0].mxu0
    %v364 = vadd.f32 %v246, %v363
    %v365 = vpop.f32.mrb[0].mxu0
    %366 = vmatprep.mubr.f32.mxu0 0.0
    %367 = vmatmul.mubr.f32.gmra.mrb[0].mxu0 %v253
    %v368 = vpop.f32.mrb[0].mxu0
    %v369 = vadd.f32 %v246, %v368
    %v370 = vpop.f32.mrb[0].mxu0
    %371 = vmatprep.mubr.f32.mxu0 0.0
    %372 = vmatmul.mubr.f32.gmra.mrb[0].mxu0 %v256
    %v373 = vpop.f32.mrb[0].mxu0
    %v374 = vadd.f32 %v246, %v373
    %v375 = vpop.f32.mrb[0].mxu0
    %376 = vmatprep.mubr.f32.mxu0 0.0
    %377 = vmatmul.mubr.f32.gmra.mrb[0].mxu0 %v259
    %v378 = vpop.f32.mrb[0].mxu0
    %v379 = vadd.f32 %v246, %v378
    %v380 = vpop.f32.mrb[0].mxu0
    %381 = vmatprep.mubr.f32.mxu0 0.0
    %382 = vmatmul.mubr.f32.gmra.mrb[0].mxu0 %v262
    %v383 = vpop.f32.mrb[0].mxu0
    %v384 = vadd.f32 %v246, %v383
    %v385 = vpop.f32.mrb[0].mxu0
    %386 = vmatprep.mubr.f32.mxu0 0.0
    %387 = vmatmul.mubr.f32.gmra.mrb[0].mxu0 %v265
    %v388 = vpop.f32.mrb[0].mxu0
    %v389 = vadd.f32 %v246, %v388
    %v390 = vpop.f32.mrb[0].mxu0
    %391 = vmatprep.mubr.f32.mxu0 0.0
    %392 = vmatmul.mubr.f32.gmra.mrb[0].mxu0 %v268
    %v393 = vpop.f32.mrb[0].mxu0
    %v394 = vadd.f32 %v246, %v393
    %v395 = vpop.f32.mrb[0].mxu0
    %396 = vmatprep.mubr.f32.mxu0 0.0
    %397 = vmatmul.mubr.f32.gmra.mrb[0].mxu0 %v271
    %v398 = vpop.f32.mrb[0].mxu0
    %v399 = vadd.f32 %v246, %v398
    %v400 = vpop.f32.mrb[0].mxu0
    %401 = vmatprep.mubr.f32.mxu0 0.0
    %402 = vmatmul.mubr.f32.gmra.mrb[0].mxu0 %v274
    %v403 = vpop.f32.mrb[0].mxu0
    %v404 = vadd.f32 %v246, %v403
    %v405 = vpop.f32.mrb[0].mxu0
    %406 = vmatprep.mubr.f32.mxu0 0.0
    %407 = vmatmul.mubr.f32.gmra.mrb[0].mxu0 %v277
    %v408 = vpop.f32.mrb[0].mxu0
    %v409 = vadd.f32 %v246, %v408
    %v410 = vpop.f32.mrb[0].mxu0
    %411 = vmatprep.mubr.f32.mxu0 0.0
    %412 = vmatmul.mubr.f32.gmra.mrb[0].mxu0 %v280
    %v413 = vpop.f32.mrb[0].mxu0
    %v414 = vadd.f32 %v246, %v413
    %v415 = vpop.f32.mrb[0].mxu0
    %416 = vmatprep.mubr.f32.mxu0 0.0
    %417 = vmatmul.mubr.f32.gmra.mrb[0].mxu0 %v283
    %v418 = vpop.f32.mrb[0].mxu0
    %v419 = vadd.f32 %v246, %v418
    %v420 = vpop.f32.mrb[0].mxu0
    %421 = vmatprep.mubr.f32.mxu0 0.0
    %422 = vmatmul.mubr.f32.gmra.mrb[0].mxu0 %v286
    %v423 = vpop.f32.mrb[0].mxu0
    %v424 = vadd.f32 %v246, %v423
    %v425 = vpop.f32.mrb[0].mxu0
    %426 = vmatprep.mubr.f32.mxu0 0.0
    %427 = vmatmul.mubr.f32.gmra.mrb[0].mxu0 %v289
    %v428 = vpop.f32.mrb[0].mxu0
    %v429 = vadd.f32 %v246, %v428
    %v430 = vpop.f32.mrb[0].mxu0
    %431 = vmatprep.mubr.f32.mxu0 0.0
    %432 = vmatmul.mubr.f32.gmra.mrb[0].mxu0 %v292
    %v433 = vpop.f32.mrb[0].mxu0
    %v434 = vadd.f32 %v246, %v433
    %v435 = vpop.f32.mrb[0].mxu0
    %436 = vmatprep.mubr.f32.mxu0 0.0
    %437 = vmatmul.mubr.f32.gmra.mrb[0].mxu0 %v295
    %v438 = vpop.f32.mrb[0].mxu0
    %v439 = vadd.f32 %v246, %v438
    %v440 = vpop.f32.mrb[0].mxu0
    %441 = vdwg.mxu0
    %v442 = vld [vmem:[%s2] sm:$0xff]
    %v443 = vld [vmem:[%s2 + $0x8] sm:$0xff]
    %v444 = vld [vmem:[%s2 + $0x10] sm:$0xff]
    %v445 = vld [vmem:[%s2 + $0x18] sm:$0xff]
    %v446 = vld [vmem:[%s2 + $0x20] sm:$0xff]
    %v447 = vld [vmem:[%s2 + $0x28] sm:$0xff]
    %v448 = vld [vmem:[%s2 + $0x30] sm:$0xff]
    %v449 = vld [vmem:[%s2 + $0x38] sm:$0xff]
    %v450 = vld [vmem:[%s2 + $0x40] sm:$0xff]
    %v451 = vld [vmem:[%s2 + $0x48] sm:$0xff]
    %v452 = vld [vmem:[%s2 + $0x50] sm:$0xff]
    %v453 = vld [vmem:[%s2 + $0x58] sm:$0xff]
    %v454 = vld [vmem:[%s2 + $0x60] sm:$0xff]
    %v455 = vld [vmem:[%s2 + $0x68] sm:$0xff]
    %v456 = vld [vmem:[%s2 + $0x70] sm:$0xff]
    %v457 = vld [vmem:[%s2 + $0x78] sm:$0xff]
    %474 = vrot.lane.b32.xlu0 %v364, 80
    %v475 = vpop.permute.xlu0 %474
    %476 = vrot.lane.b32.xlu0 %v369, 80
    %v477 = vpop.permute.xlu0 %476
    %478 = vrot.lane.b32.xlu0 %v374, 80
    %v479 = vpop.permute.xlu0 %478
    %480 = vrot.lane.b32.xlu0 %v379, 80
    %v481 = vpop.permute.xlu0 %480
    %482 = vrot.lane.b32.xlu0 %v384, 80
    %v483 = vpop.permute.xlu0 %482
    %484 = vrot.lane.b32.xlu0 %v389, 80
    %v485 = vpop.permute.xlu0 %484
    %486 = vrot.lane.b32.xlu0 %v394, 80
    %v487 = vpop.permute.xlu0 %486
    %488 = vrot.lane.b32.xlu0 %v399, 80
    %v489 = vpop.permute.xlu0 %488
    %490 = vrot.lane.b32.xlu0 %v404, 80
    %v491 = vpop.permute.xlu0 %490
    %492 = vrot.lane.b32.xlu0 %v409, 80
    %v493 = vpop.permute.xlu0 %492
    %494 = vrot.lane.b32.xlu0 %v414, 80
    %v495 = vpop.permute.xlu0 %494
    %496 = vrot.lane.b32.xlu0 %v419, 80
    %v497 = vpop.permute.xlu0 %496
    %498 = vrot.lane.b32.xlu0 %v424, 80
    %v499 = vpop.permute.xlu0 %498
    %500 = vrot.lane.b32.xlu0 %v429, 80
    %v501 = vpop.permute.xlu0 %500
    %502 = vrot.lane.b32.xlu0 %v434, 80
    %v503 = vpop.permute.xlu0 %502
    %504 = vrot.lane.b32.xlu0 %v439, 80
    %v505 = vpop.permute.xlu0 %504
    %vm506 = vcmask 130048
    %v507 = vsel %vm506, %v364, 0
    %v509 = vsel %vm506, %v369, 0
    %v511 = vsel %vm506, %v374, 0
    %v513 = vsel %vm506, %v379, 0
    %v515 = vsel %vm506, %v384, 0
    %v517 = vsel %vm506, %v389, 0
    %v519 = vsel %vm506, %v394, 0
    %v521 = vsel %vm506, %v399, 0
    %v523 = vsel %vm506, %v404, 0
    %v525 = vsel %vm506, %v409, 0
    %v527 = vsel %vm506, %v414, 0
    %v529 = vsel %vm506, %v419, 0
    %v531 = vsel %vm506, %v424, 0
    %v533 = vsel %vm506, %v429, 0
    %v535 = vsel %vm506, %v434, 0
    %v537 = vsel %vm506, %v439, 0
    %v539 = vsel %vm506, %v475, 0
    %v541 = vsel %vm506, %v477, 0
    %v543 = vsel %vm506, %v479, 0
    %v545 = vsel %vm506, %v481, 0
    %v547 = vsel %vm506, %v483, 0
    %v549 = vsel %vm506, %v485, 0
    %v551 = vsel %vm506, %v487, 0
    %v553 = vsel %vm506, %v489, 0
    %v555 = vsel %vm506, %v491, 0
    %v557 = vsel %vm506, %v493, 0
    %v559 = vsel %vm506, %v495, 0
    %v561 = vsel %vm506, %v497, 0
    %v563 = vsel %vm506, %v499, 0
    %v565 = vsel %vm506, %v501, 0
    %v567 = vsel %vm506, %v503, 0
    %v569 = vsel %vm506, %v505, 0
    %571 = vmatprep.subr.mxu0 0.0
    %572 = vmatpush1.xpose.msra.mxu0 %v539
    %573 = vmatprep.subr.mxu0 0.0
    %574 = vmatpush1.xpose.msra.mxu0 %v541
    %575 = vmatprep.subr.mxu0 0.0
    %576 = vmatpush1.xpose.msra.mxu0 %v543
    %577 = vmatprep.subr.mxu0 0.0
    %578 = vmatpush1.xpose.msra.mxu0 %v545
    %579 = vmatprep.subr.mxu0 0.0
    %580 = vmatpush1.xpose.msra.mxu0 %v547
    %581 = vmatprep.subr.mxu0 0.0
    %582 = vmatpush1.xpose.msra.mxu0 %v549
    %583 = vmatprep.subr.mxu0 0.0
    %584 = vmatpush1.xpose.msra.mxu0 %v551
    %585 = vmatprep.subr.mxu0 0.0
    %586 = vmatpush1.xpose.msra.mxu0 %v553
    %587 = vmatprep.subr.mxu0 0.0
    %588 = vmatpush1.xpose.msra.mxu0 %v555
    %589 = vmatprep.subr.mxu0 0.0
    %590 = vmatpush1.xpose.msra.mxu0 %v557
    %591 = vmatprep.subr.mxu0 0.0
    %592 = vmatpush1.xpose.msra.mxu0 %v559
    %593 = vmatprep.subr.mxu0 0.0
    %594 = vmatpush1.xpose.msra.mxu0 %v561
    %595 = vmatprep.subr.mxu0 0.0
    %596 = vmatpush1.xpose.msra.mxu0 %v563
    %597 = vmatprep.subr.mxu0 0.0
    %598 = vmatpush1.xpose.msra.mxu0 %v565
    %599 = vmatprep.subr.mxu0 0.0
    %600 = vmatpush1.xpose.msra.mxu0 %v567
    %601 = vmatprep.subr.mxu0 0.0
    %602 = vmatpush1.xpose.msra.mxu0 %v569
    %603 = vmatprep.subr.mxu0 0.0
    %604 = vmatpush1.xpose.msra.mxu0 0.0
    %605 = vmatprep.subr.mxu0 0.0
    %606 = vmatpush1.xpose.msra.mxu0 0.0
    %607 = vmatprep.subr.mxu0 0.0
    %608 = vmatpush1.xpose.msra.mxu0 0.0
    %609 = vmatprep.subr.mxu0 0.0
    %610 = vmatpush1.xpose.msra.mxu0 0.0
    %611 = vmatprep.subr.mxu0 0.0
    %612 = vmatpush1.xpose.msra.mxu0 0.0
    %613 = vmatprep.subr.mxu0 0.0
    %614 = vmatpush1.xpose.msra.mxu0 0.0
    %615 = vmatprep.subr.mxu0 0.0
    %616 = vmatpush1.xpose.msra.mxu0 0.0
    %617 = vmatprep.subr.mxu0 0.0
    %618 = vmatpush1.xpose.msra.mxu0 0.0
    %619 = vmatprep.subr.mxu0 0.0
    %620 = vmatpush1.xpose.msra.mxu0 0.0
    %621 = vmatprep.subr.mxu0 0.0
    %622 = vmatpush1.xpose.msra.mxu0 0.0
    %623 = vmatprep.subr.mxu0 0.0
    %624 = vmatpush1.xpose.msra.mxu0 0.0
    %625 = vmatprep.subr.mxu0 0.0
    %626 = vmatpush1.xpose.msra.mxu0 0.0
    %627 = vmatprep.subr.mxu0 0.0
    %628 = vmatpush1.xpose.msra.mxu0 0.0
    %629 = vmatprep.subr.mxu0 0.0
    %630 = vmatpush1.xpose.msra.mxu0 0.0
    %631 = vmatprep.subr.mxu0 0.0
    %632 = vmatpush1.xpose.msra.mxu0 0.0
    %633 = vmatprep.subr.mxu0 0.0
    %634 = vmatpush1.xpose.msra.mxu0 0.0
    %635 = vmatprep.mubr.f32.mxu0 0.0
    %636 = vmatmul.mubr.f32.gmra.mrb[0].mxu0 %v507
    %v637 = vpop.f32.mrb[0].mxu0
    %v638 = vadd.f32 %v442, %v637
    %v639 = vpop.f32.mrb[0].mxu0
    %640 = vmatprep.mubr.f32.mxu0 0.0
    %641 = vmatmul.mubr.f32.gmra.mrb[0].mxu0 %v509
    %v642 = vpop.f32.mrb[0].mxu0
    %v643 = vadd.f32 %v443, %v642
    %v644 = vpop.f32.mrb[0].mxu0
    %645 = vmatprep.mubr.f32.mxu0 0.0
    %646 = vmatmul.mubr.f32.gmra.mrb[0].mxu0 %v511
    %v647 = vpop.f32.mrb[0].mxu0
    %v648 = vadd.f32 %v444, %v647
    %v649 = vpop.f32.mrb[0].mxu0
    %650 = vmatprep.mubr.f32.mxu0 0.0
    %651 = vmatmul.mubr.f32.gmra.mrb[0].mxu0 %v513
    %v652 = vpop.f32.mrb[0].mxu0
    %v653 = vadd.f32 %v445, %v652
    %v654 = vpop.f32.mrb[0].mxu0
    %655 = vmatprep.mubr.f32.mxu0 0.0
    %656 = vmatmul.mubr.f32.gmra.mrb[0].mxu0 %v515
    %v657 = vpop.f32.mrb[0].mxu0
    %v658 = vadd.f32 %v446, %v657
    %v659 = vpop.f32.mrb[0].mxu0
    %660 = vmatprep.mubr.f32.mxu0 0.0
    %661 = vmatmul.mubr.f32.gmra.mrb[0].mxu0 %v517
    %v662 = vpop.f32.mrb[0].mxu0
    %v663 = vadd.f32 %v447, %v662
    %v664 = vpop.f32.mrb[0].mxu0
    %665 = vmatprep.mubr.f32.mxu0 0.0
    %666 = vmatmul.mubr.f32.gmra.mrb[0].mxu0 %v519
    %v667 = vpop.f32.mrb[0].mxu0
    %v668 = vadd.f32 %v448, %v667
    %v669 = vpop.f32.mrb[0].mxu0
    %670 = vmatprep.mubr.f32.mxu0 0.0
    %671 = vmatmul.mubr.f32.gmra.mrb[0].mxu0 %v521
    %v672 = vpop.f32.mrb[0].mxu0
    %v673 = vadd.f32 %v449, %v672
    %v674 = vpop.f32.mrb[0].mxu0
    %675 = vmatprep.mubr.f32.mxu0 0.0
    %676 = vmatmul.mubr.f32.gmra.mrb[0].mxu0 %v523
    %v677 = vpop.f32.mrb[0].mxu0
    %v678 = vadd.f32 %v450, %v677
    %v679 = vpop.f32.mrb[0].mxu0
    %680 = vmatprep.mubr.f32.mxu0 0.0
    %681 = vmatmul.mubr.f32.gmra.mrb[0].mxu0 %v525
    %v682 = vpop.f32.mrb[0].mxu0
    %v683 = vadd.f32 %v451, %v682
    %v684 = vpop.f32.mrb[0].mxu0
    %685 = vmatprep.mubr.f32.mxu0 0.0
    %686 = vmatmul.mubr.f32.gmra.mrb[0].mxu0 %v527
    %v687 = vpop.f32.mrb[0].mxu0
    %v688 = vadd.f32 %v452, %v687
    %v689 = vpop.f32.mrb[0].mxu0
    %690 = vmatprep.mubr.f32.mxu0 0.0
    %691 = vmatmul.mubr.f32.gmra.mrb[0].mxu0 %v529
    %v692 = vpop.f32.mrb[0].mxu0
    %v693 = vadd.f32 %v453, %v692
    %v694 = vpop.f32.mrb[0].mxu0
    %695 = vmatprep.mubr.f32.mxu0 0.0
    %696 = vmatmul.mubr.f32.gmra.mrb[0].mxu0 %v531
    %v697 = vpop.f32.mrb[0].mxu0
    %v698 = vadd.f32 %v454, %v697
    %v699 = vpop.f32.mrb[0].mxu0
    %700 = vmatprep.mubr.f32.mxu0 0.0
    %701 = vmatmul.mubr.f32.gmra.mrb[0].mxu0 %v533
    %v702 = vpop.f32.mrb[0].mxu0
    %v703 = vadd.f32 %v455, %v702
    %v704 = vpop.f32.mrb[0].mxu0
    %705 = vmatprep.mubr.f32.mxu0 0.0
    %706 = vmatmul.mubr.f32.gmra.mrb[0].mxu0 %v535
    %v707 = vpop.f32.mrb[0].mxu0
    %v708 = vadd.f32 %v456, %v707
    %v709 = vpop.f32.mrb[0].mxu0
    %710 = vmatprep.mubr.f32.mxu0 0.0
    %711 = vmatmul.mubr.f32.gmra.mrb[0].mxu0 %v537
    %v712 = vpop.f32.mrb[0].mxu0
    %v713 = vadd.f32 %v457, %v712
    %v714 = vpop.f32.mrb[0].mxu0
    %715 = vdwg.mxu0
    %716 = vmax.xlane.f32.xlu0 %v638
    %v717 = vpop.xlane.xlu0 %716
    %718 = vmax.xlane.f32.xlu0 %v643
    %v719 = vpop.xlane.xlu0 %718
    %720 = vmax.xlane.f32.xlu0 %v648
    %v721 = vpop.xlane.xlu0 %720
    %722 = vmax.xlane.f32.xlu0 %v653
    %v723 = vpop.xlane.xlu0 %722
    %724 = vmax.xlane.f32.xlu0 %v658
    %v725 = vpop.xlane.xlu0 %724
    %726 = vmax.xlane.f32.xlu0 %v663
    %v727 = vpop.xlane.xlu0 %726
    %728 = vmax.xlane.f32.xlu0 %v668
    %v729 = vpop.xlane.xlu0 %728
    %730 = vmax.xlane.f32.xlu0 %v673
    %v731 = vpop.xlane.xlu0 %730
    %732 = vmax.xlane.f32.xlu0 %v678
    %v733 = vpop.xlane.xlu0 %732
    %734 = vmax.xlane.f32.xlu0 %v683
    %v735 = vpop.xlane.xlu0 %734
    %736 = vmax.xlane.f32.xlu0 %v688
    %v737 = vpop.xlane.xlu0 %736
    %738 = vmax.xlane.f32.xlu0 %v693
    %v739 = vpop.xlane.xlu0 %738
    %740 = vmax.xlane.f32.xlu0 %v698
    %v741 = vpop.xlane.xlu0 %740
    %742 = vmax.xlane.f32.xlu0 %v703
    %v743 = vpop.xlane.xlu0 %742
    %744 = vmax.xlane.f32.xlu0 %v708
    %v745 = vpop.xlane.xlu0 %744
    %746 = vmax.xlane.f32.xlu0 %v713
    %v747 = vpop.xlane.xlu0 %746
    %v748 = vsub.f32 %v638, %v717
    %v749 = vsub.f32 %v643, %v719
    %v750 = vsub.f32 %v648, %v721
    %v751 = vsub.f32 %v653, %v723
    %v752 = vsub.f32 %v658, %v725
    %v753 = vsub.f32 %v663, %v727
    %v754 = vsub.f32 %v668, %v729
    %v755 = vsub.f32 %v673, %v731
    %v756 = vsub.f32 %v678, %v733
    %v757 = vsub.f32 %v683, %v735
    %v758 = vsub.f32 %v688, %v737
    %v759 = vsub.f32 %v693, %v739
    %v760 = vsub.f32 %v698, %v741
    %v761 = vsub.f32 %v703, %v743
    %v762 = vsub.f32 %v708, %v745
    %v763 = vsub.f32 %v713, %v747
    %v764 = vmul.f32 %v748, 1.442695
    %v765 = vpow.pop %v764
    %v766 = vmul.f32 %v749, 1.442695
    %v767 = vpow.pop %v766
    %v768 = vmul.f32 %v750, 1.442695
    %v769 = vpow.pop %v768
    %v770 = vmul.f32 %v751, 1.442695
    %v771 = vpow.pop %v770
    %v772 = vmul.f32 %v752, 1.442695
    %v773 = vpow.pop %v772
    %v774 = vmul.f32 %v753, 1.442695
    %v775 = vpow.pop %v774
    %v776 = vmul.f32 %v754, 1.442695
    %v777 = vpow.pop %v776
    %v778 = vmul.f32 %v755, 1.442695
    %v779 = vpow.pop %v778
    %v780 = vmul.f32 %v756, 1.442695
    %v781 = vpow.pop %v780
    %v782 = vmul.f32 %v757, 1.442695
    %v783 = vpow.pop %v782
    %v784 = vmul.f32 %v758, 1.442695
    %v785 = vpow.pop %v784
    %v786 = vmul.f32 %v759, 1.442695
    %v787 = vpow.pop %v786
    %v788 = vmul.f32 %v760, 1.442695
    %v789 = vpow.pop %v788
    %v790 = vmul.f32 %v761, 1.442695
    %v791 = vpow.pop %v790
    %v792 = vmul.f32 %v762, 1.442695
    %v793 = vpow.pop %v792
    %v794 = vmul.f32 %v763, 1.442695
    %v795 = vpow.pop %v794
    %796 = vadd.xlane.f32.xlu0 %v765
    %v797 = vpop.xlane.xlu0 %796
    %798 = vadd.xlane.f32.xlu0 %v767
    %v799 = vpop.xlane.xlu0 %798
    %800 = vadd.xlane.f32.xlu0 %v769
    %v801 = vpop.xlane.xlu0 %800
    %802 = vadd.xlane.f32.xlu0 %v771
    %v803 = vpop.xlane.xlu0 %802
    %804 = vadd.xlane.f32.xlu0 %v773
    %v805 = vpop.xlane.xlu0 %804
    %806 = vadd.xlane.f32.xlu0 %v775
    %v807 = vpop.xlane.xlu0 %806
    %808 = vadd.xlane.f32.xlu0 %v777
    %v809 = vpop.xlane.xlu0 %808
    %810 = vadd.xlane.f32.xlu0 %v779
    %v811 = vpop.xlane.xlu0 %810
    %812 = vadd.xlane.f32.xlu0 %v781
    %v813 = vpop.xlane.xlu0 %812
    %814 = vadd.xlane.f32.xlu0 %v783
    %v815 = vpop.xlane.xlu0 %814
    %816 = vadd.xlane.f32.xlu0 %v785
    %v817 = vpop.xlane.xlu0 %816
    %818 = vadd.xlane.f32.xlu0 %v787
    %v819 = vpop.xlane.xlu0 %818
    %820 = vadd.xlane.f32.xlu0 %v789
    %v821 = vpop.xlane.xlu0 %820
    %822 = vadd.xlane.f32.xlu0 %v791
    %v823 = vpop.xlane.xlu0 %822
    %824 = vadd.xlane.f32.xlu0 %v793
    %v825 = vpop.xlane.xlu0 %824
    %826 = vadd.xlane.f32.xlu0 %v795
    %v827 = vpop.xlane.xlu0 %826
    %v828 = vrcp.pop %v797
    %v829 = vrcp.pop %v799
    %v830 = vrcp.pop %v801
    %v831 = vrcp.pop %v803
    %v832 = vrcp.pop %v805
    %v833 = vrcp.pop %v807
    %v834 = vrcp.pop %v809
    %v835 = vrcp.pop %v811
    %v836 = vrcp.pop %v813
    %v837 = vrcp.pop %v815
    %v838 = vrcp.pop %v817
    %v839 = vrcp.pop %v819
    %v840 = vrcp.pop %v821
    %v841 = vrcp.pop %v823
    %v842 = vrcp.pop %v825
    %v843 = vrcp.pop %v827
    %v844 = vmul.f32 %v765, %v828
    %v845 = vmul.f32 %v767, %v829
    %v846 = vmul.f32 %v769, %v830
    %v847 = vmul.f32 %v771, %v831
    %v848 = vmul.f32 %v773, %v832
    %v849 = vmul.f32 %v775, %v833
    %v850 = vmul.f32 %v777, %v834
    %v851 = vmul.f32 %v779, %v835
    %v852 = vmul.f32 %v781, %v836
    %v853 = vmul.f32 %v783, %v837
    %v854 = vmul.f32 %v785, %v838
    %v855 = vmul.f32 %v787, %v839
    %v856 = vmul.f32 %v789, %v840
    %v857 = vmul.f32 %v791, %v841
    %v858 = vmul.f32 %v793, %v842
    %v859 = vmul.f32 %v795, %v843
    %s860 = sld [smem:[#allocation3]]
    %v861 = vstv %s860
    %v862 = vmul.f32 %v861, %v844
    %v863 = vmul.f32 %v861, %v845
    %v864 = vmul.f32 %v861, %v846
    %v865 = vmul.f32 %v861, %v847
    %v866 = vmul.f32 %v861, %v848
    %v867 = vmul.f32 %v861, %v849
    %v868 = vmul.f32 %v861, %v850
    %v869 = vmul.f32 %v861, %v851
    %v870 = vmul.f32 %v861, %v852
    %v871 = vmul.f32 %v861, %v853
    %v872 = vmul.f32 %v861, %v854
    %v873 = vmul.f32 %v861, %v855
    %v874 = vmul.f32 %v861, %v856
    %v875 = vmul.f32 %v861, %v857
    %v876 = vmul.f32 %v861, %v858
    %v877 = vmul.f32 %v861, %v859
    %v878 = vadd.f32 %v862, 0.0
    %v879 = vadd.f32 %v863, 0.0
    %v880 = vadd.f32 %v864, 0.0
    %v881 = vadd.f32 %v865, 0.0
    %v882 = vadd.f32 %v866, 0.0
    %v883 = vadd.f32 %v867, 0.0
    %v884 = vadd.f32 %v868, 0.0
    %v885 = vadd.f32 %v869, 0.0
    %v886 = vadd.f32 %v870, 0.0
    %v887 = vadd.f32 %v871, 0.0
    %v888 = vadd.f32 %v872, 0.0
    %v889 = vadd.f32 %v873, 0.0
    %v890 = vadd.f32 %v874, 0.0
    %v891 = vadd.f32 %v875, 0.0
    %v892 = vadd.f32 %v876, 0.0
    %v893 = vadd.f32 %v877, 0.0
    %v894 = vld [vmem:[%s2] sm:$0xff]
    %v895 = vld [vmem:[%s2 + $0x8] sm:$0xff]
    %v896 = vld [vmem:[%s2 + $0x10] sm:$0xff]
    %v897 = vld [vmem:[%s2 + $0x18] sm:$0xff]
    %v898 = vld [vmem:[%s2 + $0x20] sm:$0xff]
    %v899 = vld [vmem:[%s2 + $0x28] sm:$0xff]
    %v900 = vld [vmem:[%s2 + $0x30] sm:$0xff]
    %v901 = vld [vmem:[%s2 + $0x38] sm:$0xff]
    %v902 = vld [vmem:[%s2 + $0x40] sm:$0xff]
    %v903 = vld [vmem:[%s2 + $0x48] sm:$0xff]
    %v904 = vld [vmem:[%s2 + $0x50] sm:$0xff]
    %v905 = vld [vmem:[%s2 + $0x58] sm:$0xff]
    %v906 = vld [vmem:[%s2 + $0x60] sm:$0xff]
    %v907 = vld [vmem:[%s2 + $0x68] sm:$0xff]
    %v908 = vld [vmem:[%s2 + $0x70] sm:$0xff]
    %v909 = vld [vmem:[%s2 + $0x78] sm:$0xff]
    %910 = vrot.lane.b32.xlu0 %v364, 112
    %v911 = vpop.permute.xlu0 %910
    %912 = vrot.lane.b32.xlu0 %v369, 112
    %v913 = vpop.permute.xlu0 %912
    %914 = vrot.lane.b32.xlu0 %v374, 112
    %v915 = vpop.permute.xlu0 %914
    %916 = vrot.lane.b32.xlu0 %v379, 112
    %v917 = vpop.permute.xlu0 %916
    %918 = vrot.lane.b32.xlu0 %v384, 112
    %v919 = vpop.permute.xlu0 %918
    %920 = vrot.lane.b32.xlu0 %v389, 112
    %v921 = vpop.permute.xlu0 %920
    %922 = vrot.lane.b32.xlu0 %v394, 112
    %v923 = vpop.permute.xlu0 %922
    %924 = vrot.lane.b32.xlu0 %v399, 112
    %v925 = vpop.permute.xlu0 %924
    %926 = vrot.lane.b32.xlu0 %v404, 112
    %v927 = vpop.permute.xlu0 %926
    %928 = vrot.lane.b32.xlu0 %v409, 112
    %v929 = vpop.permute.xlu0 %928
    %930 = vrot.lane.b32.xlu0 %v414, 112
    %v931 = vpop.permute.xlu0 %930
    %932 = vrot.lane.b32.xlu0 %v419, 112
    %v933 = vpop.permute.xlu0 %932
    %934 = vrot.lane.b32.xlu0 %v424, 112
    %v935 = vpop.permute.xlu0 %934
    %936 = vrot.lane.b32.xlu0 %v429, 112
    %v937 = vpop.permute.xlu0 %936
    %938 = vrot.lane.b32.xlu0 %v434, 112
    %v939 = vpop.permute.xlu0 %938
    %940 = vrot.lane.b32.xlu0 %v439, 112
    %v941 = vpop.permute.xlu0 %940
    %v942 = vsel %vm506, %v911, 0
    %v944 = vsel %vm506, %v913, 0
    %v946 = vsel %vm506, %v915, 0
    %v948 = vsel %vm506, %v917, 0
    %v950 = vsel %vm506, %v919, 0
    %v952 = vsel %vm506, %v921, 0
    %v954 = vsel %vm506, %v923, 0
    %v956 = vsel %vm506, %v925, 0
    %v958 = vsel %vm506, %v927, 0
    %v960 = vsel %vm506, %v929, 0
    %v962 = vsel %vm506, %v931, 0
    %v964 = vsel %vm506, %v933, 0
    %v966 = vsel %vm506, %v935, 0
    %v968 = vsel %vm506, %v937, 0
    %v970 = vsel %vm506, %v939, 0
    %v972 = vsel %vm506, %v941, 0
    %974 = vmatprep.subr.mxu0 0.0
    %975 = vmatpush1.xpose.msra.mxu0 %v539
    %976 = vmatprep.subr.mxu0 0.0
    %977 = vmatpush1.xpose.msra.mxu0 %v541
    %978 = vmatprep.subr.mxu0 0.0
    %979 = vmatpush1.xpose.msra.mxu0 %v543
    %980 = vmatprep.subr.mxu0 0.0
    %981 = vmatpush1.xpose.msra.mxu0 %v545
    %982 = vmatprep.subr.mxu0 0.0
    %983 = vmatpush1.xpose.msra.mxu0 %v547
    %984 = vmatprep.subr.mxu0 0.0
    %985 = vmatpush1.xpose.msra.mxu0 %v549
    %986 = vmatprep.subr.mxu0 0.0
    %987 = vmatpush1.xpose.msra.mxu0 %v551
    %988 = vmatprep.subr.mxu0 0.0
    %989 = vmatpush1.xpose.msra.mxu0 %v553
    %990 = vmatprep.subr.mxu0 0.0
    %991 = vmatpush1.xpose.msra.mxu0 %v555
    %992 = vmatprep.subr.mxu0 0.0
    %993 = vmatpush1.xpose.msra.mxu0 %v557
    %994 = vmatprep.subr.mxu0 0.0
    %995 = vmatpush1.xpose.msra.mxu0 %v559
    %996 = vmatprep.subr.mxu0 0.0
    %997 = vmatpush1.xpose.msra.mxu0 %v561
    %998 = vmatprep.subr.mxu0 0.0
    %999 = vmatpush1.xpose.msra.mxu0 %v563
    %1000 = vmatprep.subr.mxu0 0.0
    %1001 = vmatpush1.xpose.msra.mxu0 %v565
    %1002 = vmatprep.subr.mxu0 0.0
    %1003 = vmatpush1.xpose.msra.mxu0 %v567
    %1004 = vmatprep.subr.mxu0 0.0
    %1005 = vmatpush1.xpose.msra.mxu0 %v569
    %1006 = vmatprep.subr.mxu0 0.0
    %1007 = vmatpush1.xpose.msra.mxu0 0.0
    %1008 = vmatprep.subr.mxu0 0.0
    %1009 = vmatpush1.xpose.msra.mxu0 0.0
    %1010 = vmatprep.subr.mxu0 0.0
    %1011 = vmatpush1.xpose.msra.mxu0 0.0
    %1012 = vmatprep.subr.mxu0 0.0
    %1013 = vmatpush1.xpose.msra.mxu0 0.0
    %1014 = vmatprep.subr.mxu0 0.0
    %1015 = vmatpush1.xpose.msra.mxu0 0.0
    %1016 = vmatprep.subr.mxu0 0.0
    %1017 = vmatpush1.xpose.msra.mxu0 0.0
    %1018 = vmatprep.subr.mxu0 0.0
    %1019 = vmatpush1.xpose.msra.mxu0 0.0
    %1020 = vmatprep.subr.mxu0 0.0
    %1021 = vmatpush1.xpose.msra.mxu0 0.0
    %1022 = vmatprep.subr.mxu0 0.0
    %1023 = vmatpush1.xpose.msra.mxu0 0.0
    %1024 = vmatprep.subr.mxu0 0.0
    %1025 = vmatpush1.xpose.msra.mxu0 0.0
    %1026 = vmatprep.subr.mxu0 0.0
    %1027 = vmatpush1.xpose.msra.mxu0 0.0
    %1028 = vmatprep.subr.mxu0 0.0
    %1029 = vmatpush1.xpose.msra.mxu0 0.0
    %1030 = vmatprep.subr.mxu0 0.0
    %1031 = vmatpush1.xpose.msra.mxu0 0.0
    %1032 = vmatprep.subr.mxu0 0.0
    %1033 = vmatpush1.xpose.msra.mxu0 0.0
    %1034 = vmatprep.subr.mxu0 0.0
    %1035 = vmatpush1.xpose.msra.mxu0 0.0
    %1036 = vmatprep.subr.mxu0 0.0
    %1037 = vmatpush1.xpose.msra.mxu0 0.0
    %1038 = vmatprep.mubr.f32.mxu0 0.0
    %1039 = vmatmul.mubr.f32.gmra.mrb[0].mxu0 %v942
    %v1040 = vpop.f32.mrb[0].mxu0
    %v1041 = vadd.f32 %v894, %v1040
    %v1042 = vpop.f32.mrb[0].mxu0
    %1043 = vmatprep.mubr.f32.mxu0 0.0
    %1044 = vmatmul.mubr.f32.gmra.mrb[0].mxu0 %v944
    %v1045 = vpop.f32.mrb[0].mxu0
    %v1046 = vadd.f32 %v895, %v1045
    %v1047 = vpop.f32.mrb[0].mxu0
    %1048 = vmatprep.mubr.f32.mxu0 0.0
    %1049 = vmatmul.mubr.f32.gmra.mrb[0].mxu0 %v946
    %v1050 = vpop.f32.mrb[0].mxu0
    %v1051 = vadd.f32 %v896, %v1050
    %v1052 = vpop.f32.mrb[0].mxu0
    %1053 = vmatprep.mubr.f32.mxu0 0.0
    %1054 = vmatmul.mubr.f32.gmra.mrb[0].mxu0 %v948
    %v1055 = vpop.f32.mrb[0].mxu0
    %v1056 = vadd.f32 %v897, %v1055
    %v1057 = vpop.f32.mrb[0].mxu0
    %1058 = vmatprep.mubr.f32.mxu0 0.0
    %1059 = vmatmul.mubr.f32.gmra.mrb[0].mxu0 %v950
    %v1060 = vpop.f32.mrb[0].mxu0
    %v1061 = vadd.f32 %v898, %v1060
    %v1062 = vpop.f32.mrb[0].mxu0
    %1063 = vmatprep.mubr.f32.mxu0 0.0
    %1064 = vmatmul.mubr.f32.gmra.mrb[0].mxu0 %v952
    %v1065 = vpop.f32.mrb[0].mxu0
    %v1066 = vadd.f32 %v899, %v1065
    %v1067 = vpop.f32.mrb[0].mxu0
    %1068 = vmatprep.mubr.f32.mxu0 0.0
    %1069 = vmatmul.mubr.f32.gmra.mrb[0].mxu0 %v954
    %v1070 = vpop.f32.mrb[0].mxu0
    %v1071 = vadd.f32 %v900, %v1070
    %v1072 = vpop.f32.mrb[0].mxu0
    %1073 = vmatprep.mubr.f32.mxu0 0.0
    %1074 = vmatmul.mubr.f32.gmra.mrb[0].mxu0 %v956
    %v1075 = vpop.f32.mrb[0].mxu0
    %v1076 = vadd.f32 %v901, %v1075
    %v1077 = vpop.f32.mrb[0].mxu0
    %1078 = vmatprep.mubr.f32.mxu0 0.0
    %1079 = vmatmul.mubr.f32.gmra.mrb[0].mxu0 %v958
    %v1080 = vpop.f32.mrb[0].mxu0
    %v1081 = vadd.f32 %v902, %v1080
    %v1082 = vpop.f32.mrb[0].mxu0
    %1083 = vmatprep.mubr.f32.mxu0 0.0
    %1084 = vmatmul.mubr.f32.gmra.mrb[0].mxu0 %v960
    %v1085 = vpop.f32.mrb[0].mxu0
    %v1086 = vadd.f32 %v903, %v1085
    %v1087 = vpop.f32.mrb[0].mxu0
    %1088 = vmatprep.mubr.f32.mxu0 0.0
    %1089 = vmatmul.mubr.f32.gmra.mrb[0].mxu0 %v962
    %v1090 = vpop.f32.mrb[0].mxu0
    %v1091 = vadd.f32 %v904, %v1090
    %v1092 = vpop.f32.mrb[0].mxu0
    %1093 = vmatprep.mubr.f32.mxu0 0.0
    %1094 = vmatmul.mubr.f32.gmra.mrb[0].mxu0 %v964
    %v1095 = vpop.f32.mrb[0].mxu0
    %v1096 = vadd.f32 %v905, %v1095
    %v1097 = vpop.f32.mrb[0].mxu0
    %1098 = vmatprep.mubr.f32.mxu0 0.0
    %1099 = vmatmul.mubr.f32.gmra.mrb[0].mxu0 %v966
    %v1100 = vpop.f32.mrb[0].mxu0
    %v1101 = vadd.f32 %v906, %v1100
    %v1102 = vpop.f32.mrb[0].mxu0
    %1103 = vmatprep.mubr.f32.mxu0 0.0
    %1104 = vmatmul.mubr.f32.gmra.mrb[0].mxu0 %v968
    %v1105 = vpop.f32.mrb[0].mxu0
    %v1106 = vadd.f32 %v907, %v1105
    %v1107 = vpop.f32.mrb[0].mxu0
    %1108 = vmatprep.mubr.f32.mxu0 0.0
    %1109 = vmatmul.mubr.f32.gmra.mrb[0].mxu0 %v970
    %v1110 = vpop.f32.mrb[0].mxu0
    %v1111 = vadd.f32 %v908, %v1110
    %v1112 = vpop.f32.mrb[0].mxu0
    %1113 = vmatprep.mubr.f32.mxu0 0.0
    %1114 = vmatmul.mubr.f32.gmra.mrb[0].mxu0 %v972
    %v1115 = vpop.f32.mrb[0].mxu0
    %v1116 = vadd.f32 %v909, %v1115
    %v1117 = vpop.f32.mrb[0].mxu0
    %1118 = vdwg.mxu0
    %1119 = vmax.xlane.f32.xlu0 %v1041
    %v1120 = vpop.xlane.xlu0 %1119
    %1121 = vmax.xlane.f32.xlu0 %v1046
    %v1122 = vpop.xlane.xlu0 %1121
    %1123 = vmax.xlane.f32.xlu0 %v1051
    %v1124 = vpop.xlane.xlu0 %1123
    %1125 = vmax.xlane.f32.xlu0 %v1056
    %v1126 = vpop.xlane.xlu0 %1125
    %1127 = vmax.xlane.f32.xlu0 %v1061
    %v1128 = vpop.xlane.xlu0 %1127
    %1129 = vmax.xlane.f32.xlu0 %v1066
    %v1130 = vpop.xlane.xlu0 %1129
    %1131 = vmax.xlane.f32.xlu0 %v1071
    %v1132 = vpop.xlane.xlu0 %1131
    %1133 = vmax.xlane.f32.xlu0 %v1076
    %v1134 = vpop.xlane.xlu0 %1133
    %1135 = vmax.xlane.f32.xlu0 %v1081
    %v1136 = vpop.xlane.xlu0 %1135
    %1137 = vmax.xlane.f32.xlu0 %v1086
    %v1138 = vpop.xlane.xlu0 %1137
    %1139 = vmax.xlane.f32.xlu0 %v1091
    %v1140 = vpop.xlane.xlu0 %1139
    %1141 = vmax.xlane.f32.xlu0 %v1096
    %v1142 = vpop.xlane.xlu0 %1141
    %1143 = vmax.xlane.f32.xlu0 %v1101
    %v1144 = vpop.xlane.xlu0 %1143
    %1145 = vmax.xlane.f32.xlu0 %v1106
    %v1146 = vpop.xlane.xlu0 %1145
    %1147 = vmax.xlane.f32.xlu0 %v1111
    %v1148 = vpop.xlane.xlu0 %1147
    %1149 = vmax.xlane.f32.xlu0 %v1116
    %v1150 = vpop.xlane.xlu0 %1149
    %v1151 = vsub.f32 %v1041, %v1120
    %v1152 = vsub.f32 %v1046, %v1122
    %v1153 = vsub.f32 %v1051, %v1124
    %v1154 = vsub.f32 %v1056, %v1126
    %v1155 = vsub.f32 %v1061, %v1128
    %v1156 = vsub.f32 %v1066, %v1130
    %v1157 = vsub.f32 %v1071, %v1132
    %v1158 = vsub.f32 %v1076, %v1134
    %v1159 = vsub.f32 %v1081, %v1136
    %v1160 = vsub.f32 %v1086, %v1138
    %v1161 = vsub.f32 %v1091, %v1140
    %v1162 = vsub.f32 %v1096, %v1142
    %v1163 = vsub.f32 %v1101, %v1144
    %v1164 = vsub.f32 %v1106, %v1146
    %v1165 = vsub.f32 %v1111, %v1148
    %v1166 = vsub.f32 %v1116, %v1150
    %v1167 = vmul.f32 %v1151, 1.442695
    %v1168 = vpow.pop %v1167
    %v1169 = vmul.f32 %v1152, 1.442695
    %v1170 = vpow.pop %v1169
    %v1171 = vmul.f32 %v1153, 1.442695
    %v1172 = vpow.pop %v1171
    %v1173 = vmul.f32 %v1154, 1.442695
    %v1174 = vpow.pop %v1173
    %v1175 = vmul.f32 %v1155, 1.442695
    %v1176 = vpow.pop %v1175
    %v1177 = vmul.f32 %v1156, 1.442695
    %v1178 = vpow.pop %v1177
    %v1179 = vmul.f32 %v1157, 1.442695
    %v1180 = vpow.pop %v1179
    %v1181 = vmul.f32 %v1158, 1.442695
    %v1182 = vpow.pop %v1181
    %v1183 = vmul.f32 %v1159, 1.442695
    %v1184 = vpow.pop %v1183
    %v1185 = vmul.f32 %v1160, 1.442695
    %v1186 = vpow.pop %v1185
    %v1187 = vmul.f32 %v1161, 1.442695
    %v1188 = vpow.pop %v1187
    %v1189 = vmul.f32 %v1162, 1.442695
    %v1190 = vpow.pop %v1189
    %v1191 = vmul.f32 %v1163, 1.442695
    %v1192 = vpow.pop %v1191
    %v1193 = vmul.f32 %v1164, 1.442695
    %v1194 = vpow.pop %v1193
    %v1195 = vmul.f32 %v1165, 1.442695
    %v1196 = vpow.pop %v1195
    %v1197 = vmul.f32 %v1166, 1.442695
    %v1198 = vpow.pop %v1197
    %1199 = vadd.xlane.f32.xlu0 %v1168
    %v1200 = vpop.xlane.xlu0 %1199
    %1201 = vadd.xlane.f32.xlu0 %v1170
    %v1202 = vpop.xlane.xlu0 %1201
    %1203 = vadd.xlane.f32.xlu0 %v1172
    %v1204 = vpop.xlane.xlu0 %1203
    %1205 = vadd.xlane.f32.xlu0 %v1174
    %v1206 = vpop.xlane.xlu0 %1205
    %1207 = vadd.xlane.f32.xlu0 %v1176
    %v1208 = vpop.xlane.xlu0 %1207
    %1209 = vadd.xlane.f32.xlu0 %v1178
    %v1210 = vpop.xlane.xlu0 %1209
    %1211 = vadd.xlane.f32.xlu0 %v1180
    %v1212 = vpop.xlane.xlu0 %1211
    %1213 = vadd.xlane.f32.xlu0 %v1182
    %v1214 = vpop.xlane.xlu0 %1213
    %1215 = vadd.xlane.f32.xlu0 %v1184
    %v1216 = vpop.xlane.xlu0 %1215
    %1217 = vadd.xlane.f32.xlu0 %v1186
    %v1218 = vpop.xlane.xlu0 %1217
    %1219 = vadd.xlane.f32.xlu0 %v1188
    %v1220 = vpop.xlane.xlu0 %1219
    %1221 = vadd.xlane.f32.xlu0 %v1190
    %v1222 = vpop.xlane.xlu0 %1221
    %1223 = vadd.xlane.f32.xlu0 %v1192
    %v1224 = vpop.xlane.xlu0 %1223
    %1225 = vadd.xlane.f32.xlu0 %v1194
    %v1226 = vpop.xlane.xlu0 %1225
    %1227 = vadd.xlane.f32.xlu0 %v1196
    %v1228 = vpop.xlane.xlu0 %1227
    %1229 = vadd.xlane.f32.xlu0 %v1198
    %v1230 = vpop.xlane.xlu0 %1229
    %v1231 = vrcp.pop %v1200
    %v1232 = vrcp.pop %v1202
    %v1233 = vrcp.pop %v1204
    %v1234 = vrcp.pop %v1206
    %v1235 = vrcp.pop %v1208
    %v1236 = vrcp.pop %v1210
    %v1237 = vrcp.pop %v1212
    %v1238 = vrcp.pop %v1214
    %v1239 = vrcp.pop %v1216
    %v1240 = vrcp.pop %v1218
    %v1241 = vrcp.pop %v1220
    %v1242 = vrcp.pop %v1222
    %v1243 = vrcp.pop %v1224
    %v1244 = vrcp.pop %v1226
    %v1245 = vrcp.pop %v1228
    %v1246 = vrcp.pop %v1230
    %v1247 = vmul.f32 %v1168, %v1231
    %v1248 = vmul.f32 %v1170, %v1232
    %v1249 = vmul.f32 %v1172, %v1233
    %v1250 = vmul.f32 %v1174, %v1234
    %v1251 = vmul.f32 %v1176, %v1235
    %v1252 = vmul.f32 %v1178, %v1236
    %v1253 = vmul.f32 %v1180, %v1237
    %v1254 = vmul.f32 %v1182, %v1238
    %v1255 = vmul.f32 %v1184, %v1239
    %v1256 = vmul.f32 %v1186, %v1240
    %v1257 = vmul.f32 %v1188, %v1241
    %v1258 = vmul.f32 %v1190, %v1242
    %v1259 = vmul.f32 %v1192, %v1243
    %v1260 = vmul.f32 %v1194, %v1244
    %v1261 = vmul.f32 %v1196, %v1245
    %v1262 = vmul.f32 %v1198, %v1246
    %s1263 = sld [smem:[#allocation3 + $0x1]]
    %v1264 = vstv %s1263
    %v1265 = vmul.f32 %v1264, %v1247
    %v1266 = vmul.f32 %v1264, %v1248
    %v1267 = vmul.f32 %v1264, %v1249
    %v1268 = vmul.f32 %v1264, %v1250
    %v1269 = vmul.f32 %v1264, %v1251
    %v1270 = vmul.f32 %v1264, %v1252
    %v1271 = vmul.f32 %v1264, %v1253
    %v1272 = vmul.f32 %v1264, %v1254
    %v1273 = vmul.f32 %v1264, %v1255
    %v1274 = vmul.f32 %v1264, %v1256
    %v1275 = vmul.f32 %v1264, %v1257
    %v1276 = vmul.f32 %v1264, %v1258
    %v1277 = vmul.f32 %v1264, %v1259
    %v1278 = vmul.f32 %v1264, %v1260
    %v1279 = vmul.f32 %v1264, %v1261
    %v1280 = vmul.f32 %v1264, %v1262
    %v1281 = vadd.f32 %v878, %v1265
    %v1282 = vadd.f32 %v879, %v1266
    %v1283 = vadd.f32 %v880, %v1267
    %v1284 = vadd.f32 %v881, %v1268
    %v1285 = vadd.f32 %v882, %v1269
    %v1286 = vadd.f32 %v883, %v1270
    %v1287 = vadd.f32 %v884, %v1271
    %v1288 = vadd.f32 %v885, %v1272
    %v1289 = vadd.f32 %v886, %v1273
    %v1290 = vadd.f32 %v887, %v1274
    %v1291 = vadd.f32 %v888, %v1275
    %v1292 = vadd.f32 %v889, %v1276
    %v1293 = vadd.f32 %v890, %v1277
    %v1294 = vadd.f32 %v891, %v1278
    %v1295 = vadd.f32 %v892, %v1279
    %v1296 = vadd.f32 %v893, %v1280
    %v1297 = vld [vmem:[%s2] sm:$0xff]
    %v1298 = vld [vmem:[%s2 + $0x8] sm:$0xff]
    %v1299 = vld [vmem:[%s2 + $0x10] sm:$0xff]
    %v1300 = vld [vmem:[%s2 + $0x18] sm:$0xff]
    %v1301 = vld [vmem:[%s2 + $0x20] sm:$0xff]
    %v1302 = vld [vmem:[%s2 + $0x28] sm:$0xff]
    %v1303 = vld [vmem:[%s2 + $0x30] sm:$0xff]
    %v1304 = vld [vmem:[%s2 + $0x38] sm:$0xff]
    %v1305 = vld [vmem:[%s2 + $0x40] sm:$0xff]
    %v1306 = vld [vmem:[%s2 + $0x48] sm:$0xff]
    %v1307 = vld [vmem:[%s2 + $0x50] sm:$0xff]
    %v1308 = vld [vmem:[%s2 + $0x58] sm:$0xff]
    %v1309 = vld [vmem:[%s2 + $0x60] sm:$0xff]
    %v1310 = vld [vmem:[%s2 + $0x68] sm:$0xff]
    %v1311 = vld [vmem:[%s2 + $0x70] sm:$0xff]
    %v1312 = vld [vmem:[%s2 + $0x78] sm:$0xff]
    %1313 = vrot.lane.b32.xlu0 %v364, 96
    %v1314 = vpop.permute.xlu0 %1313
    %1315 = vrot.lane.b32.xlu0 %v369, 96
    %v1316 = vpop.permute.xlu0 %1315
    %1317 = vrot.lane.b32.xlu0 %v374, 96
    %v1318 = vpop.permute.xlu0 %1317
    %1319 = vrot.lane.b32.xlu0 %v379, 96
    %v1320 = vpop.permute.xlu0 %1319
    %1321 = vrot.lane.b32.xlu0 %v384, 96
    %v1322 = vpop.permute.xlu0 %1321
    %1323 = vrot.lane.b32.xlu0 %v389, 96
    %v1324 = vpop.permute.xlu0 %1323
    %1325 = vrot.lane.b32.xlu0 %v394, 96
    %v1326 = vpop.permute.xlu0 %1325
    %1327 = vrot.lane.b32.xlu0 %v399, 96
    %v1328 = vpop.permute.xlu0 %1327
    %1329 = vrot.lane.b32.xlu0 %v404, 96
    %v1330 = vpop.permute.xlu0 %1329
    %1331 = vrot.lane.b32.xlu0 %v409, 96
    %v1332 = vpop.permute.xlu0 %1331
    %1333 = vrot.lane.b32.xlu0 %v414, 96
    %v1334 = vpop.permute.xlu0 %1333
    %1335 = vrot.lane.b32.xlu0 %v419, 96
    %v1336 = vpop.permute.xlu0 %1335
    %1337 = vrot.lane.b32.xlu0 %v424, 96
    %v1338 = vpop.permute.xlu0 %1337
    %1339 = vrot.lane.b32.xlu0 %v429, 96
    %v1340 = vpop.permute.xlu0 %1339
    %1341 = vrot.lane.b32.xlu0 %v434, 96
    %v1342 = vpop.permute.xlu0 %1341
    %1343 = vrot.lane.b32.xlu0 %v439, 96
    %v1344 = vpop.permute.xlu0 %1343
    %v1345 = vsel %vm506, %v1314, 0
    %v1347 = vsel %vm506, %v1316, 0
    %v1349 = vsel %vm506, %v1318, 0
    %v1351 = vsel %vm506, %v1320, 0
    %v1353 = vsel %vm506, %v1322, 0
    %v1355 = vsel %vm506, %v1324, 0
    %v1357 = vsel %vm506, %v1326, 0
    %v1359 = vsel %vm506, %v1328, 0
    %v1361 = vsel %vm506, %v1330, 0
    %v1363 = vsel %vm506, %v1332, 0
    %v1365 = vsel %vm506, %v1334, 0
    %v1367 = vsel %vm506, %v1336, 0
    %v1369 = vsel %vm506, %v1338, 0
    %v1371 = vsel %vm506, %v1340, 0
    %v1373 = vsel %vm506, %v1342, 0
    %v1375 = vsel %vm506, %v1344, 0
    %1377 = vmatprep.subr.mxu0 0.0
    %1378 = vmatpush1.xpose.msra.mxu0 %v539
    %1379 = vmatprep.subr.mxu0 0.0
    %1380 = vmatpush1.xpose.msra.mxu0 %v541
    %1381 = vmatprep.subr.mxu0 0.0
    %1382 = vmatpush1.xpose.msra.mxu0 %v543
    %1383 = vmatprep.subr.mxu0 0.0
    %1384 = vmatpush1.xpose.msra.mxu0 %v545
    %1385 = vmatprep.subr.mxu0 0.0
    %1386 = vmatpush1.xpose.msra.mxu0 %v547
    %1387 = vmatprep.subr.mxu0 0.0
    %1388 = vmatpush1.xpose.msra.mxu0 %v549
    %1389 = vmatprep.subr.mxu0 0.0
    %1390 = vmatpush1.xpose.msra.mxu0 %v551
    %1391 = vmatprep.subr.mxu0 0.0
    %1392 = vmatpush1.xpose.msra.mxu0 %v553
    %1393 = vmatprep.subr.mxu0 0.0
    %1394 = vmatpush1.xpose.msra.mxu0 %v555
    %1395 = vmatprep.subr.mxu0 0.0
    %1396 = vmatpush1.xpose.msra.mxu0 %v557
    %1397 = vmatprep.subr.mxu0 0.0
    %1398 = vmatpush1.xpose.msra.mxu0 %v559
    %1399 = vmatprep.subr.mxu0 0.0
    %1400 = vmatpush1.xpose.msra.mxu0 %v561
    %1401 = vmatprep.subr.mxu0 0.0
    %1402 = vmatpush1.xpose.msra.mxu0 %v563
    %1403 = vmatprep.subr.mxu0 0.0
    %1404 = vmatpush1.xpose.msra.mxu0 %v565
    %1405 = vmatprep.subr.mxu0 0.0
    %1406 = vmatpush1.xpose.msra.mxu0 %v567
    %1407 = vmatprep.subr.mxu0 0.0
    %1408 = vmatpush1.xpose.msra.mxu0 %v569
    %1409 = vmatprep.subr.mxu0 0.0
    %1410 = vmatpush1.xpose.msra.mxu0 0.0
    %1411 = vmatprep.subr.mxu0 0.0
    %1412 = vmatpush1.xpose.msra.mxu0 0.0
    %1413 = vmatprep.subr.mxu0 0.0
    %1414 = vmatpush1.xpose.msra.mxu0 0.0
    %1415 = vmatprep.subr.mxu0 0.0
    %1416 = vmatpush1.xpose.msra.mxu0 0.0
    %1417 = vmatprep.subr.mxu0 0.0
    %1418 = vmatpush1.xpose.msra.mxu0 0.0
    %1419 = vmatprep.subr.mxu0 0.0
    %1420 = vmatpush1.xpose.msra.mxu0 0.0
    %1421 = vmatprep.subr.mxu0 0.0
    %1422 = vmatpush1.xpose.msra.mxu0 0.0
    %1423 = vmatprep.subr.mxu0 0.0
    %1424 = vmatpush1.xpose.msra.mxu0 0.0
    %1425 = vmatprep.subr.mxu0 0.0
    %1426 = vmatpush1.xpose.msra.mxu0 0.0
    %1427 = vmatprep.subr.mxu0 0.0
    %1428 = vmatpush1.xpose.msra.mxu0 0.0
    %1429 = vmatprep.subr.mxu0 0.0
    %1430 = vmatpush1.xpose.msra.mxu0 0.0
    %1431 = vmatprep.subr.mxu0 0.0
    %1432 = vmatpush1.xpose.msra.mxu0 0.0
    %1433 = vmatprep.subr.mxu0 0.0
    %1434 = vmatpush1.xpose.msra.mxu0 0.0
    %1435 = vmatprep.subr.mxu0 0.0
    %1436 = vmatpush1.xpose.msra.mxu0 0.0
    %1437 = vmatprep.subr.mxu0 0.0
    %1438 = vmatpush1.xpose.msra.mxu0 0.0
    %1439 = vmatprep.subr.mxu0 0.0
    %1440 = vmatpush1.xpose.msra.mxu0 0.0
    %1441 = vmatprep.mubr.f32.mxu0 0.0
    %1442 = vmatmul.mubr.f32.gmra.mrb[0].mxu0 %v1345
    %v1443 = vpop.f32.mrb[0].mxu0
    %v1444 = vadd.f32 %v1297, %v1443
    %v1445 = vpop.f32.mrb[0].mxu0
    %1446 = vmatprep.mubr.f32.mxu0 0.0
    %1447 = vmatmul.mubr.f32.gmra.mrb[0].mxu0 %v1347
    %v1448 = vpop.f32.mrb[0].mxu0
    %v1449 = vadd.f32 %v1298, %v1448
    %v1450 = vpop.f32.mrb[0].mxu0
    %1451 = vmatprep.mubr.f32.mxu0 0.0
    %1452 = vmatmul.mubr.f32.gmra.mrb[0].mxu0 %v1349
    %v1453 = vpop.f32.mrb[0].mxu0
    %v1454 = vadd.f32 %v1299, %v1453
    %v1455 = vpop.f32.mrb[0].mxu0
    %1456 = vmatprep.mubr.f32.mxu0 0.0
    %1457 = vmatmul.mubr.f32.gmra.mrb[0].mxu0 %v1351
    %v1458 = vpop.f32.mrb[0].mxu0
    %v1459 = vadd.f32 %v1300, %v1458
    %v1460 = vpop.f32.mrb[0].mxu0
    %1461 = vmatprep.mubr.f32.mxu0 0.0
    %1462 = vmatmul.mubr.f32.gmra.mrb[0].mxu0 %v1353
    %v1463 = vpop.f32.mrb[0].mxu0
    %v1464 = vadd.f32 %v1301, %v1463
    %v1465 = vpop.f32.mrb[0].mxu0
    %1466 = vmatprep.mubr.f32.mxu0 0.0
    %1467 = vmatmul.mubr.f32.gmra.mrb[0].mxu0 %v1355
    %v1468 = vpop.f32.mrb[0].mxu0
    %v1469 = vadd.f32 %v1302, %v1468
    %v1470 = vpop.f32.mrb[0].mxu0
    %1471 = vmatprep.mubr.f32.mxu0 0.0
    %1472 = vmatmul.mubr.f32.gmra.mrb[0].mxu0 %v1357
    %v1473 = vpop.f32.mrb[0].mxu0
    %v1474 = vadd.f32 %v1303, %v1473
    %v1475 = vpop.f32.mrb[0].mxu0
    %1476 = vmatprep.mubr.f32.mxu0 0.0
    %1477 = vmatmul.mubr.f32.gmra.mrb[0].mxu0 %v1359
    %v1478 = vpop.f32.mrb[0].mxu0
    %v1479 = vadd.f32 %v1304, %v1478
    %v1480 = vpop.f32.mrb[0].mxu0
    %1481 = vmatprep.mubr.f32.mxu0 0.0
    %1482 = vmatmul.mubr.f32.gmra.mrb[0].mxu0 %v1361
    %v1483 = vpop.f32.mrb[0].mxu0
    %v1484 = vadd.f32 %v1305, %v1483
    %v1485 = vpop.f32.mrb[0].mxu0
    %1486 = vmatprep.mubr.f32.mxu0 0.0
    %1487 = vmatmul.mubr.f32.gmra.mrb[0].mxu0 %v1363
    %v1488 = vpop.f32.mrb[0].mxu0
    %v1489 = vadd.f32 %v1306, %v1488
    %v1490 = vpop.f32.mrb[0].mxu0
    %1491 = vmatprep.mubr.f32.mxu0 0.0
    %1492 = vmatmul.mubr.f32.gmra.mrb[0].mxu0 %v1365
    %v1493 = vpop.f32.mrb[0].mxu0
    %v1494 = vadd.f32 %v1307, %v1493
    %v1495 = vpop.f32.mrb[0].mxu0
    %1496 = vmatprep.mubr.f32.mxu0 0.0
    %1497 = vmatmul.mubr.f32.gmra.mrb[0].mxu0 %v1367
    %v1498 = vpop.f32.mrb[0].mxu0
    %v1499 = vadd.f32 %v1308, %v1498
    %v1500 = vpop.f32.mrb[0].mxu0
    %1501 = vmatprep.mubr.f32.mxu0 0.0
    %1502 = vmatmul.mubr.f32.gmra.mrb[0].mxu0 %v1369
    %v1503 = vpop.f32.mrb[0].mxu0
    %v1504 = vadd.f32 %v1309, %v1503
    %v1505 = vpop.f32.mrb[0].mxu0
    %1506 = vmatprep.mubr.f32.mxu0 0.0
    %1507 = vmatmul.mubr.f32.gmra.mrb[0].mxu0 %v1371
    %v1508 = vpop.f32.mrb[0].mxu0
    %v1509 = vadd.f32 %v1310, %v1508
    %v1510 = vpop.f32.mrb[0].mxu0
    %1511 = vmatprep.mubr.f32.mxu0 0.0
    %1512 = vmatmul.mubr.f32.gmra.mrb[0].mxu0 %v1373
    %v1513 = vpop.f32.mrb[0].mxu0
    %v1514 = vadd.f32 %v1311, %v1513
    %v1515 = vpop.f32.mrb[0].mxu0
    %1516 = vmatprep.mubr.f32.mxu0 0.0
    %1517 = vmatmul.mubr.f32.gmra.mrb[0].mxu0 %v1375
    %v1518 = vpop.f32.mrb[0].mxu0
    %v1519 = vadd.f32 %v1312, %v1518
    %v1520 = vpop.f32.mrb[0].mxu0
    %1521 = vdwg.mxu0
    %1522 = vmax.xlane.f32.xlu0 %v1444
    %v1523 = vpop.xlane.xlu0 %1522
    %1524 = vmax.xlane.f32.xlu0 %v1449
    %v1525 = vpop.xlane.xlu0 %1524
    %1526 = vmax.xlane.f32.xlu0 %v1454
    %v1527 = vpop.xlane.xlu0 %1526
    %1528 = vmax.xlane.f32.xlu0 %v1459
    %v1529 = vpop.xlane.xlu0 %1528
    %1530 = vmax.xlane.f32.xlu0 %v1464
    %v1531 = vpop.xlane.xlu0 %1530
    %1532 = vmax.xlane.f32.xlu0 %v1469
    %v1533 = vpop.xlane.xlu0 %1532
    %1534 = vmax.xlane.f32.xlu0 %v1474
    %v1535 = vpop.xlane.xlu0 %1534
    %1536 = vmax.xlane.f32.xlu0 %v1479
    %v1537 = vpop.xlane.xlu0 %1536
    %1538 = vmax.xlane.f32.xlu0 %v1484
    %v1539 = vpop.xlane.xlu0 %1538
    %1540 = vmax.xlane.f32.xlu0 %v1489
    %v1541 = vpop.xlane.xlu0 %1540
    %1542 = vmax.xlane.f32.xlu0 %v1494
    %v1543 = vpop.xlane.xlu0 %1542
    %1544 = vmax.xlane.f32.xlu0 %v1499
    %v1545 = vpop.xlane.xlu0 %1544
    %1546 = vmax.xlane.f32.xlu0 %v1504
    %v1547 = vpop.xlane.xlu0 %1546
    %1548 = vmax.xlane.f32.xlu0 %v1509
    %v1549 = vpop.xlane.xlu0 %1548
    %1550 = vmax.xlane.f32.xlu0 %v1514
    %v1551 = vpop.xlane.xlu0 %1550
    %1552 = vmax.xlane.f32.xlu0 %v1519
    %v1553 = vpop.xlane.xlu0 %1552
    %v1554 = vsub.f32 %v1444, %v1523
    %v1555 = vsub.f32 %v1449, %v1525
    %v1556 = vsub.f32 %v1454, %v1527
    %v1557 = vsub.f32 %v1459, %v1529
    %v1558 = vsub.f32 %v1464, %v1531
    %v1559 = vsub.f32 %v1469, %v1533
    %v1560 = vsub.f32 %v1474, %v1535
    %v1561 = vsub.f32 %v1479, %v1537
    %v1562 = vsub.f32 %v1484, %v1539
    %v1563 = vsub.f32 %v1489, %v1541
    %v1564 = vsub.f32 %v1494, %v1543
    %v1565 = vsub.f32 %v1499, %v1545
    %v1566 = vsub.f32 %v1504, %v1547
    %v1567 = vsub.f32 %v1509, %v1549
    %v1568 = vsub.f32 %v1514, %v1551
    %v1569 = vsub.f32 %v1519, %v1553
    %v1570 = vmul.f32 %v1554, 1.442695
    %v1571 = vpow.pop %v1570
    %v1572 = vmul.f32 %v1555, 1.442695
    %v1573 = vpow.pop %v1572
    %v1574 = vmul.f32 %v1556, 1.442695
    %v1575 = vpow.pop %v1574
    %v1576 = vmul.f32 %v1557, 1.442695
    %v1577 = vpow.pop %v1576
    %v1578 = vmul.f32 %v1558, 1.442695
    %v1579 = vpow.pop %v1578
    %v1580 = vmul.f32 %v1559, 1.442695
    %v1581 = vpow.pop %v1580
    %v1582 = vmul.f32 %v1560, 1.442695
    %v1583 = vpow.pop %v1582
    %v1584 = vmul.f32 %v1561, 1.442695
    %v1585 = vpow.pop %v1584
    %v1586 = vmul.f32 %v1562, 1.442695
    %v1587 = vpow.pop %v1586
    %v1588 = vmul.f32 %v1563, 1.442695
    %v1589 = vpow.pop %v1588
    %v1590 = vmul.f32 %v1564, 1.442695
    %v1591 = vpow.pop %v1590
    %v1592 = vmul.f32 %v1565, 1.442695
    %v1593 = vpow.pop %v1592
    %v1594 = vmul.f32 %v1566, 1.442695
    %v1595 = vpow.pop %v1594
    %v1596 = vmul.f32 %v1567, 1.442695
    %v1597 = vpow.pop %v1596
    %v1598 = vmul.f32 %v1568, 1.442695
    %v1599 = vpow.pop %v1598
    %v1600 = vmul.f32 %v1569, 1.442695
    %v1601 = vpow.pop %v1600
    %1602 = vadd.xlane.f32.xlu0 %v1571
    %v1603 = vpop.xlane.xlu0 %1602
    %1604 = vadd.xlane.f32.xlu0 %v1573
    %v1605 = vpop.xlane.xlu0 %1604
    %1606 = vadd.xlane.f32.xlu0 %v1575
    %v1607 = vpop.xlane.xlu0 %1606
    %1608 = vadd.xlane.f32.xlu0 %v1577
    %v1609 = vpop.xlane.xlu0 %1608
    %1610 = vadd.xlane.f32.xlu0 %v1579
    %v1611 = vpop.xlane.xlu0 %1610
    %1612 = vadd.xlane.f32.xlu0 %v1581
    %v1613 = vpop.xlane.xlu0 %1612
    %1614 = vadd.xlane.f32.xlu0 %v1583
    %v1615 = vpop.xlane.xlu0 %1614
    %1616 = vadd.xlane.f32.xlu0 %v1585
    %v1617 = vpop.xlane.xlu0 %1616
    %1618 = vadd.xlane.f32.xlu0 %v1587
    %v1619 = vpop.xlane.xlu0 %1618
    %1620 = vadd.xlane.f32.xlu0 %v1589
    %v1621 = vpop.xlane.xlu0 %1620
    %1622 = vadd.xlane.f32.xlu0 %v1591
    %v1623 = vpop.xlane.xlu0 %1622
    %1624 = vadd.xlane.f32.xlu0 %v1593
    %v1625 = vpop.xlane.xlu0 %1624
    %1626 = vadd.xlane.f32.xlu0 %v1595
    %v1627 = vpop.xlane.xlu0 %1626
    %1628 = vadd.xlane.f32.xlu0 %v1597
    %v1629 = vpop.xlane.xlu0 %1628
    %1630 = vadd.xlane.f32.xlu0 %v1599
    %v1631 = vpop.xlane.xlu0 %1630
    %1632 = vadd.xlane.f32.xlu0 %v1601
    %v1633 = vpop.xlane.xlu0 %1632
    %v1634 = vrcp.pop %v1603
    %v1635 = vrcp.pop %v1605
    %v1636 = vrcp.pop %v1607
    %v1637 = vrcp.pop %v1609
    %v1638 = vrcp.pop %v1611
    %v1639 = vrcp.pop %v1613
    %v1640 = vrcp.pop %v1615
    %v1641 = vrcp.pop %v1617
    %v1642 = vrcp.pop %v1619
    %v1643 = vrcp.pop %v1621
    %v1644 = vrcp.pop %v1623
    %v1645 = vrcp.pop %v1625
    %v1646 = vrcp.pop %v1627
    %v1647 = vrcp.pop %v1629
    %v1648 = vrcp.pop %v1631
    %v1649 = vrcp.pop %v1633
    %v1650 = vmul.f32 %v1571, %v1634
    %v1651 = vmul.f32 %v1573, %v1635
    %v1652 = vmul.f32 %v1575, %v1636
    %v1653 = vmul.f32 %v1577, %v1637
    %v1654 = vmul.f32 %v1579, %v1638
    %v1655 = vmul.f32 %v1581, %v1639
    %v1656 = vmul.f32 %v1583, %v1640
    %v1657 = vmul.f32 %v1585, %v1641
    %v1658 = vmul.f32 %v1587, %v1642
    %v1659 = vmul.f32 %v1589, %v1643
    %v1660 = vmul.f32 %v1591, %v1644
    %v1661 = vmul.f32 %v1593, %v1645
    %v1662 = vmul.f32 %v1595, %v1646
    %v1663 = vmul.f32 %v1597, %v1647
    %v1664 = vmul.f32 %v1599, %v1648
    %v1665 = vmul.f32 %v1601, %v1649
    %s1666 = sld [smem:[#allocation3 + $0x2]]
    %v1667 = vstv %s1666
    %v1668 = vmul.f32 %v1667, %v1650
    %v1669 = vmul.f32 %v1667, %v1651
    %v1670 = vmul.f32 %v1667, %v1652
    %v1671 = vmul.f32 %v1667, %v1653
    %v1672 = vmul.f32 %v1667, %v1654
    %v1673 = vmul.f32 %v1667, %v1655
    %v1674 = vmul.f32 %v1667, %v1656
    %v1675 = vmul.f32 %v1667, %v1657
    %v1676 = vmul.f32 %v1667, %v1658
    %v1677 = vmul.f32 %v1667, %v1659
    %v1678 = vmul.f32 %v1667, %v1660
    %v1679 = vmul.f32 %v1667, %v1661
    %v1680 = vmul.f32 %v1667, %v1662
    %v1681 = vmul.f32 %v1667, %v1663
    %v1682 = vmul.f32 %v1667, %v1664
    %v1683 = vmul.f32 %v1667, %v1665
    %v1684 = vadd.f32 %v1281, %v1668
    %v1685 = vadd.f32 %v1282, %v1669
    %v1686 = vadd.f32 %v1283, %v1670
    %v1687 = vadd.f32 %v1284, %v1671
    %v1688 = vadd.f32 %v1285, %v1672
    %v1689 = vadd.f32 %v1286, %v1673
    %v1690 = vadd.f32 %v1287, %v1674
    %v1691 = vadd.f32 %v1288, %v1675
    %v1692 = vadd.f32 %v1289, %v1676
    %v1693 = vadd.f32 %v1290, %v1677
    %v1694 = vadd.f32 %v1291, %v1678
    %v1695 = vadd.f32 %v1292, %v1679
    %v1696 = vadd.f32 %v1293, %v1680
    %v1697 = vadd.f32 %v1294, %v1681
    %v1698 = vadd.f32 %v1295, %v1682
    %v1699 = vadd.f32 %v1296, %v1683
    %1700 = vrot.lane.b32.xlu0 %v364, 64
    %v1701 = vpop.permute.xlu0 %1700
    %1702 = vrot.lane.b32.xlu0 %v369, 64
    %v1703 = vpop.permute.xlu0 %1702
    %1704 = vrot.lane.b32.xlu0 %v374, 64
    %v1705 = vpop.permute.xlu0 %1704
    %1706 = vrot.lane.b32.xlu0 %v379, 64
    %v1707 = vpop.permute.xlu0 %1706
    %1708 = vrot.lane.b32.xlu0 %v384, 64
    %v1709 = vpop.permute.xlu0 %1708
    %1710 = vrot.lane.b32.xlu0 %v389, 64
    %v1711 = vpop.permute.xlu0 %1710
    %1712 = vrot.lane.b32.xlu0 %v394, 64
    %v1713 = vpop.permute.xlu0 %1712
    %1714 = vrot.lane.b32.xlu0 %v399, 64
    %v1715 = vpop.permute.xlu0 %1714
    %1716 = vrot.lane.b32.xlu0 %v404, 64
    %v1717 = vpop.permute.xlu0 %1716
    %1718 = vrot.lane.b32.xlu0 %v409, 64
    %v1719 = vpop.permute.xlu0 %1718
    %1720 = vrot.lane.b32.xlu0 %v414, 64
    %v1721 = vpop.permute.xlu0 %1720
    %1722 = vrot.lane.b32.xlu0 %v419, 64
    %v1723 = vpop.permute.xlu0 %1722
    %1724 = vrot.lane.b32.xlu0 %v424, 64
    %v1725 = vpop.permute.xlu0 %1724
    %1726 = vrot.lane.b32.xlu0 %v429, 64
    %v1727 = vpop.permute.xlu0 %1726
    %1728 = vrot.lane.b32.xlu0 %v434, 64
    %v1729 = vpop.permute.xlu0 %1728
    %1730 = vrot.lane.b32.xlu0 %v439, 64
    %v1731 = vpop.permute.xlu0 %1730
    %1748 = vmatprep.subr.mxu0 0.0
    %1749 = vmatpush1.msra.mxu0 %v1701
    %1750 = vmatprep.subr.mxu0 0.0
    %1751 = vmatpush1.msra.mxu0 %v1703
    %1752 = vmatprep.subr.mxu0 0.0
    %1753 = vmatpush1.msra.mxu0 %v1705
    %1754 = vmatprep.subr.mxu0 0.0
    %1755 = vmatpush1.msra.mxu0 %v1707
    %1756 = vmatprep.subr.mxu0 0.0
    %1757 = vmatpush1.msra.mxu0 %v1709
    %1758 = vmatprep.subr.mxu0 0.0
    %1759 = vmatpush1.msra.mxu0 %v1711
    %1760 = vmatprep.subr.mxu0 0.0
    %1761 = vmatpush1.msra.mxu0 %v1713
    %1762 = vmatprep.subr.mxu0 0.0
    %1763 = vmatpush1.msra.mxu0 %v1715
    %1764 = vmatprep.subr.mxu0 0.0
    %1765 = vmatpush1.msra.mxu0 %v1717
    %1766 = vmatprep.subr.mxu0 0.0
    %1767 = vmatpush1.msra.mxu0 %v1719
    %1768 = vmatprep.subr.mxu0 0.0
    %1769 = vmatpush1.msra.mxu0 %v1721
    %1770 = vmatprep.subr.mxu0 0.0
    %1771 = vmatpush1.msra.mxu0 %v1723
    %1772 = vmatprep.subr.mxu0 0.0
    %1773 = vmatpush1.msra.mxu0 %v1725
    %1774 = vmatprep.subr.mxu0 0.0
    %1775 = vmatpush1.msra.mxu0 %v1727
    %1776 = vmatprep.subr.mxu0 0.0
    %1777 = vmatpush1.msra.mxu0 %v1729
    %1778 = vmatprep.subr.mxu0 0.0
    %1779 = vmatpush1.msra.mxu0 %v1731
    %1780 = vmatprep.subr.mxu0 0.0
    %1781 = vmatpush1.msra.mxu0 0.0
    %1782 = vmatprep.subr.mxu0 0.0
    %1783 = vmatpush1.msra.mxu0 0.0
    %1784 = vmatprep.subr.mxu0 0.0
    %1785 = vmatpush1.msra.mxu0 0.0
    %1786 = vmatprep.subr.mxu0 0.0
    %1787 = vmatpush1.msra.mxu0 0.0
    %1788 = vmatprep.subr.mxu0 0.0
    %1789 = vmatpush1.msra.mxu0 0.0
    %1790 = vmatprep.subr.mxu0 0.0
    %1791 = vmatpush1.msra.mxu0 0.0
    %1792 = vmatprep.subr.mxu0 0.0
    %1793 = vmatpush1.msra.mxu0 0.0
    %1794 = vmatprep.subr.mxu0 0.0
    %1795 = vmatpush1.msra.mxu0 0.0
    %1796 = vmatprep.subr.mxu0 0.0
    %1797 = vmatpush1.msra.mxu0 0.0
    %1798 = vmatprep.subr.mxu0 0.0
    %1799 = vmatpush1.msra.mxu0 0.0
    %1800 = vmatprep.subr.mxu0 0.0
    %1801 = vmatpush1.msra.mxu0 0.0
    %1802 = vmatprep.subr.mxu0 0.0
    %1803 = vmatpush1.msra.mxu0 0.0
    %1804 = vmatprep.subr.mxu0 0.0
    %1805 = vmatpush1.msra.mxu0 0.0
    %1806 = vmatprep.subr.mxu0 0.0
    %1807 = vmatpush1.msra.mxu0 0.0
    %1808 = vmatprep.subr.mxu0 0.0
    %1809 = vmatpush1.msra.mxu0 0.0
    %1810 = vmatprep.subr.mxu0 0.0
    %1811 = vmatpush1.msra.mxu0 0.0
    %1812 = vmatprep.mubr.f32.mxu0 0.0
    %1813 = vmatmul.mubr.f32.gmra.mrb[0].mxu0 %v1684
    %v1814 = vpop.f32.mrb[0].mxu0
    %v1815 = vadd.f32 0.0, %v1814
    %v1816 = vpop.f32.mrb[0].mxu0
    %1817 = vmatprep.mubr.f32.mxu0 0.0
    %1818 = vmatmul.mubr.f32.gmra.mrb[0].mxu0 %v1685
    %v1819 = vpop.f32.mrb[0].mxu0
    %v1820 = vadd.f32 0.0, %v1819
    %v1821 = vpop.f32.mrb[0].mxu0
    %1822 = vmatprep.mubr.f32.mxu0 0.0
    %1823 = vmatmul.mubr.f32.gmra.mrb[0].mxu0 %v1686
    %v1824 = vpop.f32.mrb[0].mxu0
    %v1825 = vadd.f32 0.0, %v1824
    %v1826 = vpop.f32.mrb[0].mxu0
    %1827 = vmatprep.mubr.f32.mxu0 0.0
    %1828 = vmatmul.mubr.f32.gmra.mrb[0].mxu0 %v1687
    %v1829 = vpop.f32.mrb[0].mxu0
    %v1830 = vadd.f32 0.0, %v1829
    %v1831 = vpop.f32.mrb[0].mxu0
    %1832 = vmatprep.mubr.f32.mxu0 0.0
    %1833 = vmatmul.mubr.f32.gmra.mrb[0].mxu0 %v1688
    %v1834 = vpop.f32.mrb[0].mxu0
    %v1835 = vadd.f32 0.0, %v1834
    %v1836 = vpop.f32.mrb[0].mxu0
    %1837 = vmatprep.mubr.f32.mxu0 0.0
    %1838 = vmatmul.mubr.f32.gmra.mrb[0].mxu0 %v1689
    %v1839 = vpop.f32.mrb[0].mxu0
    %v1840 = vadd.f32 0.0, %v1839
    %v1841 = vpop.f32.mrb[0].mxu0
    %1842 = vmatprep.mubr.f32.mxu0 0.0
    %1843 = vmatmul.mubr.f32.gmra.mrb[0].mxu0 %v1690
    %v1844 = vpop.f32.mrb[0].mxu0
    %v1845 = vadd.f32 0.0, %v1844
    %v1846 = vpop.f32.mrb[0].mxu0
    %1847 = vmatprep.mubr.f32.mxu0 0.0
    %1848 = vmatmul.mubr.f32.gmra.mrb[0].mxu0 %v1691
    %v1849 = vpop.f32.mrb[0].mxu0
    %v1850 = vadd.f32 0.0, %v1849
    %v1851 = vpop.f32.mrb[0].mxu0
    %1852 = vmatprep.mubr.f32.mxu0 0.0
    %1853 = vmatmul.mubr.f32.gmra.mrb[0].mxu0 %v1692
    %v1854 = vpop.f32.mrb[0].mxu0
    %v1855 = vadd.f32 0.0, %v1854
    %v1856 = vpop.f32.mrb[0].mxu0
    %1857 = vmatprep.mubr.f32.mxu0 0.0
    %1858 = vmatmul.mubr.f32.gmra.mrb[0].mxu0 %v1693
    %v1859 = vpop.f32.mrb[0].mxu0
    %v1860 = vadd.f32 0.0, %v1859
    %v1861 = vpop.f32.mrb[0].mxu0
    %1862 = vmatprep.mubr.f32.mxu0 0.0
    %1863 = vmatmul.mubr.f32.gmra.mrb[0].mxu0 %v1694
    %v1864 = vpop.f32.mrb[0].mxu0
    %v1865 = vadd.f32 0.0, %v1864
    %v1866 = vpop.f32.mrb[0].mxu0
    %1867 = vmatprep.mubr.f32.mxu0 0.0
    %1868 = vmatmul.mubr.f32.gmra.mrb[0].mxu0 %v1695
    %v1869 = vpop.f32.mrb[0].mxu0
    %v1870 = vadd.f32 0.0, %v1869
    %v1871 = vpop.f32.mrb[0].mxu0
    %1872 = vmatprep.mubr.f32.mxu0 0.0
    %1873 = vmatmul.mubr.f32.gmra.mrb[0].mxu0 %v1696
    %v1874 = vpop.f32.mrb[0].mxu0
    %v1875 = vadd.f32 0.0, %v1874
    %v1876 = vpop.f32.mrb[0].mxu0
    %1877 = vmatprep.mubr.f32.mxu0 0.0
    %1878 = vmatmul.mubr.f32.gmra.mrb[0].mxu0 %v1697
    %v1879 = vpop.f32.mrb[0].mxu0
    %v1880 = vadd.f32 0.0, %v1879
    %v1881 = vpop.f32.mrb[0].mxu0
    %1882 = vmatprep.mubr.f32.mxu0 0.0
    %1883 = vmatmul.mubr.f32.gmra.mrb[0].mxu0 %v1698
    %v1884 = vpop.f32.mrb[0].mxu0
    %v1885 = vadd.f32 0.0, %v1884
    %v1886 = vpop.f32.mrb[0].mxu0
    %1887 = vmatprep.mubr.f32.mxu0 0.0
    %1888 = vmatmul.mubr.f32.gmra.mrb[0].mxu0 %v1699
    %v1889 = vpop.f32.mrb[0].mxu0
    %v1890 = vadd.f32 0.0, %v1889
    %v1891 = vpop.f32.mrb[0].mxu0
    %1892 = vdwg.mxu0
    %v1901 = vrot.slane %v1825, 7
    %vm1902 = vcmask 1041409
    %v1903 = vsel %vm1902, %v1901, %v1815
    %v1904 = vrot.slane %v1835, 6
    %vm1905 = vcmask 1042434
    %v1906 = vsel %vm1905, %v1904, %v1903
    %v1907 = vrot.slane %v1845, 5
    %vm1908 = vcmask 1043459
    %v1909 = vsel %vm1908, %v1907, %v1906
    %v1910 = vrot.slane %v1855, 4
    %vm1911 = vcmask 1044484
    %v1912 = vsel %vm1911, %v1910, %v1909
    %v1913 = vrot.slane %v1865, 3
    %vm1914 = vcmask 1045509
    %v1915 = vsel %vm1914, %v1913, %v1912
    %v1916 = vrot.slane %v1875, 2
    %vm1917 = vcmask 1046534
    %v1918 = vsel %vm1917, %v1916, %v1915
    %v1919 = vrot.slane %v1885, 1
    %vm1920 = vcmask 1047559
    %v1921 = vsel %vm1920, %v1919, %v1918
    %1923 = vst.msk [vmem:[#allocation2] sm:$0xff] %vm506, %v1921
    %v1924 = vrot.slane %v1815, 1
    %v1925 = vsel %vm1902, %v1825, %v1924
    %v1926 = vrot.slane %v1835, 7
    %v1927 = vsel %vm1905, %v1926, %v1925
    %v1928 = vrot.slane %v1845, 6
    %v1929 = vsel %vm1908, %v1928, %v1927
    %v1930 = vrot.slane %v1855, 5
    %v1931 = vsel %vm1911, %v1930, %v1929
    %v1932 = vrot.slane %v1865, 4
    %v1933 = vsel %vm1914, %v1932, %v1931
    %v1934 = vrot.slane %v1875, 3
    %v1935 = vsel %vm1917, %v1934, %v1933
    %v1936 = vrot.slane %v1885, 2
    %v1937 = vsel %vm1920, %v1936, %v1935
    %1938 = vrot.lane.b32.xlu0 %v1937, 16
    %v1939 = vpop.permute.xlu0 %1938
    %vm1941 = vcmask 261248
    %1942 = vst.msk [vmem:[#allocation2] sm:$0xff] %vm1941, %v1939
    %v1943 = vrot.slane %v1815, 2
    %v1944 = vrot.slane %v1825, 1
    %v1945 = vsel %vm1902, %v1944, %v1943
    %v1946 = vsel %vm1905, %v1835, %v1945
    %v1947 = vrot.slane %v1845, 7
    %v1948 = vsel %vm1908, %v1947, %v1946
    %v1949 = vrot.slane %v1855, 6
    %v1950 = vsel %vm1911, %v1949, %v1948
    %v1951 = vrot.slane %v1865, 5
    %v1952 = vsel %vm1914, %v1951, %v1950
    %v1953 = vrot.slane %v1875, 4
    %v1954 = vsel %vm1917, %v1953, %v1952
    %v1955 = vrot.slane %v1885, 3
    %v1956 = vsel %vm1920, %v1955, %v1954
    %1957 = vrot.lane.b32.xlu0 %v1956, 32
    %v1958 = vpop.permute.xlu0 %1957
    %vm1960 = vcmask 392448
    %1961 = vst.msk [vmem:[#allocation2] sm:$0xff] %vm1960, %v1958
    %v1962 = vrot.slane %v1815, 3
    %v1963 = vrot.slane %v1825, 2
    %v1964 = vsel %vm1902, %v1963, %v1962
    %v1965 = vrot.slane %v1835, 1
    %v1966 = vsel %vm1905, %v1965, %v1964
    %v1967 = vsel %vm1908, %v1845, %v1966
    %v1968 = vrot.slane %v1855, 7
    %v1969 = vsel %vm1911, %v1968, %v1967
    %v1970 = vrot.slane %v1865, 6
    %v1971 = vsel %vm1914, %v1970, %v1969
    %v1972 = vrot.slane %v1875, 5
    %v1973 = vsel %vm1917, %v1972, %v1971
    %v1974 = vrot.slane %v1885, 4
    %v1975 = vsel %vm1920, %v1974, %v1973
    %1976 = vrot.lane.b32.xlu0 %v1975, 48
    %v1977 = vpop.permute.xlu0 %1976
    %vm1979 = vcmask 523648
    %1980 = vst.msk [vmem:[#allocation2] sm:$0xff] %vm1979, %v1977
    %v1981 = vrot.slane %v1815, 4
    %v1982 = vrot.slane %v1825, 3
    %v1983 = vsel %vm1902, %v1982, %v1981
    %v1984 = vrot.slane %v1835, 2
    %v1985 = vsel %vm1905, %v1984, %v1983
    %v1986 = vrot.slane %v1845, 1
    %v1987 = vsel %vm1908, %v1986, %v1985
    %v1988 = vsel %vm1911, %v1855, %v1987
    %v1989 = vrot.slane %v1865, 7
    %v1990 = vsel %vm1914, %v1989, %v1988
    %v1991 = vrot.slane %v1875, 6
    %v1992 = vsel %vm1917, %v1991, %v1990
    %v1993 = vrot.slane %v1885, 5
    %v1994 = vsel %vm1920, %v1993, %v1992
    %1995 = vrot.lane.b32.xlu0 %v1994, 64
    %v1996 = vpop.permute.xlu0 %1995
    %vm1998 = vcmask 654848
    %1999 = vst.msk [vmem:[#allocation2] sm:$0xff] %vm1998, %v1996
    %v2000 = vrot.slane %v1815, 5
    %v2001 = vrot.slane %v1825, 4
    %v2002 = vsel %vm1902, %v2001, %v2000
    %v2003 = vrot.slane %v1835, 3
    %v2004 = vsel %vm1905, %v2003, %v2002
    %v2005 = vrot.slane %v1845, 2
    %v2006 = vsel %vm1908, %v2005, %v2004
    %v2007 = vrot.slane %v1855, 1
    %v2008 = vsel %vm1911, %v2007, %v2006
    %v2009 = vsel %vm1914, %v1865, %v2008
    %v2010 = vrot.slane %v1875, 7
    %v2011 = vsel %vm1917, %v2010, %v2009
    %v2012 = vrot.slane %v1885, 6
    %v2013 = vsel %vm1920, %v2012, %v2011
    %2014 = vrot.lane.b32.xlu0 %v2013, 80
    %v2015 = vpop.permute.xlu0 %2014
    %vm2017 = vcmask 786048
    %2018 = vst.msk [vmem:[#allocation2] sm:$0xff] %vm2017, %v2015
    %v2019 = vrot.slane %v1815, 6
    %v2020 = vrot.slane %v1825, 5
    %v2021 = vsel %vm1902, %v2020, %v2019
    %v2022 = vrot.slane %v1835, 4
    %v2023 = vsel %vm1905, %v2022, %v2021
    %v2024 = vrot.slane %v1845, 3
    %v2025 = vsel %vm1908, %v2024, %v2023
    %v2026 = vrot.slane %v1855, 2
    %v2027 = vsel %vm1911, %v2026, %v2025
    %v2028 = vrot.slane %v1865, 1
    %v2029 = vsel %vm1914, %v2028, %v2027
    %v2030 = vsel %vm1917, %v1875, %v2029
    %v2031 = vrot.slane %v1885, 7
    %v2032 = vsel %vm1920, %v2031, %v2030
    %2033 = vrot.lane.b32.xlu0 %v2032, 96
    %v2034 = vpop.permute.xlu0 %2033
    %vm2036 = vcmask 917248
    %2037 = vst.msk [vmem:[#allocation2] sm:$0xff] %vm2036, %v2034
    %v2038 = vrot.slane %v1815, 7
    %v2039 = vrot.slane %v1825, 6
    %v2040 = vsel %vm1902, %v2039, %v2038
    %v2041 = vrot.slane %v1835, 5
    %v2042 = vsel %vm1905, %v2041, %v2040
    %v2043 = vrot.slane %v1845, 4
    %v2044 = vsel %vm1908, %v2043, %v2042
    %v2045 = vrot.slane %v1855, 3
    %v2046 = vsel %vm1911, %v2045, %v2044
    %v2047 = vrot.slane %v1865, 2
    %v2048 = vsel %vm1914, %v2047, %v2046
    %v2049 = vrot.slane %v1875, 1
    %v2050 = vsel %vm1917, %v2049, %v2048
    %v2051 = vsel %vm1920, %v1885, %v2050
    %2052 = vrot.lane.b32.xlu0 %v2051, 112
    %v2053 = vpop.permute.xlu0 %2052
    %vm2055 = vcmask 1048448
    %2056 = vst.msk [vmem:[#allocation2] sm:$0xff] %vm2055, %v2053
    %v2065 = vrot.slane %v1830, 7
    %v2066 = vsel %vm1902, %v2065, %v1820
    %v2067 = vrot.slane %v1840, 6
    %v2068 = vsel %vm1905, %v2067, %v2066
    %v2069 = vrot.slane %v1850, 5
    %v2070 = vsel %vm1908, %v2069, %v2068
    %v2071 = vrot.slane %v1860, 4
    %v2072 = vsel %vm1911, %v2071, %v2070
    %v2073 = vrot.slane %v1870, 3
    %v2074 = vsel %vm1914, %v2073, %v2072
    %v2075 = vrot.slane %v1880, 2
    %v2076 = vsel %vm1917, %v2075, %v2074
    %v2077 = vrot.slane %v1890, 1
    %v2078 = vsel %vm1920, %v2077, %v2076
    %2080 = vst.msk [vmem:[#allocation2 + $0x8] sm:$0xff] %vm506, %v2078
    %v2081 = vrot.slane %v1820, 1
    %v2082 = vsel %vm1902, %v1830, %v2081
    %v2083 = vrot.slane %v1840, 7
    %v2084 = vsel %vm1905, %v2083, %v2082
    %v2085 = vrot.slane %v1850, 6
    %v2086 = vsel %vm1908, %v2085, %v2084
    %v2087 = vrot.slane %v1860, 5
    %v2088 = vsel %vm1911, %v2087, %v2086
    %v2089 = vrot.slane %v1870, 4
    %v2090 = vsel %vm1914, %v2089, %v2088
    %v2091 = vrot.slane %v1880, 3
    %v2092 = vsel %vm1917, %v2091, %v2090
    %v2093 = vrot.slane %v1890, 2
    %v2094 = vsel %vm1920, %v2093, %v2092
    %2095 = vrot.lane.b32.xlu0 %v2094, 16
    %v2096 = vpop.permute.xlu0 %2095
    %2098 = vst.msk [vmem:[#allocation2 + $0x8] sm:$0xff] %vm1941, %v2096
    %v2099 = vrot.slane %v1820, 2
    %v2100 = vrot.slane %v1830, 1
    %v2101 = vsel %vm1902, %v2100, %v2099
    %v2102 = vsel %vm1905, %v1840, %v2101
    %v2103 = vrot.slane %v1850, 7
    %v2104 = vsel %vm1908, %v2103, %v2102
    %v2105 = vrot.slane %v1860, 6
    %v2106 = vsel %vm1911, %v2105, %v2104
    %v2107 = vrot.slane %v1870, 5
    %v2108 = vsel %vm1914, %v2107, %v2106
    %v2109 = vrot.slane %v1880, 4
    %v2110 = vsel %vm1917, %v2109, %v2108
    %v2111 = vrot.slane %v1890, 3
    %v2112 = vsel %vm1920, %v2111, %v2110
    %2113 = vrot.lane.b32.xlu0 %v2112, 32
    %v2114 = vpop.permute.xlu0 %2113
    %2116 = vst.msk [vmem:[#allocation2 + $0x8] sm:$0xff] %vm1960, %v2114
    %v2117 = vrot.slane %v1820, 3
    %v2118 = vrot.slane %v1830, 2
    %v2119 = vsel %vm1902, %v2118, %v2117
    %v2120 = vrot.slane %v1840, 1
    %v2121 = vsel %vm1905, %v2120, %v2119
    %v2122 = vsel %vm1908, %v1850, %v2121
    %v2123 = vrot.slane %v1860, 7
    %v2124 = vsel %vm1911, %v2123, %v2122
    %v2125 = vrot.slane %v1870, 6
    %v2126 = vsel %vm1914, %v2125, %v2124
    %v2127 = vrot.slane %v1880, 5
    %v2128 = vsel %vm1917, %v2127, %v2126
    %v2129 = vrot.slane %v1890, 4
    %v2130 = vsel %vm1920, %v2129, %v2128
    %2131 = vrot.lane.b32.xlu0 %v2130, 48
    %v2132 = vpop.permute.xlu0 %2131
    %2134 = vst.msk [vmem:[#allocation2 + $0x8] sm:$0xff] %vm1979, %v2132
    %v2135 = vrot.slane %v1820, 4
    %v2136 = vrot.slane %v1830, 3
    %v2137 = vsel %vm1902, %v2136, %v2135
    %v2138 = vrot.slane %v1840, 2
    %v2139 = vsel %vm1905, %v2138, %v2137
    %v2140 = vrot.slane %v1850, 1
    %v2141 = vsel %vm1908, %v2140, %v2139
    %v2142 = vsel %vm1911, %v1860, %v2141
    %v2143 = vrot.slane %v1870, 7
    %v2144 = vsel %vm1914, %v2143, %v2142
    %v2145 = vrot.slane %v1880, 6
    %v2146 = vsel %vm1917, %v2145, %v2144
    %v2147 = vrot.slane %v1890, 5
    %v2148 = vsel %vm1920, %v2147, %v2146
    %2149 = vrot.lane.b32.xlu0 %v2148, 64
    %v2150 = vpop.permute.xlu0 %2149
    %2152 = vst.msk [vmem:[#allocation2 + $0x8] sm:$0xff] %vm1998, %v2150
    %v2153 = vrot.slane %v1820, 5
    %v2154 = vrot.slane %v1830, 4
    %v2155 = vsel %vm1902, %v2154, %v2153
    %v2156 = vrot.slane %v1840, 3
    %v2157 = vsel %vm1905, %v2156, %v2155
    %v2158 = vrot.slane %v1850, 2
    %v2159 = vsel %vm1908, %v2158, %v2157
    %v2160 = vrot.slane %v1860, 1
    %v2161 = vsel %vm1911, %v2160, %v2159
    %v2162 = vsel %vm1914, %v1870, %v2161
    %v2163 = vrot.slane %v1880, 7
    %v2164 = vsel %vm1917, %v2163, %v2162
    %v2165 = vrot.slane %v1890, 6
    %v2166 = vsel %vm1920, %v2165, %v2164
    %2167 = vrot.lane.b32.xlu0 %v2166, 80
    %v2168 = vpop.permute.xlu0 %2167
    %2170 = vst.msk [vmem:[#allocation2 + $0x8] sm:$0xff] %vm2017, %v2168
    %v2171 = vrot.slane %v1820, 6
    %v2172 = vrot.slane %v1830, 5
    %v2173 = vsel %vm1902, %v2172, %v2171
    %v2174 = vrot.slane %v1840, 4
    %v2175 = vsel %vm1905, %v2174, %v2173
    %v2176 = vrot.slane %v1850, 3
    %v2177 = vsel %vm1908, %v2176, %v2175
    %v2178 = vrot.slane %v1860, 2
    %v2179 = vsel %vm1911, %v2178, %v2177
    %v2180 = vrot.slane %v1870, 1
    %v2181 = vsel %vm1914, %v2180, %v2179
    %v2182 = vsel %vm1917, %v1880, %v2181
    %v2183 = vrot.slane %v1890, 7
    %v2184 = vsel %vm1920, %v2183, %v2182
    %2185 = vrot.lane.b32.xlu0 %v2184, 96
    %v2186 = vpop.permute.xlu0 %2185
    %2188 = vst.msk [vmem:[#allocation2 + $0x8] sm:$0xff] %vm2036, %v2186
    %v2189 = vrot.slane %v1820, 7
    %v2190 = vrot.slane %v1830, 6
    %v2191 = vsel %vm1902, %v2190, %v2189
    %v2192 = vrot.slane %v1840, 5
    %v2193 = vsel %vm1905, %v2192, %v2191
    %v2194 = vrot.slane %v1850, 4
    %v2195 = vsel %vm1908, %v2194, %v2193
    %v2196 = vrot.slane %v1860, 3
    %v2197 = vsel %vm1911, %v2196, %v2195
    %v2198 = vrot.slane %v1870, 2
    %v2199 = vsel %vm1914, %v2198, %v2197
    %v2200 = vrot.slane %v1880, 1
    %v2201 = vsel %vm1917, %v2200, %v2199
    %v2202 = vsel %vm1920, %v1890, %v2201
    %2203 = vrot.lane.b32.xlu0 %v2202, 112
    %v2204 = vpop.permute.xlu0 %2203
    %2206 = vst.msk [vmem:[#allocation2 + $0x8] sm:$0xff] %vm2055, %v2204
    %v2207 = vld [vmem:[%s1] sm:$0xff]
    %v2208 = vld [vmem:[%s1 + $0x8] sm:$0xff]
    %v2209 = vld [vmem:[%s1 + $0x10] sm:$0xff]
    %v2210 = vld [vmem:[%s1 + $0x18] sm:$0xff]
    %v2211 = vld [vmem:[%s1 + $0x20] sm:$0xff]
    %v2212 = vld [vmem:[%s1 + $0x28] sm:$0xff]
    %v2213 = vld [vmem:[%s1 + $0x30] sm:$0xff]
    %v2214 = vld [vmem:[%s1 + $0x38] sm:$0xff]
    %v2215 = vld [vmem:[%s1 + $0x40] sm:$0xff]
    %v2216 = vld [vmem:[%s1 + $0x48] sm:$0xff]
    %v2217 = vld [vmem:[%s1 + $0x50] sm:$0xff]
    %v2218 = vld [vmem:[%s1 + $0x58] sm:$0xff]
    %v2219 = vld [vmem:[%s1 + $0x60] sm:$0xff]
    %v2220 = vld [vmem:[%s1 + $0x68] sm:$0xff]
    %v2221 = vld [vmem:[%s1 + $0x70] sm:$0xff]
    %v2222 = vld [vmem:[%s1 + $0x78] sm:$0xff]
    %s2223 = scalar_lea.vmem %s3, 48
    %v2224 = vld [vmem:[%s2223] sm:$0xff]
    %v2225 = vld [vmem:[%s2223 + $0x8] sm:$0xff]
    %v2226 = vld [vmem:[%s2223 + $0x10] sm:$0xff]
    %v2227 = vld [vmem:[%s2223 + $0x18] sm:$0xff]
    %v2228 = vld [vmem:[%s2223 + $0x20] sm:$0xff]
    %v2229 = vld [vmem:[%s2223 + $0x28] sm:$0xff]
    %s2230 = scalar_lea.vmem %s4, 1
    %v2231 = vld [vmem:[%s2230] sm:$0x1]
    %v2233 = vlaneseq
    %v2234 = vshrl.u32 %v2233, 7
    %v2235 = vsub.s32 0, %v2234
    %v2236 = vrot.slane %v2231, %v2235
    %v2239 = vsel %vm248, %v2207, 0
    %v2242 = vsel %vm248, %v2208, 0
    %v2245 = vsel %vm248, %v2209, 0
    %v2248 = vsel %vm248, %v2210, 0
    %v2251 = vsel %vm248, %v2211, 0
    %v2254 = vsel %vm248, %v2212, 0
    %v2257 = vsel %vm248, %v2213, 0
    %v2260 = vsel %vm248, %v2214, 0
    %v2263 = vsel %vm248, %v2215, 0
    %v2266 = vsel %vm248, %v2216, 0
    %v2269 = vsel %vm248, %v2217, 0
    %v2272 = vsel %vm248, %v2218, 0
    %v2275 = vsel %vm248, %v2219, 0
    %v2278 = vsel %vm248, %v2220, 0
    %v2281 = vsel %vm248, %v2221, 0
    %v2284 = vsel %vm248, %v2222, 0
    %2286 = vmatprep.subr.mxu0 0.0
    %2287 = vmatpush1.msra.mxu0 %v2224
    %2288 = vmatprep.subr.mxu0 0.0
    %2289 = vmatpush1.msra.mxu0 %v2225
    %2290 = vmatprep.subr.mxu0 0.0
    %2291 = vmatpush1.msra.mxu0 %v2226
    %2292 = vmatprep.subr.mxu0 0.0
    %2293 = vmatpush1.msra.mxu0 %v2227
    %2294 = vmatprep.subr.mxu0 0.0
    %2295 = vmatpush1.msra.mxu0 %v2228
    %2296 = vmatprep.subr.mxu0 0.0
    %2297 = vmatpush1.msra.mxu0 %v2229
    %2298 = vmatprep.subr.mxu0 0.0
    %2299 = vmatpush1.msra.mxu0 0.0
    %2300 = vmatprep.subr.mxu0 0.0
    %2301 = vmatpush1.msra.mxu0 0.0
    %2302 = vmatprep.subr.mxu0 0.0
    %2303 = vmatpush1.msra.mxu0 0.0
    %2304 = vmatprep.subr.mxu0 0.0
    %2305 = vmatpush1.msra.mxu0 0.0
    %2306 = vmatprep.subr.mxu0 0.0
    %2307 = vmatpush1.msra.mxu0 0.0
    %2308 = vmatprep.subr.mxu0 0.0
    %2309 = vmatpush1.msra.mxu0 0.0
    %2310 = vmatprep.subr.mxu0 0.0
    %2311 = vmatpush1.msra.mxu0 0.0
    %2312 = vmatprep.subr.mxu0 0.0
    %2313 = vmatpush1.msra.mxu0 0.0
    %2314 = vmatprep.subr.mxu0 0.0
    %2315 = vmatpush1.msra.mxu0 0.0
    %2316 = vmatprep.subr.mxu0 0.0
    %2317 = vmatpush1.msra.mxu0 0.0
    %2318 = vmatprep.subr.mxu0 0.0
    %2319 = vmatpush1.msra.mxu0 0.0
    %2320 = vmatprep.subr.mxu0 0.0
    %2321 = vmatpush1.msra.mxu0 0.0
    %2322 = vmatprep.subr.mxu0 0.0
    %2323 = vmatpush1.msra.mxu0 0.0
    %2324 = vmatprep.subr.mxu0 0.0
    %2325 = vmatpush1.msra.mxu0 0.0
    %2326 = vmatprep.subr.mxu0 0.0
    %2327 = vmatpush1.msra.mxu0 0.0
    %2328 = vmatprep.subr.mxu0 0.0
    %2329 = vmatpush1.msra.mxu0 0.0
    %2330 = vmatprep.subr.mxu0 0.0
    %2331 = vmatpush1.msra.mxu0 0.0
    %2332 = vmatprep.subr.mxu0 0.0
    %2333 = vmatpush1.msra.mxu0 0.0
    %2334 = vmatprep.subr.mxu0 0.0
    %2335 = vmatpush1.msra.mxu0 0.0
    %2336 = vmatprep.subr.mxu0 0.0
    %2337 = vmatpush1.msra.mxu0 0.0
    %2338 = vmatprep.subr.mxu0 0.0
    %2339 = vmatpush1.msra.mxu0 0.0
    %2340 = vmatprep.subr.mxu0 0.0
    %2341 = vmatpush1.msra.mxu0 0.0
    %2342 = vmatprep.subr.mxu0 0.0
    %2343 = vmatpush1.msra.mxu0 0.0
    %2344 = vmatprep.subr.mxu0 0.0
    %2345 = vmatpush1.msra.mxu0 0.0
    %2346 = vmatprep.subr.mxu0 0.0
    %2347 = vmatpush1.msra.mxu0 0.0
    %2348 = vmatprep.subr.mxu0 0.0
    %2349 = vmatpush1.msra.mxu0 0.0
    %2350 = vmatprep.mubr.f32.mxu0 0.0
    %2351 = vmatmul.mubr.f32.gmra.mrb[0].mxu0 %v2239
    %v2352 = vpop.f32.mrb[0].mxu0
    %v2353 = vadd.f32 %v2236, %v2352
    %v2354 = vpop.f32.mrb[0].mxu0
    %2355 = vmatprep.mubr.f32.mxu0 0.0
    %2356 = vmatmul.mubr.f32.gmra.mrb[0].mxu0 %v2242
    %v2357 = vpop.f32.mrb[0].mxu0
    %v2358 = vadd.f32 %v2236, %v2357
    %v2359 = vpop.f32.mrb[0].mxu0
    %2360 = vmatprep.mubr.f32.mxu0 0.0
    %2361 = vmatmul.mubr.f32.gmra.mrb[0].mxu0 %v2245
    %v2362 = vpop.f32.mrb[0].mxu0
    %v2363 = vadd.f32 %v2236, %v2362
    %v2364 = vpop.f32.mrb[0].mxu0
    %2365 = vmatprep.mubr.f32.mxu0 0.0
    %2366 = vmatmul.mubr.f32.gmra.mrb[0].mxu0 %v2248
    %v2367 = vpop.f32.mrb[0].mxu0
    %v2368 = vadd.f32 %v2236, %v2367
    %v2369 = vpop.f32.mrb[0].mxu0
    %2370 = vmatprep.mubr.f32.mxu0 0.0
    %2371 = vmatmul.mubr.f32.gmra.mrb[0].mxu0 %v2251
    %v2372 = vpop.f32.mrb[0].mxu0
    %v2373 = vadd.f32 %v2236, %v2372
    %v2374 = vpop.f32.mrb[0].mxu0
    %2375 = vmatprep.mubr.f32.mxu0 0.0
    %2376 = vmatmul.mubr.f32.gmra.mrb[0].mxu0 %v2254
    %v2377 = vpop.f32.mrb[0].mxu0
    %v2378 = vadd.f32 %v2236, %v2377
    %v2379 = vpop.f32.mrb[0].mxu0
    %2380 = vmatprep.mubr.f32.mxu0 0.0
    %2381 = vmatmul.mubr.f32.gmra.mrb[0].mxu0 %v2257
    %v2382 = vpop.f32.mrb[0].mxu0
    %v2383 = vadd.f32 %v2236, %v2382
    %v2384 = vpop.f32.mrb[0].mxu0
    %2385 = vmatprep.mubr.f32.mxu0 0.0
    %2386 = vmatmul.mubr.f32.gmra.mrb[0].mxu0 %v2260
    %v2387 = vpop.f32.mrb[0].mxu0
    %v2388 = vadd.f32 %v2236, %v2387
    %v2389 = vpop.f32.mrb[0].mxu0
    %2390 = vmatprep.mubr.f32.mxu0 0.0
    %2391 = vmatmul.mubr.f32.gmra.mrb[0].mxu0 %v2263
    %v2392 = vpop.f32.mrb[0].mxu0
    %v2393 = vadd.f32 %v2236, %v2392
    %v2394 = vpop.f32.mrb[0].mxu0
    %2395 = vmatprep.mubr.f32.mxu0 0.0
    %2396 = vmatmul.mubr.f32.gmra.mrb[0].mxu0 %v2266
    %v2397 = vpop.f32.mrb[0].mxu0
    %v2398 = vadd.f32 %v2236, %v2397
    %v2399 = vpop.f32.mrb[0].mxu0
    %2400 = vmatprep.mubr.f32.mxu0 0.0
    %2401 = vmatmul.mubr.f32.gmra.mrb[0].mxu0 %v2269
    %v2402 = vpop.f32.mrb[0].mxu0
    %v2403 = vadd.f32 %v2236, %v2402
    %v2404 = vpop.f32.mrb[0].mxu0
    %2405 = vmatprep.mubr.f32.mxu0 0.0
    %2406 = vmatmul.mubr.f32.gmra.mrb[0].mxu0 %v2272
    %v2407 = vpop.f32.mrb[0].mxu0
    %v2408 = vadd.f32 %v2236, %v2407
    %v2409 = vpop.f32.mrb[0].mxu0
    %2410 = vmatprep.mubr.f32.mxu0 0.0
    %2411 = vmatmul.mubr.f32.gmra.mrb[0].mxu0 %v2275
    %v2412 = vpop.f32.mrb[0].mxu0
    %v2413 = vadd.f32 %v2236, %v2412
    %v2414 = vpop.f32.mrb[0].mxu0
    %2415 = vmatprep.mubr.f32.mxu0 0.0
    %2416 = vmatmul.mubr.f32.gmra.mrb[0].mxu0 %v2278
    %v2417 = vpop.f32.mrb[0].mxu0
    %v2418 = vadd.f32 %v2236, %v2417
    %v2419 = vpop.f32.mrb[0].mxu0
    %2420 = vmatprep.mubr.f32.mxu0 0.0
    %2421 = vmatmul.mubr.f32.gmra.mrb[0].mxu0 %v2281
    %v2422 = vpop.f32.mrb[0].mxu0
    %v2423 = vadd.f32 %v2236, %v2422
    %v2424 = vpop.f32.mrb[0].mxu0
    %2425 = vmatprep.mubr.f32.mxu0 0.0
    %2426 = vmatmul.mubr.f32.gmra.mrb[0].mxu0 %v2284
    %v2427 = vpop.f32.mrb[0].mxu0
    %v2428 = vadd.f32 %v2236, %v2427
    %v2429 = vpop.f32.mrb[0].mxu0
    %2430 = vdwg.mxu0
    %v2431 = vld [vmem:[%s2] sm:$0xff]
    %v2432 = vld [vmem:[%s2 + $0x8] sm:$0xff]
    %v2433 = vld [vmem:[%s2 + $0x10] sm:$0xff]
    %v2434 = vld [vmem:[%s2 + $0x18] sm:$0xff]
    %v2435 = vld [vmem:[%s2 + $0x20] sm:$0xff]
    %v2436 = vld [vmem:[%s2 + $0x28] sm:$0xff]
    %v2437 = vld [vmem:[%s2 + $0x30] sm:$0xff]
    %v2438 = vld [vmem:[%s2 + $0x38] sm:$0xff]
    %v2439 = vld [vmem:[%s2 + $0x40] sm:$0xff]
    %v2440 = vld [vmem:[%s2 + $0x48] sm:$0xff]
    %v2441 = vld [vmem:[%s2 + $0x50] sm:$0xff]
    %v2442 = vld [vmem:[%s2 + $0x58] sm:$0xff]
    %v2443 = vld [vmem:[%s2 + $0x60] sm:$0xff]
    %v2444 = vld [vmem:[%s2 + $0x68] sm:$0xff]
    %v2445 = vld [vmem:[%s2 + $0x70] sm:$0xff]
    %v2446 = vld [vmem:[%s2 + $0x78] sm:$0xff]
    %2463 = vrot.lane.b32.xlu0 %v2353, 80
    %v2464 = vpop.permute.xlu0 %2463
    %2465 = vrot.lane.b32.xlu0 %v2358, 80
    %v2466 = vpop.permute.xlu0 %2465
    %2467 = vrot.lane.b32.xlu0 %v2363, 80
    %v2468 = vpop.permute.xlu0 %2467
    %2469 = vrot.lane.b32.xlu0 %v2368, 80
    %v2470 = vpop.permute.xlu0 %2469
    %2471 = vrot.lane.b32.xlu0 %v2373, 80
    %v2472 = vpop.permute.xlu0 %2471
    %2473 = vrot.lane.b32.xlu0 %v2378, 80
    %v2474 = vpop.permute.xlu0 %2473
    %2475 = vrot.lane.b32.xlu0 %v2383, 80
    %v2476 = vpop.permute.xlu0 %2475
    %2477 = vrot.lane.b32.xlu0 %v2388, 80
    %v2478 = vpop.permute.xlu0 %2477
    %2479 = vrot.lane.b32.xlu0 %v2393, 80
    %v2480 = vpop.permute.xlu0 %2479
    %2481 = vrot.lane.b32.xlu0 %v2398, 80
    %v2482 = vpop.permute.xlu0 %2481
    %2483 = vrot.lane.b32.xlu0 %v2403, 80
    %v2484 = vpop.permute.xlu0 %2483
    %2485 = vrot.lane.b32.xlu0 %v2408, 80
    %v2486 = vpop.permute.xlu0 %2485
    %2487 = vrot.lane.b32.xlu0 %v2413, 80
    %v2488 = vpop.permute.xlu0 %2487
    %2489 = vrot.lane.b32.xlu0 %v2418, 80
    %v2490 = vpop.permute.xlu0 %2489
    %2491 = vrot.lane.b32.xlu0 %v2423, 80
    %v2492 = vpop.permute.xlu0 %2491
    %2493 = vrot.lane.b32.xlu0 %v2428, 80
    %v2494 = vpop.permute.xlu0 %2493
    %v2495 = vsel %vm506, %v2353, 0
    %v2497 = vsel %vm506, %v2358, 0
    %v2499 = vsel %vm506, %v2363, 0
    %v2501 = vsel %vm506, %v2368, 0
    %v2503 = vsel %vm506, %v2373, 0
    %v2505 = vsel %vm506, %v2378, 0
    %v2507 = vsel %vm506, %v2383, 0
    %v2509 = vsel %vm506, %v2388, 0
    %v2511 = vsel %vm506, %v2393, 0
    %v2513 = vsel %vm506, %v2398, 0
    %v2515 = vsel %vm506, %v2403, 0
    %v2517 = vsel %vm506, %v2408, 0
    %v2519 = vsel %vm506, %v2413, 0
    %v2521 = vsel %vm506, %v2418, 0
    %v2523 = vsel %vm506, %v2423, 0
    %v2525 = vsel %vm506, %v2428, 0
    %v2527 = vsel %vm506, %v2464, 0
    %v2529 = vsel %vm506, %v2466, 0
    %v2531 = vsel %vm506, %v2468, 0
    %v2533 = vsel %vm506, %v2470, 0
    %v2535 = vsel %vm506, %v2472, 0
    %v2537 = vsel %vm506, %v2474, 0
    %v2539 = vsel %vm506, %v2476, 0
    %v2541 = vsel %vm506, %v2478, 0
    %v2543 = vsel %vm506, %v2480, 0
    %v2545 = vsel %vm506, %v2482, 0
    %v2547 = vsel %vm506, %v2484, 0
    %v2549 = vsel %vm506, %v2486, 0
    %v2551 = vsel %vm506, %v2488, 0
    %v2553 = vsel %vm506, %v2490, 0
    %v2555 = vsel %vm506, %v2492, 0
    %v2557 = vsel %vm506, %v2494, 0
    %2559 = vmatprep.subr.mxu0 0.0
    %2560 = vmatpush1.xpose.msra.mxu0 %v2527
    %2561 = vmatprep.subr.mxu0 0.0
    %2562 = vmatpush1.xpose.msra.mxu0 %v2529
    %2563 = vmatprep.subr.mxu0 0.0
    %2564 = vmatpush1.xpose.msra.mxu0 %v2531
    %2565 = vmatprep.subr.mxu0 0.0
    %2566 = vmatpush1.xpose.msra.mxu0 %v2533
    %2567 = vmatprep.subr.mxu0 0.0
    %2568 = vmatpush1.xpose.msra.mxu0 %v2535
    %2569 = vmatprep.subr.mxu0 0.0
    %2570 = vmatpush1.xpose.msra.mxu0 %v2537
    %2571 = vmatprep.subr.mxu0 0.0
    %2572 = vmatpush1.xpose.msra.mxu0 %v2539
    %2573 = vmatprep.subr.mxu0 0.0
    %2574 = vmatpush1.xpose.msra.mxu0 %v2541
    %2575 = vmatprep.subr.mxu0 0.0
    %2576 = vmatpush1.xpose.msra.mxu0 %v2543
    %2577 = vmatprep.subr.mxu0 0.0
    %2578 = vmatpush1.xpose.msra.mxu0 %v2545
    %2579 = vmatprep.subr.mxu0 0.0
    %2580 = vmatpush1.xpose.msra.mxu0 %v2547
    %2581 = vmatprep.subr.mxu0 0.0
    %2582 = vmatpush1.xpose.msra.mxu0 %v2549
    %2583 = vmatprep.subr.mxu0 0.0
    %2584 = vmatpush1.xpose.msra.mxu0 %v2551
    %2585 = vmatprep.subr.mxu0 0.0
    %2586 = vmatpush1.xpose.msra.mxu0 %v2553
    %2587 = vmatprep.subr.mxu0 0.0
    %2588 = vmatpush1.xpose.msra.mxu0 %v2555
    %2589 = vmatprep.subr.mxu0 0.0
    %2590 = vmatpush1.xpose.msra.mxu0 %v2557
    %2591 = vmatprep.subr.mxu0 0.0
    %2592 = vmatpush1.xpose.msra.mxu0 0.0
    %2593 = vmatprep.subr.mxu0 0.0
    %2594 = vmatpush1.xpose.msra.mxu0 0.0
    %2595 = vmatprep.subr.mxu0 0.0
    %2596 = vmatpush1.xpose.msra.mxu0 0.0
    %2597 = vmatprep.subr.mxu0 0.0
    %2598 = vmatpush1.xpose.msra.mxu0 0.0
    %2599 = vmatprep.subr.mxu0 0.0
    %2600 = vmatpush1.xpose.msra.mxu0 0.0
    %2601 = vmatprep.subr.mxu0 0.0
    %2602 = vmatpush1.xpose.msra.mxu0 0.0
    %2603 = vmatprep.subr.mxu0 0.0
    %2604 = vmatpush1.xpose.msra.mxu0 0.0
    %2605 = vmatprep.subr.mxu0 0.0
    %2606 = vmatpush1.xpose.msra.mxu0 0.0
    %2607 = vmatprep.subr.mxu0 0.0
    %2608 = vmatpush1.xpose.msra.mxu0 0.0
    %2609 = vmatprep.subr.mxu0 0.0
    %2610 = vmatpush1.xpose.msra.mxu0 0.0
    %2611 = vmatprep.subr.mxu0 0.0
    %2612 = vmatpush1.xpose.msra.mxu0 0.0
    %2613 = vmatprep.subr.mxu0 0.0
    %2614 = vmatpush1.xpose.msra.mxu0 0.0
    %2615 = vmatprep.subr.mxu0 0.0
    %2616 = vmatpush1.xpose.msra.mxu0 0.0
    %2617 = vmatprep.subr.mxu0 0.0
    %2618 = vmatpush1.xpose.msra.mxu0 0.0
    %2619 = vmatprep.subr.mxu0 0.0
    %2620 = vmatpush1.xpose.msra.mxu0 0.0
    %2621 = vmatprep.subr.mxu0 0.0
    %2622 = vmatpush1.xpose.msra.mxu0 0.0
    %2623 = vmatprep.mubr.f32.mxu0 0.0
    %2624 = vmatmul.mubr.f32.gmra.mrb[0].mxu0 %v2495
    %v2625 = vpop.f32.mrb[0].mxu0
    %v2626 = vadd.f32 %v2431, %v2625
    %v2627 = vpop.f32.mrb[0].mxu0
    %2628 = vmatprep.mubr.f32.mxu0 0.0
    %2629 = vmatmul.mubr.f32.gmra.mrb[0].mxu0 %v2497
    %v2630 = vpop.f32.mrb[0].mxu0
    %v2631 = vadd.f32 %v2432, %v2630
    %v2632 = vpop.f32.mrb[0].mxu0
    %2633 = vmatprep.mubr.f32.mxu0 0.0
    %2634 = vmatmul.mubr.f32.gmra.mrb[0].mxu0 %v2499
    %v2635 = vpop.f32.mrb[0].mxu0
    %v2636 = vadd.f32 %v2433, %v2635
    %v2637 = vpop.f32.mrb[0].mxu0
    %2638 = vmatprep.mubr.f32.mxu0 0.0
    %2639 = vmatmul.mubr.f32.gmra.mrb[0].mxu0 %v2501
    %v2640 = vpop.f32.mrb[0].mxu0
    %v2641 = vadd.f32 %v2434, %v2640
    %v2642 = vpop.f32.mrb[0].mxu0
    %2643 = vmatprep.mubr.f32.mxu0 0.0
    %2644 = vmatmul.mubr.f32.gmra.mrb[0].mxu0 %v2503
    %v2645 = vpop.f32.mrb[0].mxu0
    %v2646 = vadd.f32 %v2435, %v2645
    %v2647 = vpop.f32.mrb[0].mxu0
    %2648 = vmatprep.mubr.f32.mxu0 0.0
    %2649 = vmatmul.mubr.f32.gmra.mrb[0].mxu0 %v2505
    %v2650 = vpop.f32.mrb[0].mxu0
    %v2651 = vadd.f32 %v2436, %v2650
    %v2652 = vpop.f32.mrb[0].mxu0
    %2653 = vmatprep.mubr.f32.mxu0 0.0
    %2654 = vmatmul.mubr.f32.gmra.mrb[0].mxu0 %v2507
    %v2655 = vpop.f32.mrb[0].mxu0
    %v2656 = vadd.f32 %v2437, %v2655
    %v2657 = vpop.f32.mrb[0].mxu0
    %2658 = vmatprep.mubr.f32.mxu0 0.0
    %2659 = vmatmul.mubr.f32.gmra.mrb[0].mxu0 %v2509
    %v2660 = vpop.f32.mrb[0].mxu0
    %v2661 = vadd.f32 %v2438, %v2660
    %v2662 = vpop.f32.mrb[0].mxu0
    %2663 = vmatprep.mubr.f32.mxu0 0.0
    %2664 = vmatmul.mubr.f32.gmra.mrb[0].mxu0 %v2511
    %v2665 = vpop.f32.mrb[0].mxu0
    %v2666 = vadd.f32 %v2439, %v2665
    %v2667 = vpop.f32.mrb[0].mxu0
    %2668 = vmatprep.mubr.f32.mxu0 0.0
    %2669 = vmatmul.mubr.f32.gmra.mrb[0].mxu0 %v2513
    %v2670 = vpop.f32.mrb[0].mxu0
    %v2671 = vadd.f32 %v2440, %v2670
    %v2672 = vpop.f32.mrb[0].mxu0
    %2673 = vmatprep.mubr.f32.mxu0 0.0
    %2674 = vmatmul.mubr.f32.gmra.mrb[0].mxu0 %v2515
    %v2675 = vpop.f32.mrb[0].mxu0
    %v2676 = vadd.f32 %v2441, %v2675
    %v2677 = vpop.f32.mrb[0].mxu0
    %2678 = vmatprep.mubr.f32.mxu0 0.0
    %2679 = vmatmul.mubr.f32.gmra.mrb[0].mxu0 %v2517
    %v2680 = vpop.f32.mrb[0].mxu0
    %v2681 = vadd.f32 %v2442, %v2680
    %v2682 = vpop.f32.mrb[0].mxu0
    %2683 = vmatprep.mubr.f32.mxu0 0.0
    %2684 = vmatmul.mubr.f32.gmra.mrb[0].mxu0 %v2519
    %v2685 = vpop.f32.mrb[0].mxu0
    %v2686 = vadd.f32 %v2443, %v2685
    %v2687 = vpop.f32.mrb[0].mxu0
    %2688 = vmatprep.mubr.f32.mxu0 0.0
    %2689 = vmatmul.mubr.f32.gmra.mrb[0].mxu0 %v2521
    %v2690 = vpop.f32.mrb[0].mxu0
    %v2691 = vadd.f32 %v2444, %v2690
    %v2692 = vpop.f32.mrb[0].mxu0
    %2693 = vmatprep.mubr.f32.mxu0 0.0
    %2694 = vmatmul.mubr.f32.gmra.mrb[0].mxu0 %v2523
    %v2695 = vpop.f32.mrb[0].mxu0
    %v2696 = vadd.f32 %v2445, %v2695
    %v2697 = vpop.f32.mrb[0].mxu0
    %2698 = vmatprep.mubr.f32.mxu0 0.0
    %2699 = vmatmul.mubr.f32.gmra.mrb[0].mxu0 %v2525
    %v2700 = vpop.f32.mrb[0].mxu0
    %v2701 = vadd.f32 %v2446, %v2700
    %v2702 = vpop.f32.mrb[0].mxu0
    %2703 = vdwg.mxu0
    %2704 = vmax.xlane.f32.xlu0 %v2626
    %v2705 = vpop.xlane.xlu0 %2704
    %2706 = vmax.xlane.f32.xlu0 %v2631
    %v2707 = vpop.xlane.xlu0 %2706
    %2708 = vmax.xlane.f32.xlu0 %v2636
    %v2709 = vpop.xlane.xlu0 %2708
    %2710 = vmax.xlane.f32.xlu0 %v2641
    %v2711 = vpop.xlane.xlu0 %2710
    %2712 = vmax.xlane.f32.xlu0 %v2646
    %v2713 = vpop.xlane.xlu0 %2712
    %2714 = vmax.xlane.f32.xlu0 %v2651
    %v2715 = vpop.xlane.xlu0 %2714
    %2716 = vmax.xlane.f32.xlu0 %v2656
    %v2717 = vpop.xlane.xlu0 %2716
    %2718 = vmax.xlane.f32.xlu0 %v2661
    %v2719 = vpop.xlane.xlu0 %2718
    %2720 = vmax.xlane.f32.xlu0 %v2666
    %v2721 = vpop.xlane.xlu0 %2720
    %2722 = vmax.xlane.f32.xlu0 %v2671
    %v2723 = vpop.xlane.xlu0 %2722
    %2724 = vmax.xlane.f32.xlu0 %v2676
    %v2725 = vpop.xlane.xlu0 %2724
    %2726 = vmax.xlane.f32.xlu0 %v2681
    %v2727 = vpop.xlane.xlu0 %2726
    %2728 = vmax.xlane.f32.xlu0 %v2686
    %v2729 = vpop.xlane.xlu0 %2728
    %2730 = vmax.xlane.f32.xlu0 %v2691
    %v2731 = vpop.xlane.xlu0 %2730
    %2732 = vmax.xlane.f32.xlu0 %v2696
    %v2733 = vpop.xlane.xlu0 %2732
    %2734 = vmax.xlane.f32.xlu0 %v2701
    %v2735 = vpop.xlane.xlu0 %2734
    %v2736 = vsub.f32 %v2626, %v2705
    %v2737 = vsub.f32 %v2631, %v2707
    %v2738 = vsub.f32 %v2636, %v2709
    %v2739 = vsub.f32 %v2641, %v2711
    %v2740 = vsub.f32 %v2646, %v2713
    %v2741 = vsub.f32 %v2651, %v2715
    %v2742 = vsub.f32 %v2656, %v2717
    %v2743 = vsub.f32 %v2661, %v2719
    %v2744 = vsub.f32 %v2666, %v2721
    %v2745 = vsub.f32 %v2671, %v2723
    %v2746 = vsub.f32 %v2676, %v2725
    %v2747 = vsub.f32 %v2681, %v2727
    %v2748 = vsub.f32 %v2686, %v2729
    %v2749 = vsub.f32 %v2691, %v2731
    %v2750 = vsub.f32 %v2696, %v2733
    %v2751 = vsub.f32 %v2701, %v2735
    %v2752 = vmul.f32 %v2736, 1.442695
    %v2753 = vpow.pop %v2752
    %v2754 = vmul.f32 %v2737, 1.442695
    %v2755 = vpow.pop %v2754
    %v2756 = vmul.f32 %v2738, 1.442695
    %v2757 = vpow.pop %v2756
    %v2758 = vmul.f32 %v2739, 1.442695
    %v2759 = vpow.pop %v2758
    %v2760 = vmul.f32 %v2740, 1.442695
    %v2761 = vpow.pop %v2760
    %v2762 = vmul.f32 %v2741, 1.442695
    %v2763 = vpow.pop %v2762
    %v2764 = vmul.f32 %v2742, 1.442695
    %v2765 = vpow.pop %v2764
    %v2766 = vmul.f32 %v2743, 1.442695
    %v2767 = vpow.pop %v2766
    %v2768 = vmul.f32 %v2744, 1.442695
    %v2769 = vpow.pop %v2768
    %v2770 = vmul.f32 %v2745, 1.442695
    %v2771 = vpow.pop %v2770
    %v2772 = vmul.f32 %v2746, 1.442695
    %v2773 = vpow.pop %v2772
    %v2774 = vmul.f32 %v2747, 1.442695
    %v2775 = vpow.pop %v2774
    %v2776 = vmul.f32 %v2748, 1.442695
    %v2777 = vpow.pop %v2776
    %v2778 = vmul.f32 %v2749, 1.442695
    %v2779 = vpow.pop %v2778
    %v2780 = vmul.f32 %v2750, 1.442695
    %v2781 = vpow.pop %v2780
    %v2782 = vmul.f32 %v2751, 1.442695
    %v2783 = vpow.pop %v2782
    %2784 = vadd.xlane.f32.xlu0 %v2753
    %v2785 = vpop.xlane.xlu0 %2784
    %2786 = vadd.xlane.f32.xlu0 %v2755
    %v2787 = vpop.xlane.xlu0 %2786
    %2788 = vadd.xlane.f32.xlu0 %v2757
    %v2789 = vpop.xlane.xlu0 %2788
    %2790 = vadd.xlane.f32.xlu0 %v2759
    %v2791 = vpop.xlane.xlu0 %2790
    %2792 = vadd.xlane.f32.xlu0 %v2761
    %v2793 = vpop.xlane.xlu0 %2792
    %2794 = vadd.xlane.f32.xlu0 %v2763
    %v2795 = vpop.xlane.xlu0 %2794
    %2796 = vadd.xlane.f32.xlu0 %v2765
    %v2797 = vpop.xlane.xlu0 %2796
    %2798 = vadd.xlane.f32.xlu0 %v2767
    %v2799 = vpop.xlane.xlu0 %2798
    %2800 = vadd.xlane.f32.xlu0 %v2769
    %v2801 = vpop.xlane.xlu0 %2800
    %2802 = vadd.xlane.f32.xlu0 %v2771
    %v2803 = vpop.xlane.xlu0 %2802
    %2804 = vadd.xlane.f32.xlu0 %v2773
    %v2805 = vpop.xlane.xlu0 %2804
    %2806 = vadd.xlane.f32.xlu0 %v2775
    %v2807 = vpop.xlane.xlu0 %2806
    %2808 = vadd.xlane.f32.xlu0 %v2777
    %v2809 = vpop.xlane.xlu0 %2808
    %2810 = vadd.xlane.f32.xlu0 %v2779
    %v2811 = vpop.xlane.xlu0 %2810
    %2812 = vadd.xlane.f32.xlu0 %v2781
    %v2813 = vpop.xlane.xlu0 %2812
    %2814 = vadd.xlane.f32.xlu0 %v2783
    %v2815 = vpop.xlane.xlu0 %2814
    %v2816 = vrcp.pop %v2785
    %v2817 = vrcp.pop %v2787
    %v2818 = vrcp.pop %v2789
    %v2819 = vrcp.pop %v2791
    %v2820 = vrcp.pop %v2793
    %v2821 = vrcp.pop %v2795
    %v2822 = vrcp.pop %v2797
    %v2823 = vrcp.pop %v2799
    %v2824 = vrcp.pop %v2801
    %v2825 = vrcp.pop %v2803
    %v2826 = vrcp.pop %v2805
    %v2827 = vrcp.pop %v2807
    %v2828 = vrcp.pop %v2809
    %v2829 = vrcp.pop %v2811
    %v2830 = vrcp.pop %v2813
    %v2831 = vrcp.pop %v2815
    %v2832 = vmul.f32 %v2753, %v2816
    %v2833 = vmul.f32 %v2755, %v2817
    %v2834 = vmul.f32 %v2757, %v2818
    %v2835 = vmul.f32 %v2759, %v2819
    %v2836 = vmul.f32 %v2761, %v2820
    %v2837 = vmul.f32 %v2763, %v2821
    %v2838 = vmul.f32 %v2765, %v2822
    %v2839 = vmul.f32 %v2767, %v2823
    %v2840 = vmul.f32 %v2769, %v2824
    %v2841 = vmul.f32 %v2771, %v2825
    %v2842 = vmul.f32 %v2773, %v2826
    %v2843 = vmul.f32 %v2775, %v2827
    %v2844 = vmul.f32 %v2777, %v2828
    %v2845 = vmul.f32 %v2779, %v2829
    %v2846 = vmul.f32 %v2781, %v2830
    %v2847 = vmul.f32 %v2783, %v2831
    %s2848 = sld [smem:[#allocation3 + $0x3]]
    %v2849 = vstv %s2848
    %v2850 = vmul.f32 %v2849, %v2832
    %v2851 = vmul.f32 %v2849, %v2833
    %v2852 = vmul.f32 %v2849, %v2834
    %v2853 = vmul.f32 %v2849, %v2835
    %v2854 = vmul.f32 %v2849, %v2836
    %v2855 = vmul.f32 %v2849, %v2837
    %v2856 = vmul.f32 %v2849, %v2838
    %v2857 = vmul.f32 %v2849, %v2839
    %v2858 = vmul.f32 %v2849, %v2840
    %v2859 = vmul.f32 %v2849, %v2841
    %v2860 = vmul.f32 %v2849, %v2842
    %v2861 = vmul.f32 %v2849, %v2843
    %v2862 = vmul.f32 %v2849, %v2844
    %v2863 = vmul.f32 %v2849, %v2845
    %v2864 = vmul.f32 %v2849, %v2846
    %v2865 = vmul.f32 %v2849, %v2847
    %v2866 = vadd.f32 %v2850, 0.0
    %v2867 = vadd.f32 %v2851, 0.0
    %v2868 = vadd.f32 %v2852, 0.0
    %v2869 = vadd.f32 %v2853, 0.0
    %v2870 = vadd.f32 %v2854, 0.0
    %v2871 = vadd.f32 %v2855, 0.0
    %v2872 = vadd.f32 %v2856, 0.0
    %v2873 = vadd.f32 %v2857, 0.0
    %v2874 = vadd.f32 %v2858, 0.0
    %v2875 = vadd.f32 %v2859, 0.0
    %v2876 = vadd.f32 %v2860, 0.0
    %v2877 = vadd.f32 %v2861, 0.0
    %v2878 = vadd.f32 %v2862, 0.0
    %v2879 = vadd.f32 %v2863, 0.0
    %v2880 = vadd.f32 %v2864, 0.0
    %v2881 = vadd.f32 %v2865, 0.0
    %v2882 = vld [vmem:[%s2] sm:$0xff]
    %v2883 = vld [vmem:[%s2 + $0x8] sm:$0xff]
    %v2884 = vld [vmem:[%s2 + $0x10] sm:$0xff]
    %v2885 = vld [vmem:[%s2 + $0x18] sm:$0xff]
    %v2886 = vld [vmem:[%s2 + $0x20] sm:$0xff]
    %v2887 = vld [vmem:[%s2 + $0x28] sm:$0xff]
    %v2888 = vld [vmem:[%s2 + $0x30] sm:$0xff]
    %v2889 = vld [vmem:[%s2 + $0x38] sm:$0xff]
    %v2890 = vld [vmem:[%s2 + $0x40] sm:$0xff]
    %v2891 = vld [vmem:[%s2 + $0x48] sm:$0xff]
    %v2892 = vld [vmem:[%s2 + $0x50] sm:$0xff]
    %v2893 = vld [vmem:[%s2 + $0x58] sm:$0xff]
    %v2894 = vld [vmem:[%s2 + $0x60] sm:$0xff]
    %v2895 = vld [vmem:[%s2 + $0x68] sm:$0xff]
    %v2896 = vld [vmem:[%s2 + $0x70] sm:$0xff]
    %v2897 = vld [vmem:[%s2 + $0x78] sm:$0xff]
    %2898 = vrot.lane.b32.xlu0 %v2353, 112
    %v2899 = vpop.permute.xlu0 %2898
    %2900 = vrot.lane.b32.xlu0 %v2358, 112
    %v2901 = vpop.permute.xlu0 %2900
    %2902 = vrot.lane.b32.xlu0 %v2363, 112
    %v2903 = vpop.permute.xlu0 %2902
    %2904 = vrot.lane.b32.xlu0 %v2368, 112
    %v2905 = vpop.permute.xlu0 %2904
    %2906 = vrot.lane.b32.xlu0 %v2373, 112
    %v2907 = vpop.permute.xlu0 %2906
    %2908 = vrot.lane.b32.xlu0 %v2378, 112
    %v2909 = vpop.permute.xlu0 %2908
    %2910 = vrot.lane.b32.xlu0 %v2383, 112
    %v2911 = vpop.permute.xlu0 %2910
    %2912 = vrot.lane.b32.xlu0 %v2388, 112
    %v2913 = vpop.permute.xlu0 %2912
    %2914 = vrot.lane.b32.xlu0 %v2393, 112
    %v2915 = vpop.permute.xlu0 %2914
    %2916 = vrot.lane.b32.xlu0 %v2398, 112
    %v2917 = vpop.permute.xlu0 %2916
    %2918 = vrot.lane.b32.xlu0 %v2403, 112
    %v2919 = vpop.permute.xlu0 %2918
    %2920 = vrot.lane.b32.xlu0 %v2408, 112
    %v2921 = vpop.permute.xlu0 %2920
    %2922 = vrot.lane.b32.xlu0 %v2413, 112
    %v2923 = vpop.permute.xlu0 %2922
    %2924 = vrot.lane.b32.xlu0 %v2418, 112
    %v2925 = vpop.permute.xlu0 %2924
    %2926 = vrot.lane.b32.xlu0 %v2423, 112
    %v2927 = vpop.permute.xlu0 %2926
    %2928 = vrot.lane.b32.xlu0 %v2428, 112
    %v2929 = vpop.permute.xlu0 %2928
    %v2930 = vsel %vm506, %v2899, 0
    %v2932 = vsel %vm506, %v2901, 0
    %v2934 = vsel %vm506, %v2903, 0
    %v2936 = vsel %vm506, %v2905, 0
    %v2938 = vsel %vm506, %v2907, 0
    %v2940 = vsel %vm506, %v2909, 0
    %v2942 = vsel %vm506, %v2911, 0
    %v2944 = vsel %vm506, %v2913, 0
    %v2946 = vsel %vm506, %v2915, 0
    %v2948 = vsel %vm506, %v2917, 0
    %v2950 = vsel %vm506, %v2919, 0
    %v2952 = vsel %vm506, %v2921, 0
    %v2954 = vsel %vm506, %v2923, 0
    %v2956 = vsel %vm506, %v2925, 0
    %v2958 = vsel %vm506, %v2927, 0
    %v2960 = vsel %vm506, %v2929, 0
    %2962 = vmatprep.subr.mxu0 0.0
    %2963 = vmatpush1.xpose.msra.mxu0 %v2527
    %2964 = vmatprep.subr.mxu0 0.0
    %2965 = vmatpush1.xpose.msra.mxu0 %v2529
    %2966 = vmatprep.subr.mxu0 0.0
    %2967 = vmatpush1.xpose.msra.mxu0 %v2531
    %2968 = vmatprep.subr.mxu0 0.0
    %2969 = vmatpush1.xpose.msra.mxu0 %v2533
    %2970 = vmatprep.subr.mxu0 0.0
    %2971 = vmatpush1.xpose.msra.mxu0 %v2535
    %2972 = vmatprep.subr.mxu0 0.0
    %2973 = vmatpush1.xpose.msra.mxu0 %v2537
    %2974 = vmatprep.subr.mxu0 0.0
    %2975 = vmatpush1.xpose.msra.mxu0 %v2539
    %2976 = vmatprep.subr.mxu0 0.0
    %2977 = vmatpush1.xpose.msra.mxu0 %v2541
    %2978 = vmatprep.subr.mxu0 0.0
    %2979 = vmatpush1.xpose.msra.mxu0 %v2543
    %2980 = vmatprep.subr.mxu0 0.0
    %2981 = vmatpush1.xpose.msra.mxu0 %v2545
    %2982 = vmatprep.subr.mxu0 0.0
    %2983 = vmatpush1.xpose.msra.mxu0 %v2547
    %2984 = vmatprep.subr.mxu0 0.0
    %2985 = vmatpush1.xpose.msra.mxu0 %v2549
    %2986 = vmatprep.subr.mxu0 0.0
    %2987 = vmatpush1.xpose.msra.mxu0 %v2551
    %2988 = vmatprep.subr.mxu0 0.0
    %2989 = vmatpush1.xpose.msra.mxu0 %v2553
    %2990 = vmatprep.subr.mxu0 0.0
    %2991 = vmatpush1.xpose.msra.mxu0 %v2555
    %2992 = vmatprep.subr.mxu0 0.0
    %2993 = vmatpush1.xpose.msra.mxu0 %v2557
    %2994 = vmatprep.subr.mxu0 0.0
    %2995 = vmatpush1.xpose.msra.mxu0 0.0
    %2996 = vmatprep.subr.mxu0 0.0
    %2997 = vmatpush1.xpose.msra.mxu0 0.0
    %2998 = vmatprep.subr.mxu0 0.0
    %2999 = vmatpush1.xpose.msra.mxu0 0.0
    %3000 = vmatprep.subr.mxu0 0.0
    %3001 = vmatpush1.xpose.msra.mxu0 0.0
    %3002 = vmatprep.subr.mxu0 0.0
    %3003 = vmatpush1.xpose.msra.mxu0 0.0
    %3004 = vmatprep.subr.mxu0 0.0
    %3005 = vmatpush1.xpose.msra.mxu0 0.0
    %3006 = vmatprep.subr.mxu0 0.0
    %3007 = vmatpush1.xpose.msra.mxu0 0.0
    %3008 = vmatprep.subr.mxu0 0.0
    %3009 = vmatpush1.xpose.msra.mxu0 0.0
    %3010 = vmatprep.subr.mxu0 0.0
    %3011 = vmatpush1.xpose.msra.mxu0 0.0
    %3012 = vmatprep.subr.mxu0 0.0
    %3013 = vmatpush1.xpose.msra.mxu0 0.0
    %3014 = vmatprep.subr.mxu0 0.0
    %3015 = vmatpush1.xpose.msra.mxu0 0.0
    %3016 = vmatprep.subr.mxu0 0.0
    %3017 = vmatpush1.xpose.msra.mxu0 0.0
    %3018 = vmatprep.subr.mxu0 0.0
    %3019 = vmatpush1.xpose.msra.mxu0 0.0
    %3020 = vmatprep.subr.mxu0 0.0
    %3021 = vmatpush1.xpose.msra.mxu0 0.0
    %3022 = vmatprep.subr.mxu0 0.0
    %3023 = vmatpush1.xpose.msra.mxu0 0.0
    %3024 = vmatprep.subr.mxu0 0.0
    %3025 = vmatpush1.xpose.msra.mxu0 0.0
    %3026 = vmatprep.mubr.f32.mxu0 0.0
    %3027 = vmatmul.mubr.f32.gmra.mrb[0].mxu0 %v2930
    %v3028 = vpop.f32.mrb[0].mxu0
    %v3029 = vadd.f32 %v2882, %v3028
    %v3030 = vpop.f32.mrb[0].mxu0
    %3031 = vmatprep.mubr.f32.mxu0 0.0
    %3032 = vmatmul.mubr.f32.gmra.mrb[0].mxu0 %v2932
    %v3033 = vpop.f32.mrb[0].mxu0
    %v3034 = vadd.f32 %v2883, %v3033
    %v3035 = vpop.f32.mrb[0].mxu0
    %3036 = vmatprep.mubr.f32.mxu0 0.0
    %3037 = vmatmul.mubr.f32.gmra.mrb[0].mxu0 %v2934
    %v3038 = vpop.f32.mrb[0].mxu0
    %v3039 = vadd.f32 %v2884, %v3038
    %v3040 = vpop.f32.mrb[0].mxu0
    %3041 = vmatprep.mubr.f32.mxu0 0.0
    %3042 = vmatmul.mubr.f32.gmra.mrb[0].mxu0 %v2936
    %v3043 = vpop.f32.mrb[0].mxu0
    %v3044 = vadd.f32 %v2885, %v3043
    %v3045 = vpop.f32.mrb[0].mxu0
    %3046 = vmatprep.mubr.f32.mxu0 0.0
    %3047 = vmatmul.mubr.f32.gmra.mrb[0].mxu0 %v2938
    %v3048 = vpop.f32.mrb[0].mxu0
    %v3049 = vadd.f32 %v2886, %v3048
    %v3050 = vpop.f32.mrb[0].mxu0
    %3051 = vmatprep.mubr.f32.mxu0 0.0
    %3052 = vmatmul.mubr.f32.gmra.mrb[0].mxu0 %v2940
    %v3053 = vpop.f32.mrb[0].mxu0
    %v3054 = vadd.f32 %v2887, %v3053
    %v3055 = vpop.f32.mrb[0].mxu0
    %3056 = vmatprep.mubr.f32.mxu0 0.0
    %3057 = vmatmul.mubr.f32.gmra.mrb[0].mxu0 %v2942
    %v3058 = vpop.f32.mrb[0].mxu0
    %v3059 = vadd.f32 %v2888, %v3058
    %v3060 = vpop.f32.mrb[0].mxu0
    %3061 = vmatprep.mubr.f32.mxu0 0.0
    %3062 = vmatmul.mubr.f32.gmra.mrb[0].mxu0 %v2944
    %v3063 = vpop.f32.mrb[0].mxu0
    %v3064 = vadd.f32 %v2889, %v3063
    %v3065 = vpop.f32.mrb[0].mxu0
    %3066 = vmatprep.mubr.f32.mxu0 0.0
    %3067 = vmatmul.mubr.f32.gmra.mrb[0].mxu0 %v2946
    %v3068 = vpop.f32.mrb[0].mxu0
    %v3069 = vadd.f32 %v2890, %v3068
    %v3070 = vpop.f32.mrb[0].mxu0
    %3071 = vmatprep.mubr.f32.mxu0 0.0
    %3072 = vmatmul.mubr.f32.gmra.mrb[0].mxu0 %v2948
    %v3073 = vpop.f32.mrb[0].mxu0
    %v3074 = vadd.f32 %v2891, %v3073
    %v3075 = vpop.f32.mrb[0].mxu0
    %3076 = vmatprep.mubr.f32.mxu0 0.0
    %3077 = vmatmul.mubr.f32.gmra.mrb[0].mxu0 %v2950
    %v3078 = vpop.f32.mrb[0].mxu0
    %v3079 = vadd.f32 %v2892, %v3078
    %v3080 = vpop.f32.mrb[0].mxu0
    %3081 = vmatprep.mubr.f32.mxu0 0.0
    %3082 = vmatmul.mubr.f32.gmra.mrb[0].mxu0 %v2952
    %v3083 = vpop.f32.mrb[0].mxu0
    %v3084 = vadd.f32 %v2893, %v3083
    %v3085 = vpop.f32.mrb[0].mxu0
    %3086 = vmatprep.mubr.f32.mxu0 0.0
    %3087 = vmatmul.mubr.f32.gmra.mrb[0].mxu0 %v2954
    %v3088 = vpop.f32.mrb[0].mxu0
    %v3089 = vadd.f32 %v2894, %v3088
    %v3090 = vpop.f32.mrb[0].mxu0
    %3091 = vmatprep.mubr.f32.mxu0 0.0
    %3092 = vmatmul.mubr.f32.gmra.mrb[0].mxu0 %v2956
    %v3093 = vpop.f32.mrb[0].mxu0
    %v3094 = vadd.f32 %v2895, %v3093
    %v3095 = vpop.f32.mrb[0].mxu0
    %3096 = vmatprep.mubr.f32.mxu0 0.0
    %3097 = vmatmul.mubr.f32.gmra.mrb[0].mxu0 %v2958
    %v3098 = vpop.f32.mrb[0].mxu0
    %v3099 = vadd.f32 %v2896, %v3098
    %v3100 = vpop.f32.mrb[0].mxu0
    %3101 = vmatprep.mubr.f32.mxu0 0.0
    %3102 = vmatmul.mubr.f32.gmra.mrb[0].mxu0 %v2960
    %v3103 = vpop.f32.mrb[0].mxu0
    %v3104 = vadd.f32 %v2897, %v3103
    %v3105 = vpop.f32.mrb[0].mxu0
    %3106 = vdwg.mxu0
    %3107 = vmax.xlane.f32.xlu0 %v3029
    %v3108 = vpop.xlane.xlu0 %3107
    %3109 = vmax.xlane.f32.xlu0 %v3034
    %v3110 = vpop.xlane.xlu0 %3109
    %3111 = vmax.xlane.f32.xlu0 %v3039
    %v3112 = vpop.xlane.xlu0 %3111
    %3113 = vmax.xlane.f32.xlu0 %v3044
    %v3114 = vpop.xlane.xlu0 %3113
    %3115 = vmax.xlane.f32.xlu0 %v3049
    %v3116 = vpop.xlane.xlu0 %3115
    %3117 = vmax.xlane.f32.xlu0 %v3054
    %v3118 = vpop.xlane.xlu0 %3117
    %3119 = vmax.xlane.f32.xlu0 %v3059
    %v3120 = vpop.xlane.xlu0 %3119
    %3121 = vmax.xlane.f32.xlu0 %v3064
    %v3122 = vpop.xlane.xlu0 %3121
    %3123 = vmax.xlane.f32.xlu0 %v3069
    %v3124 = vpop.xlane.xlu0 %3123
    %3125 = vmax.xlane.f32.xlu0 %v3074
    %v3126 = vpop.xlane.xlu0 %3125
    %3127 = vmax.xlane.f32.xlu0 %v3079
    %v3128 = vpop.xlane.xlu0 %3127
    %3129 = vmax.xlane.f32.xlu0 %v3084
    %v3130 = vpop.xlane.xlu0 %3129
    %3131 = vmax.xlane.f32.xlu0 %v3089
    %v3132 = vpop.xlane.xlu0 %3131
    %3133 = vmax.xlane.f32.xlu0 %v3094
    %v3134 = vpop.xlane.xlu0 %3133
    %3135 = vmax.xlane.f32.xlu0 %v3099
    %v3136 = vpop.xlane.xlu0 %3135
    %3137 = vmax.xlane.f32.xlu0 %v3104
    %v3138 = vpop.xlane.xlu0 %3137
    %v3139 = vsub.f32 %v3029, %v3108
    %v3140 = vsub.f32 %v3034, %v3110
    %v3141 = vsub.f32 %v3039, %v3112
    %v3142 = vsub.f32 %v3044, %v3114
    %v3143 = vsub.f32 %v3049, %v3116
    %v3144 = vsub.f32 %v3054, %v3118
    %v3145 = vsub.f32 %v3059, %v3120
    %v3146 = vsub.f32 %v3064, %v3122
    %v3147 = vsub.f32 %v3069, %v3124
    %v3148 = vsub.f32 %v3074, %v3126
    %v3149 = vsub.f32 %v3079, %v3128
    %v3150 = vsub.f32 %v3084, %v3130
    %v3151 = vsub.f32 %v3089, %v3132
    %v3152 = vsub.f32 %v3094, %v3134
    %v3153 = vsub.f32 %v3099, %v3136
    %v3154 = vsub.f32 %v3104, %v3138
    %v3155 = vmul.f32 %v3139, 1.442695
    %v3156 = vpow.pop %v3155
    %v3157 = vmul.f32 %v3140, 1.442695
    %v3158 = vpow.pop %v3157
    %v3159 = vmul.f32 %v3141, 1.442695
    %v3160 = vpow.pop %v3159
    %v3161 = vmul.f32 %v3142, 1.442695
    %v3162 = vpow.pop %v3161
    %v3163 = vmul.f32 %v3143, 1.442695
    %v3164 = vpow.pop %v3163
    %v3165 = vmul.f32 %v3144, 1.442695
    %v3166 = vpow.pop %v3165
    %v3167 = vmul.f32 %v3145, 1.442695
    %v3168 = vpow.pop %v3167
    %v3169 = vmul.f32 %v3146, 1.442695
    %v3170 = vpow.pop %v3169
    %v3171 = vmul.f32 %v3147, 1.442695
    %v3172 = vpow.pop %v3171
    %v3173 = vmul.f32 %v3148, 1.442695
    %v3174 = vpow.pop %v3173
    %v3175 = vmul.f32 %v3149, 1.442695
    %v3176 = vpow.pop %v3175
    %v3177 = vmul.f32 %v3150, 1.442695
    %v3178 = vpow.pop %v3177
    %v3179 = vmul.f32 %v3151, 1.442695
    %v3180 = vpow.pop %v3179
    %v3181 = vmul.f32 %v3152, 1.442695
    %v3182 = vpow.pop %v3181
    %v3183 = vmul.f32 %v3153, 1.442695
    %v3184 = vpow.pop %v3183
    %v3185 = vmul.f32 %v3154, 1.442695
    %v3186 = vpow.pop %v3185
    %3187 = vadd.xlane.f32.xlu0 %v3156
    %v3188 = vpop.xlane.xlu0 %3187
    %3189 = vadd.xlane.f32.xlu0 %v3158
    %v3190 = vpop.xlane.xlu0 %3189
    %3191 = vadd.xlane.f32.xlu0 %v3160
    %v3192 = vpop.xlane.xlu0 %3191
    %3193 = vadd.xlane.f32.xlu0 %v3162
    %v3194 = vpop.xlane.xlu0 %3193
    %3195 = vadd.xlane.f32.xlu0 %v3164
    %v3196 = vpop.xlane.xlu0 %3195
    %3197 = vadd.xlane.f32.xlu0 %v3166
    %v3198 = vpop.xlane.xlu0 %3197
    %3199 = vadd.xlane.f32.xlu0 %v3168
    %v3200 = vpop.xlane.xlu0 %3199
    %3201 = vadd.xlane.f32.xlu0 %v3170
    %v3202 = vpop.xlane.xlu0 %3201
    %3203 = vadd.xlane.f32.xlu0 %v3172
    %v3204 = vpop.xlane.xlu0 %3203
    %3205 = vadd.xlane.f32.xlu0 %v3174
    %v3206 = vpop.xlane.xlu0 %3205
    %3207 = vadd.xlane.f32.xlu0 %v3176
    %v3208 = vpop.xlane.xlu0 %3207
    %3209 = vadd.xlane.f32.xlu0 %v3178
    %v3210 = vpop.xlane.xlu0 %3209
    %3211 = vadd.xlane.f32.xlu0 %v3180
    %v3212 = vpop.xlane.xlu0 %3211
    %3213 = vadd.xlane.f32.xlu0 %v3182
    %v3214 = vpop.xlane.xlu0 %3213
    %3215 = vadd.xlane.f32.xlu0 %v3184
    %v3216 = vpop.xlane.xlu0 %3215
    %3217 = vadd.xlane.f32.xlu0 %v3186
    %v3218 = vpop.xlane.xlu0 %3217
    %v3219 = vrcp.pop %v3188
    %v3220 = vrcp.pop %v3190
    %v3221 = vrcp.pop %v3192
    %v3222 = vrcp.pop %v3194
    %v3223 = vrcp.pop %v3196
    %v3224 = vrcp.pop %v3198
    %v3225 = vrcp.pop %v3200
    %v3226 = vrcp.pop %v3202
    %v3227 = vrcp.pop %v3204
    %v3228 = vrcp.pop %v3206
    %v3229 = vrcp.pop %v3208
    %v3230 = vrcp.pop %v3210
    %v3231 = vrcp.pop %v3212
    %v3232 = vrcp.pop %v3214
    %v3233 = vrcp.pop %v3216
    %v3234 = vrcp.pop %v3218
    %v3235 = vmul.f32 %v3156, %v3219
    %v3236 = vmul.f32 %v3158, %v3220
    %v3237 = vmul.f32 %v3160, %v3221
    %v3238 = vmul.f32 %v3162, %v3222
    %v3239 = vmul.f32 %v3164, %v3223
    %v3240 = vmul.f32 %v3166, %v3224
    %v3241 = vmul.f32 %v3168, %v3225
    %v3242 = vmul.f32 %v3170, %v3226
    %v3243 = vmul.f32 %v3172, %v3227
    %v3244 = vmul.f32 %v3174, %v3228
    %v3245 = vmul.f32 %v3176, %v3229
    %v3246 = vmul.f32 %v3178, %v3230
    %v3247 = vmul.f32 %v3180, %v3231
    %v3248 = vmul.f32 %v3182, %v3232
    %v3249 = vmul.f32 %v3184, %v3233
    %v3250 = vmul.f32 %v3186, %v3234
    %s3251 = sld [smem:[#allocation3 + $0x4]]
    %v3252 = vstv %s3251
    %v3253 = vmul.f32 %v3252, %v3235
    %v3254 = vmul.f32 %v3252, %v3236
    %v3255 = vmul.f32 %v3252, %v3237
    %v3256 = vmul.f32 %v3252, %v3238
    %v3257 = vmul.f32 %v3252, %v3239
    %v3258 = vmul.f32 %v3252, %v3240
    %v3259 = vmul.f32 %v3252, %v3241
    %v3260 = vmul.f32 %v3252, %v3242
    %v3261 = vmul.f32 %v3252, %v3243
    %v3262 = vmul.f32 %v3252, %v3244
    %v3263 = vmul.f32 %v3252, %v3245
    %v3264 = vmul.f32 %v3252, %v3246
    %v3265 = vmul.f32 %v3252, %v3247
    %v3266 = vmul.f32 %v3252, %v3248
    %v3267 = vmul.f32 %v3252, %v3249
    %v3268 = vmul.f32 %v3252, %v3250
    %v3269 = vadd.f32 %v2866, %v3253
    %v3270 = vadd.f32 %v2867, %v3254
    %v3271 = vadd.f32 %v2868, %v3255
    %v3272 = vadd.f32 %v2869, %v3256
    %v3273 = vadd.f32 %v2870, %v3257
    %v3274 = vadd.f32 %v2871, %v3258
    %v3275 = vadd.f32 %v2872, %v3259
    %v3276 = vadd.f32 %v2873, %v3260
    %v3277 = vadd.f32 %v2874, %v3261
    %v3278 = vadd.f32 %v2875, %v3262
    %v3279 = vadd.f32 %v2876, %v3263
    %v3280 = vadd.f32 %v2877, %v3264
    %v3281 = vadd.f32 %v2878, %v3265
    %v3282 = vadd.f32 %v2879, %v3266
    %v3283 = vadd.f32 %v2880, %v3267
    %v3284 = vadd.f32 %v2881, %v3268
    %v3285 = vld [vmem:[%s2] sm:$0xff]
    %v3286 = vld [vmem:[%s2 + $0x8] sm:$0xff]
    %v3287 = vld [vmem:[%s2 + $0x10] sm:$0xff]
    %v3288 = vld [vmem:[%s2 + $0x18] sm:$0xff]
    %v3289 = vld [vmem:[%s2 + $0x20] sm:$0xff]
    %v3290 = vld [vmem:[%s2 + $0x28] sm:$0xff]
    %v3291 = vld [vmem:[%s2 + $0x30] sm:$0xff]
    %v3292 = vld [vmem:[%s2 + $0x38] sm:$0xff]
    %v3293 = vld [vmem:[%s2 + $0x40] sm:$0xff]
    %v3294 = vld [vmem:[%s2 + $0x48] sm:$0xff]
    %v3295 = vld [vmem:[%s2 + $0x50] sm:$0xff]
    %v3296 = vld [vmem:[%s2 + $0x58] sm:$0xff]
    %v3297 = vld [vmem:[%s2 + $0x60] sm:$0xff]
    %v3298 = vld [vmem:[%s2 + $0x68] sm:$0xff]
    %v3299 = vld [vmem:[%s2 + $0x70] sm:$0xff]
    %v3300 = vld [vmem:[%s2 + $0x78] sm:$0xff]
    %3301 = vrot.lane.b32.xlu0 %v2353, 96
    %v3302 = vpop.permute.xlu0 %3301
    %3303 = vrot.lane.b32.xlu0 %v2358, 96
    %v3304 = vpop.permute.xlu0 %3303
    %3305 = vrot.lane.b32.xlu0 %v2363, 96
    %v3306 = vpop.permute.xlu0 %3305
    %3307 = vrot.lane.b32.xlu0 %v2368, 96
    %v3308 = vpop.permute.xlu0 %3307
    %3309 = vrot.lane.b32.xlu0 %v2373, 96
    %v3310 = vpop.permute.xlu0 %3309
    %3311 = vrot.lane.b32.xlu0 %v2378, 96
    %v3312 = vpop.permute.xlu0 %3311
    %3313 = vrot.lane.b32.xlu0 %v2383, 96
    %v3314 = vpop.permute.xlu0 %3313
    %3315 = vrot.lane.b32.xlu0 %v2388, 96
    %v3316 = vpop.permute.xlu0 %3315
    %3317 = vrot.lane.b32.xlu0 %v2393, 96
    %v3318 = vpop.permute.xlu0 %3317
    %3319 = vrot.lane.b32.xlu0 %v2398, 96
    %v3320 = vpop.permute.xlu0 %3319
    %3321 = vrot.lane.b32.xlu0 %v2403, 96
    %v3322 = vpop.permute.xlu0 %3321
    %3323 = vrot.lane.b32.xlu0 %v2408, 96
    %v3324 = vpop.permute.xlu0 %3323
    %3325 = vrot.lane.b32.xlu0 %v2413, 96
    %v3326 = vpop.permute.xlu0 %3325
    %3327 = vrot.lane.b32.xlu0 %v2418, 96
    %v3328 = vpop.permute.xlu0 %3327
    %3329 = vrot.lane.b32.xlu0 %v2423, 96
    %v3330 = vpop.permute.xlu0 %3329
    %3331 = vrot.lane.b32.xlu0 %v2428, 96
    %v3332 = vpop.permute.xlu0 %3331
    %v3333 = vsel %vm506, %v3302, 0
    %v3335 = vsel %vm506, %v3304, 0
    %v3337 = vsel %vm506, %v3306, 0
    %v3339 = vsel %vm506, %v3308, 0
    %v3341 = vsel %vm506, %v3310, 0
    %v3343 = vsel %vm506, %v3312, 0
    %v3345 = vsel %vm506, %v3314, 0
    %v3347 = vsel %vm506, %v3316, 0
    %v3349 = vsel %vm506, %v3318, 0
    %v3351 = vsel %vm506, %v3320, 0
    %v3353 = vsel %vm506, %v3322, 0
    %v3355 = vsel %vm506, %v3324, 0
    %v3357 = vsel %vm506, %v3326, 0
    %v3359 = vsel %vm506, %v3328, 0
    %v3361 = vsel %vm506, %v3330, 0
    %v3363 = vsel %vm506, %v3332, 0
    %3365 = vmatprep.subr.mxu0 0.0
    %3366 = vmatpush1.xpose.msra.mxu0 %v2527
    %3367 = vmatprep.subr.mxu0 0.0
    %3368 = vmatpush1.xpose.msra.mxu0 %v2529
    %3369 = vmatprep.subr.mxu0 0.0
    %3370 = vmatpush1.xpose.msra.mxu0 %v2531
    %3371 = vmatprep.subr.mxu0 0.0
    %3372 = vmatpush1.xpose.msra.mxu0 %v2533
    %3373 = vmatprep.subr.mxu0 0.0
    %3374 = vmatpush1.xpose.msra.mxu0 %v2535
    %3375 = vmatprep.subr.mxu0 0.0
    %3376 = vmatpush1.xpose.msra.mxu0 %v2537
    %3377 = vmatprep.subr.mxu0 0.0
    %3378 = vmatpush1.xpose.msra.mxu0 %v2539
    %3379 = vmatprep.subr.mxu0 0.0
    %3380 = vmatpush1.xpose.msra.mxu0 %v2541
    %3381 = vmatprep.subr.mxu0 0.0
    %3382 = vmatpush1.xpose.msra.mxu0 %v2543
    %3383 = vmatprep.subr.mxu0 0.0
    %3384 = vmatpush1.xpose.msra.mxu0 %v2545
    %3385 = vmatprep.subr.mxu0 0.0
    %3386 = vmatpush1.xpose.msra.mxu0 %v2547
    %3387 = vmatprep.subr.mxu0 0.0
    %3388 = vmatpush1.xpose.msra.mxu0 %v2549
    %3389 = vmatprep.subr.mxu0 0.0
    %3390 = vmatpush1.xpose.msra.mxu0 %v2551
    %3391 = vmatprep.subr.mxu0 0.0
    %3392 = vmatpush1.xpose.msra.mxu0 %v2553
    %3393 = vmatprep.subr.mxu0 0.0
    %3394 = vmatpush1.xpose.msra.mxu0 %v2555
    %3395 = vmatprep.subr.mxu0 0.0
    %3396 = vmatpush1.xpose.msra.mxu0 %v2557
    %3397 = vmatprep.subr.mxu0 0.0
    %3398 = vmatpush1.xpose.msra.mxu0 0.0
    %3399 = vmatprep.subr.mxu0 0.0
    %3400 = vmatpush1.xpose.msra.mxu0 0.0
    %3401 = vmatprep.subr.mxu0 0.0
    %3402 = vmatpush1.xpose.msra.mxu0 0.0
    %3403 = vmatprep.subr.mxu0 0.0
    %3404 = vmatpush1.xpose.msra.mxu0 0.0
    %3405 = vmatprep.subr.mxu0 0.0
    %3406 = vmatpush1.xpose.msra.mxu0 0.0
    %3407 = vmatprep.subr.mxu0 0.0
    %3408 = vmatpush1.xpose.msra.mxu0 0.0
    %3409 = vmatprep.subr.mxu0 0.0
    %3410 = vmatpush1.xpose.msra.mxu0 0.0
    %3411 = vmatprep.subr.mxu0 0.0
    %3412 = vmatpush1.xpose.msra.mxu0 0.0
    %3413 = vmatprep.subr.mxu0 0.0
    %3414 = vmatpush1.xpose.msra.mxu0 0.0
    %3415 = vmatprep.subr.mxu0 0.0
    %3416 = vmatpush1.xpose.msra.mxu0 0.0
    %3417 = vmatprep.subr.mxu0 0.0
    %3418 = vmatpush1.xpose.msra.mxu0 0.0
    %3419 = vmatprep.subr.mxu0 0.0
    %3420 = vmatpush1.xpose.msra.mxu0 0.0
    %3421 = vmatprep.subr.mxu0 0.0
    %3422 = vmatpush1.xpose.msra.mxu0 0.0
    %3423 = vmatprep.subr.mxu0 0.0
    %3424 = vmatpush1.xpose.msra.mxu0 0.0
    %3425 = vmatprep.subr.mxu0 0.0
    %3426 = vmatpush1.xpose.msra.mxu0 0.0
    %3427 = vmatprep.subr.mxu0 0.0
    %3428 = vmatpush1.xpose.msra.mxu0 0.0
    %3429 = vmatprep.mubr.f32.mxu0 0.0
    %3430 = vmatmul.mubr.f32.gmra.mrb[0].mxu0 %v3333
    %v3431 = vpop.f32.mrb[0].mxu0
    %v3432 = vadd.f32 %v3285, %v3431
    %v3433 = vpop.f32.mrb[0].mxu0
    %3434 = vmatprep.mubr.f32.mxu0 0.0
    %3435 = vmatmul.mubr.f32.gmra.mrb[0].mxu0 %v3335
    %v3436 = vpop.f32.mrb[0].mxu0
    %v3437 = vadd.f32 %v3286, %v3436
    %v3438 = vpop.f32.mrb[0].mxu0
    %3439 = vmatprep.mubr.f32.mxu0 0.0
    %3440 = vmatmul.mubr.f32.gmra.mrb[0].mxu0 %v3337
    %v3441 = vpop.f32.mrb[0].mxu0
    %v3442 = vadd.f32 %v3287, %v3441
    %v3443 = vpop.f32.mrb[0].mxu0
    %3444 = vmatprep.mubr.f32.mxu0 0.0
    %3445 = vmatmul.mubr.f32.gmra.mrb[0].mxu0 %v3339
    %v3446 = vpop.f32.mrb[0].mxu0
    %v3447 = vadd.f32 %v3288, %v3446
    %v3448 = vpop.f32.mrb[0].mxu0
    %3449 = vmatprep.mubr.f32.mxu0 0.0
    %3450 = vmatmul.mubr.f32.gmra.mrb[0].mxu0 %v3341
    %v3451 = vpop.f32.mrb[0].mxu0
    %v3452 = vadd.f32 %v3289, %v3451
    %v3453 = vpop.f32.mrb[0].mxu0
    %3454 = vmatprep.mubr.f32.mxu0 0.0
    %3455 = vmatmul.mubr.f32.gmra.mrb[0].mxu0 %v3343
    %v3456 = vpop.f32.mrb[0].mxu0
    %v3457 = vadd.f32 %v3290, %v3456
    %v3458 = vpop.f32.mrb[0].mxu0
    %3459 = vmatprep.mubr.f32.mxu0 0.0
    %3460 = vmatmul.mubr.f32.gmra.mrb[0].mxu0 %v3345
    %v3461 = vpop.f32.mrb[0].mxu0
    %v3462 = vadd.f32 %v3291, %v3461
    %v3463 = vpop.f32.mrb[0].mxu0
    %3464 = vmatprep.mubr.f32.mxu0 0.0
    %3465 = vmatmul.mubr.f32.gmra.mrb[0].mxu0 %v3347
    %v3466 = vpop.f32.mrb[0].mxu0
    %v3467 = vadd.f32 %v3292, %v3466
    %v3468 = vpop.f32.mrb[0].mxu0
    %3469 = vmatprep.mubr.f32.mxu0 0.0
    %3470 = vmatmul.mubr.f32.gmra.mrb[0].mxu0 %v3349
    %v3471 = vpop.f32.mrb[0].mxu0
    %v3472 = vadd.f32 %v3293, %v3471
    %v3473 = vpop.f32.mrb[0].mxu0
    %3474 = vmatprep.mubr.f32.mxu0 0.0
    %3475 = vmatmul.mubr.f32.gmra.mrb[0].mxu0 %v3351
    %v3476 = vpop.f32.mrb[0].mxu0
    %v3477 = vadd.f32 %v3294, %v3476
    %v3478 = vpop.f32.mrb[0].mxu0
    %3479 = vmatprep.mubr.f32.mxu0 0.0
    %3480 = vmatmul.mubr.f32.gmra.mrb[0].mxu0 %v3353
    %v3481 = vpop.f32.mrb[0].mxu0
    %v3482 = vadd.f32 %v3295, %v3481
    %v3483 = vpop.f32.mrb[0].mxu0
    %3484 = vmatprep.mubr.f32.mxu0 0.0
    %3485 = vmatmul.mubr.f32.gmra.mrb[0].mxu0 %v3355
    %v3486 = vpop.f32.mrb[0].mxu0
    %v3487 = vadd.f32 %v3296, %v3486
    %v3488 = vpop.f32.mrb[0].mxu0
    %3489 = vmatprep.mubr.f32.mxu0 0.0
    %3490 = vmatmul.mubr.f32.gmra.mrb[0].mxu0 %v3357
    %v3491 = vpop.f32.mrb[0].mxu0
    %v3492 = vadd.f32 %v3297, %v3491
    %v3493 = vpop.f32.mrb[0].mxu0
    %3494 = vmatprep.mubr.f32.mxu0 0.0
    %3495 = vmatmul.mubr.f32.gmra.mrb[0].mxu0 %v3359
    %v3496 = vpop.f32.mrb[0].mxu0
    %v3497 = vadd.f32 %v3298, %v3496
    %v3498 = vpop.f32.mrb[0].mxu0
    %3499 = vmatprep.mubr.f32.mxu0 0.0
    %3500 = vmatmul.mubr.f32.gmra.mrb[0].mxu0 %v3361
    %v3501 = vpop.f32.mrb[0].mxu0
    %v3502 = vadd.f32 %v3299, %v3501
    %v3503 = vpop.f32.mrb[0].mxu0
    %3504 = vmatprep.mubr.f32.mxu0 0.0
    %3505 = vmatmul.mubr.f32.gmra.mrb[0].mxu0 %v3363
    %v3506 = vpop.f32.mrb[0].mxu0
    %v3507 = vadd.f32 %v3300, %v3506
    %v3508 = vpop.f32.mrb[0].mxu0
    %3509 = vdwg.mxu0
    %3510 = vmax.xlane.f32.xlu0 %v3432
    %v3511 = vpop.xlane.xlu0 %3510
    %3512 = vmax.xlane.f32.xlu0 %v3437
    %v3513 = vpop.xlane.xlu0 %3512
    %3514 = vmax.xlane.f32.xlu0 %v3442
    %v3515 = vpop.xlane.xlu0 %3514
    %3516 = vmax.xlane.f32.xlu0 %v3447
    %v3517 = vpop.xlane.xlu0 %3516
    %3518 = vmax.xlane.f32.xlu0 %v3452
    %v3519 = vpop.xlane.xlu0 %3518
    %3520 = vmax.xlane.f32.xlu0 %v3457
    %v3521 = vpop.xlane.xlu0 %3520
    %3522 = vmax.xlane.f32.xlu0 %v3462
    %v3523 = vpop.xlane.xlu0 %3522
    %3524 = vmax.xlane.f32.xlu0 %v3467
    %v3525 = vpop.xlane.xlu0 %3524
    %3526 = vmax.xlane.f32.xlu0 %v3472
    %v3527 = vpop.xlane.xlu0 %3526
    %3528 = vmax.xlane.f32.xlu0 %v3477
    %v3529 = vpop.xlane.xlu0 %3528
    %3530 = vmax.xlane.f32.xlu0 %v3482
    %v3531 = vpop.xlane.xlu0 %3530
    %3532 = vmax.xlane.f32.xlu0 %v3487
    %v3533 = vpop.xlane.xlu0 %3532
    %3534 = vmax.xlane.f32.xlu0 %v3492
    %v3535 = vpop.xlane.xlu0 %3534
    %3536 = vmax.xlane.f32.xlu0 %v3497
    %v3537 = vpop.xlane.xlu0 %3536
    %3538 = vmax.xlane.f32.xlu0 %v3502
    %v3539 = vpop.xlane.xlu0 %3538
    %3540 = vmax.xlane.f32.xlu0 %v3507
    %v3541 = vpop.xlane.xlu0 %3540
    %v3542 = vsub.f32 %v3432, %v3511
    %v3543 = vsub.f32 %v3437, %v3513
    %v3544 = vsub.f32 %v3442, %v3515
    %v3545 = vsub.f32 %v3447, %v3517
    %v3546 = vsub.f32 %v3452, %v3519
    %v3547 = vsub.f32 %v3457, %v3521
    %v3548 = vsub.f32 %v3462, %v3523
    %v3549 = vsub.f32 %v3467, %v3525
    %v3550 = vsub.f32 %v3472, %v3527
    %v3551 = vsub.f32 %v3477, %v3529
    %v3552 = vsub.f32 %v3482, %v3531
    %v3553 = vsub.f32 %v3487, %v3533
    %v3554 = vsub.f32 %v3492, %v3535
    %v3555 = vsub.f32 %v3497, %v3537
    %v3556 = vsub.f32 %v3502, %v3539
    %v3557 = vsub.f32 %v3507, %v3541
    %v3558 = vmul.f32 %v3542, 1.442695
    %v3559 = vpow.pop %v3558
    %v3560 = vmul.f32 %v3543, 1.442695
    %v3561 = vpow.pop %v3560
    %v3562 = vmul.f32 %v3544, 1.442695
    %v3563 = vpow.pop %v3562
    %v3564 = vmul.f32 %v3545, 1.442695
    %v3565 = vpow.pop %v3564
    %v3566 = vmul.f32 %v3546, 1.442695
    %v3567 = vpow.pop %v3566
    %v3568 = vmul.f32 %v3547, 1.442695
    %v3569 = vpow.pop %v3568
    %v3570 = vmul.f32 %v3548, 1.442695
    %v3571 = vpow.pop %v3570
    %v3572 = vmul.f32 %v3549, 1.442695
    %v3573 = vpow.pop %v3572
    %v3574 = vmul.f32 %v3550, 1.442695
    %v3575 = vpow.pop %v3574
    %v3576 = vmul.f32 %v3551, 1.442695
    %v3577 = vpow.pop %v3576
    %v3578 = vmul.f32 %v3552, 1.442695
    %v3579 = vpow.pop %v3578
    %v3580 = vmul.f32 %v3553, 1.442695
    %v3581 = vpow.pop %v3580
    %v3582 = vmul.f32 %v3554, 1.442695
    %v3583 = vpow.pop %v3582
    %v3584 = vmul.f32 %v3555, 1.442695
    %v3585 = vpow.pop %v3584
    %v3586 = vmul.f32 %v3556, 1.442695
    %v3587 = vpow.pop %v3586
    %v3588 = vmul.f32 %v3557, 1.442695
    %v3589 = vpow.pop %v3588
    %3590 = vadd.xlane.f32.xlu0 %v3559
    %v3591 = vpop.xlane.xlu0 %3590
    %3592 = vadd.xlane.f32.xlu0 %v3561
    %v3593 = vpop.xlane.xlu0 %3592
    %3594 = vadd.xlane.f32.xlu0 %v3563
    %v3595 = vpop.xlane.xlu0 %3594
    %3596 = vadd.xlane.f32.xlu0 %v3565
    %v3597 = vpop.xlane.xlu0 %3596
    %3598 = vadd.xlane.f32.xlu0 %v3567
    %v3599 = vpop.xlane.xlu0 %3598
    %3600 = vadd.xlane.f32.xlu0 %v3569
    %v3601 = vpop.xlane.xlu0 %3600
    %3602 = vadd.xlane.f32.xlu0 %v3571
    %v3603 = vpop.xlane.xlu0 %3602
    %3604 = vadd.xlane.f32.xlu0 %v3573
    %v3605 = vpop.xlane.xlu0 %3604
    %3606 = vadd.xlane.f32.xlu0 %v3575
    %v3607 = vpop.xlane.xlu0 %3606
    %3608 = vadd.xlane.f32.xlu0 %v3577
    %v3609 = vpop.xlane.xlu0 %3608
    %3610 = vadd.xlane.f32.xlu0 %v3579
    %v3611 = vpop.xlane.xlu0 %3610
    %3612 = vadd.xlane.f32.xlu0 %v3581
    %v3613 = vpop.xlane.xlu0 %3612
    %3614 = vadd.xlane.f32.xlu0 %v3583
    %v3615 = vpop.xlane.xlu0 %3614
    %3616 = vadd.xlane.f32.xlu0 %v3585
    %v3617 = vpop.xlane.xlu0 %3616
    %3618 = vadd.xlane.f32.xlu0 %v3587
    %v3619 = vpop.xlane.xlu0 %3618
    %3620 = vadd.xlane.f32.xlu0 %v3589
    %v3621 = vpop.xlane.xlu0 %3620
    %v3622 = vrcp.pop %v3591
    %v3623 = vrcp.pop %v3593
    %v3624 = vrcp.pop %v3595
    %v3625 = vrcp.pop %v3597
    %v3626 = vrcp.pop %v3599
    %v3627 = vrcp.pop %v3601
    %v3628 = vrcp.pop %v3603
    %v3629 = vrcp.pop %v3605
    %v3630 = vrcp.pop %v3607
    %v3631 = vrcp.pop %v3609
    %v3632 = vrcp.pop %v3611
    %v3633 = vrcp.pop %v3613
    %v3634 = vrcp.pop %v3615
    %v3635 = vrcp.pop %v3617
    %v3636 = vrcp.pop %v3619
    %v3637 = vrcp.pop %v3621
    %v3638 = vmul.f32 %v3559, %v3622
    %v3639 = vmul.f32 %v3561, %v3623
    %v3640 = vmul.f32 %v3563, %v3624
    %v3641 = vmul.f32 %v3565, %v3625
    %v3642 = vmul.f32 %v3567, %v3626
    %v3643 = vmul.f32 %v3569, %v3627
    %v3644 = vmul.f32 %v3571, %v3628
    %v3645 = vmul.f32 %v3573, %v3629
    %v3646 = vmul.f32 %v3575, %v3630
    %v3647 = vmul.f32 %v3577, %v3631
    %v3648 = vmul.f32 %v3579, %v3632
    %v3649 = vmul.f32 %v3581, %v3633
    %v3650 = vmul.f32 %v3583, %v3634
    %v3651 = vmul.f32 %v3585, %v3635
    %v3652 = vmul.f32 %v3587, %v3636
    %v3653 = vmul.f32 %v3589, %v3637
    %s3654 = sld [smem:[#allocation3 + $0x5]]
    %v3655 = vstv %s3654
    %v3656 = vmul.f32 %v3655, %v3638
    %v3657 = vmul.f32 %v3655, %v3639
    %v3658 = vmul.f32 %v3655, %v3640
    %v3659 = vmul.f32 %v3655, %v3641
    %v3660 = vmul.f32 %v3655, %v3642
    %v3661 = vmul.f32 %v3655, %v3643
    %v3662 = vmul.f32 %v3655, %v3644
    %v3663 = vmul.f32 %v3655, %v3645
    %v3664 = vmul.f32 %v3655, %v3646
    %v3665 = vmul.f32 %v3655, %v3647
    %v3666 = vmul.f32 %v3655, %v3648
    %v3667 = vmul.f32 %v3655, %v3649
    %v3668 = vmul.f32 %v3655, %v3650
    %v3669 = vmul.f32 %v3655, %v3651
    %v3670 = vmul.f32 %v3655, %v3652
    %v3671 = vmul.f32 %v3655, %v3653
    %v3672 = vadd.f32 %v3269, %v3656
    %v3673 = vadd.f32 %v3270, %v3657
    %v3674 = vadd.f32 %v3271, %v3658
    %v3675 = vadd.f32 %v3272, %v3659
    %v3676 = vadd.f32 %v3273, %v3660
    %v3677 = vadd.f32 %v3274, %v3661
    %v3678 = vadd.f32 %v3275, %v3662
    %v3679 = vadd.f32 %v3276, %v3663
    %v3680 = vadd.f32 %v3277, %v3664
    %v3681 = vadd.f32 %v3278, %v3665
    %v3682 = vadd.f32 %v3279, %v3666
    %v3683 = vadd.f32 %v3280, %v3667
    %v3684 = vadd.f32 %v3281, %v3668
    %v3685 = vadd.f32 %v3282, %v3669
    %v3686 = vadd.f32 %v3283, %v3670
    %v3687 = vadd.f32 %v3284, %v3671
    %3688 = vrot.lane.b32.xlu0 %v2353, 64
    %v3689 = vpop.permute.xlu0 %3688
    %3690 = vrot.lane.b32.xlu0 %v2358, 64
    %v3691 = vpop.permute.xlu0 %3690
    %3692 = vrot.lane.b32.xlu0 %v2363, 64
    %v3693 = vpop.permute.xlu0 %3692
    %3694 = vrot.lane.b32.xlu0 %v2368, 64
    %v3695 = vpop.permute.xlu0 %3694
    %3696 = vrot.lane.b32.xlu0 %v2373, 64
    %v3697 = vpop.permute.xlu0 %3696
    %3698 = vrot.lane.b32.xlu0 %v2378, 64
    %v3699 = vpop.permute.xlu0 %3698
    %3700 = vrot.lane.b32.xlu0 %v2383, 64
    %v3701 = vpop.permute.xlu0 %3700
    %3702 = vrot.lane.b32.xlu0 %v2388, 64
    %v3703 = vpop.permute.xlu0 %3702
    %3704 = vrot.lane.b32.xlu0 %v2393, 64
    %v3705 = vpop.permute.xlu0 %3704
    %3706 = vrot.lane.b32.xlu0 %v2398, 64
    %v3707 = vpop.permute.xlu0 %3706
    %3708 = vrot.lane.b32.xlu0 %v2403, 64
    %v3709 = vpop.permute.xlu0 %3708
    %3710 = vrot.lane.b32.xlu0 %v2408, 64
    %v3711 = vpop.permute.xlu0 %3710
    %3712 = vrot.lane.b32.xlu0 %v2413, 64
    %v3713 = vpop.permute.xlu0 %3712
    %3714 = vrot.lane.b32.xlu0 %v2418, 64
    %v3715 = vpop.permute.xlu0 %3714
    %3716 = vrot.lane.b32.xlu0 %v2423, 64
    %v3717 = vpop.permute.xlu0 %3716
    %3718 = vrot.lane.b32.xlu0 %v2428, 64
    %v3719 = vpop.permute.xlu0 %3718
    %3736 = vmatprep.subr.mxu0 0.0
    %3737 = vmatpush1.msra.mxu0 %v3689
    %3738 = vmatprep.subr.mxu0 0.0
    %3739 = vmatpush1.msra.mxu0 %v3691
    %3740 = vmatprep.subr.mxu0 0.0
    %3741 = vmatpush1.msra.mxu0 %v3693
    %3742 = vmatprep.subr.mxu0 0.0
    %3743 = vmatpush1.msra.mxu0 %v3695
    %3744 = vmatprep.subr.mxu0 0.0
    %3745 = vmatpush1.msra.mxu0 %v3697
    %3746 = vmatprep.subr.mxu0 0.0
    %3747 = vmatpush1.msra.mxu0 %v3699
    %3748 = vmatprep.subr.mxu0 0.0
    %3749 = vmatpush1.msra.mxu0 %v3701
    %3750 = vmatprep.subr.mxu0 0.0
    %3751 = vmatpush1.msra.mxu0 %v3703
    %3752 = vmatprep.subr.mxu0 0.0
    %3753 = vmatpush1.msra.mxu0 %v3705
    %3754 = vmatprep.subr.mxu0 0.0
    %3755 = vmatpush1.msra.mxu0 %v3707
    %3756 = vmatprep.subr.mxu0 0.0
    %3757 = vmatpush1.msra.mxu0 %v3709
    %3758 = vmatprep.subr.mxu0 0.0
    %3759 = vmatpush1.msra.mxu0 %v3711
    %3760 = vmatprep.subr.mxu0 0.0
    %3761 = vmatpush1.msra.mxu0 %v3713
    %3762 = vmatprep.subr.mxu0 0.0
    %3763 = vmatpush1.msra.mxu0 %v3715
    %3764 = vmatprep.subr.mxu0 0.0
    %3765 = vmatpush1.msra.mxu0 %v3717
    %3766 = vmatprep.subr.mxu0 0.0
    %3767 = vmatpush1.msra.mxu0 %v3719
    %3768 = vmatprep.subr.mxu0 0.0
    %3769 = vmatpush1.msra.mxu0 0.0
    %3770 = vmatprep.subr.mxu0 0.0
    %3771 = vmatpush1.msra.mxu0 0.0
    %3772 = vmatprep.subr.mxu0 0.0
    %3773 = vmatpush1.msra.mxu0 0.0
    %3774 = vmatprep.subr.mxu0 0.0
    %3775 = vmatpush1.msra.mxu0 0.0
    %3776 = vmatprep.subr.mxu0 0.0
    %3777 = vmatpush1.msra.mxu0 0.0
    %3778 = vmatprep.subr.mxu0 0.0
    %3779 = vmatpush1.msra.mxu0 0.0
    %3780 = vmatprep.subr.mxu0 0.0
    %3781 = vmatpush1.msra.mxu0 0.0
    %3782 = vmatprep.subr.mxu0 0.0
    %3783 = vmatpush1.msra.mxu0 0.0
    %3784 = vmatprep.subr.mxu0 0.0
    %3785 = vmatpush1.msra.mxu0 0.0
    %3786 = vmatprep.subr.mxu0 0.0
    %3787 = vmatpush1.msra.mxu0 0.0
    %3788 = vmatprep.subr.mxu0 0.0
    %3789 = vmatpush1.msra.mxu0 0.0
    %3790 = vmatprep.subr.mxu0 0.0
    %3791 = vmatpush1.msra.mxu0 0.0
    %3792 = vmatprep.subr.mxu0 0.0
    %3793 = vmatpush1.msra.mxu0 0.0
    %3794 = vmatprep.subr.mxu0 0.0
    %3795 = vmatpush1.msra.mxu0 0.0
    %3796 = vmatprep.subr.mxu0 0.0
    %3797 = vmatpush1.msra.mxu0 0.0
    %3798 = vmatprep.subr.mxu0 0.0
    %3799 = vmatpush1.msra.mxu0 0.0
    %3800 = vmatprep.mubr.f32.mxu0 0.0
    %3801 = vmatmul.mubr.f32.gmra.mrb[0].mxu0 %v3672
    %v3802 = vpop.f32.mrb[0].mxu0
    %v3803 = vadd.f32 0.0, %v3802
    %v3804 = vpop.f32.mrb[0].mxu0
    %3805 = vmatprep.mubr.f32.mxu0 0.0
    %3806 = vmatmul.mubr.f32.gmra.mrb[0].mxu0 %v3673
    %v3807 = vpop.f32.mrb[0].mxu0
    %v3808 = vadd.f32 0.0, %v3807
    %v3809 = vpop.f32.mrb[0].mxu0
    %3810 = vmatprep.mubr.f32.mxu0 0.0
    %3811 = vmatmul.mubr.f32.gmra.mrb[0].mxu0 %v3674
    %v3812 = vpop.f32.mrb[0].mxu0
    %v3813 = vadd.f32 0.0, %v3812
    %v3814 = vpop.f32.mrb[0].mxu0
    %3815 = vmatprep.mubr.f32.mxu0 0.0
    %3816 = vmatmul.mubr.f32.gmra.mrb[0].mxu0 %v3675
    %v3817 = vpop.f32.mrb[0].mxu0
    %v3818 = vadd.f32 0.0, %v3817
    %v3819 = vpop.f32.mrb[0].mxu0
    %3820 = vmatprep.mubr.f32.mxu0 0.0
    %3821 = vmatmul.mubr.f32.gmra.mrb[0].mxu0 %v3676
    %v3822 = vpop.f32.mrb[0].mxu0
    %v3823 = vadd.f32 0.0, %v3822
    %v3824 = vpop.f32.mrb[0].mxu0
    %3825 = vmatprep.mubr.f32.mxu0 0.0
    %3826 = vmatmul.mubr.f32.gmra.mrb[0].mxu0 %v3677
    %v3827 = vpop.f32.mrb[0].mxu0
    %v3828 = vadd.f32 0.0, %v3827
    %v3829 = vpop.f32.mrb[0].mxu0
    %3830 = vmatprep.mubr.f32.mxu0 0.0
    %3831 = vmatmul.mubr.f32.gmra.mrb[0].mxu0 %v3678
    %v3832 = vpop.f32.mrb[0].mxu0
    %v3833 = vadd.f32 0.0, %v3832
    %v3834 = vpop.f32.mrb[0].mxu0
    %3835 = vmatprep.mubr.f32.mxu0 0.0
    %3836 = vmatmul.mubr.f32.gmra.mrb[0].mxu0 %v3679
    %v3837 = vpop.f32.mrb[0].mxu0
    %v3838 = vadd.f32 0.0, %v3837
    %v3839 = vpop.f32.mrb[0].mxu0
    %3840 = vmatprep.mubr.f32.mxu0 0.0
    %3841 = vmatmul.mubr.f32.gmra.mrb[0].mxu0 %v3680
    %v3842 = vpop.f32.mrb[0].mxu0
    %v3843 = vadd.f32 0.0, %v3842
    %v3844 = vpop.f32.mrb[0].mxu0
    %3845 = vmatprep.mubr.f32.mxu0 0.0
    %3846 = vmatmul.mubr.f32.gmra.mrb[0].mxu0 %v3681
    %v3847 = vpop.f32.mrb[0].mxu0
    %v3848 = vadd.f32 0.0, %v3847
    %v3849 = vpop.f32.mrb[0].mxu0
    %3850 = vmatprep.mubr.f32.mxu0 0.0
    %3851 = vmatmul.mubr.f32.gmra.mrb[0].mxu0 %v3682
    %v3852 = vpop.f32.mrb[0].mxu0
    %v3853 = vadd.f32 0.0, %v3852
    %v3854 = vpop.f32.mrb[0].mxu0
    %3855 = vmatprep.mubr.f32.mxu0 0.0
    %3856 = vmatmul.mubr.f32.gmra.mrb[0].mxu0 %v3683
    %v3857 = vpop.f32.mrb[0].mxu0
    %v3858 = vadd.f32 0.0, %v3857
    %v3859 = vpop.f32.mrb[0].mxu0
    %3860 = vmatprep.mubr.f32.mxu0 0.0
    %3861 = vmatmul.mubr.f32.gmra.mrb[0].mxu0 %v3684
    %v3862 = vpop.f32.mrb[0].mxu0
    %v3863 = vadd.f32 0.0, %v3862
    %v3864 = vpop.f32.mrb[0].mxu0
    %3865 = vmatprep.mubr.f32.mxu0 0.0
    %3866 = vmatmul.mubr.f32.gmra.mrb[0].mxu0 %v3685
    %v3867 = vpop.f32.mrb[0].mxu0
    %v3868 = vadd.f32 0.0, %v3867
    %v3869 = vpop.f32.mrb[0].mxu0
    %3870 = vmatprep.mubr.f32.mxu0 0.0
    %3871 = vmatmul.mubr.f32.gmra.mrb[0].mxu0 %v3686
    %v3872 = vpop.f32.mrb[0].mxu0
    %v3873 = vadd.f32 0.0, %v3872
    %v3874 = vpop.f32.mrb[0].mxu0
    %3875 = vmatprep.mubr.f32.mxu0 0.0
    %3876 = vmatmul.mubr.f32.gmra.mrb[0].mxu0 %v3687
    %v3877 = vpop.f32.mrb[0].mxu0
    %v3878 = vadd.f32 0.0, %v3877
    %v3879 = vpop.f32.mrb[0].mxu0
    %3880 = vdwg.mxu0
    %v3889 = vrot.slane %v3813, 7
    %v3890 = vsel %vm1902, %v3889, %v3803
    %v3891 = vrot.slane %v3823, 6
    %v3892 = vsel %vm1905, %v3891, %v3890
    %v3893 = vrot.slane %v3833, 5
    %v3894 = vsel %vm1908, %v3893, %v3892
    %v3895 = vrot.slane %v3843, 4
    %v3896 = vsel %vm1911, %v3895, %v3894
    %v3897 = vrot.slane %v3853, 3
    %v3898 = vsel %vm1914, %v3897, %v3896
    %v3899 = vrot.slane %v3863, 2
    %v3900 = vsel %vm1917, %v3899, %v3898
    %v3901 = vrot.slane %v3873, 1
    %v3902 = vsel %vm1920, %v3901, %v3900
    %3904 = vst.msk [vmem:[#allocation2 + $0x10] sm:$0xff] %vm506, %v3902
    %v3905 = vrot.slane %v3803, 1
    %v3906 = vsel %vm1902, %v3813, %v3905
    %v3907 = vrot.slane %v3823, 7
    %v3908 = vsel %vm1905, %v3907, %v3906
    %v3909 = vrot.slane %v3833, 6
    %v3910 = vsel %vm1908, %v3909, %v3908
    %v3911 = vrot.slane %v3843, 5
    %v3912 = vsel %vm1911, %v3911, %v3910
    %v3913 = vrot.slane %v3853, 4
    %v3914 = vsel %vm1914, %v3913, %v3912
    %v3915 = vrot.slane %v3863, 3
    %v3916 = vsel %vm1917, %v3915, %v3914
    %v3917 = vrot.slane %v3873, 2
    %v3918 = vsel %vm1920, %v3917, %v3916
    %3919 = vrot.lane.b32.xlu0 %v3918, 16
    %v3920 = vpop.permute.xlu0 %3919
    %3922 = vst.msk [vmem:[#allocation2 + $0x10] sm:$0xff] %vm1941, %v3920
    %v3923 = vrot.slane %v3803, 2
    %v3924 = vrot.slane %v3813, 1
    %v3925 = vsel %vm1902, %v3924, %v3923
    %v3926 = vsel %vm1905, %v3823, %v3925
    %v3927 = vrot.slane %v3833, 7
    %v3928 = vsel %vm1908, %v3927, %v3926
    %v3929 = vrot.slane %v3843, 6
    %v3930 = vsel %vm1911, %v3929, %v3928
    %v3931 = vrot.slane %v3853, 5
    %v3932 = vsel %vm1914, %v3931, %v3930
    %v3933 = vrot.slane %v3863, 4
    %v3934 = vsel %vm1917, %v3933, %v3932
    %v3935 = vrot.slane %v3873, 3
    %v3936 = vsel %vm1920, %v3935, %v3934
    %3937 = vrot.lane.b32.xlu0 %v3936, 32
    %v3938 = vpop.permute.xlu0 %3937
    %3940 = vst.msk [vmem:[#allocation2 + $0x10] sm:$0xff] %vm1960, %v3938
    %v3941 = vrot.slane %v3803, 3
    %v3942 = vrot.slane %v3813, 2
    %v3943 = vsel %vm1902, %v3942, %v3941
    %v3944 = vrot.slane %v3823, 1
    %v3945 = vsel %vm1905, %v3944, %v3943
    %v3946 = vsel %vm1908, %v3833, %v3945
    %v3947 = vrot.slane %v3843, 7
    %v3948 = vsel %vm1911, %v3947, %v3946
    %v3949 = vrot.slane %v3853, 6
    %v3950 = vsel %vm1914, %v3949, %v3948
    %v3951 = vrot.slane %v3863, 5
    %v3952 = vsel %vm1917, %v3951, %v3950
    %v3953 = vrot.slane %v3873, 4
    %v3954 = vsel %vm1920, %v3953, %v3952
    %3955 = vrot.lane.b32.xlu0 %v3954, 48
    %v3956 = vpop.permute.xlu0 %3955
    %3958 = vst.msk [vmem:[#allocation2 + $0x10] sm:$0xff] %vm1979, %v3956
    %v3959 = vrot.slane %v3803, 4
    %v3960 = vrot.slane %v3813, 3
    %v3961 = vsel %vm1902, %v3960, %v3959
    %v3962 = vrot.slane %v3823, 2
    %v3963 = vsel %vm1905, %v3962, %v3961
    %v3964 = vrot.slane %v3833, 1
    %v3965 = vsel %vm1908, %v3964, %v3963
    %v3966 = vsel %vm1911, %v3843, %v3965
    %v3967 = vrot.slane %v3853, 7
    %v3968 = vsel %vm1914, %v3967, %v3966
    %v3969 = vrot.slane %v3863, 6
    %v3970 = vsel %vm1917, %v3969, %v3968
    %v3971 = vrot.slane %v3873, 5
    %v3972 = vsel %vm1920, %v3971, %v3970
    %3973 = vrot.lane.b32.xlu0 %v3972, 64
    %v3974 = vpop.permute.xlu0 %3973
    %3976 = vst.msk [vmem:[#allocation2 + $0x10] sm:$0xff] %vm1998, %v3974
    %v3977 = vrot.slane %v3803, 5
    %v3978 = vrot.slane %v3813, 4
    %v3979 = vsel %vm1902, %v3978, %v3977
    %v3980 = vrot.slane %v3823, 3
    %v3981 = vsel %vm1905, %v3980, %v3979
    %v3982 = vrot.slane %v3833, 2
    %v3983 = vsel %vm1908, %v3982, %v3981
    %v3984 = vrot.slane %v3843, 1
    %v3985 = vsel %vm1911, %v3984, %v3983
    %v3986 = vsel %vm1914, %v3853, %v3985
    %v3987 = vrot.slane %v3863, 7
    %v3988 = vsel %vm1917, %v3987, %v3986
    %v3989 = vrot.slane %v3873, 6
    %v3990 = vsel %vm1920, %v3989, %v3988
    %3991 = vrot.lane.b32.xlu0 %v3990, 80
    %v3992 = vpop.permute.xlu0 %3991
    %3994 = vst.msk [vmem:[#allocation2 + $0x10] sm:$0xff] %vm2017, %v3992
    %v3995 = vrot.slane %v3803, 6
    %v3996 = vrot.slane %v3813, 5
    %v3997 = vsel %vm1902, %v3996, %v3995
    %v3998 = vrot.slane %v3823, 4
    %v3999 = vsel %vm1905, %v3998, %v3997
    %v4000 = vrot.slane %v3833, 3
    %v4001 = vsel %vm1908, %v4000, %v3999
    %v4002 = vrot.slane %v3843, 2
    %v4003 = vsel %vm1911, %v4002, %v4001
    %v4004 = vrot.slane %v3853, 1
    %v4005 = vsel %vm1914, %v4004, %v4003
    %v4006 = vsel %vm1917, %v3863, %v4005
    %v4007 = vrot.slane %v3873, 7
    %v4008 = vsel %vm1920, %v4007, %v4006
    %4009 = vrot.lane.b32.xlu0 %v4008, 96
    %v4010 = vpop.permute.xlu0 %4009
    %4012 = vst.msk [vmem:[#allocation2 + $0x10] sm:$0xff] %vm2036, %v4010
    %v4013 = vrot.slane %v3803, 7
    %v4014 = vrot.slane %v3813, 6
    %v4015 = vsel %vm1902, %v4014, %v4013
    %v4016 = vrot.slane %v3823, 5
    %v4017 = vsel %vm1905, %v4016, %v4015
    %v4018 = vrot.slane %v3833, 4
    %v4019 = vsel %vm1908, %v4018, %v4017
    %v4020 = vrot.slane %v3843, 3
    %v4021 = vsel %vm1911, %v4020, %v4019
    %v4022 = vrot.slane %v3853, 2
    %v4023 = vsel %vm1914, %v4022, %v4021
    %v4024 = vrot.slane %v3863, 1
    %v4025 = vsel %vm1917, %v4024, %v4023
    %v4026 = vsel %vm1920, %v3873, %v4025
    %4027 = vrot.lane.b32.xlu0 %v4026, 112
    %v4028 = vpop.permute.xlu0 %4027
    %4030 = vst.msk [vmem:[#allocation2 + $0x10] sm:$0xff] %vm2055, %v4028
    %v4039 = vrot.slane %v3818, 7
    %v4040 = vsel %vm1902, %v4039, %v3808
    %v4041 = vrot.slane %v3828, 6
    %v4042 = vsel %vm1905, %v4041, %v4040
    %v4043 = vrot.slane %v3838, 5
    %v4044 = vsel %vm1908, %v4043, %v4042
    %v4045 = vrot.slane %v3848, 4
    %v4046 = vsel %vm1911, %v4045, %v4044
    %v4047 = vrot.slane %v3858, 3
    %v4048 = vsel %vm1914, %v4047, %v4046
    %v4049 = vrot.slane %v3868, 2
    %v4050 = vsel %vm1917, %v4049, %v4048
    %v4051 = vrot.slane %v3878, 1
    %v4052 = vsel %vm1920, %v4051, %v4050
    %4054 = vst.msk [vmem:[#allocation2 + $0x18] sm:$0xff] %vm506, %v4052
    %v4055 = vrot.slane %v3808, 1
    %v4056 = vsel %vm1902, %v3818, %v4055
    %v4057 = vrot.slane %v3828, 7
    %v4058 = vsel %vm1905, %v4057, %v4056
    %v4059 = vrot.slane %v3838, 6
    %v4060 = vsel %vm1908, %v4059, %v4058
    %v4061 = vrot.slane %v3848, 5
    %v4062 = vsel %vm1911, %v4061, %v4060
    %v4063 = vrot.slane %v3858, 4
    %v4064 = vsel %vm1914, %v4063, %v4062
    %v4065 = vrot.slane %v3868, 3
    %v4066 = vsel %vm1917, %v4065, %v4064
    %v4067 = vrot.slane %v3878, 2
    %v4068 = vsel %vm1920, %v4067, %v4066
    %4069 = vrot.lane.b32.xlu0 %v4068, 16
    %v4070 = vpop.permute.xlu0 %4069
    %4072 = vst.msk [vmem:[#allocation2 + $0x18] sm:$0xff] %vm1941, %v4070
    %v4073 = vrot.slane %v3808, 2
    %v4074 = vrot.slane %v3818, 1
    %v4075 = vsel %vm1902, %v4074, %v4073
    %v4076 = vsel %vm1905, %v3828, %v4075
    %v4077 = vrot.slane %v3838, 7
    %v4078 = vsel %vm1908, %v4077, %v4076
    %v4079 = vrot.slane %v3848, 6
    %v4080 = vsel %vm1911, %v4079, %v4078
    %v4081 = vrot.slane %v3858, 5
    %v4082 = vsel %vm1914, %v4081, %v4080
    %v4083 = vrot.slane %v3868, 4
    %v4084 = vsel %vm1917, %v4083, %v4082
    %v4085 = vrot.slane %v3878, 3
    %v4086 = vsel %vm1920, %v4085, %v4084
    %4087 = vrot.lane.b32.xlu0 %v4086, 32
    %v4088 = vpop.permute.xlu0 %4087
    %4090 = vst.msk [vmem:[#allocation2 + $0x18] sm:$0xff] %vm1960, %v4088
    %v4091 = vrot.slane %v3808, 3
    %v4092 = vrot.slane %v3818, 2
    %v4093 = vsel %vm1902, %v4092, %v4091
    %v4094 = vrot.slane %v3828, 1
    %v4095 = vsel %vm1905, %v4094, %v4093
    %v4096 = vsel %vm1908, %v3838, %v4095
    %v4097 = vrot.slane %v3848, 7
    %v4098 = vsel %vm1911, %v4097, %v4096
    %v4099 = vrot.slane %v3858, 6
    %v4100 = vsel %vm1914, %v4099, %v4098
    %v4101 = vrot.slane %v3868, 5
    %v4102 = vsel %vm1917, %v4101, %v4100
    %v4103 = vrot.slane %v3878, 4
    %v4104 = vsel %vm1920, %v4103, %v4102
    %4105 = vrot.lane.b32.xlu0 %v4104, 48
    %v4106 = vpop.permute.xlu0 %4105
    %4108 = vst.msk [vmem:[#allocation2 + $0x18] sm:$0xff] %vm1979, %v4106
    %v4109 = vrot.slane %v3808, 4
    %v4110 = vrot.slane %v3818, 3
    %v4111 = vsel %vm1902, %v4110, %v4109
    %v4112 = vrot.slane %v3828, 2
    %v4113 = vsel %vm1905, %v4112, %v4111
    %v4114 = vrot.slane %v3838, 1
    %v4115 = vsel %vm1908, %v4114, %v4113
    %v4116 = vsel %vm1911, %v3848, %v4115
    %v4117 = vrot.slane %v3858, 7
    %v4118 = vsel %vm1914, %v4117, %v4116
    %v4119 = vrot.slane %v3868, 6
    %v4120 = vsel %vm1917, %v4119, %v4118
    %v4121 = vrot.slane %v3878, 5
    %v4122 = vsel %vm1920, %v4121, %v4120
    %4123 = vrot.lane.b32.xlu0 %v4122, 64
    %v4124 = vpop.permute.xlu0 %4123
    %4126 = vst.msk [vmem:[#allocation2 + $0x18] sm:$0xff] %vm1998, %v4124
    %v4127 = vrot.slane %v3808, 5
    %v4128 = vrot.slane %v3818, 4
    %v4129 = vsel %vm1902, %v4128, %v4127
    %v4130 = vrot.slane %v3828, 3
    %v4131 = vsel %vm1905, %v4130, %v4129
    %v4132 = vrot.slane %v3838, 2
    %v4133 = vsel %vm1908, %v4132, %v4131
    %v4134 = vrot.slane %v3848, 1
    %v4135 = vsel %vm1911, %v4134, %v4133
    %v4136 = vsel %vm1914, %v3858, %v4135
    %v4137 = vrot.slane %v3868, 7
    %v4138 = vsel %vm1917, %v4137, %v4136
    %v4139 = vrot.slane %v3878, 6
    %v4140 = vsel %vm1920, %v4139, %v4138
    %4141 = vrot.lane.b32.xlu0 %v4140, 80
    %v4142 = vpop.permute.xlu0 %4141
    %4144 = vst.msk [vmem:[#allocation2 + $0x18] sm:$0xff] %vm2017, %v4142
    %v4145 = vrot.slane %v3808, 6
    %v4146 = vrot.slane %v3818, 5
    %v4147 = vsel %vm1902, %v4146, %v4145
    %v4148 = vrot.slane %v3828, 4
    %v4149 = vsel %vm1905, %v4148, %v4147
    %v4150 = vrot.slane %v3838, 3
    %v4151 = vsel %vm1908, %v4150, %v4149
    %v4152 = vrot.slane %v3848, 2
    %v4153 = vsel %vm1911, %v4152, %v4151
    %v4154 = vrot.slane %v3858, 1
    %v4155 = vsel %vm1914, %v4154, %v4153
    %v4156 = vsel %vm1917, %v3868, %v4155
    %v4157 = vrot.slane %v3878, 7
    %v4158 = vsel %vm1920, %v4157, %v4156
    %4159 = vrot.lane.b32.xlu0 %v4158, 96
    %v4160 = vpop.permute.xlu0 %4159
    %4162 = vst.msk [vmem:[#allocation2 + $0x18] sm:$0xff] %vm2036, %v4160
    %v4163 = vrot.slane %v3808, 7
    %v4164 = vrot.slane %v3818, 6
    %v4165 = vsel %vm1902, %v4164, %v4163
    %v4166 = vrot.slane %v3828, 5
    %v4167 = vsel %vm1905, %v4166, %v4165
    %v4168 = vrot.slane %v3838, 4
    %v4169 = vsel %vm1908, %v4168, %v4167
    %v4170 = vrot.slane %v3848, 3
    %v4171 = vsel %vm1911, %v4170, %v4169
    %v4172 = vrot.slane %v3858, 2
    %v4173 = vsel %vm1914, %v4172, %v4171
    %v4174 = vrot.slane %v3868, 1
    %v4175 = vsel %vm1917, %v4174, %v4173
    %v4176 = vsel %vm1920, %v3878, %v4175
    %4177 = vrot.lane.b32.xlu0 %v4176, 112
    %v4178 = vpop.permute.xlu0 %4177
    %4180 = vst.msk [vmem:[#allocation2 + $0x18] sm:$0xff] %vm2055, %v4178
    %v4181 = vld [vmem:[%s1] sm:$0xff]
    %v4182 = vld [vmem:[%s1 + $0x8] sm:$0xff]
    %v4183 = vld [vmem:[%s1 + $0x10] sm:$0xff]
    %v4184 = vld [vmem:[%s1 + $0x18] sm:$0xff]
    %v4185 = vld [vmem:[%s1 + $0x20] sm:$0xff]
    %v4186 = vld [vmem:[%s1 + $0x28] sm:$0xff]
    %v4187 = vld [vmem:[%s1 + $0x30] sm:$0xff]
    %v4188 = vld [vmem:[%s1 + $0x38] sm:$0xff]
    %v4189 = vld [vmem:[%s1 + $0x40] sm:$0xff]
    %v4190 = vld [vmem:[%s1 + $0x48] sm:$0xff]
    %v4191 = vld [vmem:[%s1 + $0x50] sm:$0xff]
    %v4192 = vld [vmem:[%s1 + $0x58] sm:$0xff]
    %v4193 = vld [vmem:[%s1 + $0x60] sm:$0xff]
    %v4194 = vld [vmem:[%s1 + $0x68] sm:$0xff]
    %v4195 = vld [vmem:[%s1 + $0x70] sm:$0xff]
    %v4196 = vld [vmem:[%s1 + $0x78] sm:$0xff]
    %s4197 = scalar_lea.vmem %s3, 96
    %v4198 = vld [vmem:[%s4197] sm:$0xff]
    %v4199 = vld [vmem:[%s4197 + $0x8] sm:$0xff]
    %v4200 = vld [vmem:[%s4197 + $0x10] sm:$0xff]
    %v4201 = vld [vmem:[%s4197 + $0x18] sm:$0xff]
    %v4202 = vld [vmem:[%s4197 + $0x20] sm:$0xff]
    %v4203 = vld [vmem:[%s4197 + $0x28] sm:$0xff]
    %s4204 = scalar_lea.vmem %s4, 2
    %v4205 = vld [vmem:[%s4204] sm:$0x1]
    %v4207 = vlaneseq
    %v4208 = vshrl.u32 %v4207, 7
    %v4209 = vsub.s32 0, %v4208
    %v4210 = vrot.slane %v4205, %v4209
    %v4213 = vsel %vm248, %v4181, 0
    %v4216 = vsel %vm248, %v4182, 0
    %v4219 = vsel %vm248, %v4183, 0
    %v4222 = vsel %vm248, %v4184, 0
    %v4225 = vsel %vm248, %v4185, 0
    %v4228 = vsel %vm248, %v4186, 0
    %v4231 = vsel %vm248, %v4187, 0
    %v4234 = vsel %vm248, %v4188, 0
    %v4237 = vsel %vm248, %v4189, 0
    %v4240 = vsel %vm248, %v4190, 0
    %v4243 = vsel %vm248, %v4191, 0
    %v4246 = vsel %vm248, %v4192, 0
    %v4249 = vsel %vm248, %v4193, 0
    %v4252 = vsel %vm248, %v4194, 0
    %v4255 = vsel %vm248, %v4195, 0
    %v4258 = vsel %vm248, %v4196, 0
    %4260 = vmatprep.subr.mxu0 0.0
    %4261 = vmatpush1.msra.mxu0 %v4198
    %4262 = vmatprep.subr.mxu0 0.0
    %4263 = vmatpush1.msra.mxu0 %v4199
    %4264 = vmatprep.subr.mxu0 0.0
    %4265 = vmatpush1.msra.mxu0 %v4200
    %4266 = vmatprep.subr.mxu0 0.0
    %4267 = vmatpush1.msra.mxu0 %v4201
    %4268 = vmatprep.subr.mxu0 0.0
    %4269 = vmatpush1.msra.mxu0 %v4202
    %4270 = vmatprep.subr.mxu0 0.0
    %4271 = vmatpush1.msra.mxu0 %v4203
    %4272 = vmatprep.subr.mxu0 0.0
    %4273 = vmatpush1.msra.mxu0 0.0
    %4274 = vmatprep.subr.mxu0 0.0
    %4275 = vmatpush1.msra.mxu0 0.0
    %4276 = vmatprep.subr.mxu0 0.0
    %4277 = vmatpush1.msra.mxu0 0.0
    %4278 = vmatprep.subr.mxu0 0.0
    %4279 = vmatpush1.msra.mxu0 0.0
    %4280 = vmatprep.subr.mxu0 0.0
    %4281 = vmatpush1.msra.mxu0 0.0
    %4282 = vmatprep.subr.mxu0 0.0
    %4283 = vmatpush1.msra.mxu0 0.0
    %4284 = vmatprep.subr.mxu0 0.0
    %4285 = vmatpush1.msra.mxu0 0.0
    %4286 = vmatprep.subr.mxu0 0.0
    %4287 = vmatpush1.msra.mxu0 0.0
    %4288 = vmatprep.subr.mxu0 0.0
    %4289 = vmatpush1.msra.mxu0 0.0
    %4290 = vmatprep.subr.mxu0 0.0
    %4291 = vmatpush1.msra.mxu0 0.0
    %4292 = vmatprep.subr.mxu0 0.0
    %4293 = vmatpush1.msra.mxu0 0.0
    %4294 = vmatprep.subr.mxu0 0.0
    %4295 = vmatpush1.msra.mxu0 0.0
    %4296 = vmatprep.subr.mxu0 0.0
    %4297 = vmatpush1.msra.mxu0 0.0
    %4298 = vmatprep.subr.mxu0 0.0
    %4299 = vmatpush1.msra.mxu0 0.0
    %4300 = vmatprep.subr.mxu0 0.0
    %4301 = vmatpush1.msra.mxu0 0.0
    %4302 = vmatprep.subr.mxu0 0.0
    %4303 = vmatpush1.msra.mxu0 0.0
    %4304 = vmatprep.subr.mxu0 0.0
    %4305 = vmatpush1.msra.mxu0 0.0
    %4306 = vmatprep.subr.mxu0 0.0
    %4307 = vmatpush1.msra.mxu0 0.0
    %4308 = vmatprep.subr.mxu0 0.0
    %4309 = vmatpush1.msra.mxu0 0.0
    %4310 = vmatprep.subr.mxu0 0.0
    %4311 = vmatpush1.msra.mxu0 0.0
    %4312 = vmatprep.subr.mxu0 0.0
    %4313 = vmatpush1.msra.mxu0 0.0
    %4314 = vmatprep.subr.mxu0 0.0
    %4315 = vmatpush1.msra.mxu0 0.0
    %4316 = vmatprep.subr.mxu0 0.0
    %4317 = vmatpush1.msra.mxu0 0.0
    %4318 = vmatprep.subr.mxu0 0.0
    %4319 = vmatpush1.msra.mxu0 0.0
    %4320 = vmatprep.subr.mxu0 0.0
    %4321 = vmatpush1.msra.mxu0 0.0
    %4322 = vmatprep.subr.mxu0 0.0
    %4323 = vmatpush1.msra.mxu0 0.0
    %4324 = vmatprep.mubr.f32.mxu0 0.0
    %4325 = vmatmul.mubr.f32.gmra.mrb[0].mxu0 %v4213
    %v4326 = vpop.f32.mrb[0].mxu0
    %v4327 = vadd.f32 %v4210, %v4326
    %v4328 = vpop.f32.mrb[0].mxu0
    %4329 = vmatprep.mubr.f32.mxu0 0.0
    %4330 = vmatmul.mubr.f32.gmra.mrb[0].mxu0 %v4216
    %v4331 = vpop.f32.mrb[0].mxu0
    %v4332 = vadd.f32 %v4210, %v4331
    %v4333 = vpop.f32.mrb[0].mxu0
    %4334 = vmatprep.mubr.f32.mxu0 0.0
    %4335 = vmatmul.mubr.f32.gmra.mrb[0].mxu0 %v4219
    %v4336 = vpop.f32.mrb[0].mxu0
    %v4337 = vadd.f32 %v4210, %v4336
    %v4338 = vpop.f32.mrb[0].mxu0
    %4339 = vmatprep.mubr.f32.mxu0 0.0
    %4340 = vmatmul.mubr.f32.gmra.mrb[0].mxu0 %v4222
    %v4341 = vpop.f32.mrb[0].mxu0
    %v4342 = vadd.f32 %v4210, %v4341
    %v4343 = vpop.f32.mrb[0].mxu0
    %4344 = vmatprep.mubr.f32.mxu0 0.0
    %4345 = vmatmul.mubr.f32.gmra.mrb[0].mxu0 %v4225
    %v4346 = vpop.f32.mrb[0].mxu0
    %v4347 = vadd.f32 %v4210, %v4346
    %v4348 = vpop.f32.mrb[0].mxu0
    %4349 = vmatprep.mubr.f32.mxu0 0.0
    %4350 = vmatmul.mubr.f32.gmra.mrb[0].mxu0 %v4228
    %v4351 = vpop.f32.mrb[0].mxu0
    %v4352 = vadd.f32 %v4210, %v4351
    %v4353 = vpop.f32.mrb[0].mxu0
    %4354 = vmatprep.mubr.f32.mxu0 0.0
    %4355 = vmatmul.mubr.f32.gmra.mrb[0].mxu0 %v4231
    %v4356 = vpop.f32.mrb[0].mxu0
    %v4357 = vadd.f32 %v4210, %v4356
    %v4358 = vpop.f32.mrb[0].mxu0
    %4359 = vmatprep.mubr.f32.mxu0 0.0
    %4360 = vmatmul.mubr.f32.gmra.mrb[0].mxu0 %v4234
    %v4361 = vpop.f32.mrb[0].mxu0
    %v4362 = vadd.f32 %v4210, %v4361
    %v4363 = vpop.f32.mrb[0].mxu0
    %4364 = vmatprep.mubr.f32.mxu0 0.0
    %4365 = vmatmul.mubr.f32.gmra.mrb[0].mxu0 %v4237
    %v4366 = vpop.f32.mrb[0].mxu0
    %v4367 = vadd.f32 %v4210, %v4366
    %v4368 = vpop.f32.mrb[0].mxu0
    %4369 = vmatprep.mubr.f32.mxu0 0.0
    %4370 = vmatmul.mubr.f32.gmra.mrb[0].mxu0 %v4240
    %v4371 = vpop.f32.mrb[0].mxu0
    %v4372 = vadd.f32 %v4210, %v4371
    %v4373 = vpop.f32.mrb[0].mxu0
    %4374 = vmatprep.mubr.f32.mxu0 0.0
    %4375 = vmatmul.mubr.f32.gmra.mrb[0].mxu0 %v4243
    %v4376 = vpop.f32.mrb[0].mxu0
    %v4377 = vadd.f32 %v4210, %v4376
    %v4378 = vpop.f32.mrb[0].mxu0
    %4379 = vmatprep.mubr.f32.mxu0 0.0
    %4380 = vmatmul.mubr.f32.gmra.mrb[0].mxu0 %v4246
    %v4381 = vpop.f32.mrb[0].mxu0
    %v4382 = vadd.f32 %v4210, %v4381
    %v4383 = vpop.f32.mrb[0].mxu0
    %4384 = vmatprep.mubr.f32.mxu0 0.0
    %4385 = vmatmul.mubr.f32.gmra.mrb[0].mxu0 %v4249
    %v4386 = vpop.f32.mrb[0].mxu0
    %v4387 = vadd.f32 %v4210, %v4386
    %v4388 = vpop.f32.mrb[0].mxu0
    %4389 = vmatprep.mubr.f32.mxu0 0.0
    %4390 = vmatmul.mubr.f32.gmra.mrb[0].mxu0 %v4252
    %v4391 = vpop.f32.mrb[0].mxu0
    %v4392 = vadd.f32 %v4210, %v4391
    %v4393 = vpop.f32.mrb[0].mxu0
    %4394 = vmatprep.mubr.f32.mxu0 0.0
    %4395 = vmatmul.mubr.f32.gmra.mrb[0].mxu0 %v4255
    %v4396 = vpop.f32.mrb[0].mxu0
    %v4397 = vadd.f32 %v4210, %v4396
    %v4398 = vpop.f32.mrb[0].mxu0
    %4399 = vmatprep.mubr.f32.mxu0 0.0
    %4400 = vmatmul.mubr.f32.gmra.mrb[0].mxu0 %v4258
    %v4401 = vpop.f32.mrb[0].mxu0
    %v4402 = vadd.f32 %v4210, %v4401
    %v4403 = vpop.f32.mrb[0].mxu0
    %4404 = vdwg.mxu0
    %v4405 = vld [vmem:[%s2] sm:$0xff]
    %v4406 = vld [vmem:[%s2 + $0x8] sm:$0xff]
    %v4407 = vld [vmem:[%s2 + $0x10] sm:$0xff]
    %v4408 = vld [vmem:[%s2 + $0x18] sm:$0xff]
    %v4409 = vld [vmem:[%s2 + $0x20] sm:$0xff]
    %v4410 = vld [vmem:[%s2 + $0x28] sm:$0xff]
    %v4411 = vld [vmem:[%s2 + $0x30] sm:$0xff]
    %v4412 = vld [vmem:[%s2 + $0x38] sm:$0xff]
    %v4413 = vld [vmem:[%s2 + $0x40] sm:$0xff]
    %v4414 = vld [vmem:[%s2 + $0x48] sm:$0xff]
    %v4415 = vld [vmem:[%s2 + $0x50] sm:$0xff]
    %v4416 = vld [vmem:[%s2 + $0x58] sm:$0xff]
    %v4417 = vld [vmem:[%s2 + $0x60] sm:$0xff]
    %v4418 = vld [vmem:[%s2 + $0x68] sm:$0xff]
    %v4419 = vld [vmem:[%s2 + $0x70] sm:$0xff]
    %v4420 = vld [vmem:[%s2 + $0x78] sm:$0xff]
    %4437 = vrot.lane.b32.xlu0 %v4327, 80
    %v4438 = vpop.permute.xlu0 %4437
    %4439 = vrot.lane.b32.xlu0 %v4332, 80
    %v4440 = vpop.permute.xlu0 %4439
    %4441 = vrot.lane.b32.xlu0 %v4337, 80
    %v4442 = vpop.permute.xlu0 %4441
    %4443 = vrot.lane.b32.xlu0 %v4342, 80
    %v4444 = vpop.permute.xlu0 %4443
    %4445 = vrot.lane.b32.xlu0 %v4347, 80
    %v4446 = vpop.permute.xlu0 %4445
    %4447 = vrot.lane.b32.xlu0 %v4352, 80
    %v4448 = vpop.permute.xlu0 %4447
    %4449 = vrot.lane.b32.xlu0 %v4357, 80
    %v4450 = vpop.permute.xlu0 %4449
    %4451 = vrot.lane.b32.xlu0 %v4362, 80
    %v4452 = vpop.permute.xlu0 %4451
    %4453 = vrot.lane.b32.xlu0 %v4367, 80
    %v4454 = vpop.permute.xlu0 %4453
    %4455 = vrot.lane.b32.xlu0 %v4372, 80
    %v4456 = vpop.permute.xlu0 %4455
    %4457 = vrot.lane.b32.xlu0 %v4377, 80
    %v4458 = vpop.permute.xlu0 %4457
    %4459 = vrot.lane.b32.xlu0 %v4382, 80
    %v4460 = vpop.permute.xlu0 %4459
    %4461 = vrot.lane.b32.xlu0 %v4387, 80
    %v4462 = vpop.permute.xlu0 %4461
    %4463 = vrot.lane.b32.xlu0 %v4392, 80
    %v4464 = vpop.permute.xlu0 %4463
    %4465 = vrot.lane.b32.xlu0 %v4397, 80
    %v4466 = vpop.permute.xlu0 %4465
    %4467 = vrot.lane.b32.xlu0 %v4402, 80
    %v4468 = vpop.permute.xlu0 %4467
    %v4469 = vsel %vm506, %v4327, 0
    %v4471 = vsel %vm506, %v4332, 0
    %v4473 = vsel %vm506, %v4337, 0
    %v4475 = vsel %vm506, %v4342, 0
    %v4477 = vsel %vm506, %v4347, 0
    %v4479 = vsel %vm506, %v4352, 0
    %v4481 = vsel %vm506, %v4357, 0
    %v4483 = vsel %vm506, %v4362, 0
    %v4485 = vsel %vm506, %v4367, 0
    %v4487 = vsel %vm506, %v4372, 0
    %v4489 = vsel %vm506, %v4377, 0
    %v4491 = vsel %vm506, %v4382, 0
    %v4493 = vsel %vm506, %v4387, 0
    %v4495 = vsel %vm506, %v4392, 0
    %v4497 = vsel %vm506, %v4397, 0
    %v4499 = vsel %vm506, %v4402, 0
    %v4501 = vsel %vm506, %v4438, 0
    %v4503 = vsel %vm506, %v4440, 0
    %v4505 = vsel %vm506, %v4442, 0
    %v4507 = vsel %vm506, %v4444, 0
    %v4509 = vsel %vm506, %v4446, 0
    %v4511 = vsel %vm506, %v4448, 0
    %v4513 = vsel %vm506, %v4450, 0
    %v4515 = vsel %vm506, %v4452, 0
    %v4517 = vsel %vm506, %v4454, 0
    %v4519 = vsel %vm506, %v4456, 0
    %v4521 = vsel %vm506, %v4458, 0
    %v4523 = vsel %vm506, %v4460, 0
    %v4525 = vsel %vm506, %v4462, 0
    %v4527 = vsel %vm506, %v4464, 0
    %v4529 = vsel %vm506, %v4466, 0
    %v4531 = vsel %vm506, %v4468, 0
    %4533 = vmatprep.subr.mxu0 0.0
    %4534 = vmatpush1.xpose.msra.mxu0 %v4501
    %4535 = vmatprep.subr.mxu0 0.0
    %4536 = vmatpush1.xpose.msra.mxu0 %v4503
    %4537 = vmatprep.subr.mxu0 0.0
    %4538 = vmatpush1.xpose.msra.mxu0 %v4505
    %4539 = vmatprep.subr.mxu0 0.0
    %4540 = vmatpush1.xpose.msra.mxu0 %v4507
    %4541 = vmatprep.subr.mxu0 0.0
    %4542 = vmatpush1.xpose.msra.mxu0 %v4509
    %4543 = vmatprep.subr.mxu0 0.0
    %4544 = vmatpush1.xpose.msra.mxu0 %v4511
    %4545 = vmatprep.subr.mxu0 0.0
    %4546 = vmatpush1.xpose.msra.mxu0 %v4513
    %4547 = vmatprep.subr.mxu0 0.0
    %4548 = vmatpush1.xpose.msra.mxu0 %v4515
    %4549 = vmatprep.subr.mxu0 0.0
    %4550 = vmatpush1.xpose.msra.mxu0 %v4517
    %4551 = vmatprep.subr.mxu0 0.0
    %4552 = vmatpush1.xpose.msra.mxu0 %v4519
    %4553 = vmatprep.subr.mxu0 0.0
    %4554 = vmatpush1.xpose.msra.mxu0 %v4521
    %4555 = vmatprep.subr.mxu0 0.0
    %4556 = vmatpush1.xpose.msra.mxu0 %v4523
    %4557 = vmatprep.subr.mxu0 0.0
    %4558 = vmatpush1.xpose.msra.mxu0 %v4525
    %4559 = vmatprep.subr.mxu0 0.0
    %4560 = vmatpush1.xpose.msra.mxu0 %v4527
    %4561 = vmatprep.subr.mxu0 0.0
    %4562 = vmatpush1.xpose.msra.mxu0 %v4529
    %4563 = vmatprep.subr.mxu0 0.0
    %4564 = vmatpush1.xpose.msra.mxu0 %v4531
    %4565 = vmatprep.subr.mxu0 0.0
    %4566 = vmatpush1.xpose.msra.mxu0 0.0
    %4567 = vmatprep.subr.mxu0 0.0
    %4568 = vmatpush1.xpose.msra.mxu0 0.0
    %4569 = vmatprep.subr.mxu0 0.0
    %4570 = vmatpush1.xpose.msra.mxu0 0.0
    %4571 = vmatprep.subr.mxu0 0.0
    %4572 = vmatpush1.xpose.msra.mxu0 0.0
    %4573 = vmatprep.subr.mxu0 0.0
    %4574 = vmatpush1.xpose.msra.mxu0 0.0
    %4575 = vmatprep.subr.mxu0 0.0
    %4576 = vmatpush1.xpose.msra.mxu0 0.0
    %4577 = vmatprep.subr.mxu0 0.0
    %4578 = vmatpush1.xpose.msra.mxu0 0.0
    %4579 = vmatprep.subr.mxu0 0.0
    %4580 = vmatpush1.xpose.msra.mxu0 0.0
    %4581 = vmatprep.subr.mxu0 0.0
    %4582 = vmatpush1.xpose.msra.mxu0 0.0
    %4583 = vmatprep.subr.mxu0 0.0
    %4584 = vmatpush1.xpose.msra.mxu0 0.0
    %4585 = vmatprep.subr.mxu0 0.0
    %4586 = vmatpush1.xpose.msra.mxu0 0.0
    %4587 = vmatprep.subr.mxu0 0.0
    %4588 = vmatpush1.xpose.msra.mxu0 0.0
    %4589 = vmatprep.subr.mxu0 0.0
    %4590 = vmatpush1.xpose.msra.mxu0 0.0
    %4591 = vmatprep.subr.mxu0 0.0
    %4592 = vmatpush1.xpose.msra.mxu0 0.0
    %4593 = vmatprep.subr.mxu0 0.0
    %4594 = vmatpush1.xpose.msra.mxu0 0.0
    %4595 = vmatprep.subr.mxu0 0.0
    %4596 = vmatpush1.xpose.msra.mxu0 0.0
    %4597 = vmatprep.mubr.f32.mxu0 0.0
    %4598 = vmatmul.mubr.f32.gmra.mrb[0].mxu0 %v4469
    %v4599 = vpop.f32.mrb[0].mxu0
    %v4600 = vadd.f32 %v4405, %v4599
    %v4601 = vpop.f32.mrb[0].mxu0
    %4602 = vmatprep.mubr.f32.mxu0 0.0
    %4603 = vmatmul.mubr.f32.gmra.mrb[0].mxu0 %v4471
    %v4604 = vpop.f32.mrb[0].mxu0
    %v4605 = vadd.f32 %v4406, %v4604
    %v4606 = vpop.f32.mrb[0].mxu0
    %4607 = vmatprep.mubr.f32.mxu0 0.0
    %4608 = vmatmul.mubr.f32.gmra.mrb[0].mxu0 %v4473
    %v4609 = vpop.f32.mrb[0].mxu0
    %v4610 = vadd.f32 %v4407, %v4609
    %v4611 = vpop.f32.mrb[0].mxu0
    %4612 = vmatprep.mubr.f32.mxu0 0.0
    %4613 = vmatmul.mubr.f32.gmra.mrb[0].mxu0 %v4475
    %v4614 = vpop.f32.mrb[0].mxu0
    %v4615 = vadd.f32 %v4408, %v4614
    %v4616 = vpop.f32.mrb[0].mxu0
    %4617 = vmatprep.mubr.f32.mxu0 0.0
    %4618 = vmatmul.mubr.f32.gmra.mrb[0].mxu0 %v4477
    %v4619 = vpop.f32.mrb[0].mxu0
    %v4620 = vadd.f32 %v4409, %v4619
    %v4621 = vpop.f32.mrb[0].mxu0
    %4622 = vmatprep.mubr.f32.mxu0 0.0
    %4623 = vmatmul.mubr.f32.gmra.mrb[0].mxu0 %v4479
    %v4624 = vpop.f32.mrb[0].mxu0
    %v4625 = vadd.f32 %v4410, %v4624
    %v4626 = vpop.f32.mrb[0].mxu0
    %4627 = vmatprep.mubr.f32.mxu0 0.0
    %4628 = vmatmul.mubr.f32.gmra.mrb[0].mxu0 %v4481
    %v4629 = vpop.f32.mrb[0].mxu0
    %v4630 = vadd.f32 %v4411, %v4629
    %v4631 = vpop.f32.mrb[0].mxu0
    %4632 = vmatprep.mubr.f32.mxu0 0.0
    %4633 = vmatmul.mubr.f32.gmra.mrb[0].mxu0 %v4483
    %v4634 = vpop.f32.mrb[0].mxu0
    %v4635 = vadd.f32 %v4412, %v4634
    %v4636 = vpop.f32.mrb[0].mxu0
    %4637 = vmatprep.mubr.f32.mxu0 0.0
    %4638 = vmatmul.mubr.f32.gmra.mrb[0].mxu0 %v4485
    %v4639 = vpop.f32.mrb[0].mxu0
    %v4640 = vadd.f32 %v4413, %v4639
    %v4641 = vpop.f32.mrb[0].mxu0
    %4642 = vmatprep.mubr.f32.mxu0 0.0
    %4643 = vmatmul.mubr.f32.gmra.mrb[0].mxu0 %v4487
    %v4644 = vpop.f32.mrb[0].mxu0
    %v4645 = vadd.f32 %v4414, %v4644
    %v4646 = vpop.f32.mrb[0].mxu0
    %4647 = vmatprep.mubr.f32.mxu0 0.0
    %4648 = vmatmul.mubr.f32.gmra.mrb[0].mxu0 %v4489
    %v4649 = vpop.f32.mrb[0].mxu0
    %v4650 = vadd.f32 %v4415, %v4649
    %v4651 = vpop.f32.mrb[0].mxu0
    %4652 = vmatprep.mubr.f32.mxu0 0.0
    %4653 = vmatmul.mubr.f32.gmra.mrb[0].mxu0 %v4491
    %v4654 = vpop.f32.mrb[0].mxu0
    %v4655 = vadd.f32 %v4416, %v4654
    %v4656 = vpop.f32.mrb[0].mxu0
    %4657 = vmatprep.mubr.f32.mxu0 0.0
    %4658 = vmatmul.mubr.f32.gmra.mrb[0].mxu0 %v4493
    %v4659 = vpop.f32.mrb[0].mxu0
    %v4660 = vadd.f32 %v4417, %v4659
    %v4661 = vpop.f32.mrb[0].mxu0
    %4662 = vmatprep.mubr.f32.mxu0 0.0
    %4663 = vmatmul.mubr.f32.gmra.mrb[0].mxu0 %v4495
    %v4664 = vpop.f32.mrb[0].mxu0
    %v4665 = vadd.f32 %v4418, %v4664
    %v4666 = vpop.f32.mrb[0].mxu0
    %4667 = vmatprep.mubr.f32.mxu0 0.0
    %4668 = vmatmul.mubr.f32.gmra.mrb[0].mxu0 %v4497
    %v4669 = vpop.f32.mrb[0].mxu0
    %v4670 = vadd.f32 %v4419, %v4669
    %v4671 = vpop.f32.mrb[0].mxu0
    %4672 = vmatprep.mubr.f32.mxu0 0.0
    %4673 = vmatmul.mubr.f32.gmra.mrb[0].mxu0 %v4499
    %v4674 = vpop.f32.mrb[0].mxu0
    %v4675 = vadd.f32 %v4420, %v4674
    %v4676 = vpop.f32.mrb[0].mxu0
    %4677 = vdwg.mxu0
    %4678 = vmax.xlane.f32.xlu0 %v4600
    %v4679 = vpop.xlane.xlu0 %4678
    %4680 = vmax.xlane.f32.xlu0 %v4605
    %v4681 = vpop.xlane.xlu0 %4680
    %4682 = vmax.xlane.f32.xlu0 %v4610
    %v4683 = vpop.xlane.xlu0 %4682
    %4684 = vmax.xlane.f32.xlu0 %v4615
    %v4685 = vpop.xlane.xlu0 %4684
    %4686 = vmax.xlane.f32.xlu0 %v4620
    %v4687 = vpop.xlane.xlu0 %4686
    %4688 = vmax.xlane.f32.xlu0 %v4625
    %v4689 = vpop.xlane.xlu0 %4688
    %4690 = vmax.xlane.f32.xlu0 %v4630
    %v4691 = vpop.xlane.xlu0 %4690
    %4692 = vmax.xlane.f32.xlu0 %v4635
    %v4693 = vpop.xlane.xlu0 %4692
    %4694 = vmax.xlane.f32.xlu0 %v4640
    %v4695 = vpop.xlane.xlu0 %4694
    %4696 = vmax.xlane.f32.xlu0 %v4645
    %v4697 = vpop.xlane.xlu0 %4696
    %4698 = vmax.xlane.f32.xlu0 %v4650
    %v4699 = vpop.xlane.xlu0 %4698
    %4700 = vmax.xlane.f32.xlu0 %v4655
    %v4701 = vpop.xlane.xlu0 %4700
    %4702 = vmax.xlane.f32.xlu0 %v4660
    %v4703 = vpop.xlane.xlu0 %4702
    %4704 = vmax.xlane.f32.xlu0 %v4665
    %v4705 = vpop.xlane.xlu0 %4704
    %4706 = vmax.xlane.f32.xlu0 %v4670
    %v4707 = vpop.xlane.xlu0 %4706
    %4708 = vmax.xlane.f32.xlu0 %v4675
    %v4709 = vpop.xlane.xlu0 %4708
    %v4710 = vsub.f32 %v4600, %v4679
    %v4711 = vsub.f32 %v4605, %v4681
    %v4712 = vsub.f32 %v4610, %v4683
    %v4713 = vsub.f32 %v4615, %v4685
    %v4714 = vsub.f32 %v4620, %v4687
    %v4715 = vsub.f32 %v4625, %v4689
    %v4716 = vsub.f32 %v4630, %v4691
    %v4717 = vsub.f32 %v4635, %v4693
    %v4718 = vsub.f32 %v4640, %v4695
    %v4719 = vsub.f32 %v4645, %v4697
    %v4720 = vsub.f32 %v4650, %v4699
    %v4721 = vsub.f32 %v4655, %v4701
    %v4722 = vsub.f32 %v4660, %v4703
    %v4723 = vsub.f32 %v4665, %v4705
    %v4724 = vsub.f32 %v4670, %v4707
    %v4725 = vsub.f32 %v4675, %v4709
    %v4726 = vmul.f32 %v4710, 1.442695
    %v4727 = vpow.pop %v4726
    %v4728 = vmul.f32 %v4711, 1.442695
    %v4729 = vpow.pop %v4728
    %v4730 = vmul.f32 %v4712, 1.442695
    %v4731 = vpow.pop %v4730
    %v4732 = vmul.f32 %v4713, 1.442695
    %v4733 = vpow.pop %v4732
    %v4734 = vmul.f32 %v4714, 1.442695
    %v4735 = vpow.pop %v4734
    %v4736 = vmul.f32 %v4715, 1.442695
    %v4737 = vpow.pop %v4736
    %v4738 = vmul.f32 %v4716, 1.442695
    %v4739 = vpow.pop %v4738
    %v4740 = vmul.f32 %v4717, 1.442695
    %v4741 = vpow.pop %v4740
    %v4742 = vmul.f32 %v4718, 1.442695
    %v4743 = vpow.pop %v4742
    %v4744 = vmul.f32 %v4719, 1.442695
    %v4745 = vpow.pop %v4744
    %v4746 = vmul.f32 %v4720, 1.442695
    %v4747 = vpow.pop %v4746
    %v4748 = vmul.f32 %v4721, 1.442695
    %v4749 = vpow.pop %v4748
    %v4750 = vmul.f32 %v4722, 1.442695
    %v4751 = vpow.pop %v4750
    %v4752 = vmul.f32 %v4723, 1.442695
    %v4753 = vpow.pop %v4752
    %v4754 = vmul.f32 %v4724, 1.442695
    %v4755 = vpow.pop %v4754
    %v4756 = vmul.f32 %v4725, 1.442695
    %v4757 = vpow.pop %v4756
    %4758 = vadd.xlane.f32.xlu0 %v4727
    %v4759 = vpop.xlane.xlu0 %4758
    %4760 = vadd.xlane.f32.xlu0 %v4729
    %v4761 = vpop.xlane.xlu0 %4760
    %4762 = vadd.xlane.f32.xlu0 %v4731
    %v4763 = vpop.xlane.xlu0 %4762
    %4764 = vadd.xlane.f32.xlu0 %v4733
    %v4765 = vpop.xlane.xlu0 %4764
    %4766 = vadd.xlane.f32.xlu0 %v4735
    %v4767 = vpop.xlane.xlu0 %4766
    %4768 = vadd.xlane.f32.xlu0 %v4737
    %v4769 = vpop.xlane.xlu0 %4768
    %4770 = vadd.xlane.f32.xlu0 %v4739
    %v4771 = vpop.xlane.xlu0 %4770
    %4772 = vadd.xlane.f32.xlu0 %v4741
    %v4773 = vpop.xlane.xlu0 %4772
    %4774 = vadd.xlane.f32.xlu0 %v4743
    %v4775 = vpop.xlane.xlu0 %4774
    %4776 = vadd.xlane.f32.xlu0 %v4745
    %v4777 = vpop.xlane.xlu0 %4776
    %4778 = vadd.xlane.f32.xlu0 %v4747
    %v4779 = vpop.xlane.xlu0 %4778
    %4780 = vadd.xlane.f32.xlu0 %v4749
    %v4781 = vpop.xlane.xlu0 %4780
    %4782 = vadd.xlane.f32.xlu0 %v4751
    %v4783 = vpop.xlane.xlu0 %4782
    %4784 = vadd.xlane.f32.xlu0 %v4753
    %v4785 = vpop.xlane.xlu0 %4784
    %4786 = vadd.xlane.f32.xlu0 %v4755
    %v4787 = vpop.xlane.xlu0 %4786
    %4788 = vadd.xlane.f32.xlu0 %v4757
    %v4789 = vpop.xlane.xlu0 %4788
    %v4790 = vrcp.pop %v4759
    %v4791 = vrcp.pop %v4761
    %v4792 = vrcp.pop %v4763
    %v4793 = vrcp.pop %v4765
    %v4794 = vrcp.pop %v4767
    %v4795 = vrcp.pop %v4769
    %v4796 = vrcp.pop %v4771
    %v4797 = vrcp.pop %v4773
    %v4798 = vrcp.pop %v4775
    %v4799 = vrcp.pop %v4777
    %v4800 = vrcp.pop %v4779
    %v4801 = vrcp.pop %v4781
    %v4802 = vrcp.pop %v4783
    %v4803 = vrcp.pop %v4785
    %v4804 = vrcp.pop %v4787
    %v4805 = vrcp.pop %v4789
    %v4806 = vmul.f32 %v4727, %v4790
    %v4807 = vmul.f32 %v4729, %v4791
    %v4808 = vmul.f32 %v4731, %v4792
    %v4809 = vmul.f32 %v4733, %v4793
    %v4810 = vmul.f32 %v4735, %v4794
    %v4811 = vmul.f32 %v4737, %v4795
    %v4812 = vmul.f32 %v4739, %v4796
    %v4813 = vmul.f32 %v4741, %v4797
    %v4814 = vmul.f32 %v4743, %v4798
    %v4815 = vmul.f32 %v4745, %v4799
    %v4816 = vmul.f32 %v4747, %v4800
    %v4817 = vmul.f32 %v4749, %v4801
    %v4818 = vmul.f32 %v4751, %v4802
    %v4819 = vmul.f32 %v4753, %v4803
    %v4820 = vmul.f32 %v4755, %v4804
    %v4821 = vmul.f32 %v4757, %v4805
    %s4822 = sld [smem:[#allocation3 + $0x6]]
    %v4823 = vstv %s4822
    %v4824 = vmul.f32 %v4823, %v4806
    %v4825 = vmul.f32 %v4823, %v4807
    %v4826 = vmul.f32 %v4823, %v4808
    %v4827 = vmul.f32 %v4823, %v4809
    %v4828 = vmul.f32 %v4823, %v4810
    %v4829 = vmul.f32 %v4823, %v4811
    %v4830 = vmul.f32 %v4823, %v4812
    %v4831 = vmul.f32 %v4823, %v4813
    %v4832 = vmul.f32 %v4823, %v4814
    %v4833 = vmul.f32 %v4823, %v4815
    %v4834 = vmul.f32 %v4823, %v4816
    %v4835 = vmul.f32 %v4823, %v4817
    %v4836 = vmul.f32 %v4823, %v4818
    %v4837 = vmul.f32 %v4823, %v4819
    %v4838 = vmul.f32 %v4823, %v4820
    %v4839 = vmul.f32 %v4823, %v4821
    %v4840 = vadd.f32 %v4824, 0.0
    %v4841 = vadd.f32 %v4825, 0.0
    %v4842 = vadd.f32 %v4826, 0.0
    %v4843 = vadd.f32 %v4827, 0.0
    %v4844 = vadd.f32 %v4828, 0.0
    %v4845 = vadd.f32 %v4829, 0.0
    %v4846 = vadd.f32 %v4830, 0.0
    %v4847 = vadd.f32 %v4831, 0.0
    %v4848 = vadd.f32 %v4832, 0.0
    %v4849 = vadd.f32 %v4833, 0.0
    %v4850 = vadd.f32 %v4834, 0.0
    %v4851 = vadd.f32 %v4835, 0.0
    %v4852 = vadd.f32 %v4836, 0.0
    %v4853 = vadd.f32 %v4837, 0.0
    %v4854 = vadd.f32 %v4838, 0.0
    %v4855 = vadd.f32 %v4839, 0.0
    %v4856 = vld [vmem:[%s2] sm:$0xff]
    %v4857 = vld [vmem:[%s2 + $0x8] sm:$0xff]
    %v4858 = vld [vmem:[%s2 + $0x10] sm:$0xff]
    %v4859 = vld [vmem:[%s2 + $0x18] sm:$0xff]
    %v4860 = vld [vmem:[%s2 + $0x20] sm:$0xff]
    %v4861 = vld [vmem:[%s2 + $0x28] sm:$0xff]
    %v4862 = vld [vmem:[%s2 + $0x30] sm:$0xff]
    %v4863 = vld [vmem:[%s2 + $0x38] sm:$0xff]
    %v4864 = vld [vmem:[%s2 + $0x40] sm:$0xff]
    %v4865 = vld [vmem:[%s2 + $0x48] sm:$0xff]
    %v4866 = vld [vmem:[%s2 + $0x50] sm:$0xff]
    %v4867 = vld [vmem:[%s2 + $0x58] sm:$0xff]
    %v4868 = vld [vmem:[%s2 + $0x60] sm:$0xff]
    %v4869 = vld [vmem:[%s2 + $0x68] sm:$0xff]
    %v4870 = vld [vmem:[%s2 + $0x70] sm:$0xff]
    %v4871 = vld [vmem:[%s2 + $0x78] sm:$0xff]
    %4872 = vrot.lane.b32.xlu0 %v4327, 112
    %v4873 = vpop.permute.xlu0 %4872
    %4874 = vrot.lane.b32.xlu0 %v4332, 112
    %v4875 = vpop.permute.xlu0 %4874
    %4876 = vrot.lane.b32.xlu0 %v4337, 112
    %v4877 = vpop.permute.xlu0 %4876
    %4878 = vrot.lane.b32.xlu0 %v4342, 112
    %v4879 = vpop.permute.xlu0 %4878
    %4880 = vrot.lane.b32.xlu0 %v4347, 112
    %v4881 = vpop.permute.xlu0 %4880
    %4882 = vrot.lane.b32.xlu0 %v4352, 112
    %v4883 = vpop.permute.xlu0 %4882
    %4884 = vrot.lane.b32.xlu0 %v4357, 112
    %v4885 = vpop.permute.xlu0 %4884
    %4886 = vrot.lane.b32.xlu0 %v4362, 112
    %v4887 = vpop.permute.xlu0 %4886
    %4888 = vrot.lane.b32.xlu0 %v4367, 112
    %v4889 = vpop.permute.xlu0 %4888
    %4890 = vrot.lane.b32.xlu0 %v4372, 112
    %v4891 = vpop.permute.xlu0 %4890
    %4892 = vrot.lane.b32.xlu0 %v4377, 112
    %v4893 = vpop.permute.xlu0 %4892
    %4894 = vrot.lane.b32.xlu0 %v4382, 112
    %v4895 = vpop.permute.xlu0 %4894
    %4896 = vrot.lane.b32.xlu0 %v4387, 112
    %v4897 = vpop.permute.xlu0 %4896
    %4898 = vrot.lane.b32.xlu0 %v4392, 112
    %v4899 = vpop.permute.xlu0 %4898
    %4900 = vrot.lane.b32.xlu0 %v4397, 112
    %v4901 = vpop.permute.xlu0 %4900
    %4902 = vrot.lane.b32.xlu0 %v4402, 112
    %v4903 = vpop.permute.xlu0 %4902
    %v4904 = vsel %vm506, %v4873, 0
    %v4906 = vsel %vm506, %v4875, 0
    %v4908 = vsel %vm506, %v4877, 0
    %v4910 = vsel %vm506, %v4879, 0
    %v4912 = vsel %vm506, %v4881, 0
    %v4914 = vsel %vm506, %v4883, 0
    %v4916 = vsel %vm506, %v4885, 0
    %v4918 = vsel %vm506, %v4887, 0
    %v4920 = vsel %vm506, %v4889, 0
    %v4922 = vsel %vm506, %v4891, 0
    %v4924 = vsel %vm506, %v4893, 0
    %v4926 = vsel %vm506, %v4895, 0
    %v4928 = vsel %vm506, %v4897, 0
    %v4930 = vsel %vm506, %v4899, 0
    %v4932 = vsel %vm506, %v4901, 0
    %v4934 = vsel %vm506, %v4903, 0
    %4936 = vmatprep.subr.mxu0 0.0
    %4937 = vmatpush1.xpose.msra.mxu0 %v4501
    %4938 = vmatprep.subr.mxu0 0.0
    %4939 = vmatpush1.xpose.msra.mxu0 %v4503
    %4940 = vmatprep.subr.mxu0 0.0
    %4941 = vmatpush1.xpose.msra.mxu0 %v4505
    %4942 = vmatprep.subr.mxu0 0.0
    %4943 = vmatpush1.xpose.msra.mxu0 %v4507
    %4944 = vmatprep.subr.mxu0 0.0
    %4945 = vmatpush1.xpose.msra.mxu0 %v4509
    %4946 = vmatprep.subr.mxu0 0.0
    %4947 = vmatpush1.xpose.msra.mxu0 %v4511
    %4948 = vmatprep.subr.mxu0 0.0
    %4949 = vmatpush1.xpose.msra.mxu0 %v4513
    %4950 = vmatprep.subr.mxu0 0.0
    %4951 = vmatpush1.xpose.msra.mxu0 %v4515
    %4952 = vmatprep.subr.mxu0 0.0
    %4953 = vmatpush1.xpose.msra.mxu0 %v4517
    %4954 = vmatprep.subr.mxu0 0.0
    %4955 = vmatpush1.xpose.msra.mxu0 %v4519
    %4956 = vmatprep.subr.mxu0 0.0
    %4957 = vmatpush1.xpose.msra.mxu0 %v4521
    %4958 = vmatprep.subr.mxu0 0.0
    %4959 = vmatpush1.xpose.msra.mxu0 %v4523
    %4960 = vmatprep.subr.mxu0 0.0
    %4961 = vmatpush1.xpose.msra.mxu0 %v4525
    %4962 = vmatprep.subr.mxu0 0.0
    %4963 = vmatpush1.xpose.msra.mxu0 %v4527
    %4964 = vmatprep.subr.mxu0 0.0
    %4965 = vmatpush1.xpose.msra.mxu0 %v4529
    %4966 = vmatprep.subr.mxu0 0.0
    %4967 = vmatpush1.xpose.msra.mxu0 %v4531
    %4968 = vmatprep.subr.mxu0 0.0
    %4969 = vmatpush1.xpose.msra.mxu0 0.0
    %4970 = vmatprep.subr.mxu0 0.0
    %4971 = vmatpush1.xpose.msra.mxu0 0.0
    %4972 = vmatprep.subr.mxu0 0.0
    %4973 = vmatpush1.xpose.msra.mxu0 0.0
    %4974 = vmatprep.subr.mxu0 0.0
    %4975 = vmatpush1.xpose.msra.mxu0 0.0
    %4976 = vmatprep.subr.mxu0 0.0
    %4977 = vmatpush1.xpose.msra.mxu0 0.0
    %4978 = vmatprep.subr.mxu0 0.0
    %4979 = vmatpush1.xpose.msra.mxu0 0.0
    %4980 = vmatprep.subr.mxu0 0.0
    %4981 = vmatpush1.xpose.msra.mxu0 0.0
    %4982 = vmatprep.subr.mxu0 0.0
    %4983 = vmatpush1.xpose.msra.mxu0 0.0
    %4984 = vmatprep.subr.mxu0 0.0
    %4985 = vmatpush1.xpose.msra.mxu0 0.0
    %4986 = vmatprep.subr.mxu0 0.0
    %4987 = vmatpush1.xpose.msra.mxu0 0.0
    %4988 = vmatprep.subr.mxu0 0.0
    %4989 = vmatpush1.xpose.msra.mxu0 0.0
    %4990 = vmatprep.subr.mxu0 0.0
    %4991 = vmatpush1.xpose.msra.mxu0 0.0
    %4992 = vmatprep.subr.mxu0 0.0
    %4993 = vmatpush1.xpose.msra.mxu0 0.0
    %4994 = vmatprep.subr.mxu0 0.0
    %4995 = vmatpush1.xpose.msra.mxu0 0.0
    %4996 = vmatprep.subr.mxu0 0.0
    %4997 = vmatpush1.xpose.msra.mxu0 0.0
    %4998 = vmatprep.subr.mxu0 0.0
    %4999 = vmatpush1.xpose.msra.mxu0 0.0
    %5000 = vmatprep.mubr.f32.mxu0 0.0
    %5001 = vmatmul.mubr.f32.gmra.mrb[0].mxu0 %v4904
    %v5002 = vpop.f32.mrb[0].mxu0
    %v5003 = vadd.f32 %v4856, %v5002
    %v5004 = vpop.f32.mrb[0].mxu0
    %5005 = vmatprep.mubr.f32.mxu0 0.0
    %5006 = vmatmul.mubr.f32.gmra.mrb[0].mxu0 %v4906
    %v5007 = vpop.f32.mrb[0].mxu0
    %v5008 = vadd.f32 %v4857, %v5007
    %v5009 = vpop.f32.mrb[0].mxu0
    %5010 = vmatprep.mubr.f32.mxu0 0.0
    %5011 = vmatmul.mubr.f32.gmra.mrb[0].mxu0 %v4908
    %v5012 = vpop.f32.mrb[0].mxu0
    %v5013 = vadd.f32 %v4858, %v5012
    %v5014 = vpop.f32.mrb[0].mxu0
    %5015 = vmatprep.mubr.f32.mxu0 0.0
    %5016 = vmatmul.mubr.f32.gmra.mrb[0].mxu0 %v4910
    %v5017 = vpop.f32.mrb[0].mxu0
    %v5018 = vadd.f32 %v4859, %v5017
    %v5019 = vpop.f32.mrb[0].mxu0
    %5020 = vmatprep.mubr.f32.mxu0 0.0
    %5021 = vmatmul.mubr.f32.gmra.mrb[0].mxu0 %v4912
    %v5022 = vpop.f32.mrb[0].mxu0
    %v5023 = vadd.f32 %v4860, %v5022
    %v5024 = vpop.f32.mrb[0].mxu0
    %5025 = vmatprep.mubr.f32.mxu0 0.0
    %5026 = vmatmul.mubr.f32.gmra.mrb[0].mxu0 %v4914
    %v5027 = vpop.f32.mrb[0].mxu0
    %v5028 = vadd.f32 %v4861, %v5027
    %v5029 = vpop.f32.mrb[0].mxu0
    %5030 = vmatprep.mubr.f32.mxu0 0.0
    %5031 = vmatmul.mubr.f32.gmra.mrb[0].mxu0 %v4916
    %v5032 = vpop.f32.mrb[0].mxu0
    %v5033 = vadd.f32 %v4862, %v5032
    %v5034 = vpop.f32.mrb[0].mxu0
    %5035 = vmatprep.mubr.f32.mxu0 0.0
    %5036 = vmatmul.mubr.f32.gmra.mrb[0].mxu0 %v4918
    %v5037 = vpop.f32.mrb[0].mxu0
    %v5038 = vadd.f32 %v4863, %v5037
    %v5039 = vpop.f32.mrb[0].mxu0
    %5040 = vmatprep.mubr.f32.mxu0 0.0
    %5041 = vmatmul.mubr.f32.gmra.mrb[0].mxu0 %v4920
    %v5042 = vpop.f32.mrb[0].mxu0
    %v5043 = vadd.f32 %v4864, %v5042
    %v5044 = vpop.f32.mrb[0].mxu0
    %5045 = vmatprep.mubr.f32.mxu0 0.0
    %5046 = vmatmul.mubr.f32.gmra.mrb[0].mxu0 %v4922
    %v5047 = vpop.f32.mrb[0].mxu0
    %v5048 = vadd.f32 %v4865, %v5047
    %v5049 = vpop.f32.mrb[0].mxu0
    %5050 = vmatprep.mubr.f32.mxu0 0.0
    %5051 = vmatmul.mubr.f32.gmra.mrb[0].mxu0 %v4924
    %v5052 = vpop.f32.mrb[0].mxu0
    %v5053 = vadd.f32 %v4866, %v5052
    %v5054 = vpop.f32.mrb[0].mxu0
    %5055 = vmatprep.mubr.f32.mxu0 0.0
    %5056 = vmatmul.mubr.f32.gmra.mrb[0].mxu0 %v4926
    %v5057 = vpop.f32.mrb[0].mxu0
    %v5058 = vadd.f32 %v4867, %v5057
    %v5059 = vpop.f32.mrb[0].mxu0
    %5060 = vmatprep.mubr.f32.mxu0 0.0
    %5061 = vmatmul.mubr.f32.gmra.mrb[0].mxu0 %v4928
    %v5062 = vpop.f32.mrb[0].mxu0
    %v5063 = vadd.f32 %v4868, %v5062
    %v5064 = vpop.f32.mrb[0].mxu0
    %5065 = vmatprep.mubr.f32.mxu0 0.0
    %5066 = vmatmul.mubr.f32.gmra.mrb[0].mxu0 %v4930
    %v5067 = vpop.f32.mrb[0].mxu0
    %v5068 = vadd.f32 %v4869, %v5067
    %v5069 = vpop.f32.mrb[0].mxu0
    %5070 = vmatprep.mubr.f32.mxu0 0.0
    %5071 = vmatmul.mubr.f32.gmra.mrb[0].mxu0 %v4932
    %v5072 = vpop.f32.mrb[0].mxu0
    %v5073 = vadd.f32 %v4870, %v5072
    %v5074 = vpop.f32.mrb[0].mxu0
    %5075 = vmatprep.mubr.f32.mxu0 0.0
    %5076 = vmatmul.mubr.f32.gmra.mrb[0].mxu0 %v4934
    %v5077 = vpop.f32.mrb[0].mxu0
    %v5078 = vadd.f32 %v4871, %v5077
    %v5079 = vpop.f32.mrb[0].mxu0
    %5080 = vdwg.mxu0
    %5081 = vmax.xlane.f32.xlu0 %v5003
    %v5082 = vpop.xlane.xlu0 %5081
    %5083 = vmax.xlane.f32.xlu0 %v5008
    %v5084 = vpop.xlane.xlu0 %5083
    %5085 = vmax.xlane.f32.xlu0 %v5013
    %v5086 = vpop.xlane.xlu0 %5085
    %5087 = vmax.xlane.f32.xlu0 %v5018
    %v5088 = vpop.xlane.xlu0 %5087
    %5089 = vmax.xlane.f32.xlu0 %v5023
    %v5090 = vpop.xlane.xlu0 %5089
    %5091 = vmax.xlane.f32.xlu0 %v5028
    %v5092 = vpop.xlane.xlu0 %5091
    %5093 = vmax.xlane.f32.xlu0 %v5033
    %v5094 = vpop.xlane.xlu0 %5093
    %5095 = vmax.xlane.f32.xlu0 %v5038
    %v5096 = vpop.xlane.xlu0 %5095
    %5097 = vmax.xlane.f32.xlu0 %v5043
    %v5098 = vpop.xlane.xlu0 %5097
    %5099 = vmax.xlane.f32.xlu0 %v5048
    %v5100 = vpop.xlane.xlu0 %5099
    %5101 = vmax.xlane.f32.xlu0 %v5053
    %v5102 = vpop.xlane.xlu0 %5101
    %5103 = vmax.xlane.f32.xlu0 %v5058
    %v5104 = vpop.xlane.xlu0 %5103
    %5105 = vmax.xlane.f32.xlu0 %v5063
    %v5106 = vpop.xlane.xlu0 %5105
    %5107 = vmax.xlane.f32.xlu0 %v5068
    %v5108 = vpop.xlane.xlu0 %5107
    %5109 = vmax.xlane.f32.xlu0 %v5073
    %v5110 = vpop.xlane.xlu0 %5109
    %5111 = vmax.xlane.f32.xlu0 %v5078
    %v5112 = vpop.xlane.xlu0 %5111
    %v5113 = vsub.f32 %v5003, %v5082
    %v5114 = vsub.f32 %v5008, %v5084
    %v5115 = vsub.f32 %v5013, %v5086
    %v5116 = vsub.f32 %v5018, %v5088
    %v5117 = vsub.f32 %v5023, %v5090
    %v5118 = vsub.f32 %v5028, %v5092
    %v5119 = vsub.f32 %v5033, %v5094
    %v5120 = vsub.f32 %v5038, %v5096
    %v5121 = vsub.f32 %v5043, %v5098
    %v5122 = vsub.f32 %v5048, %v5100
    %v5123 = vsub.f32 %v5053, %v5102
    %v5124 = vsub.f32 %v5058, %v5104
    %v5125 = vsub.f32 %v5063, %v5106
    %v5126 = vsub.f32 %v5068, %v5108
    %v5127 = vsub.f32 %v5073, %v5110
    %v5128 = vsub.f32 %v5078, %v5112
    %v5129 = vmul.f32 %v5113, 1.442695
    %v5130 = vpow.pop %v5129
    %v5131 = vmul.f32 %v5114, 1.442695
    %v5132 = vpow.pop %v5131
    %v5133 = vmul.f32 %v5115, 1.442695
    %v5134 = vpow.pop %v5133
    %v5135 = vmul.f32 %v5116, 1.442695
    %v5136 = vpow.pop %v5135
    %v5137 = vmul.f32 %v5117, 1.442695
    %v5138 = vpow.pop %v5137
    %v5139 = vmul.f32 %v5118, 1.442695
    %v5140 = vpow.pop %v5139
    %v5141 = vmul.f32 %v5119, 1.442695
    %v5142 = vpow.pop %v5141
    %v5143 = vmul.f32 %v5120, 1.442695
    %v5144 = vpow.pop %v5143
    %v5145 = vmul.f32 %v5121, 1.442695
    %v5146 = vpow.pop %v5145
    %v5147 = vmul.f32 %v5122, 1.442695
    %v5148 = vpow.pop %v5147
    %v5149 = vmul.f32 %v5123, 1.442695
    %v5150 = vpow.pop %v5149
    %v5151 = vmul.f32 %v5124, 1.442695
    %v5152 = vpow.pop %v5151
    %v5153 = vmul.f32 %v5125, 1.442695
    %v5154 = vpow.pop %v5153
    %v5155 = vmul.f32 %v5126, 1.442695
    %v5156 = vpow.pop %v5155
    %v5157 = vmul.f32 %v5127, 1.442695
    %v5158 = vpow.pop %v5157
    %v5159 = vmul.f32 %v5128, 1.442695
    %v5160 = vpow.pop %v5159
    %5161 = vadd.xlane.f32.xlu0 %v5130
    %v5162 = vpop.xlane.xlu0 %5161
    %5163 = vadd.xlane.f32.xlu0 %v5132
    %v5164 = vpop.xlane.xlu0 %5163
    %5165 = vadd.xlane.f32.xlu0 %v5134
    %v5166 = vpop.xlane.xlu0 %5165
    %5167 = vadd.xlane.f32.xlu0 %v5136
    %v5168 = vpop.xlane.xlu0 %5167
    %5169 = vadd.xlane.f32.xlu0 %v5138
    %v5170 = vpop.xlane.xlu0 %5169
    %5171 = vadd.xlane.f32.xlu0 %v5140
    %v5172 = vpop.xlane.xlu0 %5171
    %5173 = vadd.xlane.f32.xlu0 %v5142
    %v5174 = vpop.xlane.xlu0 %5173
    %5175 = vadd.xlane.f32.xlu0 %v5144
    %v5176 = vpop.xlane.xlu0 %5175
    %5177 = vadd.xlane.f32.xlu0 %v5146
    %v5178 = vpop.xlane.xlu0 %5177
    %5179 = vadd.xlane.f32.xlu0 %v5148
    %v5180 = vpop.xlane.xlu0 %5179
    %5181 = vadd.xlane.f32.xlu0 %v5150
    %v5182 = vpop.xlane.xlu0 %5181
    %5183 = vadd.xlane.f32.xlu0 %v5152
    %v5184 = vpop.xlane.xlu0 %5183
    %5185 = vadd.xlane.f32.xlu0 %v5154
    %v5186 = vpop.xlane.xlu0 %5185
    %5187 = vadd.xlane.f32.xlu0 %v5156
    %v5188 = vpop.xlane.xlu0 %5187
    %5189 = vadd.xlane.f32.xlu0 %v5158
    %v5190 = vpop.xlane.xlu0 %5189
    %5191 = vadd.xlane.f32.xlu0 %v5160
    %v5192 = vpop.xlane.xlu0 %5191
    %v5193 = vrcp.pop %v5162
    %v5194 = vrcp.pop %v5164
    %v5195 = vrcp.pop %v5166
    %v5196 = vrcp.pop %v5168
    %v5197 = vrcp.pop %v5170
    %v5198 = vrcp.pop %v5172
    %v5199 = vrcp.pop %v5174
    %v5200 = vrcp.pop %v5176
    %v5201 = vrcp.pop %v5178
    %v5202 = vrcp.pop %v5180
    %v5203 = vrcp.pop %v5182
    %v5204 = vrcp.pop %v5184
    %v5205 = vrcp.pop %v5186
    %v5206 = vrcp.pop %v5188
    %v5207 = vrcp.pop %v5190
    %v5208 = vrcp.pop %v5192
    %v5209 = vmul.f32 %v5130, %v5193
    %v5210 = vmul.f32 %v5132, %v5194
    %v5211 = vmul.f32 %v5134, %v5195
    %v5212 = vmul.f32 %v5136, %v5196
    %v5213 = vmul.f32 %v5138, %v5197
    %v5214 = vmul.f32 %v5140, %v5198
    %v5215 = vmul.f32 %v5142, %v5199
    %v5216 = vmul.f32 %v5144, %v5200
    %v5217 = vmul.f32 %v5146, %v5201
    %v5218 = vmul.f32 %v5148, %v5202
    %v5219 = vmul.f32 %v5150, %v5203
    %v5220 = vmul.f32 %v5152, %v5204
    %v5221 = vmul.f32 %v5154, %v5205
    %v5222 = vmul.f32 %v5156, %v5206
    %v5223 = vmul.f32 %v5158, %v5207
    %v5224 = vmul.f32 %v5160, %v5208
    %s5225 = sld [smem:[#allocation3 + $0x7]]
    %v5226 = vstv %s5225
    %v5227 = vmul.f32 %v5226, %v5209
    %v5228 = vmul.f32 %v5226, %v5210
    %v5229 = vmul.f32 %v5226, %v5211
    %v5230 = vmul.f32 %v5226, %v5212
    %v5231 = vmul.f32 %v5226, %v5213
    %v5232 = vmul.f32 %v5226, %v5214
    %v5233 = vmul.f32 %v5226, %v5215
    %v5234 = vmul.f32 %v5226, %v5216
    %v5235 = vmul.f32 %v5226, %v5217
    %v5236 = vmul.f32 %v5226, %v5218
    %v5237 = vmul.f32 %v5226, %v5219
    %v5238 = vmul.f32 %v5226, %v5220
    %v5239 = vmul.f32 %v5226, %v5221
    %v5240 = vmul.f32 %v5226, %v5222
    %v5241 = vmul.f32 %v5226, %v5223
    %v5242 = vmul.f32 %v5226, %v5224
    %v5243 = vadd.f32 %v4840, %v5227
    %v5244 = vadd.f32 %v4841, %v5228
    %v5245 = vadd.f32 %v4842, %v5229
    %v5246 = vadd.f32 %v4843, %v5230
    %v5247 = vadd.f32 %v4844, %v5231
    %v5248 = vadd.f32 %v4845, %v5232
    %v5249 = vadd.f32 %v4846, %v5233
    %v5250 = vadd.f32 %v4847, %v5234
    %v5251 = vadd.f32 %v4848, %v5235
    %v5252 = vadd.f32 %v4849, %v5236
    %v5253 = vadd.f32 %v4850, %v5237
    %v5254 = vadd.f32 %v4851, %v5238
    %v5255 = vadd.f32 %v4852, %v5239
    %v5256 = vadd.f32 %v4853, %v5240
    %v5257 = vadd.f32 %v4854, %v5241
    %v5258 = vadd.f32 %v4855, %v5242
    %v5259 = vld [vmem:[%s2] sm:$0xff]
    %v5260 = vld [vmem:[%s2 + $0x8] sm:$0xff]
    %v5261 = vld [vmem:[%s2 + $0x10] sm:$0xff]
    %v5262 = vld [vmem:[%s2 + $0x18] sm:$0xff]
    %v5263 = vld [vmem:[%s2 + $0x20] sm:$0xff]
    %v5264 = vld [vmem:[%s2 + $0x28] sm:$0xff]
    %v5265 = vld [vmem:[%s2 + $0x30] sm:$0xff]
    %v5266 = vld [vmem:[%s2 + $0x38] sm:$0xff]
    %v5267 = vld [vmem:[%s2 + $0x40] sm:$0xff]
    %v5268 = vld [vmem:[%s2 + $0x48] sm:$0xff]
    %v5269 = vld [vmem:[%s2 + $0x50] sm:$0xff]
    %v5270 = vld [vmem:[%s2 + $0x58] sm:$0xff]
    %v5271 = vld [vmem:[%s2 + $0x60] sm:$0xff]
    %v5272 = vld [vmem:[%s2 + $0x68] sm:$0xff]
    %v5273 = vld [vmem:[%s2 + $0x70] sm:$0xff]
    %v5274 = vld [vmem:[%s2 + $0x78] sm:$0xff]
    %5275 = vrot.lane.b32.xlu0 %v4327, 96
    %v5276 = vpop.permute.xlu0 %5275
    %5277 = vrot.lane.b32.xlu0 %v4332, 96
    %v5278 = vpop.permute.xlu0 %5277
    %5279 = vrot.lane.b32.xlu0 %v4337, 96
    %v5280 = vpop.permute.xlu0 %5279
    %5281 = vrot.lane.b32.xlu0 %v4342, 96
    %v5282 = vpop.permute.xlu0 %5281
    %5283 = vrot.lane.b32.xlu0 %v4347, 96
    %v5284 = vpop.permute.xlu0 %5283
    %5285 = vrot.lane.b32.xlu0 %v4352, 96
    %v5286 = vpop.permute.xlu0 %5285
    %5287 = vrot.lane.b32.xlu0 %v4357, 96
    %v5288 = vpop.permute.xlu0 %5287
    %5289 = vrot.lane.b32.xlu0 %v4362, 96
    %v5290 = vpop.permute.xlu0 %5289
    %5291 = vrot.lane.b32.xlu0 %v4367, 96
    %v5292 = vpop.permute.xlu0 %5291
    %5293 = vrot.lane.b32.xlu0 %v4372, 96
    %v5294 = vpop.permute.xlu0 %5293
    %5295 = vrot.lane.b32.xlu0 %v4377, 96
    %v5296 = vpop.permute.xlu0 %5295
    %5297 = vrot.lane.b32.xlu0 %v4382, 96
    %v5298 = vpop.permute.xlu0 %5297
    %5299 = vrot.lane.b32.xlu0 %v4387, 96
    %v5300 = vpop.permute.xlu0 %5299
    %5301 = vrot.lane.b32.xlu0 %v4392, 96
    %v5302 = vpop.permute.xlu0 %5301
    %5303 = vrot.lane.b32.xlu0 %v4397, 96
    %v5304 = vpop.permute.xlu0 %5303
    %5305 = vrot.lane.b32.xlu0 %v4402, 96
    %v5306 = vpop.permute.xlu0 %5305
    %v5307 = vsel %vm506, %v5276, 0
    %v5309 = vsel %vm506, %v5278, 0
    %v5311 = vsel %vm506, %v5280, 0
    %v5313 = vsel %vm506, %v5282, 0
    %v5315 = vsel %vm506, %v5284, 0
    %v5317 = vsel %vm506, %v5286, 0
    %v5319 = vsel %vm506, %v5288, 0
    %v5321 = vsel %vm506, %v5290, 0
    %v5323 = vsel %vm506, %v5292, 0
    %v5325 = vsel %vm506, %v5294, 0
    %v5327 = vsel %vm506, %v5296, 0
    %v5329 = vsel %vm506, %v5298, 0
    %v5331 = vsel %vm506, %v5300, 0
    %v5333 = vsel %vm506, %v5302, 0
    %v5335 = vsel %vm506, %v5304, 0
    %v5337 = vsel %vm506, %v5306, 0
    %5339 = vmatprep.subr.mxu0 0.0
    %5340 = vmatpush1.xpose.msra.mxu0 %v4501
    %5341 = vmatprep.subr.mxu0 0.0
    %5342 = vmatpush1.xpose.msra.mxu0 %v4503
    %5343 = vmatprep.subr.mxu0 0.0
    %5344 = vmatpush1.xpose.msra.mxu0 %v4505
    %5345 = vmatprep.subr.mxu0 0.0
    %5346 = vmatpush1.xpose.msra.mxu0 %v4507
    %5347 = vmatprep.subr.mxu0 0.0
    %5348 = vmatpush1.xpose.msra.mxu0 %v4509
    %5349 = vmatprep.subr.mxu0 0.0
    %5350 = vmatpush1.xpose.msra.mxu0 %v4511
    %5351 = vmatprep.subr.mxu0 0.0
    %5352 = vmatpush1.xpose.msra.mxu0 %v4513
    %5353 = vmatprep.subr.mxu0 0.0
    %5354 = vmatpush1.xpose.msra.mxu0 %v4515
    %5355 = vmatprep.subr.mxu0 0.0
    %5356 = vmatpush1.xpose.msra.mxu0 %v4517
    %5357 = vmatprep.subr.mxu0 0.0
    %5358 = vmatpush1.xpose.msra.mxu0 %v4519
    %5359 = vmatprep.subr.mxu0 0.0
    %5360 = vmatpush1.xpose.msra.mxu0 %v4521
    %5361 = vmatprep.subr.mxu0 0.0
    %5362 = vmatpush1.xpose.msra.mxu0 %v4523
    %5363 = vmatprep.subr.mxu0 0.0
    %5364 = vmatpush1.xpose.msra.mxu0 %v4525
    %5365 = vmatprep.subr.mxu0 0.0
    %5366 = vmatpush1.xpose.msra.mxu0 %v4527
    %5367 = vmatprep.subr.mxu0 0.0
    %5368 = vmatpush1.xpose.msra.mxu0 %v4529
    %5369 = vmatprep.subr.mxu0 0.0
    %5370 = vmatpush1.xpose.msra.mxu0 %v4531
    %5371 = vmatprep.subr.mxu0 0.0
    %5372 = vmatpush1.xpose.msra.mxu0 0.0
    %5373 = vmatprep.subr.mxu0 0.0
    %5374 = vmatpush1.xpose.msra.mxu0 0.0
    %5375 = vmatprep.subr.mxu0 0.0
    %5376 = vmatpush1.xpose.msra.mxu0 0.0
    %5377 = vmatprep.subr.mxu0 0.0
    %5378 = vmatpush1.xpose.msra.mxu0 0.0
    %5379 = vmatprep.subr.mxu0 0.0
    %5380 = vmatpush1.xpose.msra.mxu0 0.0
    %5381 = vmatprep.subr.mxu0 0.0
    %5382 = vmatpush1.xpose.msra.mxu0 0.0
    %5383 = vmatprep.subr.mxu0 0.0
    %5384 = vmatpush1.xpose.msra.mxu0 0.0
    %5385 = vmatprep.subr.mxu0 0.0
    %5386 = vmatpush1.xpose.msra.mxu0 0.0
    %5387 = vmatprep.subr.mxu0 0.0
    %5388 = vmatpush1.xpose.msra.mxu0 0.0
    %5389 = vmatprep.subr.mxu0 0.0
    %5390 = vmatpush1.xpose.msra.mxu0 0.0
    %5391 = vmatprep.subr.mxu0 0.0
    %5392 = vmatpush1.xpose.msra.mxu0 0.0
    %5393 = vmatprep.subr.mxu0 0.0
    %5394 = vmatpush1.xpose.msra.mxu0 0.0
    %5395 = vmatprep.subr.mxu0 0.0
    %5396 = vmatpush1.xpose.msra.mxu0 0.0
    %5397 = vmatprep.subr.mxu0 0.0
    %5398 = vmatpush1.xpose.msra.mxu0 0.0
    %5399 = vmatprep.subr.mxu0 0.0
    %5400 = vmatpush1.xpose.msra.mxu0 0.0
    %5401 = vmatprep.subr.mxu0 0.0
    %5402 = vmatpush1.xpose.msra.mxu0 0.0
    %5403 = vmatprep.mubr.f32.mxu0 0.0
    %5404 = vmatmul.mubr.f32.gmra.mrb[0].mxu0 %v5307
    %v5405 = vpop.f32.mrb[0].mxu0
    %v5406 = vadd.f32 %v5259, %v5405
    %v5407 = vpop.f32.mrb[0].mxu0
    %5408 = vmatprep.mubr.f32.mxu0 0.0
    %5409 = vmatmul.mubr.f32.gmra.mrb[0].mxu0 %v5309
    %v5410 = vpop.f32.mrb[0].mxu0
    %v5411 = vadd.f32 %v5260, %v5410
    %v5412 = vpop.f32.mrb[0].mxu0
    %5413 = vmatprep.mubr.f32.mxu0 0.0
    %5414 = vmatmul.mubr.f32.gmra.mrb[0].mxu0 %v5311
    %v5415 = vpop.f32.mrb[0].mxu0
    %v5416 = vadd.f32 %v5261, %v5415
    %v5417 = vpop.f32.mrb[0].mxu0
    %5418 = vmatprep.mubr.f32.mxu0 0.0
    %5419 = vmatmul.mubr.f32.gmra.mrb[0].mxu0 %v5313
    %v5420 = vpop.f32.mrb[0].mxu0
    %v5421 = vadd.f32 %v5262, %v5420
    %v5422 = vpop.f32.mrb[0].mxu0
    %5423 = vmatprep.mubr.f32.mxu0 0.0
    %5424 = vmatmul.mubr.f32.gmra.mrb[0].mxu0 %v5315
    %v5425 = vpop.f32.mrb[0].mxu0
    %v5426 = vadd.f32 %v5263, %v5425
    %v5427 = vpop.f32.mrb[0].mxu0
    %5428 = vmatprep.mubr.f32.mxu0 0.0
    %5429 = vmatmul.mubr.f32.gmra.mrb[0].mxu0 %v5317
    %v5430 = vpop.f32.mrb[0].mxu0
    %v5431 = vadd.f32 %v5264, %v5430
    %v5432 = vpop.f32.mrb[0].mxu0
    %5433 = vmatprep.mubr.f32.mxu0 0.0
    %5434 = vmatmul.mubr.f32.gmra.mrb[0].mxu0 %v5319
    %v5435 = vpop.f32.mrb[0].mxu0
    %v5436 = vadd.f32 %v5265, %v5435
    %v5437 = vpop.f32.mrb[0].mxu0
    %5438 = vmatprep.mubr.f32.mxu0 0.0
    %5439 = vmatmul.mubr.f32.gmra.mrb[0].mxu0 %v5321
    %v5440 = vpop.f32.mrb[0].mxu0
    %v5441 = vadd.f32 %v5266, %v5440
    %v5442 = vpop.f32.mrb[0].mxu0
    %5443 = vmatprep.mubr.f32.mxu0 0.0
    %5444 = vmatmul.mubr.f32.gmra.mrb[0].mxu0 %v5323
    %v5445 = vpop.f32.mrb[0].mxu0
    %v5446 = vadd.f32 %v5267, %v5445
    %v5447 = vpop.f32.mrb[0].mxu0
    %5448 = vmatprep.mubr.f32.mxu0 0.0
    %5449 = vmatmul.mubr.f32.gmra.mrb[0].mxu0 %v5325
    %v5450 = vpop.f32.mrb[0].mxu0
    %v5451 = vadd.f32 %v5268, %v5450
    %v5452 = vpop.f32.mrb[0].mxu0
    %5453 = vmatprep.mubr.f32.mxu0 0.0
    %5454 = vmatmul.mubr.f32.gmra.mrb[0].mxu0 %v5327
    %v5455 = vpop.f32.mrb[0].mxu0
    %v5456 = vadd.f32 %v5269, %v5455
    %v5457 = vpop.f32.mrb[0].mxu0
    %5458 = vmatprep.mubr.f32.mxu0 0.0
    %5459 = vmatmul.mubr.f32.gmra.mrb[0].mxu0 %v5329
    %v5460 = vpop.f32.mrb[0].mxu0
    %v5461 = vadd.f32 %v5270, %v5460
    %v5462 = vpop.f32.mrb[0].mxu0
    %5463 = vmatprep.mubr.f32.mxu0 0.0
    %5464 = vmatmul.mubr.f32.gmra.mrb[0].mxu0 %v5331
    %v5465 = vpop.f32.mrb[0].mxu0
    %v5466 = vadd.f32 %v5271, %v5465
    %v5467 = vpop.f32.mrb[0].mxu0
    %5468 = vmatprep.mubr.f32.mxu0 0.0
    %5469 = vmatmul.mubr.f32.gmra.mrb[0].mxu0 %v5333
    %v5470 = vpop.f32.mrb[0].mxu0
    %v5471 = vadd.f32 %v5272, %v5470
    %v5472 = vpop.f32.mrb[0].mxu0
    %5473 = vmatprep.mubr.f32.mxu0 0.0
    %5474 = vmatmul.mubr.f32.gmra.mrb[0].mxu0 %v5335
    %v5475 = vpop.f32.mrb[0].mxu0
    %v5476 = vadd.f32 %v5273, %v5475
    %v5477 = vpop.f32.mrb[0].mxu0
    %5478 = vmatprep.mubr.f32.mxu0 0.0
    %5479 = vmatmul.mubr.f32.gmra.mrb[0].mxu0 %v5337
    %v5480 = vpop.f32.mrb[0].mxu0
    %v5481 = vadd.f32 %v5274, %v5480
    %v5482 = vpop.f32.mrb[0].mxu0
    %5483 = vdwg.mxu0
    %5484 = vmax.xlane.f32.xlu0 %v5406
    %v5485 = vpop.xlane.xlu0 %5484
    %5486 = vmax.xlane.f32.xlu0 %v5411
    %v5487 = vpop.xlane.xlu0 %5486
    %5488 = vmax.xlane.f32.xlu0 %v5416
    %v5489 = vpop.xlane.xlu0 %5488
    %5490 = vmax.xlane.f32.xlu0 %v5421
    %v5491 = vpop.xlane.xlu0 %5490
    %5492 = vmax.xlane.f32.xlu0 %v5426
    %v5493 = vpop.xlane.xlu0 %5492
    %5494 = vmax.xlane.f32.xlu0 %v5431
    %v5495 = vpop.xlane.xlu0 %5494
    %5496 = vmax.xlane.f32.xlu0 %v5436
    %v5497 = vpop.xlane.xlu0 %5496
    %5498 = vmax.xlane.f32.xlu0 %v5441
    %v5499 = vpop.xlane.xlu0 %5498
    %5500 = vmax.xlane.f32.xlu0 %v5446
    %v5501 = vpop.xlane.xlu0 %5500
    %5502 = vmax.xlane.f32.xlu0 %v5451
    %v5503 = vpop.xlane.xlu0 %5502
    %5504 = vmax.xlane.f32.xlu0 %v5456
    %v5505 = vpop.xlane.xlu0 %5504
    %5506 = vmax.xlane.f32.xlu0 %v5461
    %v5507 = vpop.xlane.xlu0 %5506
    %5508 = vmax.xlane.f32.xlu0 %v5466
    %v5509 = vpop.xlane.xlu0 %5508
    %5510 = vmax.xlane.f32.xlu0 %v5471
    %v5511 = vpop.xlane.xlu0 %5510
    %5512 = vmax.xlane.f32.xlu0 %v5476
    %v5513 = vpop.xlane.xlu0 %5512
    %5514 = vmax.xlane.f32.xlu0 %v5481
    %v5515 = vpop.xlane.xlu0 %5514
    %v5516 = vsub.f32 %v5406, %v5485
    %v5517 = vsub.f32 %v5411, %v5487
    %v5518 = vsub.f32 %v5416, %v5489
    %v5519 = vsub.f32 %v5421, %v5491
    %v5520 = vsub.f32 %v5426, %v5493
    %v5521 = vsub.f32 %v5431, %v5495
    %v5522 = vsub.f32 %v5436, %v5497
    %v5523 = vsub.f32 %v5441, %v5499
    %v5524 = vsub.f32 %v5446, %v5501
    %v5525 = vsub.f32 %v5451, %v5503
    %v5526 = vsub.f32 %v5456, %v5505
    %v5527 = vsub.f32 %v5461, %v5507
    %v5528 = vsub.f32 %v5466, %v5509
    %v5529 = vsub.f32 %v5471, %v5511
    %v5530 = vsub.f32 %v5476, %v5513
    %v5531 = vsub.f32 %v5481, %v5515
    %v5532 = vmul.f32 %v5516, 1.442695
    %v5533 = vpow.pop %v5532
    %v5534 = vmul.f32 %v5517, 1.442695
    %v5535 = vpow.pop %v5534
    %v5536 = vmul.f32 %v5518, 1.442695
    %v5537 = vpow.pop %v5536
    %v5538 = vmul.f32 %v5519, 1.442695
    %v5539 = vpow.pop %v5538
    %v5540 = vmul.f32 %v5520, 1.442695
    %v5541 = vpow.pop %v5540
    %v5542 = vmul.f32 %v5521, 1.442695
    %v5543 = vpow.pop %v5542
    %v5544 = vmul.f32 %v5522, 1.442695
    %v5545 = vpow.pop %v5544
    %v5546 = vmul.f32 %v5523, 1.442695
    %v5547 = vpow.pop %v5546
    %v5548 = vmul.f32 %v5524, 1.442695
    %v5549 = vpow.pop %v5548
    %v5550 = vmul.f32 %v5525, 1.442695
    %v5551 = vpow.pop %v5550
    %v5552 = vmul.f32 %v5526, 1.442695
    %v5553 = vpow.pop %v5552
    %v5554 = vmul.f32 %v5527, 1.442695
    %v5555 = vpow.pop %v5554
    %v5556 = vmul.f32 %v5528, 1.442695
    %v5557 = vpow.pop %v5556
    %v5558 = vmul.f32 %v5529, 1.442695
    %v5559 = vpow.pop %v5558
    %v5560 = vmul.f32 %v5530, 1.442695
    %v5561 = vpow.pop %v5560
    %v5562 = vmul.f32 %v5531, 1.442695
    %v5563 = vpow.pop %v5562
    %5564 = vadd.xlane.f32.xlu0 %v5533
    %v5565 = vpop.xlane.xlu0 %5564
    %5566 = vadd.xlane.f32.xlu0 %v5535
    %v5567 = vpop.xlane.xlu0 %5566
    %5568 = vadd.xlane.f32.xlu0 %v5537
    %v5569 = vpop.xlane.xlu0 %5568
    %5570 = vadd.xlane.f32.xlu0 %v5539
    %v5571 = vpop.xlane.xlu0 %5570
    %5572 = vadd.xlane.f32.xlu0 %v5541
    %v5573 = vpop.xlane.xlu0 %5572
    %5574 = vadd.xlane.f32.xlu0 %v5543
    %v5575 = vpop.xlane.xlu0 %5574
    %5576 = vadd.xlane.f32.xlu0 %v5545
    %v5577 = vpop.xlane.xlu0 %5576
    %5578 = vadd.xlane.f32.xlu0 %v5547
    %v5579 = vpop.xlane.xlu0 %5578
    %5580 = vadd.xlane.f32.xlu0 %v5549
    %v5581 = vpop.xlane.xlu0 %5580
    %5582 = vadd.xlane.f32.xlu0 %v5551
    %v5583 = vpop.xlane.xlu0 %5582
    %5584 = vadd.xlane.f32.xlu0 %v5553
    %v5585 = vpop.xlane.xlu0 %5584
    %5586 = vadd.xlane.f32.xlu0 %v5555
    %v5587 = vpop.xlane.xlu0 %5586
    %5588 = vadd.xlane.f32.xlu0 %v5557
    %v5589 = vpop.xlane.xlu0 %5588
    %5590 = vadd.xlane.f32.xlu0 %v5559
    %v5591 = vpop.xlane.xlu0 %5590
    %5592 = vadd.xlane.f32.xlu0 %v5561
    %v5593 = vpop.xlane.xlu0 %5592
    %5594 = vadd.xlane.f32.xlu0 %v5563
    %v5595 = vpop.xlane.xlu0 %5594
    %v5596 = vrcp.pop %v5565
    %v5597 = vrcp.pop %v5567
    %v5598 = vrcp.pop %v5569
    %v5599 = vrcp.pop %v5571
    %v5600 = vrcp.pop %v5573
    %v5601 = vrcp.pop %v5575
    %v5602 = vrcp.pop %v5577
    %v5603 = vrcp.pop %v5579
    %v5604 = vrcp.pop %v5581
    %v5605 = vrcp.pop %v5583
    %v5606 = vrcp.pop %v5585
    %v5607 = vrcp.pop %v5587
    %v5608 = vrcp.pop %v5589
    %v5609 = vrcp.pop %v5591
    %v5610 = vrcp.pop %v5593
    %v5611 = vrcp.pop %v5595
    %v5612 = vmul.f32 %v5533, %v5596
    %v5613 = vmul.f32 %v5535, %v5597
    %v5614 = vmul.f32 %v5537, %v5598
    %v5615 = vmul.f32 %v5539, %v5599
    %v5616 = vmul.f32 %v5541, %v5600
    %v5617 = vmul.f32 %v5543, %v5601
    %v5618 = vmul.f32 %v5545, %v5602
    %v5619 = vmul.f32 %v5547, %v5603
    %v5620 = vmul.f32 %v5549, %v5604
    %v5621 = vmul.f32 %v5551, %v5605
    %v5622 = vmul.f32 %v5553, %v5606
    %v5623 = vmul.f32 %v5555, %v5607
    %v5624 = vmul.f32 %v5557, %v5608
    %v5625 = vmul.f32 %v5559, %v5609
    %v5626 = vmul.f32 %v5561, %v5610
    %v5627 = vmul.f32 %v5563, %v5611
    %s5628 = sld [smem:[#allocation3 + $0x8]]
    %v5629 = vstv %s5628
    %v5630 = vmul.f32 %v5629, %v5612
    %v5631 = vmul.f32 %v5629, %v5613
    %v5632 = vmul.f32 %v5629, %v5614
    %v5633 = vmul.f32 %v5629, %v5615
    %v5634 = vmul.f32 %v5629, %v5616
    %v5635 = vmul.f32 %v5629, %v5617
    %v5636 = vmul.f32 %v5629, %v5618
    %v5637 = vmul.f32 %v5629, %v5619
    %v5638 = vmul.f32 %v5629, %v5620
    %v5639 = vmul.f32 %v5629, %v5621
    %v5640 = vmul.f32 %v5629, %v5622
    %v5641 = vmul.f32 %v5629, %v5623
    %v5642 = vmul.f32 %v5629, %v5624
    %v5643 = vmul.f32 %v5629, %v5625
    %v5644 = vmul.f32 %v5629, %v5626
    %v5645 = vmul.f32 %v5629, %v5627
    %v5646 = vadd.f32 %v5243, %v5630
    %v5647 = vadd.f32 %v5244, %v5631
    %v5648 = vadd.f32 %v5245, %v5632
    %v5649 = vadd.f32 %v5246, %v5633
    %v5650 = vadd.f32 %v5247, %v5634
    %v5651 = vadd.f32 %v5248, %v5635
    %v5652 = vadd.f32 %v5249, %v5636
    %v5653 = vadd.f32 %v5250, %v5637
    %v5654 = vadd.f32 %v5251, %v5638
    %v5655 = vadd.f32 %v5252, %v5639
    %v5656 = vadd.f32 %v5253, %v5640
    %v5657 = vadd.f32 %v5254, %v5641
    %v5658 = vadd.f32 %v5255, %v5642
    %v5659 = vadd.f32 %v5256, %v5643
    %v5660 = vadd.f32 %v5257, %v5644
    %v5661 = vadd.f32 %v5258, %v5645
    %5662 = vrot.lane.b32.xlu0 %v4327, 64
    %v5663 = vpop.permute.xlu0 %5662
    %5664 = vrot.lane.b32.xlu0 %v4332, 64
    %v5665 = vpop.permute.xlu0 %5664
    %5666 = vrot.lane.b32.xlu0 %v4337, 64
    %v5667 = vpop.permute.xlu0 %5666
    %5668 = vrot.lane.b32.xlu0 %v4342, 64
    %v5669 = vpop.permute.xlu0 %5668
    %5670 = vrot.lane.b32.xlu0 %v4347, 64
    %v5671 = vpop.permute.xlu0 %5670
    %5672 = vrot.lane.b32.xlu0 %v4352, 64
    %v5673 = vpop.permute.xlu0 %5672
    %5674 = vrot.lane.b32.xlu0 %v4357, 64
    %v5675 = vpop.permute.xlu0 %5674
    %5676 = vrot.lane.b32.xlu0 %v4362, 64
    %v5677 = vpop.permute.xlu0 %5676
    %5678 = vrot.lane.b32.xlu0 %v4367, 64
    %v5679 = vpop.permute.xlu0 %5678
    %5680 = vrot.lane.b32.xlu0 %v4372, 64
    %v5681 = vpop.permute.xlu0 %5680
    %5682 = vrot.lane.b32.xlu0 %v4377, 64
    %v5683 = vpop.permute.xlu0 %5682
    %5684 = vrot.lane.b32.xlu0 %v4382, 64
    %v5685 = vpop.permute.xlu0 %5684
    %5686 = vrot.lane.b32.xlu0 %v4387, 64
    %v5687 = vpop.permute.xlu0 %5686
    %5688 = vrot.lane.b32.xlu0 %v4392, 64
    %v5689 = vpop.permute.xlu0 %5688
    %5690 = vrot.lane.b32.xlu0 %v4397, 64
    %v5691 = vpop.permute.xlu0 %5690
    %5692 = vrot.lane.b32.xlu0 %v4402, 64
    %v5693 = vpop.permute.xlu0 %5692
    %5710 = vmatprep.subr.mxu0 0.0
    %5711 = vmatpush1.msra.mxu0 %v5663
    %5712 = vmatprep.subr.mxu0 0.0
    %5713 = vmatpush1.msra.mxu0 %v5665
    %5714 = vmatprep.subr.mxu0 0.0
    %5715 = vmatpush1.msra.mxu0 %v5667
    %5716 = vmatprep.subr.mxu0 0.0
    %5717 = vmatpush1.msra.mxu0 %v5669
    %5718 = vmatprep.subr.mxu0 0.0
    %5719 = vmatpush1.msra.mxu0 %v5671
    %5720 = vmatprep.subr.mxu0 0.0
    %5721 = vmatpush1.msra.mxu0 %v5673
    %5722 = vmatprep.subr.mxu0 0.0
    %5723 = vmatpush1.msra.mxu0 %v5675
    %5724 = vmatprep.subr.mxu0 0.0
    %5725 = vmatpush1.msra.mxu0 %v5677
    %5726 = vmatprep.subr.mxu0 0.0
    %5727 = vmatpush1.msra.mxu0 %v5679
    %5728 = vmatprep.subr.mxu0 0.0
    %5729 = vmatpush1.msra.mxu0 %v5681
    %5730 = vmatprep.subr.mxu0 0.0
    %5731 = vmatpush1.msra.mxu0 %v5683
    %5732 = vmatprep.subr.mxu0 0.0
    %5733 = vmatpush1.msra.mxu0 %v5685
    %5734 = vmatprep.subr.mxu0 0.0
    %5735 = vmatpush1.msra.mxu0 %v5687
    %5736 = vmatprep.subr.mxu0 0.0
    %5737 = vmatpush1.msra.mxu0 %v5689
    %5738 = vmatprep.subr.mxu0 0.0
    %5739 = vmatpush1.msra.mxu0 %v5691
    %5740 = vmatprep.subr.mxu0 0.0
    %5741 = vmatpush1.msra.mxu0 %v5693
    %5742 = vmatprep.subr.mxu0 0.0
    %5743 = vmatpush1.msra.mxu0 0.0
    %5744 = vmatprep.subr.mxu0 0.0
    %5745 = vmatpush1.msra.mxu0 0.0
    %5746 = vmatprep.subr.mxu0 0.0
    %5747 = vmatpush1.msra.mxu0 0.0
    %5748 = vmatprep.subr.mxu0 0.0
    %5749 = vmatpush1.msra.mxu0 0.0
    %5750 = vmatprep.subr.mxu0 0.0
    %5751 = vmatpush1.msra.mxu0 0.0
    %5752 = vmatprep.subr.mxu0 0.0
    %5753 = vmatpush1.msra.mxu0 0.0
    %5754 = vmatprep.subr.mxu0 0.0
    %5755 = vmatpush1.msra.mxu0 0.0
    %5756 = vmatprep.subr.mxu0 0.0
    %5757 = vmatpush1.msra.mxu0 0.0
    %5758 = vmatprep.subr.mxu0 0.0
    %5759 = vmatpush1.msra.mxu0 0.0
    %5760 = vmatprep.subr.mxu0 0.0
    %5761 = vmatpush1.msra.mxu0 0.0
    %5762 = vmatprep.subr.mxu0 0.0
    %5763 = vmatpush1.msra.mxu0 0.0
    %5764 = vmatprep.subr.mxu0 0.0
    %5765 = vmatpush1.msra.mxu0 0.0
    %5766 = vmatprep.subr.mxu0 0.0
    %5767 = vmatpush1.msra.mxu0 0.0
    %5768 = vmatprep.subr.mxu0 0.0
    %5769 = vmatpush1.msra.mxu0 0.0
    %5770 = vmatprep.subr.mxu0 0.0
    %5771 = vmatpush1.msra.mxu0 0.0
    %5772 = vmatprep.subr.mxu0 0.0
    %5773 = vmatpush1.msra.mxu0 0.0
    %5774 = vmatprep.mubr.f32.mxu0 0.0
    %5775 = vmatmul.mubr.f32.gmra.mrb[0].mxu0 %v5646
    %v5776 = vpop.f32.mrb[0].mxu0
    %v5777 = vadd.f32 0.0, %v5776
    %v5778 = vpop.f32.mrb[0].mxu0
    %5779 = vmatprep.mubr.f32.mxu0 0.0
    %5780 = vmatmul.mubr.f32.gmra.mrb[0].mxu0 %v5647
    %v5781 = vpop.f32.mrb[0].mxu0
    %v5782 = vadd.f32 0.0, %v5781
    %v5783 = vpop.f32.mrb[0].mxu0
    %5784 = vmatprep.mubr.f32.mxu0 0.0
    %5785 = vmatmul.mubr.f32.gmra.mrb[0].mxu0 %v5648
    %v5786 = vpop.f32.mrb[0].mxu0
    %v5787 = vadd.f32 0.0, %v5786
    %v5788 = vpop.f32.mrb[0].mxu0
    %5789 = vmatprep.mubr.f32.mxu0 0.0
    %5790 = vmatmul.mubr.f32.gmra.mrb[0].mxu0 %v5649
    %v5791 = vpop.f32.mrb[0].mxu0
    %v5792 = vadd.f32 0.0, %v5791
    %v5793 = vpop.f32.mrb[0].mxu0
    %5794 = vmatprep.mubr.f32.mxu0 0.0
    %5795 = vmatmul.mubr.f32.gmra.mrb[0].mxu0 %v5650
    %v5796 = vpop.f32.mrb[0].mxu0
    %v5797 = vadd.f32 0.0, %v5796
    %v5798 = vpop.f32.mrb[0].mxu0
    %5799 = vmatprep.mubr.f32.mxu0 0.0
    %5800 = vmatmul.mubr.f32.gmra.mrb[0].mxu0 %v5651
    %v5801 = vpop.f32.mrb[0].mxu0
    %v5802 = vadd.f32 0.0, %v5801
    %v5803 = vpop.f32.mrb[0].mxu0
    %5804 = vmatprep.mubr.f32.mxu0 0.0
    %5805 = vmatmul.mubr.f32.gmra.mrb[0].mxu0 %v5652
    %v5806 = vpop.f32.mrb[0].mxu0
    %v5807 = vadd.f32 0.0, %v5806
    %v5808 = vpop.f32.mrb[0].mxu0
    %5809 = vmatprep.mubr.f32.mxu0 0.0
    %5810 = vmatmul.mubr.f32.gmra.mrb[0].mxu0 %v5653
    %v5811 = vpop.f32.mrb[0].mxu0
    %v5812 = vadd.f32 0.0, %v5811
    %v5813 = vpop.f32.mrb[0].mxu0
    %5814 = vmatprep.mubr.f32.mxu0 0.0
    %5815 = vmatmul.mubr.f32.gmra.mrb[0].mxu0 %v5654
    %v5816 = vpop.f32.mrb[0].mxu0
    %v5817 = vadd.f32 0.0, %v5816
    %v5818 = vpop.f32.mrb[0].mxu0
    %5819 = vmatprep.mubr.f32.mxu0 0.0
    %5820 = vmatmul.mubr.f32.gmra.mrb[0].mxu0 %v5655
    %v5821 = vpop.f32.mrb[0].mxu0
    %v5822 = vadd.f32 0.0, %v5821
    %v5823 = vpop.f32.mrb[0].mxu0
    %5824 = vmatprep.mubr.f32.mxu0 0.0
    %5825 = vmatmul.mubr.f32.gmra.mrb[0].mxu0 %v5656
    %v5826 = vpop.f32.mrb[0].mxu0
    %v5827 = vadd.f32 0.0, %v5826
    %v5828 = vpop.f32.mrb[0].mxu0
    %5829 = vmatprep.mubr.f32.mxu0 0.0
    %5830 = vmatmul.mubr.f32.gmra.mrb[0].mxu0 %v5657
    %v5831 = vpop.f32.mrb[0].mxu0
    %v5832 = vadd.f32 0.0, %v5831
    %v5833 = vpop.f32.mrb[0].mxu0
    %5834 = vmatprep.mubr.f32.mxu0 0.0
    %5835 = vmatmul.mubr.f32.gmra.mrb[0].mxu0 %v5658
    %v5836 = vpop.f32.mrb[0].mxu0
    %v5837 = vadd.f32 0.0, %v5836
    %v5838 = vpop.f32.mrb[0].mxu0
    %5839 = vmatprep.mubr.f32.mxu0 0.0
    %5840 = vmatmul.mubr.f32.gmra.mrb[0].mxu0 %v5659
    %v5841 = vpop.f32.mrb[0].mxu0
    %v5842 = vadd.f32 0.0, %v5841
    %v5843 = vpop.f32.mrb[0].mxu0
    %5844 = vmatprep.mubr.f32.mxu0 0.0
    %5845 = vmatmul.mubr.f32.gmra.mrb[0].mxu0 %v5660
    %v5846 = vpop.f32.mrb[0].mxu0
    %v5847 = vadd.f32 0.0, %v5846
    %v5848 = vpop.f32.mrb[0].mxu0
    %5849 = vmatprep.mubr.f32.mxu0 0.0
    %5850 = vmatmul.mubr.f32.gmra.mrb[0].mxu0 %v5661
    %v5851 = vpop.f32.mrb[0].mxu0
    %v5852 = vadd.f32 0.0, %v5851
    %v5853 = vpop.f32.mrb[0].mxu0
    %5854 = vdwg.mxu0
    %v5863 = vrot.slane %v5787, 7
    %v5864 = vsel %vm1902, %v5863, %v5777
    %v5865 = vrot.slane %v5797, 6
    %v5866 = vsel %vm1905, %v5865, %v5864
    %v5867 = vrot.slane %v5807, 5
    %v5868 = vsel %vm1908, %v5867, %v5866
    %v5869 = vrot.slane %v5817, 4
    %v5870 = vsel %vm1911, %v5869, %v5868
    %v5871 = vrot.slane %v5827, 3
    %v5872 = vsel %vm1914, %v5871, %v5870
    %v5873 = vrot.slane %v5837, 2
    %v5874 = vsel %vm1917, %v5873, %v5872
    %v5875 = vrot.slane %v5847, 1
    %v5876 = vsel %vm1920, %v5875, %v5874
    %5878 = vst.msk [vmem:[#allocation2 + $0x20] sm:$0xff] %vm506, %v5876
    %v5879 = vrot.slane %v5777, 1
    %v5880 = vsel %vm1902, %v5787, %v5879
    %v5881 = vrot.slane %v5797, 7
    %v5882 = vsel %vm1905, %v5881, %v5880
    %v5883 = vrot.slane %v5807, 6
    %v5884 = vsel %vm1908, %v5883, %v5882
    %v5885 = vrot.slane %v5817, 5
    %v5886 = vsel %vm1911, %v5885, %v5884
    %v5887 = vrot.slane %v5827, 4
    %v5888 = vsel %vm1914, %v5887, %v5886
    %v5889 = vrot.slane %v5837, 3
    %v5890 = vsel %vm1917, %v5889, %v5888
    %v5891 = vrot.slane %v5847, 2
    %v5892 = vsel %vm1920, %v5891, %v5890
    %5893 = vrot.lane.b32.xlu0 %v5892, 16
    %v5894 = vpop.permute.xlu0 %5893
    %5896 = vst.msk [vmem:[#allocation2 + $0x20] sm:$0xff] %vm1941, %v5894
    %v5897 = vrot.slane %v5777, 2
    %v5898 = vrot.slane %v5787, 1
    %v5899 = vsel %vm1902, %v5898, %v5897
    %v5900 = vsel %vm1905, %v5797, %v5899
    %v5901 = vrot.slane %v5807, 7
    %v5902 = vsel %vm1908, %v5901, %v5900
    %v5903 = vrot.slane %v5817, 6
    %v5904 = vsel %vm1911, %v5903, %v5902
    %v5905 = vrot.slane %v5827, 5
    %v5906 = vsel %vm1914, %v5905, %v5904
    %v5907 = vrot.slane %v5837, 4
    %v5908 = vsel %vm1917, %v5907, %v5906
    %v5909 = vrot.slane %v5847, 3
    %v5910 = vsel %vm1920, %v5909, %v5908
    %5911 = vrot.lane.b32.xlu0 %v5910, 32
    %v5912 = vpop.permute.xlu0 %5911
    %5914 = vst.msk [vmem:[#allocation2 + $0x20] sm:$0xff] %vm1960, %v5912
    %v5915 = vrot.slane %v5777, 3
    %v5916 = vrot.slane %v5787, 2
    %v5917 = vsel %vm1902, %v5916, %v5915
    %v5918 = vrot.slane %v5797, 1
    %v5919 = vsel %vm1905, %v5918, %v5917
    %v5920 = vsel %vm1908, %v5807, %v5919
    %v5921 = vrot.slane %v5817, 7
    %v5922 = vsel %vm1911, %v5921, %v5920
    %v5923 = vrot.slane %v5827, 6
    %v5924 = vsel %vm1914, %v5923, %v5922
    %v5925 = vrot.slane %v5837, 5
    %v5926 = vsel %vm1917, %v5925, %v5924
    %v5927 = vrot.slane %v5847, 4
    %v5928 = vsel %vm1920, %v5927, %v5926
    %5929 = vrot.lane.b32.xlu0 %v5928, 48
    %v5930 = vpop.permute.xlu0 %5929
    %5932 = vst.msk [vmem:[#allocation2 + $0x20] sm:$0xff] %vm1979, %v5930
    %v5933 = vrot.slane %v5777, 4
    %v5934 = vrot.slane %v5787, 3
    %v5935 = vsel %vm1902, %v5934, %v5933
    %v5936 = vrot.slane %v5797, 2
    %v5937 = vsel %vm1905, %v5936, %v5935
    %v5938 = vrot.slane %v5807, 1
    %v5939 = vsel %vm1908, %v5938, %v5937
    %v5940 = vsel %vm1911, %v5817, %v5939
    %v5941 = vrot.slane %v5827, 7
    %v5942 = vsel %vm1914, %v5941, %v5940
    %v5943 = vrot.slane %v5837, 6
    %v5944 = vsel %vm1917, %v5943, %v5942
    %v5945 = vrot.slane %v5847, 5
    %v5946 = vsel %vm1920, %v5945, %v5944
    %5947 = vrot.lane.b32.xlu0 %v5946, 64
    %v5948 = vpop.permute.xlu0 %5947
    %5950 = vst.msk [vmem:[#allocation2 + $0x20] sm:$0xff] %vm1998, %v5948
    %v5951 = vrot.slane %v5777, 5
    %v5952 = vrot.slane %v5787, 4
    %v5953 = vsel %vm1902, %v5952, %v5951
    %v5954 = vrot.slane %v5797, 3
    %v5955 = vsel %vm1905, %v5954, %v5953
    %v5956 = vrot.slane %v5807, 2
    %v5957 = vsel %vm1908, %v5956, %v5955
    %v5958 = vrot.slane %v5817, 1
    %v5959 = vsel %vm1911, %v5958, %v5957
    %v5960 = vsel %vm1914, %v5827, %v5959
    %v5961 = vrot.slane %v5837, 7
    %v5962 = vsel %vm1917, %v5961, %v5960
    %v5963 = vrot.slane %v5847, 6
    %v5964 = vsel %vm1920, %v5963, %v5962
    %5965 = vrot.lane.b32.xlu0 %v5964, 80
    %v5966 = vpop.permute.xlu0 %5965
    %5968 = vst.msk [vmem:[#allocation2 + $0x20] sm:$0xff] %vm2017, %v5966
    %v5969 = vrot.slane %v5777, 6
    %v5970 = vrot.slane %v5787, 5
    %v5971 = vsel %vm1902, %v5970, %v5969
    %v5972 = vrot.slane %v5797, 4
    %v5973 = vsel %vm1905, %v5972, %v5971
    %v5974 = vrot.slane %v5807, 3
    %v5975 = vsel %vm1908, %v5974, %v5973
    %v5976 = vrot.slane %v5817, 2
    %v5977 = vsel %vm1911, %v5976, %v5975
    %v5978 = vrot.slane %v5827, 1
    %v5979 = vsel %vm1914, %v5978, %v5977
    %v5980 = vsel %vm1917, %v5837, %v5979
    %v5981 = vrot.slane %v5847, 7
    %v5982 = vsel %vm1920, %v5981, %v5980
    %5983 = vrot.lane.b32.xlu0 %v5982, 96
    %v5984 = vpop.permute.xlu0 %5983
    %5986 = vst.msk [vmem:[#allocation2 + $0x20] sm:$0xff] %vm2036, %v5984
    %v5987 = vrot.slane %v5777, 7
    %v5988 = vrot.slane %v5787, 6
    %v5989 = vsel %vm1902, %v5988, %v5987
    %v5990 = vrot.slane %v5797, 5
    %v5991 = vsel %vm1905, %v5990, %v5989
    %v5992 = vrot.slane %v5807, 4
    %v5993 = vsel %vm1908, %v5992, %v5991
    %v5994 = vrot.slane %v5817, 3
    %v5995 = vsel %vm1911, %v5994, %v5993
    %v5996 = vrot.slane %v5827, 2
    %v5997 = vsel %vm1914, %v5996, %v5995
    %v5998 = vrot.slane %v5837, 1
    %v5999 = vsel %vm1917, %v5998, %v5997
    %v6000 = vsel %vm1920, %v5847, %v5999
    %6001 = vrot.lane.b32.xlu0 %v6000, 112
    %v6002 = vpop.permute.xlu0 %6001
    %6004 = vst.msk [vmem:[#allocation2 + $0x20] sm:$0xff] %vm2055, %v6002
    %v6013 = vrot.slane %v5792, 7
    %v6014 = vsel %vm1902, %v6013, %v5782
    %v6015 = vrot.slane %v5802, 6
    %v6016 = vsel %vm1905, %v6015, %v6014
    %v6017 = vrot.slane %v5812, 5
    %v6018 = vsel %vm1908, %v6017, %v6016
    %v6019 = vrot.slane %v5822, 4
    %v6020 = vsel %vm1911, %v6019, %v6018
    %v6021 = vrot.slane %v5832, 3
    %v6022 = vsel %vm1914, %v6021, %v6020
    %v6023 = vrot.slane %v5842, 2
    %v6024 = vsel %vm1917, %v6023, %v6022
    %v6025 = vrot.slane %v5852, 1
    %v6026 = vsel %vm1920, %v6025, %v6024
    %6028 = vst.msk [vmem:[#allocation2 + $0x28] sm:$0xff] %vm506, %v6026
    %v6029 = vrot.slane %v5782, 1
    %v6030 = vsel %vm1902, %v5792, %v6029
    %v6031 = vrot.slane %v5802, 7
    %v6032 = vsel %vm1905, %v6031, %v6030
    %v6033 = vrot.slane %v5812, 6
    %v6034 = vsel %vm1908, %v6033, %v6032
    %v6035 = vrot.slane %v5822, 5
    %v6036 = vsel %vm1911, %v6035, %v6034
    %v6037 = vrot.slane %v5832, 4
    %v6038 = vsel %vm1914, %v6037, %v6036
    %v6039 = vrot.slane %v5842, 3
    %v6040 = vsel %vm1917, %v6039, %v6038
    %v6041 = vrot.slane %v5852, 2
    %v6042 = vsel %vm1920, %v6041, %v6040
    %6043 = vrot.lane.b32.xlu0 %v6042, 16
    %v6044 = vpop.permute.xlu0 %6043
    %6046 = vst.msk [vmem:[#allocation2 + $0x28] sm:$0xff] %vm1941, %v6044
    %v6047 = vrot.slane %v5782, 2
    %v6048 = vrot.slane %v5792, 1
    %v6049 = vsel %vm1902, %v6048, %v6047
    %v6050 = vsel %vm1905, %v5802, %v6049
    %v6051 = vrot.slane %v5812, 7
    %v6052 = vsel %vm1908, %v6051, %v6050
    %v6053 = vrot.slane %v5822, 6
    %v6054 = vsel %vm1911, %v6053, %v6052
    %v6055 = vrot.slane %v5832, 5
    %v6056 = vsel %vm1914, %v6055, %v6054
    %v6057 = vrot.slane %v5842, 4
    %v6058 = vsel %vm1917, %v6057, %v6056
    %v6059 = vrot.slane %v5852, 3
    %v6060 = vsel %vm1920, %v6059, %v6058
    %6061 = vrot.lane.b32.xlu0 %v6060, 32
    %v6062 = vpop.permute.xlu0 %6061
    %6064 = vst.msk [vmem:[#allocation2 + $0x28] sm:$0xff] %vm1960, %v6062
    %v6065 = vrot.slane %v5782, 3
    %v6066 = vrot.slane %v5792, 2
    %v6067 = vsel %vm1902, %v6066, %v6065
    %v6068 = vrot.slane %v5802, 1
    %v6069 = vsel %vm1905, %v6068, %v6067
    %v6070 = vsel %vm1908, %v5812, %v6069
    %v6071 = vrot.slane %v5822, 7
    %v6072 = vsel %vm1911, %v6071, %v6070
    %v6073 = vrot.slane %v5832, 6
    %v6074 = vsel %vm1914, %v6073, %v6072
    %v6075 = vrot.slane %v5842, 5
    %v6076 = vsel %vm1917, %v6075, %v6074
    %v6077 = vrot.slane %v5852, 4
    %v6078 = vsel %vm1920, %v6077, %v6076
    %6079 = vrot.lane.b32.xlu0 %v6078, 48
    %v6080 = vpop.permute.xlu0 %6079
    %6082 = vst.msk [vmem:[#allocation2 + $0x28] sm:$0xff] %vm1979, %v6080
    %v6083 = vrot.slane %v5782, 4
    %v6084 = vrot.slane %v5792, 3
    %v6085 = vsel %vm1902, %v6084, %v6083
    %v6086 = vrot.slane %v5802, 2
    %v6087 = vsel %vm1905, %v6086, %v6085
    %v6088 = vrot.slane %v5812, 1
    %v6089 = vsel %vm1908, %v6088, %v6087
    %v6090 = vsel %vm1911, %v5822, %v6089
    %v6091 = vrot.slane %v5832, 7
    %v6092 = vsel %vm1914, %v6091, %v6090
    %v6093 = vrot.slane %v5842, 6
    %v6094 = vsel %vm1917, %v6093, %v6092
    %v6095 = vrot.slane %v5852, 5
    %v6096 = vsel %vm1920, %v6095, %v6094
    %6097 = vrot.lane.b32.xlu0 %v6096, 64
    %v6098 = vpop.permute.xlu0 %6097
    %6100 = vst.msk [vmem:[#allocation2 + $0x28] sm:$0xff] %vm1998, %v6098
    %v6101 = vrot.slane %v5782, 5
    %v6102 = vrot.slane %v5792, 4
    %v6103 = vsel %vm1902, %v6102, %v6101
    %v6104 = vrot.slane %v5802, 3
    %v6105 = vsel %vm1905, %v6104, %v6103
    %v6106 = vrot.slane %v5812, 2
    %v6107 = vsel %vm1908, %v6106, %v6105
    %v6108 = vrot.slane %v5822, 1
    %v6109 = vsel %vm1911, %v6108, %v6107
    %v6110 = vsel %vm1914, %v5832, %v6109
    %v6111 = vrot.slane %v5842, 7
    %v6112 = vsel %vm1917, %v6111, %v6110
    %v6113 = vrot.slane %v5852, 6
    %v6114 = vsel %vm1920, %v6113, %v6112
    %6115 = vrot.lane.b32.xlu0 %v6114, 80
    %v6116 = vpop.permute.xlu0 %6115
    %6118 = vst.msk [vmem:[#allocation2 + $0x28] sm:$0xff] %vm2017, %v6116
    %v6119 = vrot.slane %v5782, 6
    %v6120 = vrot.slane %v5792, 5
    %v6121 = vsel %vm1902, %v6120, %v6119
    %v6122 = vrot.slane %v5802, 4
    %v6123 = vsel %vm1905, %v6122, %v6121
    %v6124 = vrot.slane %v5812, 3
    %v6125 = vsel %vm1908, %v6124, %v6123
    %v6126 = vrot.slane %v5822, 2
    %v6127 = vsel %vm1911, %v6126, %v6125
    %v6128 = vrot.slane %v5832, 1
    %v6129 = vsel %vm1914, %v6128, %v6127
    %v6130 = vsel %vm1917, %v5842, %v6129
    %v6131 = vrot.slane %v5852, 7
    %v6132 = vsel %vm1920, %v6131, %v6130
    %6133 = vrot.lane.b32.xlu0 %v6132, 96
    %v6134 = vpop.permute.xlu0 %6133
    %6136 = vst.msk [vmem:[#allocation2 + $0x28] sm:$0xff] %vm2036, %v6134
    %v6137 = vrot.slane %v5782, 7
    %v6138 = vrot.slane %v5792, 6
    %v6139 = vsel %vm1902, %v6138, %v6137
    %v6140 = vrot.slane %v5802, 5
    %v6141 = vsel %vm1905, %v6140, %v6139
    %v6142 = vrot.slane %v5812, 4
    %v6143 = vsel %vm1908, %v6142, %v6141
    %v6144 = vrot.slane %v5822, 3
    %v6145 = vsel %vm1911, %v6144, %v6143
    %v6146 = vrot.slane %v5832, 2
    %v6147 = vsel %vm1914, %v6146, %v6145
    %v6148 = vrot.slane %v5842, 1
    %v6149 = vsel %vm1917, %v6148, %v6147
    %v6150 = vsel %vm1920, %v5852, %v6149
    %6151 = vrot.lane.b32.xlu0 %v6150, 112
    %v6152 = vpop.permute.xlu0 %6151
    %6154 = vst.msk [vmem:[#allocation2 + $0x28] sm:$0xff] %vm2055, %v6152
    %v6155 = vld [vmem:[#allocation2] sm:$0xff]
    %v6156 = vld [vmem:[#allocation2 + $0x8] sm:$0xff]
    %v6157 = vld [vmem:[#allocation2 + $0x10] sm:$0xff]
    %v6158 = vld [vmem:[#allocation2 + $0x18] sm:$0xff]
    %v6159 = vld [vmem:[#allocation2 + $0x20] sm:$0xff]
    %v6160 = vld [vmem:[#allocation2 + $0x28] sm:$0xff]
    %v6161 = vpack.c.bf16 %v6155, %v6155
    %v6162 = vpack.c.bf16 %v6156, %v6156
    %v6163 = vpack.c.bf16 %v6157, %v6157
    %v6164 = vpack.c.bf16 %v6158, %v6158
    %v6165 = vpack.c.bf16 %v6159, %v6159
    %v6166 = vpack.c.bf16 %v6160, %v6160
    %v6167 = vld [vmem:[#allocation6] sm:$0xff]
    %v6168 = vld [vmem:[#allocation6 + $0x8] sm:$0xff]
    %v6169 = vld [vmem:[#allocation6 + $0x10] sm:$0xff]
    %v6170 = vld [vmem:[#allocation6 + $0x18] sm:$0xff]
    %v6171 = vld [vmem:[#allocation6 + $0x20] sm:$0xff]
    %v6172 = vld [vmem:[#allocation6 + $0x28] sm:$0xff]
    %v6173 = vld [vmem:[#allocation6 + $0x30] sm:$0xff]
    %v6174 = vld [vmem:[#allocation6 + $0x38] sm:$0xff]
    %v6175 = vld [vmem:[#allocation6 + $0x40] sm:$0xff]
    %v6176 = vld [vmem:[#allocation6 + $0x48] sm:$0xff]
    %v6177 = vld [vmem:[#allocation6 + $0x50] sm:$0xff]
    %v6178 = vld [vmem:[#allocation6 + $0x58] sm:$0xff]
    %v6179 = vld [vmem:[#allocation6 + $0x60] sm:$0xff]
    %v6180 = vld [vmem:[#allocation6 + $0x68] sm:$0xff]
    %v6181 = vld [vmem:[#allocation6 + $0x70] sm:$0xff]
    %v6182 = vld [vmem:[#allocation6 + $0x78] sm:$0xff]
    %v6183 = vld [vmem:[#allocation6 + $0x80] sm:$0xff]
    %v6184 = vld [vmem:[#allocation6 + $0x88] sm:$0xff]
    %v6185 = vld [vmem:[#allocation6 + $0x90] sm:$0xff]
    %v6186 = vld [vmem:[#allocation6 + $0x98] sm:$0xff]
    %v6187 = vld [vmem:[#allocation6 + $0xa0] sm:$0xff]
    %v6188 = vld [vmem:[#allocation6 + $0xa8] sm:$0xff]
    %v6189 = vld [vmem:[#allocation6 + $0xb0] sm:$0xff]
    %v6190 = vld [vmem:[#allocation6 + $0xb8] sm:$0xff]
    %v6191 = vld [vmem:[#allocation6 + $0xc0] sm:$0xff]
    %v6192 = vld [vmem:[#allocation6 + $0xc8] sm:$0xff]
    %v6193 = vld [vmem:[#allocation6 + $0xd0] sm:$0xff]
    %v6194 = vld [vmem:[#allocation6 + $0xd8] sm:$0xff]
    %v6195 = vld [vmem:[#allocation6 + $0xe0] sm:$0xff]
    %v6196 = vld [vmem:[#allocation6 + $0xe8] sm:$0xff]
    %v6197 = vld [vmem:[#allocation6 + $0xf0] sm:$0xff]
    %v6198 = vld [vmem:[#allocation6 + $0xf8] sm:$0xff]
    %v6199 = vld [vmem:[#allocation6 + $0x100] sm:$0xff]
    %v6200 = vld [vmem:[#allocation6 + $0x108] sm:$0xff]
    %v6201 = vld [vmem:[#allocation6 + $0x110] sm:$0xff]
    %v6202 = vld [vmem:[#allocation6 + $0x118] sm:$0xff]
    %v6203 = vld [vmem:[#allocation6 + $0x120] sm:$0xff]
    %v6204 = vld [vmem:[#allocation6 + $0x128] sm:$0xff]
    %v6205 = vld [vmem:[#allocation6 + $0x130] sm:$0xff]
    %v6206 = vld [vmem:[#allocation6 + $0x138] sm:$0xff]
    %v6207 = vld [vmem:[#allocation6 + $0x140] sm:$0xff]
    %v6208 = vld [vmem:[#allocation6 + $0x148] sm:$0xff]
    %v6209 = vld [vmem:[#allocation6 + $0x150] sm:$0xff]
    %v6210 = vld [vmem:[#allocation6 + $0x158] sm:$0xff]
    %v6211 = vld [vmem:[#allocation6 + $0x160] sm:$0xff]
    %v6212 = vld [vmem:[#allocation6 + $0x168] sm:$0xff]
    %v6213 = vld [vmem:[#allocation6 + $0x170] sm:$0xff]
    %v6214 = vld [vmem:[#allocation6 + $0x178] sm:$0xff]
    %v6215 = vld [vmem:[#allocation6 + $0x180] sm:$0xff]
    %v6216 = vld [vmem:[#allocation6 + $0x188] sm:$0xff]
    %v6217 = vld [vmem:[#allocation6 + $0x190] sm:$0xff]
    %v6218 = vld [vmem:[#allocation6 + $0x198] sm:$0xff]
    %v6219 = vld [vmem:[#allocation6 + $0x1a0] sm:$0xff]
    %v6220 = vld [vmem:[#allocation6 + $0x1a8] sm:$0xff]
    %v6221 = vld [vmem:[#allocation6 + $0x1b0] sm:$0xff]
    %v6222 = vld [vmem:[#allocation6 + $0x1b8] sm:$0xff]
    %v6223 = vld [vmem:[#allocation6 + $0x1c0] sm:$0xff]
    %v6224 = vld [vmem:[#allocation6 + $0x1c8] sm:$0xff]
    %v6225 = vld [vmem:[#allocation6 + $0x1d0] sm:$0xff]
    %v6226 = vld [vmem:[#allocation6 + $0x1d8] sm:$0xff]
    %v6227 = vld [vmem:[#allocation6 + $0x1e0] sm:$0xff]
    %v6228 = vld [vmem:[#allocation6 + $0x1e8] sm:$0xff]
    %v6229 = vld [vmem:[#allocation6 + $0x1f0] sm:$0xff]
    %v6230 = vld [vmem:[#allocation6 + $0x1f8] sm:$0xff]
    %v6231 = vld [vmem:[#allocation6 + $0x200] sm:$0xff]
    %v6232 = vld [vmem:[#allocation6 + $0x208] sm:$0xff]
    %v6233 = vld [vmem:[#allocation6 + $0x210] sm:$0xff]
    %v6234 = vld [vmem:[#allocation6 + $0x218] sm:$0xff]
    %v6235 = vld [vmem:[#allocation6 + $0x220] sm:$0xff]
    %v6236 = vld [vmem:[#allocation6 + $0x228] sm:$0xff]
    %v6237 = vld [vmem:[#allocation6 + $0x230] sm:$0xff]
    %v6238 = vld [vmem:[#allocation6 + $0x238] sm:$0xff]
    %v6239 = vld [vmem:[#allocation6 + $0x240] sm:$0xff]
    %v6240 = vld [vmem:[#allocation6 + $0x248] sm:$0xff]
    %v6241 = vld [vmem:[#allocation6 + $0x250] sm:$0xff]
    %v6242 = vld [vmem:[#allocation6 + $0x258] sm:$0xff]
    %v6243 = vld [vmem:[#allocation6 + $0x260] sm:$0xff]
    %v6244 = vld [vmem:[#allocation6 + $0x268] sm:$0xff]
    %v6245 = vld [vmem:[#allocation6 + $0x270] sm:$0xff]
    %v6246 = vld [vmem:[#allocation6 + $0x278] sm:$0xff]
    %v6247 = vld [vmem:[#allocation6 + $0x280] sm:$0xff]
    %v6248 = vld [vmem:[#allocation6 + $0x288] sm:$0xff]
    %v6249 = vld [vmem:[#allocation6 + $0x290] sm:$0xff]
    %v6250 = vld [vmem:[#allocation6 + $0x298] sm:$0xff]
    %v6251 = vld [vmem:[#allocation6 + $0x2a0] sm:$0xff]
    %v6252 = vld [vmem:[#allocation6 + $0x2a8] sm:$0xff]
    %v6253 = vld [vmem:[#allocation6 + $0x2b0] sm:$0xff]
    %v6254 = vld [vmem:[#allocation6 + $0x2b8] sm:$0xff]
    %v6255 = vld [vmem:[#allocation6 + $0x2c0] sm:$0xff]
    %v6256 = vld [vmem:[#allocation6 + $0x2c8] sm:$0xff]
    %v6257 = vld [vmem:[#allocation6 + $0x2d0] sm:$0xff]
    %v6258 = vld [vmem:[#allocation6 + $0x2d8] sm:$0xff]
    %v6259 = vld [vmem:[#allocation6 + $0x2e0] sm:$0xff]
    %v6260 = vld [vmem:[#allocation6 + $0x2e8] sm:$0xff]
    %v6261 = vld [vmem:[#allocation6 + $0x2f0] sm:$0xff]
    %v6262 = vld [vmem:[#allocation6 + $0x2f8] sm:$0xff]
    %v6263 = vld [vmem:[#allocation6 + $0x300] sm:$0xff]
    %v6264 = vld [vmem:[#allocation6 + $0x308] sm:$0xff]
    %v6265 = vld [vmem:[#allocation6 + $0x310] sm:$0xff]
    %v6266 = vld [vmem:[#allocation6 + $0x318] sm:$0xff]
    %v6267 = vld [vmem:[#allocation6 + $0x320] sm:$0xff]
    %v6268 = vld [vmem:[#allocation6 + $0x328] sm:$0xff]
    %v6269 = vld [vmem:[#allocation6 + $0x330] sm:$0xff]
    %v6270 = vld [vmem:[#allocation6 + $0x338] sm:$0xff]
    %v6271 = vld [vmem:[#allocation6 + $0x340] sm:$0xff]
    %v6272 = vld [vmem:[#allocation6 + $0x348] sm:$0xff]
    %v6273 = vld [vmem:[#allocation6 + $0x350] sm:$0xff]
    %v6274 = vld [vmem:[#allocation6 + $0x358] sm:$0xff]
    %v6275 = vld [vmem:[#allocation6 + $0x360] sm:$0xff]
    %v6276 = vld [vmem:[#allocation6 + $0x368] sm:$0xff]
    %v6277 = vld [vmem:[#allocation6 + $0x370] sm:$0xff]
    %v6278 = vld [vmem:[#allocation6 + $0x378] sm:$0xff]
    %v6279 = vld [vmem:[#allocation6 + $0x380] sm:$0xff]
    %v6280 = vld [vmem:[#allocation6 + $0x388] sm:$0xff]
    %v6281 = vld [vmem:[#allocation6 + $0x390] sm:$0xff]
    %v6282 = vld [vmem:[#allocation6 + $0x398] sm:$0xff]
    %v6283 = vld [vmem:[#allocation6 + $0x3a0] sm:$0xff]
    %v6284 = vld [vmem:[#allocation6 + $0x3a8] sm:$0xff]
    %v6285 = vld [vmem:[#allocation6 + $0x3b0] sm:$0xff]
    %v6286 = vld [vmem:[#allocation6 + $0x3b8] sm:$0xff]
    %v6287 = vld [vmem:[#allocation6 + $0x3c0] sm:$0xff]
    %v6288 = vld [vmem:[#allocation6 + $0x3c8] sm:$0xff]
    %v6289 = vld [vmem:[#allocation6 + $0x3d0] sm:$0xff]
    %v6290 = vld [vmem:[#allocation6 + $0x3d8] sm:$0xff]
    %v6291 = vld [vmem:[#allocation6 + $0x3e0] sm:$0xff]
    %v6292 = vld [vmem:[#allocation6 + $0x3e8] sm:$0xff]
    %v6293 = vld [vmem:[#allocation6 + $0x3f0] sm:$0xff]
    %v6294 = vld [vmem:[#allocation6 + $0x3f8] sm:$0xff]
    %v6295 = vld [vmem:[#allocation6 + $0x400] sm:$0xff]
    %v6296 = vld [vmem:[#allocation6 + $0x408] sm:$0xff]
    %v6297 = vld [vmem:[#allocation6 + $0x410] sm:$0xff]
    %v6298 = vld [vmem:[#allocation6 + $0x418] sm:$0xff]
    %v6299 = vld [vmem:[#allocation6 + $0x420] sm:$0xff]
    %v6300 = vld [vmem:[#allocation6 + $0x428] sm:$0xff]
    %v6301 = vld [vmem:[#allocation6 + $0x430] sm:$0xff]
    %v6302 = vld [vmem:[#allocation6 + $0x438] sm:$0xff]
    %v6303 = vld [vmem:[#allocation6 + $0x440] sm:$0xff]
    %v6304 = vld [vmem:[#allocation6 + $0x448] sm:$0xff]
    %v6305 = vld [vmem:[#allocation6 + $0x450] sm:$0xff]
    %v6306 = vld [vmem:[#allocation6 + $0x458] sm:$0xff]
    %v6307 = vld [vmem:[#allocation6 + $0x460] sm:$0xff]
    %v6308 = vld [vmem:[#allocation6 + $0x468] sm:$0xff]
    %v6309 = vld [vmem:[#allocation6 + $0x470] sm:$0xff]
    %v6310 = vld [vmem:[#allocation6 + $0x478] sm:$0xff]
    %v6311 = vld [vmem:[#allocation6 + $0x480] sm:$0xff]
    %v6312 = vld [vmem:[#allocation6 + $0x488] sm:$0xff]
    %v6313 = vld [vmem:[#allocation6 + $0x490] sm:$0xff]
    %v6314 = vld [vmem:[#allocation6 + $0x498] sm:$0xff]
    %v6315 = vld [vmem:[#allocation6 + $0x4a0] sm:$0xff]
    %v6316 = vld [vmem:[#allocation6 + $0x4a8] sm:$0xff]
    %v6317 = vld [vmem:[#allocation6 + $0x4b0] sm:$0xff]
    %v6318 = vld [vmem:[#allocation6 + $0x4b8] sm:$0xff]
    %v6319 = vld [vmem:[#allocation6 + $0x4c0] sm:$0xff]
    %v6320 = vld [vmem:[#allocation6 + $0x4c8] sm:$0xff]
    %v6321 = vld [vmem:[#allocation6 + $0x4d0] sm:$0xff]
    %v6322 = vld [vmem:[#allocation6 + $0x4d8] sm:$0xff]
    %v6323 = vld [vmem:[#allocation6 + $0x4e0] sm:$0xff]
    %v6324 = vld [vmem:[#allocation6 + $0x4e8] sm:$0xff]
    %v6325 = vld [vmem:[#allocation6 + $0x4f0] sm:$0xff]
    %v6326 = vld [vmem:[#allocation6 + $0x4f8] sm:$0xff]
    %v6327 = vld [vmem:[#allocation6 + $0x500] sm:$0xff]
    %v6328 = vld [vmem:[#allocation6 + $0x508] sm:$0xff]
    %v6329 = vld [vmem:[#allocation6 + $0x510] sm:$0xff]
    %v6330 = vld [vmem:[#allocation6 + $0x518] sm:$0xff]
    %v6331 = vld [vmem:[#allocation6 + $0x520] sm:$0xff]
    %v6332 = vld [vmem:[#allocation6 + $0x528] sm:$0xff]
    %v6333 = vld [vmem:[#allocation6 + $0x530] sm:$0xff]
    %v6334 = vld [vmem:[#allocation6 + $0x538] sm:$0xff]
    %v6335 = vld [vmem:[#allocation6 + $0x540] sm:$0xff]
    %v6336 = vld [vmem:[#allocation6 + $0x548] sm:$0xff]
    %v6337 = vld [vmem:[#allocation6 + $0x550] sm:$0xff]
    %v6338 = vld [vmem:[#allocation6 + $0x558] sm:$0xff]
    %v6339 = vld [vmem:[#allocation6 + $0x560] sm:$0xff]
    %v6340 = vld [vmem:[#allocation6 + $0x568] sm:$0xff]
    %v6341 = vld [vmem:[#allocation6 + $0x570] sm:$0xff]
    %v6342 = vld [vmem:[#allocation6 + $0x578] sm:$0xff]
    %v6343 = vld [vmem:[#allocation6 + $0x580] sm:$0xff]
    %v6344 = vld [vmem:[#allocation6 + $0x588] sm:$0xff]
    %v6345 = vld [vmem:[#allocation6 + $0x590] sm:$0xff]
    %v6346 = vld [vmem:[#allocation6 + $0x598] sm:$0xff]
    %v6347 = vld [vmem:[#allocation6 + $0x5a0] sm:$0xff]
    %v6348 = vld [vmem:[#allocation6 + $0x5a8] sm:$0xff]
    %v6349 = vld [vmem:[#allocation6 + $0x5b0] sm:$0xff]
    %v6350 = vld [vmem:[#allocation6 + $0x5b8] sm:$0xff]
    %v6351 = vld [vmem:[#allocation6 + $0x5c0] sm:$0xff]
    %v6352 = vld [vmem:[#allocation6 + $0x5c8] sm:$0xff]
    %v6353 = vld [vmem:[#allocation6 + $0x5d0] sm:$0xff]
    %v6354 = vld [vmem:[#allocation6 + $0x5d8] sm:$0xff]
    %v6355 = vld [vmem:[#allocation6 + $0x5e0] sm:$0xff]
    %v6356 = vld [vmem:[#allocation6 + $0x5e8] sm:$0xff]
    %v6357 = vld [vmem:[#allocation6 + $0x5f0] sm:$0xff]
    %v6358 = vld [vmem:[#allocation6 + $0x5f8] sm:$0xff]
    %v6359 = vld [vmem:[#allocation6 + $0x600] sm:$0xff]
    %v6360 = vld [vmem:[#allocation6 + $0x608] sm:$0xff]
    %v6361 = vld [vmem:[#allocation6 + $0x610] sm:$0xff]
    %v6362 = vld [vmem:[#allocation6 + $0x618] sm:$0xff]
    %v6363 = vld [vmem:[#allocation6 + $0x620] sm:$0xff]
    %v6364 = vld [vmem:[#allocation6 + $0x628] sm:$0xff]
    %v6365 = vld [vmem:[#allocation6 + $0x630] sm:$0xff]
    %v6366 = vld [vmem:[#allocation6 + $0x638] sm:$0xff]
    %v6367 = vld [vmem:[#allocation6 + $0x640] sm:$0xff]
    %v6368 = vld [vmem:[#allocation6 + $0x648] sm:$0xff]
    %v6369 = vld [vmem:[#allocation6 + $0x650] sm:$0xff]
    %v6370 = vld [vmem:[#allocation6 + $0x658] sm:$0xff]
    %v6371 = vld [vmem:[#allocation6 + $0x660] sm:$0xff]
    %v6372 = vld [vmem:[#allocation6 + $0x668] sm:$0xff]
    %v6373 = vld [vmem:[#allocation6 + $0x670] sm:$0xff]
    %v6374 = vld [vmem:[#allocation6 + $0x678] sm:$0xff]
    %v6375 = vld [vmem:[#allocation6 + $0x680] sm:$0xff]
    %v6376 = vld [vmem:[#allocation6 + $0x688] sm:$0xff]
    %v6377 = vld [vmem:[#allocation6 + $0x690] sm:$0xff]
    %v6378 = vld [vmem:[#allocation6 + $0x698] sm:$0xff]
    %v6379 = vld [vmem:[#allocation6 + $0x6a0] sm:$0xff]
    %v6380 = vld [vmem:[#allocation6 + $0x6a8] sm:$0xff]
    %v6381 = vld [vmem:[#allocation6 + $0x6b0] sm:$0xff]
    %v6382 = vld [vmem:[#allocation6 + $0x6b8] sm:$0xff]
    %v6383 = vld [vmem:[#allocation6 + $0x6c0] sm:$0xff]
    %v6384 = vld [vmem:[#allocation6 + $0x6c8] sm:$0xff]
    %v6385 = vld [vmem:[#allocation6 + $0x6d0] sm:$0xff]
    %v6386 = vld [vmem:[#allocation6 + $0x6d8] sm:$0xff]
    %v6387 = vld [vmem:[#allocation6 + $0x6e0] sm:$0xff]
    %v6388 = vld [vmem:[#allocation6 + $0x6e8] sm:$0xff]
    %v6389 = vld [vmem:[#allocation6 + $0x6f0] sm:$0xff]
    %v6390 = vld [vmem:[#allocation6 + $0x6f8] sm:$0xff]
    %v6391 = vld [vmem:[#allocation6 + $0x700] sm:$0xff]
    %v6392 = vld [vmem:[#allocation6 + $0x708] sm:$0xff]
    %v6393 = vld [vmem:[#allocation6 + $0x710] sm:$0xff]
    %v6394 = vld [vmem:[#allocation6 + $0x718] sm:$0xff]
    %v6395 = vld [vmem:[#allocation6 + $0x720] sm:$0xff]
    %v6396 = vld [vmem:[#allocation6 + $0x728] sm:$0xff]
    %v6397 = vld [vmem:[#allocation6 + $0x730] sm:$0xff]
    %v6398 = vld [vmem:[#allocation6 + $0x738] sm:$0xff]
    %v6399 = vld [vmem:[#allocation6 + $0x740] sm:$0xff]
    %v6400 = vld [vmem:[#allocation6 + $0x748] sm:$0xff]
    %v6401 = vld [vmem:[#allocation6 + $0x750] sm:$0xff]
    %v6402 = vld [vmem:[#allocation6 + $0x758] sm:$0xff]
    %v6403 = vld [vmem:[#allocation6 + $0x760] sm:$0xff]
    %v6404 = vld [vmem:[#allocation6 + $0x768] sm:$0xff]
    %v6405 = vld [vmem:[#allocation6 + $0x770] sm:$0xff]
    %v6406 = vld [vmem:[#allocation6 + $0x778] sm:$0xff]
    %v6407 = vld [vmem:[#allocation6 + $0x780] sm:$0xff]
    %v6408 = vld [vmem:[#allocation6 + $0x788] sm:$0xff]
    %v6409 = vld [vmem:[#allocation6 + $0x790] sm:$0xff]
    %v6410 = vld [vmem:[#allocation6 + $0x798] sm:$0xff]
    %v6411 = vld [vmem:[#allocation6 + $0x7a0] sm:$0xff]
    %v6412 = vld [vmem:[#allocation6 + $0x7a8] sm:$0xff]
    %v6413 = vld [vmem:[#allocation6 + $0x7b0] sm:$0xff]
    %v6414 = vld [vmem:[#allocation6 + $0x7b8] sm:$0xff]
    %v6415 = vld [vmem:[#allocation6 + $0x7c0] sm:$0xff]
    %v6416 = vld [vmem:[#allocation6 + $0x7c8] sm:$0xff]
    %v6417 = vld [vmem:[#allocation6 + $0x7d0] sm:$0xff]
    %v6418 = vld [vmem:[#allocation6 + $0x7d8] sm:$0xff]
    %v6419 = vld [vmem:[#allocation6 + $0x7e0] sm:$0xff]
    %v6420 = vld [vmem:[#allocation6 + $0x7e8] sm:$0xff]
    %v6421 = vld [vmem:[#allocation6 + $0x7f0] sm:$0xff]
    %v6422 = vld [vmem:[#allocation6 + $0x7f8] sm:$0xff]
    %v6423 = vld [vmem:[#allocation6 + $0x800] sm:$0xff]
    %v6424 = vld [vmem:[#allocation6 + $0x808] sm:$0xff]
    %v6425 = vld [vmem:[#allocation6 + $0x810] sm:$0xff]
    %v6426 = vld [vmem:[#allocation6 + $0x818] sm:$0xff]
    %v6427 = vld [vmem:[#allocation6 + $0x820] sm:$0xff]
    %v6428 = vld [vmem:[#allocation6 + $0x828] sm:$0xff]
    %v6429 = vld [vmem:[#allocation6 + $0x830] sm:$0xff]
    %v6430 = vld [vmem:[#allocation6 + $0x838] sm:$0xff]
    %v6431 = vld [vmem:[#allocation6 + $0x840] sm:$0xff]
    %v6432 = vld [vmem:[#allocation6 + $0x848] sm:$0xff]
    %v6433 = vld [vmem:[#allocation6 + $0x850] sm:$0xff]
    %v6434 = vld [vmem:[#allocation6 + $0x858] sm:$0xff]
    %v6435 = vld [vmem:[#allocation6 + $0x860] sm:$0xff]
    %v6436 = vld [vmem:[#allocation6 + $0x868] sm:$0xff]
    %v6437 = vld [vmem:[#allocation6 + $0x870] sm:$0xff]
    %v6438 = vld [vmem:[#allocation6 + $0x878] sm:$0xff]
    %v6439 = vld [vmem:[#allocation6 + $0x880] sm:$0xff]
    %v6440 = vld [vmem:[#allocation6 + $0x888] sm:$0xff]
    %v6441 = vld [vmem:[#allocation6 + $0x890] sm:$0xff]
    %v6442 = vld [vmem:[#allocation6 + $0x898] sm:$0xff]
    %v6443 = vld [vmem:[#allocation6 + $0x8a0] sm:$0xff]
    %v6444 = vld [vmem:[#allocation6 + $0x8a8] sm:$0xff]
    %v6445 = vld [vmem:[#allocation6 + $0x8b0] sm:$0xff]
    %v6446 = vld [vmem:[#allocation6 + $0x8b8] sm:$0xff]
    %v6447 = vld [vmem:[#allocation6 + $0x8c0] sm:$0xff]
    %v6448 = vld [vmem:[#allocation6 + $0x8c8] sm:$0xff]
    %v6449 = vld [vmem:[#allocation6 + $0x8d0] sm:$0xff]
    %v6450 = vld [vmem:[#allocation6 + $0x8d8] sm:$0xff]
    %v6451 = vld [vmem:[#allocation6 + $0x8e0] sm:$0xff]
    %v6452 = vld [vmem:[#allocation6 + $0x8e8] sm:$0xff]
    %v6453 = vld [vmem:[#allocation6 + $0x8f0] sm:$0xff]
    %v6454 = vld [vmem:[#allocation6 + $0x8f8] sm:$0xff]
    %v6455 = vld [vmem:[#allocation6 + $0x900] sm:$0xff]
    %v6456 = vld [vmem:[#allocation6 + $0x908] sm:$0xff]
    %v6457 = vld [vmem:[#allocation6 + $0x910] sm:$0xff]
    %v6458 = vld [vmem:[#allocation6 + $0x918] sm:$0xff]
    %v6459 = vld [vmem:[#allocation6 + $0x920] sm:$0xff]
    %v6460 = vld [vmem:[#allocation6 + $0x928] sm:$0xff]
    %v6461 = vld [vmem:[#allocation6 + $0x930] sm:$0xff]
    %v6462 = vld [vmem:[#allocation6 + $0x938] sm:$0xff]
    %v6463 = vld [vmem:[#allocation6 + $0x940] sm:$0xff]
    %v6464 = vld [vmem:[#allocation6 + $0x948] sm:$0xff]
    %v6465 = vld [vmem:[#allocation6 + $0x950] sm:$0xff]
    %v6466 = vld [vmem:[#allocation6 + $0x958] sm:$0xff]
    %v6467 = vld [vmem:[#allocation6 + $0x960] sm:$0xff]
    %v6468 = vld [vmem:[#allocation6 + $0x968] sm:$0xff]
    %v6469 = vld [vmem:[#allocation6 + $0x970] sm:$0xff]
    %v6470 = vld [vmem:[#allocation6 + $0x978] sm:$0xff]
    %v6471 = vld [vmem:[#allocation6 + $0x980] sm:$0xff]
    %v6472 = vld [vmem:[#allocation6 + $0x988] sm:$0xff]
    %v6473 = vld [vmem:[#allocation6 + $0x990] sm:$0xff]
    %v6474 = vld [vmem:[#allocation6 + $0x998] sm:$0xff]
    %v6475 = vld [vmem:[#allocation6 + $0x9a0] sm:$0xff]
    %v6476 = vld [vmem:[#allocation6 + $0x9a8] sm:$0xff]
    %v6477 = vld [vmem:[#allocation6 + $0x9b0] sm:$0xff]
    %v6478 = vld [vmem:[#allocation6 + $0x9b8] sm:$0xff]
    %v6479 = vld [vmem:[#allocation6 + $0x9c0] sm:$0xff]
    %v6480 = vld [vmem:[#allocation6 + $0x9c8] sm:$0xff]
    %v6481 = vld [vmem:[#allocation6 + $0x9d0] sm:$0xff]
    %v6482 = vld [vmem:[#allocation6 + $0x9d8] sm:$0xff]
    %v6483 = vld [vmem:[#allocation6 + $0x9e0] sm:$0xff]
    %v6484 = vld [vmem:[#allocation6 + $0x9e8] sm:$0xff]
    %v6485 = vld [vmem:[#allocation6 + $0x9f0] sm:$0xff]
    %v6486 = vld [vmem:[#allocation6 + $0x9f8] sm:$0xff]
    %v6487 = vld [vmem:[#allocation6 + $0xa00] sm:$0xff]
    %v6488 = vld [vmem:[#allocation6 + $0xa08] sm:$0xff]
    %v6489 = vld [vmem:[#allocation6 + $0xa10] sm:$0xff]
    %v6490 = vld [vmem:[#allocation6 + $0xa18] sm:$0xff]
    %v6491 = vld [vmem:[#allocation6 + $0xa20] sm:$0xff]
    %v6492 = vld [vmem:[#allocation6 + $0xa28] sm:$0xff]
    %v6493 = vld [vmem:[#allocation6 + $0xa30] sm:$0xff]
    %v6494 = vld [vmem:[#allocation6 + $0xa38] sm:$0xff]
    %v6495 = vld [vmem:[#allocation6 + $0xa40] sm:$0xff]
    %v6496 = vld [vmem:[#allocation6 + $0xa48] sm:$0xff]
    %v6497 = vld [vmem:[#allocation6 + $0xa50] sm:$0xff]
    %v6498 = vld [vmem:[#allocation6 + $0xa58] sm:$0xff]
    %v6499 = vld [vmem:[#allocation6 + $0xa60] sm:$0xff]
    %v6500 = vld [vmem:[#allocation6 + $0xa68] sm:$0xff]
    %v6501 = vld [vmem:[#allocation6 + $0xa70] sm:$0xff]
    %v6502 = vld [vmem:[#allocation6 + $0xa78] sm:$0xff]
    %v6503 = vld [vmem:[#allocation6 + $0xa80] sm:$0xff]
    %v6504 = vld [vmem:[#allocation6 + $0xa88] sm:$0xff]
    %v6505 = vld [vmem:[#allocation6 + $0xa90] sm:$0xff]
    %v6506 = vld [vmem:[#allocation6 + $0xa98] sm:$0xff]
    %v6507 = vld [vmem:[#allocation6 + $0xaa0] sm:$0xff]
    %v6508 = vld [vmem:[#allocation6 + $0xaa8] sm:$0xff]
    %v6509 = vld [vmem:[#allocation6 + $0xab0] sm:$0xff]
    %v6510 = vld [vmem:[#allocation6 + $0xab8] sm:$0xff]
    %v6511 = vld [vmem:[#allocation6 + $0xac0] sm:$0xff]
    %v6512 = vld [vmem:[#allocation6 + $0xac8] sm:$0xff]
    %v6513 = vld [vmem:[#allocation6 + $0xad0] sm:$0xff]
    %v6514 = vld [vmem:[#allocation6 + $0xad8] sm:$0xff]
    %v6515 = vld [vmem:[#allocation6 + $0xae0] sm:$0xff]
    %v6516 = vld [vmem:[#allocation6 + $0xae8] sm:$0xff]
    %v6517 = vld [vmem:[#allocation6 + $0xaf0] sm:$0xff]
    %v6518 = vld [vmem:[#allocation6 + $0xaf8] sm:$0xff]
    %v6519 = vld [vmem:[#allocation6 + $0xb00] sm:$0xff]
    %v6520 = vld [vmem:[#allocation6 + $0xb08] sm:$0xff]
    %v6521 = vld [vmem:[#allocation6 + $0xb10] sm:$0xff]
    %v6522 = vld [vmem:[#allocation6 + $0xb18] sm:$0xff]
    %v6523 = vld [vmem:[#allocation6 + $0xb20] sm:$0xff]
    %v6524 = vld [vmem:[#allocation6 + $0xb28] sm:$0xff]
    %v6525 = vld [vmem:[#allocation6 + $0xb30] sm:$0xff]
    %v6526 = vld [vmem:[#allocation6 + $0xb38] sm:$0xff]
    %v6527 = vld [vmem:[#allocation6 + $0xb40] sm:$0xff]
    %v6528 = vld [vmem:[#allocation6 + $0xb48] sm:$0xff]
    %v6529 = vld [vmem:[#allocation6 + $0xb50] sm:$0xff]
    %v6530 = vld [vmem:[#allocation6 + $0xb58] sm:$0xff]
    %v6531 = vld [vmem:[#allocation6 + $0xb60] sm:$0xff]
    %v6532 = vld [vmem:[#allocation6 + $0xb68] sm:$0xff]
    %v6533 = vld [vmem:[#allocation6 + $0xb70] sm:$0xff]
    %v6534 = vld [vmem:[#allocation6 + $0xb78] sm:$0xff]
    %v6535 = vld [vmem:[#allocation6 + $0xb80] sm:$0xff]
    %v6536 = vld [vmem:[#allocation6 + $0xb88] sm:$0xff]
    %v6537 = vld [vmem:[#allocation6 + $0xb90] sm:$0xff]
    %v6538 = vld [vmem:[#allocation6 + $0xb98] sm:$0xff]
    %v6539 = vld [vmem:[#allocation6 + $0xba0] sm:$0xff]
    %v6540 = vld [vmem:[#allocation6 + $0xba8] sm:$0xff]
    %v6541 = vld [vmem:[#allocation6 + $0xbb0] sm:$0xff]
    %v6542 = vld [vmem:[#allocation6 + $0xbb8] sm:$0xff]
    %v6543 = vld [vmem:[#allocation6 + $0xbc0] sm:$0xff]
    %v6544 = vld [vmem:[#allocation6 + $0xbc8] sm:$0xff]
    %v6545 = vld [vmem:[#allocation6 + $0xbd0] sm:$0xff]
    %v6546 = vld [vmem:[#allocation6 + $0xbd8] sm:$0xff]
    %v6547 = vld [vmem:[#allocation6 + $0xbe0] sm:$0xff]
    %v6548 = vld [vmem:[#allocation6 + $0xbe8] sm:$0xff]
    %v6549 = vld [vmem:[#allocation6 + $0xbf0] sm:$0xff]
    %v6550 = vld [vmem:[#allocation6 + $0xbf8] sm:$0xff]
    %v6551 = vld [vmem:[#allocation7] sm:$0xff]
    %v6553 = vlaneseq
    %v6554 = vshrl.u32 %v6553, 7
    %v6555 = vsub.s32 0, %v6554
    %v6556 = vrot.slane %v6551, %v6555
    %v6557 = vlaneseq
    %v6558 = vshrl.u32 %v6557, 7
    %v6559 = vsub.s32 1, %v6558
    %v6560 = vrot.slane %v6551, %v6559
    %v6561 = vlaneseq
    %v6562 = vshrl.u32 %v6561, 7
    %v6563 = vsub.s32 2, %v6562
    %v6564 = vrot.slane %v6551, %v6563
    %v6565 = vlaneseq
    %v6566 = vshrl.u32 %v6565, 7
    %v6567 = vsub.s32 3, %v6566
    %v6568 = vrot.slane %v6551, %v6567
    %v6569 = vlaneseq
    %v6570 = vshrl.u32 %v6569, 7
    %v6571 = vsub.s32 4, %v6570
    %v6572 = vrot.slane %v6551, %v6571
    %v6573 = vlaneseq
    %v6574 = vshrl.u32 %v6573, 7
    %v6575 = vsub.s32 5, %v6574
    %v6576 = vrot.slane %v6551, %v6575
    %v6577 = vlaneseq
    %v6578 = vshrl.u32 %v6577, 7
    %v6579 = vsub.s32 6, %v6578
    %v6580 = vrot.slane %v6551, %v6579
    %v6581 = vlaneseq
    %v6582 = vshrl.u32 %v6581, 7
    %v6583 = vsub.s32 7, %v6582
    %v6584 = vrot.slane %v6551, %v6583
    %v6977 = vunpack.c.l.b16 %v6167
    %v6978 = vunpack.c.h.b16 %v6167
    %v6979 = vunpack.c.l.b16 %v6168
    %v6980 = vunpack.c.h.b16 %v6168
    %v6981 = vunpack.c.l.b16 %v6169
    %v6982 = vunpack.c.h.b16 %v6169
    %v6983 = vunpack.c.l.b16 %v6170
    %v6984 = vunpack.c.h.b16 %v6170
    %v6985 = vunpack.c.l.b16 %v6171
    %v6986 = vunpack.c.h.b16 %v6171
    %v6987 = vunpack.c.l.b16 %v6172
    %v6988 = vunpack.c.h.b16 %v6172
    %v6989 = vunpack.c.l.b16 %v6173
    %v6990 = vunpack.c.h.b16 %v6173
    %v6991 = vunpack.c.l.b16 %v6174
    %v6992 = vunpack.c.h.b16 %v6174
    %v6993 = vunpack.c.l.b16 %v6175
    %v6994 = vunpack.c.h.b16 %v6175
    %v6995 = vunpack.c.l.b16 %v6176
    %v6996 = vunpack.c.h.b16 %v6176
    %v6997 = vunpack.c.l.b16 %v6177
    %v6998 = vunpack.c.h.b16 %v6177
    %v6999 = vunpack.c.l.b16 %v6178
    %v7000 = vunpack.c.h.b16 %v6178
    %v7001 = vunpack.c.l.b16 %v6179
    %v7002 = vunpack.c.h.b16 %v6179
    %v7003 = vunpack.c.l.b16 %v6180
    %v7004 = vunpack.c.h.b16 %v6180
    %v7005 = vunpack.c.l.b16 %v6181
    %v7006 = vunpack.c.h.b16 %v6181
    %v7007 = vunpack.c.l.b16 %v6182
    %v7008 = vunpack.c.h.b16 %v6182
    %v7009 = vunpack.c.l.b16 %v6183
    %v7010 = vunpack.c.h.b16 %v6183
    %v7011 = vunpack.c.l.b16 %v6184
    %v7012 = vunpack.c.h.b16 %v6184
    %v7013 = vunpack.c.l.b16 %v6185
    %v7014 = vunpack.c.h.b16 %v6185
    %v7015 = vunpack.c.l.b16 %v6186
    %v7016 = vunpack.c.h.b16 %v6186
    %v7017 = vunpack.c.l.b16 %v6187
    %v7018 = vunpack.c.h.b16 %v6187
    %v7019 = vunpack.c.l.b16 %v6188
    %v7020 = vunpack.c.h.b16 %v6188
    %v7021 = vunpack.c.l.b16 %v6189
    %v7022 = vunpack.c.h.b16 %v6189
    %v7023 = vunpack.c.l.b16 %v6190
    %v7024 = vunpack.c.h.b16 %v6190
    %v7025 = vunpack.c.l.b16 %v6191
    %v7026 = vunpack.c.h.b16 %v6191
    %v7027 = vunpack.c.l.b16 %v6192
    %v7028 = vunpack.c.h.b16 %v6192
    %v7029 = vunpack.c.l.b16 %v6193
    %v7030 = vunpack.c.h.b16 %v6193
    %v7031 = vunpack.c.l.b16 %v6194
    %v7032 = vunpack.c.h.b16 %v6194
    %v7033 = vunpack.c.l.b16 %v6195
    %v7034 = vunpack.c.h.b16 %v6195
    %v7035 = vunpack.c.l.b16 %v6196
    %v7036 = vunpack.c.h.b16 %v6196
    %v7037 = vunpack.c.l.b16 %v6197
    %v7038 = vunpack.c.h.b16 %v6197
    %v7039 = vunpack.c.l.b16 %v6198
    %v7040 = vunpack.c.h.b16 %v6198
    %v7041 = vunpack.c.l.b16 %v6199
    %v7042 = vunpack.c.h.b16 %v6199
    %v7043 = vunpack.c.l.b16 %v6200
    %v7044 = vunpack.c.h.b16 %v6200
    %v7045 = vunpack.c.l.b16 %v6201
    %v7046 = vunpack.c.h.b16 %v6201
    %v7047 = vunpack.c.l.b16 %v6202
    %v7048 = vunpack.c.h.b16 %v6202
    %v7049 = vunpack.c.l.b16 %v6203
    %v7050 = vunpack.c.h.b16 %v6203
    %v7051 = vunpack.c.l.b16 %v6204
    %v7052 = vunpack.c.h.b16 %v6204
    %v7053 = vunpack.c.l.b16 %v6205
    %v7054 = vunpack.c.h.b16 %v6205
    %v7055 = vunpack.c.l.b16 %v6206
    %v7056 = vunpack.c.h.b16 %v6206
    %v7057 = vunpack.c.l.b16 %v6207
    %v7058 = vunpack.c.h.b16 %v6207
    %v7059 = vunpack.c.l.b16 %v6208
    %v7060 = vunpack.c.h.b16 %v6208
    %v7061 = vunpack.c.l.b16 %v6209
    %v7062 = vunpack.c.h.b16 %v6209
    %v7063 = vunpack.c.l.b16 %v6210
    %v7064 = vunpack.c.h.b16 %v6210
    %v7065 = vunpack.c.l.b16 %v6211
    %v7066 = vunpack.c.h.b16 %v6211
    %v7067 = vunpack.c.l.b16 %v6212
    %v7068 = vunpack.c.h.b16 %v6212
    %v7069 = vunpack.c.l.b16 %v6213
    %v7070 = vunpack.c.h.b16 %v6213
    %v7071 = vunpack.c.l.b16 %v6214
    %v7072 = vunpack.c.h.b16 %v6214
    %v7073 = vunpack.c.l.b16 %v6215
    %v7074 = vunpack.c.h.b16 %v6215
    %v7075 = vunpack.c.l.b16 %v6216
    %v7076 = vunpack.c.h.b16 %v6216
    %v7077 = vunpack.c.l.b16 %v6217
    %v7078 = vunpack.c.h.b16 %v6217
    %v7079 = vunpack.c.l.b16 %v6218
    %v7080 = vunpack.c.h.b16 %v6218
    %v7081 = vunpack.c.l.b16 %v6219
    %v7082 = vunpack.c.h.b16 %v6219
    %v7083 = vunpack.c.l.b16 %v6220
    %v7084 = vunpack.c.h.b16 %v6220
    %v7085 = vunpack.c.l.b16 %v6221
    %v7086 = vunpack.c.h.b16 %v6221
    %v7087 = vunpack.c.l.b16 %v6222
    %v7088 = vunpack.c.h.b16 %v6222
    %v7089 = vunpack.c.l.b16 %v6223
    %v7090 = vunpack.c.h.b16 %v6223
    %v7091 = vunpack.c.l.b16 %v6224
    %v7092 = vunpack.c.h.b16 %v6224
    %v7093 = vunpack.c.l.b16 %v6225
    %v7094 = vunpack.c.h.b16 %v6225
    %v7095 = vunpack.c.l.b16 %v6226
    %v7096 = vunpack.c.h.b16 %v6226
    %v7097 = vunpack.c.l.b16 %v6227
    %v7098 = vunpack.c.h.b16 %v6227
    %v7099 = vunpack.c.l.b16 %v6228
    %v7100 = vunpack.c.h.b16 %v6228
    %v7101 = vunpack.c.l.b16 %v6229
    %v7102 = vunpack.c.h.b16 %v6229
    %v7103 = vunpack.c.l.b16 %v6230
    %v7104 = vunpack.c.h.b16 %v6230
    %v7105 = vunpack.c.l.b16 %v6231
    %v7106 = vunpack.c.h.b16 %v6231
    %v7107 = vunpack.c.l.b16 %v6232
    %v7108 = vunpack.c.h.b16 %v6232
    %v7109 = vunpack.c.l.b16 %v6233
    %v7110 = vunpack.c.h.b16 %v6233
    %v7111 = vunpack.c.l.b16 %v6234
    %v7112 = vunpack.c.h.b16 %v6234
    %v7113 = vunpack.c.l.b16 %v6235
    %v7114 = vunpack.c.h.b16 %v6235
    %v7115 = vunpack.c.l.b16 %v6236
    %v7116 = vunpack.c.h.b16 %v6236
    %v7117 = vunpack.c.l.b16 %v6237
    %v7118 = vunpack.c.h.b16 %v6237
    %v7119 = vunpack.c.l.b16 %v6238
    %v7120 = vunpack.c.h.b16 %v6238
    %v7121 = vunpack.c.l.b16 %v6239
    %v7122 = vunpack.c.h.b16 %v6239
    %v7123 = vunpack.c.l.b16 %v6240
    %v7124 = vunpack.c.h.b16 %v6240
    %v7125 = vunpack.c.l.b16 %v6241
    %v7126 = vunpack.c.h.b16 %v6241
    %v7127 = vunpack.c.l.b16 %v6242
    %v7128 = vunpack.c.h.b16 %v6242
    %v7129 = vunpack.c.l.b16 %v6243
    %v7130 = vunpack.c.h.b16 %v6243
    %v7131 = vunpack.c.l.b16 %v6244
    %v7132 = vunpack.c.h.b16 %v6244
    %v7133 = vunpack.c.l.b16 %v6245
    %v7134 = vunpack.c.h.b16 %v6245
    %v7135 = vunpack.c.l.b16 %v6246
    %v7136 = vunpack.c.h.b16 %v6246
    %v7137 = vunpack.c.l.b16 %v6247
    %v7138 = vunpack.c.h.b16 %v6247
    %v7139 = vunpack.c.l.b16 %v6248
    %v7140 = vunpack.c.h.b16 %v6248
    %v7141 = vunpack.c.l.b16 %v6249
    %v7142 = vunpack.c.h.b16 %v6249
    %v7143 = vunpack.c.l.b16 %v6250
    %v7144 = vunpack.c.h.b16 %v6250
    %v7145 = vunpack.c.l.b16 %v6251
    %v7146 = vunpack.c.h.b16 %v6251
    %v7147 = vunpack.c.l.b16 %v6252
    %v7148 = vunpack.c.h.b16 %v6252
    %v7149 = vunpack.c.l.b16 %v6253
    %v7150 = vunpack.c.h.b16 %v6253
    %v7151 = vunpack.c.l.b16 %v6254
    %v7152 = vunpack.c.h.b16 %v6254
    %v7153 = vunpack.c.l.b16 %v6255
    %v7154 = vunpack.c.h.b16 %v6255
    %v7155 = vunpack.c.l.b16 %v6256
    %v7156 = vunpack.c.h.b16 %v6256
    %v7157 = vunpack.c.l.b16 %v6257
    %v7158 = vunpack.c.h.b16 %v6257
    %v7159 = vunpack.c.l.b16 %v6258
    %v7160 = vunpack.c.h.b16 %v6258
    %v7161 = vunpack.c.l.b16 %v6259
    %v7162 = vunpack.c.h.b16 %v6259
    %v7163 = vunpack.c.l.b16 %v6260
    %v7164 = vunpack.c.h.b16 %v6260
    %v7165 = vunpack.c.l.b16 %v6261
    %v7166 = vunpack.c.h.b16 %v6261
    %v7167 = vunpack.c.l.b16 %v6262
    %v7168 = vunpack.c.h.b16 %v6262
    %v7169 = vunpack.c.l.b16 %v6263
    %v7170 = vunpack.c.h.b16 %v6263
    %v7171 = vunpack.c.l.b16 %v6264
    %v7172 = vunpack.c.h.b16 %v6264
    %v7173 = vunpack.c.l.b16 %v6265
    %v7174 = vunpack.c.h.b16 %v6265
    %v7175 = vunpack.c.l.b16 %v6266
    %v7176 = vunpack.c.h.b16 %v6266
    %v7177 = vunpack.c.l.b16 %v6267
    %v7178 = vunpack.c.h.b16 %v6267
    %v7179 = vunpack.c.l.b16 %v6268
    %v7180 = vunpack.c.h.b16 %v6268
    %v7181 = vunpack.c.l.b16 %v6269
    %v7182 = vunpack.c.h.b16 %v6269
    %v7183 = vunpack.c.l.b16 %v6270
    %v7184 = vunpack.c.h.b16 %v6270
    %v7185 = vunpack.c.l.b16 %v6271
    %v7186 = vunpack.c.h.b16 %v6271
    %v7187 = vunpack.c.l.b16 %v6272
    %v7188 = vunpack.c.h.b16 %v6272
    %v7189 = vunpack.c.l.b16 %v6273
    %v7190 = vunpack.c.h.b16 %v6273
    %v7191 = vunpack.c.l.b16 %v6274
    %v7192 = vunpack.c.h.b16 %v6274
    %v7193 = vunpack.c.l.b16 %v6275
    %v7194 = vunpack.c.h.b16 %v6275
    %v7195 = vunpack.c.l.b16 %v6276
    %v7196 = vunpack.c.h.b16 %v6276
    %v7197 = vunpack.c.l.b16 %v6277
    %v7198 = vunpack.c.h.b16 %v6277
    %v7199 = vunpack.c.l.b16 %v6278
    %v7200 = vunpack.c.h.b16 %v6278
    %v7201 = vunpack.c.l.b16 %v6279
    %v7202 = vunpack.c.h.b16 %v6279
    %v7203 = vunpack.c.l.b16 %v6280
    %v7204 = vunpack.c.h.b16 %v6280
    %v7205 = vunpack.c.l.b16 %v6281
    %v7206 = vunpack.c.h.b16 %v6281
    %v7207 = vunpack.c.l.b16 %v6282
    %v7208 = vunpack.c.h.b16 %v6282
    %v7209 = vunpack.c.l.b16 %v6283
    %v7210 = vunpack.c.h.b16 %v6283
    %v7211 = vunpack.c.l.b16 %v6284
    %v7212 = vunpack.c.h.b16 %v6284
    %v7213 = vunpack.c.l.b16 %v6285
    %v7214 = vunpack.c.h.b16 %v6285
    %v7215 = vunpack.c.l.b16 %v6286
    %v7216 = vunpack.c.h.b16 %v6286
    %v7217 = vunpack.c.l.b16 %v6287
    %v7218 = vunpack.c.h.b16 %v6287
    %v7219 = vunpack.c.l.b16 %v6288
    %v7220 = vunpack.c.h.b16 %v6288
    %v7221 = vunpack.c.l.b16 %v6289
    %v7222 = vunpack.c.h.b16 %v6289
    %v7223 = vunpack.c.l.b16 %v6290
    %v7224 = vunpack.c.h.b16 %v6290
    %v7225 = vunpack.c.l.b16 %v6291
    %v7226 = vunpack.c.h.b16 %v6291
    %v7227 = vunpack.c.l.b16 %v6292
    %v7228 = vunpack.c.h.b16 %v6292
    %v7229 = vunpack.c.l.b16 %v6293
    %v7230 = vunpack.c.h.b16 %v6293
    %v7231 = vunpack.c.l.b16 %v6294
    %v7232 = vunpack.c.h.b16 %v6294
    %v7233 = vunpack.c.l.b16 %v6295
    %v7234 = vunpack.c.h.b16 %v6295
    %v7235 = vunpack.c.l.b16 %v6296
    %v7236 = vunpack.c.h.b16 %v6296
    %v7237 = vunpack.c.l.b16 %v6297
    %v7238 = vunpack.c.h.b16 %v6297
    %v7239 = vunpack.c.l.b16 %v6298
    %v7240 = vunpack.c.h.b16 %v6298
    %v7241 = vunpack.c.l.b16 %v6299
    %v7242 = vunpack.c.h.b16 %v6299
    %v7243 = vunpack.c.l.b16 %v6300
    %v7244 = vunpack.c.h.b16 %v6300
    %v7245 = vunpack.c.l.b16 %v6301
    %v7246 = vunpack.c.h.b16 %v6301
    %v7247 = vunpack.c.l.b16 %v6302
    %v7248 = vunpack.c.h.b16 %v6302
    %v7249 = vunpack.c.l.b16 %v6303
    %v7250 = vunpack.c.h.b16 %v6303
    %v7251 = vunpack.c.l.b16 %v6304
    %v7252 = vunpack.c.h.b16 %v6304
    %v7253 = vunpack.c.l.b16 %v6305
    %v7254 = vunpack.c.h.b16 %v6305
    %v7255 = vunpack.c.l.b16 %v6306
    %v7256 = vunpack.c.h.b16 %v6306
    %v7257 = vunpack.c.l.b16 %v6307
    %v7258 = vunpack.c.h.b16 %v6307
    %v7259 = vunpack.c.l.b16 %v6308
    %v7260 = vunpack.c.h.b16 %v6308
    %v7261 = vunpack.c.l.b16 %v6309
    %v7262 = vunpack.c.h.b16 %v6309
    %v7263 = vunpack.c.l.b16 %v6310
    %v7264 = vunpack.c.h.b16 %v6310
    %v7265 = vunpack.c.l.b16 %v6311
    %v7266 = vunpack.c.h.b16 %v6311
    %v7267 = vunpack.c.l.b16 %v6312
    %v7268 = vunpack.c.h.b16 %v6312
    %v7269 = vunpack.c.l.b16 %v6313
    %v7270 = vunpack.c.h.b16 %v6313
    %v7271 = vunpack.c.l.b16 %v6314
    %v7272 = vunpack.c.h.b16 %v6314
    %v7273 = vunpack.c.l.b16 %v6315
    %v7274 = vunpack.c.h.b16 %v6315
    %v7275 = vunpack.c.l.b16 %v6316
    %v7276 = vunpack.c.h.b16 %v6316
    %v7277 = vunpack.c.l.b16 %v6317
    %v7278 = vunpack.c.h.b16 %v6317
    %v7279 = vunpack.c.l.b16 %v6318
    %v7280 = vunpack.c.h.b16 %v6318
    %v7281 = vunpack.c.l.b16 %v6319
    %v7282 = vunpack.c.h.b16 %v6319
    %v7283 = vunpack.c.l.b16 %v6320
    %v7284 = vunpack.c.h.b16 %v6320
    %v7285 = vunpack.c.l.b16 %v6321
    %v7286 = vunpack.c.h.b16 %v6321
    %v7287 = vunpack.c.l.b16 %v6322
    %v7288 = vunpack.c.h.b16 %v6322
    %v7289 = vunpack.c.l.b16 %v6323
    %v7290 = vunpack.c.h.b16 %v6323
    %v7291 = vunpack.c.l.b16 %v6324
    %v7292 = vunpack.c.h.b16 %v6324
    %v7293 = vunpack.c.l.b16 %v6325
    %v7294 = vunpack.c.h.b16 %v6325
    %v7295 = vunpack.c.l.b16 %v6326
    %v7296 = vunpack.c.h.b16 %v6326
    %v7297 = vunpack.c.l.b16 %v6327
    %v7298 = vunpack.c.h.b16 %v6327
    %v7299 = vunpack.c.l.b16 %v6328
    %v7300 = vunpack.c.h.b16 %v6328
    %v7301 = vunpack.c.l.b16 %v6329
    %v7302 = vunpack.c.h.b16 %v6329
    %v7303 = vunpack.c.l.b16 %v6330
    %v7304 = vunpack.c.h.b16 %v6330
    %v7305 = vunpack.c.l.b16 %v6331
    %v7306 = vunpack.c.h.b16 %v6331
    %v7307 = vunpack.c.l.b16 %v6332
    %v7308 = vunpack.c.h.b16 %v6332
    %v7309 = vunpack.c.l.b16 %v6333
    %v7310 = vunpack.c.h.b16 %v6333
    %v7311 = vunpack.c.l.b16 %v6334
    %v7312 = vunpack.c.h.b16 %v6334
    %v7313 = vunpack.c.l.b16 %v6335
    %v7314 = vunpack.c.h.b16 %v6335
    %v7315 = vunpack.c.l.b16 %v6336
    %v7316 = vunpack.c.h.b16 %v6336
    %v7317 = vunpack.c.l.b16 %v6337
    %v7318 = vunpack.c.h.b16 %v6337
    %v7319 = vunpack.c.l.b16 %v6338
    %v7320 = vunpack.c.h.b16 %v6338
    %v7321 = vunpack.c.l.b16 %v6339
    %v7322 = vunpack.c.h.b16 %v6339
    %v7323 = vunpack.c.l.b16 %v6340
    %v7324 = vunpack.c.h.b16 %v6340
    %v7325 = vunpack.c.l.b16 %v6341
    %v7326 = vunpack.c.h.b16 %v6341
    %v7327 = vunpack.c.l.b16 %v6342
    %v7328 = vunpack.c.h.b16 %v6342
    %v7329 = vunpack.c.l.b16 %v6343
    %v7330 = vunpack.c.h.b16 %v6343
    %v7331 = vunpack.c.l.b16 %v6344
    %v7332 = vunpack.c.h.b16 %v6344
    %v7333 = vunpack.c.l.b16 %v6345
    %v7334 = vunpack.c.h.b16 %v6345
    %v7335 = vunpack.c.l.b16 %v6346
    %v7336 = vunpack.c.h.b16 %v6346
    %v7337 = vunpack.c.l.b16 %v6347
    %v7338 = vunpack.c.h.b16 %v6347
    %v7339 = vunpack.c.l.b16 %v6348
    %v7340 = vunpack.c.h.b16 %v6348
    %v7341 = vunpack.c.l.b16 %v6349
    %v7342 = vunpack.c.h.b16 %v6349
    %v7343 = vunpack.c.l.b16 %v6350
    %v7344 = vunpack.c.h.b16 %v6350
    %v7345 = vunpack.c.l.b16 %v6351
    %v7346 = vunpack.c.h.b16 %v6351
    %v7347 = vunpack.c.l.b16 %v6352
    %v7348 = vunpack.c.h.b16 %v6352
    %v7349 = vunpack.c.l.b16 %v6353
    %v7350 = vunpack.c.h.b16 %v6353
    %v7351 = vunpack.c.l.b16 %v6354
    %v7352 = vunpack.c.h.b16 %v6354
    %v7353 = vunpack.c.l.b16 %v6355
    %v7354 = vunpack.c.h.b16 %v6355
    %v7355 = vunpack.c.l.b16 %v6356
    %v7356 = vunpack.c.h.b16 %v6356
    %v7357 = vunpack.c.l.b16 %v6357
    %v7358 = vunpack.c.h.b16 %v6357
    %v7359 = vunpack.c.l.b16 %v6358
    %v7360 = vunpack.c.h.b16 %v6358
    %v7361 = vunpack.c.l.b16 %v6359
    %v7362 = vunpack.c.h.b16 %v6359
    %v7363 = vunpack.c.l.b16 %v6360
    %v7364 = vunpack.c.h.b16 %v6360
    %v7365 = vunpack.c.l.b16 %v6361
    %v7366 = vunpack.c.h.b16 %v6361
    %v7367 = vunpack.c.l.b16 %v6362
    %v7368 = vunpack.c.h.b16 %v6362
    %v7369 = vunpack.c.l.b16 %v6363
    %v7370 = vunpack.c.h.b16 %v6363
    %v7371 = vunpack.c.l.b16 %v6364
    %v7372 = vunpack.c.h.b16 %v6364
    %v7373 = vunpack.c.l.b16 %v6365
    %v7374 = vunpack.c.h.b16 %v6365
    %v7375 = vunpack.c.l.b16 %v6366
    %v7376 = vunpack.c.h.b16 %v6366
    %v7377 = vunpack.c.l.b16 %v6367
    %v7378 = vunpack.c.h.b16 %v6367
    %v7379 = vunpack.c.l.b16 %v6368
    %v7380 = vunpack.c.h.b16 %v6368
    %v7381 = vunpack.c.l.b16 %v6369
    %v7382 = vunpack.c.h.b16 %v6369
    %v7383 = vunpack.c.l.b16 %v6370
    %v7384 = vunpack.c.h.b16 %v6370
    %v7385 = vunpack.c.l.b16 %v6371
    %v7386 = vunpack.c.h.b16 %v6371
    %v7387 = vunpack.c.l.b16 %v6372
    %v7388 = vunpack.c.h.b16 %v6372
    %v7389 = vunpack.c.l.b16 %v6373
    %v7390 = vunpack.c.h.b16 %v6373
    %v7391 = vunpack.c.l.b16 %v6374
    %v7392 = vunpack.c.h.b16 %v6374
    %v7393 = vunpack.c.l.b16 %v6375
    %v7394 = vunpack.c.h.b16 %v6375
    %v7395 = vunpack.c.l.b16 %v6376
    %v7396 = vunpack.c.h.b16 %v6376
    %v7397 = vunpack.c.l.b16 %v6377
    %v7398 = vunpack.c.h.b16 %v6377
    %v7399 = vunpack.c.l.b16 %v6378
    %v7400 = vunpack.c.h.b16 %v6378
    %v7401 = vunpack.c.l.b16 %v6379
    %v7402 = vunpack.c.h.b16 %v6379
    %v7403 = vunpack.c.l.b16 %v6380
    %v7404 = vunpack.c.h.b16 %v6380
    %v7405 = vunpack.c.l.b16 %v6381
    %v7406 = vunpack.c.h.b16 %v6381
    %v7407 = vunpack.c.l.b16 %v6382
    %v7408 = vunpack.c.h.b16 %v6382
    %v7409 = vunpack.c.l.b16 %v6383
    %v7410 = vunpack.c.h.b16 %v6383
    %v7411 = vunpack.c.l.b16 %v6384
    %v7412 = vunpack.c.h.b16 %v6384
    %v7413 = vunpack.c.l.b16 %v6385
    %v7414 = vunpack.c.h.b16 %v6385
    %v7415 = vunpack.c.l.b16 %v6386
    %v7416 = vunpack.c.h.b16 %v6386
    %v7417 = vunpack.c.l.b16 %v6387
    %v7418 = vunpack.c.h.b16 %v6387
    %v7419 = vunpack.c.l.b16 %v6388
    %v7420 = vunpack.c.h.b16 %v6388
    %v7421 = vunpack.c.l.b16 %v6389
    %v7422 = vunpack.c.h.b16 %v6389
    %v7423 = vunpack.c.l.b16 %v6390
    %v7424 = vunpack.c.h.b16 %v6390
    %v7425 = vunpack.c.l.b16 %v6391
    %v7426 = vunpack.c.h.b16 %v6391
    %v7427 = vunpack.c.l.b16 %v6392
    %v7428 = vunpack.c.h.b16 %v6392
    %v7429 = vunpack.c.l.b16 %v6393
    %v7430 = vunpack.c.h.b16 %v6393
    %v7431 = vunpack.c.l.b16 %v6394
    %v7432 = vunpack.c.h.b16 %v6394
    %v7433 = vunpack.c.l.b16 %v6395
    %v7434 = vunpack.c.h.b16 %v6395
    %v7435 = vunpack.c.l.b16 %v6396
    %v7436 = vunpack.c.h.b16 %v6396
    %v7437 = vunpack.c.l.b16 %v6397
    %v7438 = vunpack.c.h.b16 %v6397
    %v7439 = vunpack.c.l.b16 %v6398
    %v7440 = vunpack.c.h.b16 %v6398
    %v7441 = vunpack.c.l.b16 %v6399
    %v7442 = vunpack.c.h.b16 %v6399
    %v7443 = vunpack.c.l.b16 %v6400
    %v7444 = vunpack.c.h.b16 %v6400
    %v7445 = vunpack.c.l.b16 %v6401
    %v7446 = vunpack.c.h.b16 %v6401
    %v7447 = vunpack.c.l.b16 %v6402
    %v7448 = vunpack.c.h.b16 %v6402
    %v7449 = vunpack.c.l.b16 %v6403
    %v7450 = vunpack.c.h.b16 %v6403
    %v7451 = vunpack.c.l.b16 %v6404
    %v7452 = vunpack.c.h.b16 %v6404
    %v7453 = vunpack.c.l.b16 %v6405
    %v7454 = vunpack.c.h.b16 %v6405
    %v7455 = vunpack.c.l.b16 %v6406
    %v7456 = vunpack.c.h.b16 %v6406
    %v7457 = vunpack.c.l.b16 %v6407
    %v7458 = vunpack.c.h.b16 %v6407
    %v7459 = vunpack.c.l.b16 %v6408
    %v7460 = vunpack.c.h.b16 %v6408
    %v7461 = vunpack.c.l.b16 %v6409
    %v7462 = vunpack.c.h.b16 %v6409
    %v7463 = vunpack.c.l.b16 %v6410
    %v7464 = vunpack.c.h.b16 %v6410
    %v7465 = vunpack.c.l.b16 %v6411
    %v7466 = vunpack.c.h.b16 %v6411
    %v7467 = vunpack.c.l.b16 %v6412
    %v7468 = vunpack.c.h.b16 %v6412
    %v7469 = vunpack.c.l.b16 %v6413
    %v7470 = vunpack.c.h.b16 %v6413
    %v7471 = vunpack.c.l.b16 %v6414
    %v7472 = vunpack.c.h.b16 %v6414
    %v7473 = vunpack.c.l.b16 %v6415
    %v7474 = vunpack.c.h.b16 %v6415
    %v7475 = vunpack.c.l.b16 %v6416
    %v7476 = vunpack.c.h.b16 %v6416
    %v7477 = vunpack.c.l.b16 %v6417
    %v7478 = vunpack.c.h.b16 %v6417
    %v7479 = vunpack.c.l.b16 %v6418
    %v7480 = vunpack.c.h.b16 %v6418
    %v7481 = vunpack.c.l.b16 %v6419
    %v7482 = vunpack.c.h.b16 %v6419
    %v7483 = vunpack.c.l.b16 %v6420
    %v7484 = vunpack.c.h.b16 %v6420
    %v7485 = vunpack.c.l.b16 %v6421
    %v7486 = vunpack.c.h.b16 %v6421
    %v7487 = vunpack.c.l.b16 %v6422
    %v7488 = vunpack.c.h.b16 %v6422
    %v7489 = vunpack.c.l.b16 %v6423
    %v7490 = vunpack.c.h.b16 %v6423
    %v7491 = vunpack.c.l.b16 %v6424
    %v7492 = vunpack.c.h.b16 %v6424
    %v7493 = vunpack.c.l.b16 %v6425
    %v7494 = vunpack.c.h.b16 %v6425
    %v7495 = vunpack.c.l.b16 %v6426
    %v7496 = vunpack.c.h.b16 %v6426
    %v7497 = vunpack.c.l.b16 %v6427
    %v7498 = vunpack.c.h.b16 %v6427
    %v7499 = vunpack.c.l.b16 %v6428
    %v7500 = vunpack.c.h.b16 %v6428
    %v7501 = vunpack.c.l.b16 %v6429
    %v7502 = vunpack.c.h.b16 %v6429
    %v7503 = vunpack.c.l.b16 %v6430
    %v7504 = vunpack.c.h.b16 %v6430
    %v7505 = vunpack.c.l.b16 %v6431
    %v7506 = vunpack.c.h.b16 %v6431
    %v7507 = vunpack.c.l.b16 %v6432
    %v7508 = vunpack.c.h.b16 %v6432
    %v7509 = vunpack.c.l.b16 %v6433
    %v7510 = vunpack.c.h.b16 %v6433
    %v7511 = vunpack.c.l.b16 %v6434
    %v7512 = vunpack.c.h.b16 %v6434
    %v7513 = vunpack.c.l.b16 %v6435
    %v7514 = vunpack.c.h.b16 %v6435
    %v7515 = vunpack.c.l.b16 %v6436
    %v7516 = vunpack.c.h.b16 %v6436
    %v7517 = vunpack.c.l.b16 %v6437
    %v7518 = vunpack.c.h.b16 %v6437
    %v7519 = vunpack.c.l.b16 %v6438
    %v7520 = vunpack.c.h.b16 %v6438
    %v7521 = vunpack.c.l.b16 %v6439
    %v7522 = vunpack.c.h.b16 %v6439
    %v7523 = vunpack.c.l.b16 %v6440
    %v7524 = vunpack.c.h.b16 %v6440
    %v7525 = vunpack.c.l.b16 %v6441
    %v7526 = vunpack.c.h.b16 %v6441
    %v7527 = vunpack.c.l.b16 %v6442
    %v7528 = vunpack.c.h.b16 %v6442
    %v7529 = vunpack.c.l.b16 %v6443
    %v7530 = vunpack.c.h.b16 %v6443
    %v7531 = vunpack.c.l.b16 %v6444
    %v7532 = vunpack.c.h.b16 %v6444
    %v7533 = vunpack.c.l.b16 %v6445
    %v7534 = vunpack.c.h.b16 %v6445
    %v7535 = vunpack.c.l.b16 %v6446
    %v7536 = vunpack.c.h.b16 %v6446
    %v7537 = vunpack.c.l.b16 %v6447
    %v7538 = vunpack.c.h.b16 %v6447
    %v7539 = vunpack.c.l.b16 %v6448
    %v7540 = vunpack.c.h.b16 %v6448
    %v7541 = vunpack.c.l.b16 %v6449
    %v7542 = vunpack.c.h.b16 %v6449
    %v7543 = vunpack.c.l.b16 %v6450
    %v7544 = vunpack.c.h.b16 %v6450
    %v7545 = vunpack.c.l.b16 %v6451
    %v7546 = vunpack.c.h.b16 %v6451
    %v7547 = vunpack.c.l.b16 %v6452
    %v7548 = vunpack.c.h.b16 %v6452
    %v7549 = vunpack.c.l.b16 %v6453
    %v7550 = vunpack.c.h.b16 %v6453
    %v7551 = vunpack.c.l.b16 %v6454
    %v7552 = vunpack.c.h.b16 %v6454
    %v7553 = vunpack.c.l.b16 %v6455
    %v7554 = vunpack.c.h.b16 %v6455
    %v7555 = vunpack.c.l.b16 %v6456
    %v7556 = vunpack.c.h.b16 %v6456
    %v7557 = vunpack.c.l.b16 %v6457
    %v7558 = vunpack.c.h.b16 %v6457
    %v7559 = vunpack.c.l.b16 %v6458
    %v7560 = vunpack.c.h.b16 %v6458
    %v7561 = vunpack.c.l.b16 %v6459
    %v7562 = vunpack.c.h.b16 %v6459
    %v7563 = vunpack.c.l.b16 %v6460
    %v7564 = vunpack.c.h.b16 %v6460
    %v7565 = vunpack.c.l.b16 %v6461
    %v7566 = vunpack.c.h.b16 %v6461
    %v7567 = vunpack.c.l.b16 %v6462
    %v7568 = vunpack.c.h.b16 %v6462
    %v7569 = vunpack.c.l.b16 %v6463
    %v7570 = vunpack.c.h.b16 %v6463
    %v7571 = vunpack.c.l.b16 %v6464
    %v7572 = vunpack.c.h.b16 %v6464
    %v7573 = vunpack.c.l.b16 %v6465
    %v7574 = vunpack.c.h.b16 %v6465
    %v7575 = vunpack.c.l.b16 %v6466
    %v7576 = vunpack.c.h.b16 %v6466
    %v7577 = vunpack.c.l.b16 %v6467
    %v7578 = vunpack.c.h.b16 %v6467
    %v7579 = vunpack.c.l.b16 %v6468
    %v7580 = vunpack.c.h.b16 %v6468
    %v7581 = vunpack.c.l.b16 %v6469
    %v7582 = vunpack.c.h.b16 %v6469
    %v7583 = vunpack.c.l.b16 %v6470
    %v7584 = vunpack.c.h.b16 %v6470
    %v7585 = vunpack.c.l.b16 %v6471
    %v7586 = vunpack.c.h.b16 %v6471
    %v7587 = vunpack.c.l.b16 %v6472
    %v7588 = vunpack.c.h.b16 %v6472
    %v7589 = vunpack.c.l.b16 %v6473
    %v7590 = vunpack.c.h.b16 %v6473
    %v7591 = vunpack.c.l.b16 %v6474
    %v7592 = vunpack.c.h.b16 %v6474
    %v7593 = vunpack.c.l.b16 %v6475
    %v7594 = vunpack.c.h.b16 %v6475
    %v7595 = vunpack.c.l.b16 %v6476
    %v7596 = vunpack.c.h.b16 %v6476
    %v7597 = vunpack.c.l.b16 %v6477
    %v7598 = vunpack.c.h.b16 %v6477
    %v7599 = vunpack.c.l.b16 %v6478
    %v7600 = vunpack.c.h.b16 %v6478
    %v7601 = vunpack.c.l.b16 %v6479
    %v7602 = vunpack.c.h.b16 %v6479
    %v7603 = vunpack.c.l.b16 %v6480
    %v7604 = vunpack.c.h.b16 %v6480
    %v7605 = vunpack.c.l.b16 %v6481
    %v7606 = vunpack.c.h.b16 %v6481
    %v7607 = vunpack.c.l.b16 %v6482
    %v7608 = vunpack.c.h.b16 %v6482
    %v7609 = vunpack.c.l.b16 %v6483
    %v7610 = vunpack.c.h.b16 %v6483
    %v7611 = vunpack.c.l.b16 %v6484
    %v7612 = vunpack.c.h.b16 %v6484
    %v7613 = vunpack.c.l.b16 %v6485
    %v7614 = vunpack.c.h.b16 %v6485
    %v7615 = vunpack.c.l.b16 %v6486
    %v7616 = vunpack.c.h.b16 %v6486
    %v7617 = vunpack.c.l.b16 %v6487
    %v7618 = vunpack.c.h.b16 %v6487
    %v7619 = vunpack.c.l.b16 %v6488
    %v7620 = vunpack.c.h.b16 %v6488
    %v7621 = vunpack.c.l.b16 %v6489
    %v7622 = vunpack.c.h.b16 %v6489
    %v7623 = vunpack.c.l.b16 %v6490
    %v7624 = vunpack.c.h.b16 %v6490
    %v7625 = vunpack.c.l.b16 %v6491
    %v7626 = vunpack.c.h.b16 %v6491
    %v7627 = vunpack.c.l.b16 %v6492
    %v7628 = vunpack.c.h.b16 %v6492
    %v7629 = vunpack.c.l.b16 %v6493
    %v7630 = vunpack.c.h.b16 %v6493
    %v7631 = vunpack.c.l.b16 %v6494
    %v7632 = vunpack.c.h.b16 %v6494
    %v7633 = vunpack.c.l.b16 %v6495
    %v7634 = vunpack.c.h.b16 %v6495
    %v7635 = vunpack.c.l.b16 %v6496
    %v7636 = vunpack.c.h.b16 %v6496
    %v7637 = vunpack.c.l.b16 %v6497
    %v7638 = vunpack.c.h.b16 %v6497
    %v7639 = vunpack.c.l.b16 %v6498
    %v7640 = vunpack.c.h.b16 %v6498
    %v7641 = vunpack.c.l.b16 %v6499
    %v7642 = vunpack.c.h.b16 %v6499
    %v7643 = vunpack.c.l.b16 %v6500
    %v7644 = vunpack.c.h.b16 %v6500
    %v7645 = vunpack.c.l.b16 %v6501
    %v7646 = vunpack.c.h.b16 %v6501
    %v7647 = vunpack.c.l.b16 %v6502
    %v7648 = vunpack.c.h.b16 %v6502
    %v7649 = vunpack.c.l.b16 %v6503
    %v7650 = vunpack.c.h.b16 %v6503
    %v7651 = vunpack.c.l.b16 %v6504
    %v7652 = vunpack.c.h.b16 %v6504
    %v7653 = vunpack.c.l.b16 %v6505
    %v7654 = vunpack.c.h.b16 %v6505
    %v7655 = vunpack.c.l.b16 %v6506
    %v7656 = vunpack.c.h.b16 %v6506
    %v7657 = vunpack.c.l.b16 %v6507
    %v7658 = vunpack.c.h.b16 %v6507
    %v7659 = vunpack.c.l.b16 %v6508
    %v7660 = vunpack.c.h.b16 %v6508
    %v7661 = vunpack.c.l.b16 %v6509
    %v7662 = vunpack.c.h.b16 %v6509
    %v7663 = vunpack.c.l.b16 %v6510
    %v7664 = vunpack.c.h.b16 %v6510
    %v7665 = vunpack.c.l.b16 %v6511
    %v7666 = vunpack.c.h.b16 %v6511
    %v7667 = vunpack.c.l.b16 %v6512
    %v7668 = vunpack.c.h.b16 %v6512
    %v7669 = vunpack.c.l.b16 %v6513
    %v7670 = vunpack.c.h.b16 %v6513
    %v7671 = vunpack.c.l.b16 %v6514
    %v7672 = vunpack.c.h.b16 %v6514
    %v7673 = vunpack.c.l.b16 %v6515
    %v7674 = vunpack.c.h.b16 %v6515
    %v7675 = vunpack.c.l.b16 %v6516
    %v7676 = vunpack.c.h.b16 %v6516
    %v7677 = vunpack.c.l.b16 %v6517
    %v7678 = vunpack.c.h.b16 %v6517
    %v7679 = vunpack.c.l.b16 %v6518
    %v7680 = vunpack.c.h.b16 %v6518
    %v7681 = vunpack.c.l.b16 %v6519
    %v7682 = vunpack.c.h.b16 %v6519
    %v7683 = vunpack.c.l.b16 %v6520
    %v7684 = vunpack.c.h.b16 %v6520
    %v7685 = vunpack.c.l.b16 %v6521
    %v7686 = vunpack.c.h.b16 %v6521
    %v7687 = vunpack.c.l.b16 %v6522
    %v7688 = vunpack.c.h.b16 %v6522
    %v7689 = vunpack.c.l.b16 %v6523
    %v7690 = vunpack.c.h.b16 %v6523
    %v7691 = vunpack.c.l.b16 %v6524
    %v7692 = vunpack.c.h.b16 %v6524
    %v7693 = vunpack.c.l.b16 %v6525
    %v7694 = vunpack.c.h.b16 %v6525
    %v7695 = vunpack.c.l.b16 %v6526
    %v7696 = vunpack.c.h.b16 %v6526
    %v7697 = vunpack.c.l.b16 %v6527
    %v7698 = vunpack.c.h.b16 %v6527
    %v7699 = vunpack.c.l.b16 %v6528
    %v7700 = vunpack.c.h.b16 %v6528
    %v7701 = vunpack.c.l.b16 %v6529
    %v7702 = vunpack.c.h.b16 %v6529
    %v7703 = vunpack.c.l.b16 %v6530
    %v7704 = vunpack.c.h.b16 %v6530
    %v7705 = vunpack.c.l.b16 %v6531
    %v7706 = vunpack.c.h.b16 %v6531
    %v7707 = vunpack.c.l.b16 %v6532
    %v7708 = vunpack.c.h.b16 %v6532
    %v7709 = vunpack.c.l.b16 %v6533
    %v7710 = vunpack.c.h.b16 %v6533
    %v7711 = vunpack.c.l.b16 %v6534
    %v7712 = vunpack.c.h.b16 %v6534
    %v7713 = vunpack.c.l.b16 %v6535
    %v7714 = vunpack.c.h.b16 %v6535
    %v7715 = vunpack.c.l.b16 %v6536
    %v7716 = vunpack.c.h.b16 %v6536
    %v7717 = vunpack.c.l.b16 %v6537
    %v7718 = vunpack.c.h.b16 %v6537
    %v7719 = vunpack.c.l.b16 %v6538
    %v7720 = vunpack.c.h.b16 %v6538
    %v7721 = vunpack.c.l.b16 %v6539
    %v7722 = vunpack.c.h.b16 %v6539
    %v7723 = vunpack.c.l.b16 %v6540
    %v7724 = vunpack.c.h.b16 %v6540
    %v7725 = vunpack.c.l.b16 %v6541
    %v7726 = vunpack.c.h.b16 %v6541
    %v7727 = vunpack.c.l.b16 %v6542
    %v7728 = vunpack.c.h.b16 %v6542
    %v7729 = vunpack.c.l.b16 %v6543
    %v7730 = vunpack.c.h.b16 %v6543
    %v7731 = vunpack.c.l.b16 %v6544
    %v7732 = vunpack.c.h.b16 %v6544
    %v7733 = vunpack.c.l.b16 %v6545
    %v7734 = vunpack.c.h.b16 %v6545
    %v7735 = vunpack.c.l.b16 %v6546
    %v7736 = vunpack.c.h.b16 %v6546
    %v7737 = vunpack.c.l.b16 %v6547
    %v7738 = vunpack.c.h.b16 %v6547
    %v7739 = vunpack.c.l.b16 %v6548
    %v7740 = vunpack.c.h.b16 %v6548
    %v7741 = vunpack.c.l.b16 %v6549
    %v7742 = vunpack.c.h.b16 %v6549
    %v7743 = vunpack.c.l.b16 %v6550
    %v7744 = vunpack.c.h.b16 %v6550
    %v7745 = vpack.c.b16 %v6985, %v6977
    %v7746 = vpack.c.b16 %v6986, %v6978
    %v7747 = vpack.c.b16 %v6987, %v6979
    %v7748 = vpack.c.b16 %v6988, %v6980
    %v7749 = vpack.c.b16 %v6989, %v6981
    %v7750 = vpack.c.b16 %v6990, %v6982
    %v7751 = vpack.c.b16 %v6991, %v6983
    %v7752 = vpack.c.b16 %v6992, %v6984
    %v7753 = vpack.c.b16 %v7001, %v6993
    %v7754 = vpack.c.b16 %v7002, %v6994
    %v7755 = vpack.c.b16 %v7003, %v6995
    %v7756 = vpack.c.b16 %v7004, %v6996
    %v7757 = vpack.c.b16 %v7005, %v6997
    %v7758 = vpack.c.b16 %v7006, %v6998
    %v7759 = vpack.c.b16 %v7007, %v6999
    %v7760 = vpack.c.b16 %v7008, %v7000
    %v7761 = vpack.c.b16 %v7017, %v7009
    %v7762 = vpack.c.b16 %v7018, %v7010
    %v7763 = vpack.c.b16 %v7019, %v7011
    %v7764 = vpack.c.b16 %v7020, %v7012
    %v7765 = vpack.c.b16 %v7021, %v7013
    %v7766 = vpack.c.b16 %v7022, %v7014
    %v7767 = vpack.c.b16 %v7023, %v7015
    %v7768 = vpack.c.b16 %v7024, %v7016
    %v7769 = vpack.c.b16 %v7033, %v7025
    %v7770 = vpack.c.b16 %v7034, %v7026
    %v7771 = vpack.c.b16 %v7035, %v7027
    %v7772 = vpack.c.b16 %v7036, %v7028
    %v7773 = vpack.c.b16 %v7037, %v7029
    %v7774 = vpack.c.b16 %v7038, %v7030
    %v7775 = vpack.c.b16 %v7039, %v7031
    %v7776 = vpack.c.b16 %v7040, %v7032
    %v7777 = vpack.c.b16 %v7049, %v7041
    %v7778 = vpack.c.b16 %v7050, %v7042
    %v7779 = vpack.c.b16 %v7051, %v7043
    %v7780 = vpack.c.b16 %v7052, %v7044
    %v7781 = vpack.c.b16 %v7053, %v7045
    %v7782 = vpack.c.b16 %v7054, %v7046
    %v7783 = vpack.c.b16 %v7055, %v7047
    %v7784 = vpack.c.b16 %v7056, %v7048
    %v7785 = vpack.c.b16 %v7065, %v7057
    %v7786 = vpack.c.b16 %v7066, %v7058
    %v7787 = vpack.c.b16 %v7067, %v7059
    %v7788 = vpack.c.b16 %v7068, %v7060
    %v7789 = vpack.c.b16 %v7069, %v7061
    %v7790 = vpack.c.b16 %v7070, %v7062
    %v7791 = vpack.c.b16 %v7071, %v7063
    %v7792 = vpack.c.b16 %v7072, %v7064
    %v7793 = vpack.c.b16 %v7081, %v7073
    %v7794 = vpack.c.b16 %v7082, %v7074
    %v7795 = vpack.c.b16 %v7083, %v7075
    %v7796 = vpack.c.b16 %v7084, %v7076
    %v7797 = vpack.c.b16 %v7085, %v7077
    %v7798 = vpack.c.b16 %v7086, %v7078
    %v7799 = vpack.c.b16 %v7087, %v7079
    %v7800 = vpack.c.b16 %v7088, %v7080
    %v7801 = vpack.c.b16 %v7097, %v7089
    %v7802 = vpack.c.b16 %v7098, %v7090
    %v7803 = vpack.c.b16 %v7099, %v7091
    %v7804 = vpack.c.b16 %v7100, %v7092
    %v7805 = vpack.c.b16 %v7101, %v7093
    %v7806 = vpack.c.b16 %v7102, %v7094
    %v7807 = vpack.c.b16 %v7103, %v7095
    %v7808 = vpack.c.b16 %v7104, %v7096
    %v7809 = vpack.c.b16 %v7113, %v7105
    %v7810 = vpack.c.b16 %v7114, %v7106
    %v7811 = vpack.c.b16 %v7115, %v7107
    %v7812 = vpack.c.b16 %v7116, %v7108
    %v7813 = vpack.c.b16 %v7117, %v7109
    %v7814 = vpack.c.b16 %v7118, %v7110
    %v7815 = vpack.c.b16 %v7119, %v7111
    %v7816 = vpack.c.b16 %v7120, %v7112
    %v7817 = vpack.c.b16 %v7129, %v7121
    %v7818 = vpack.c.b16 %v7130, %v7122
    %v7819 = vpack.c.b16 %v7131, %v7123
    %v7820 = vpack.c.b16 %v7132, %v7124
    %v7821 = vpack.c.b16 %v7133, %v7125
    %v7822 = vpack.c.b16 %v7134, %v7126
    %v7823 = vpack.c.b16 %v7135, %v7127
    %v7824 = vpack.c.b16 %v7136, %v7128
    %v7825 = vpack.c.b16 %v7145, %v7137
    %v7826 = vpack.c.b16 %v7146, %v7138
    %v7827 = vpack.c.b16 %v7147, %v7139
    %v7828 = vpack.c.b16 %v7148, %v7140
    %v7829 = vpack.c.b16 %v7149, %v7141
    %v7830 = vpack.c.b16 %v7150, %v7142
    %v7831 = vpack.c.b16 %v7151, %v7143
    %v7832 = vpack.c.b16 %v7152, %v7144
    %v7833 = vpack.c.b16 %v7161, %v7153
    %v7834 = vpack.c.b16 %v7162, %v7154
    %v7835 = vpack.c.b16 %v7163, %v7155
    %v7836 = vpack.c.b16 %v7164, %v7156
    %v7837 = vpack.c.b16 %v7165, %v7157
    %v7838 = vpack.c.b16 %v7166, %v7158
    %v7839 = vpack.c.b16 %v7167, %v7159
    %v7840 = vpack.c.b16 %v7168, %v7160
    %v7841 = vpack.c.b16 %v7177, %v7169
    %v7842 = vpack.c.b16 %v7178, %v7170
    %v7843 = vpack.c.b16 %v7179, %v7171
    %v7844 = vpack.c.b16 %v7180, %v7172
    %v7845 = vpack.c.b16 %v7181, %v7173
    %v7846 = vpack.c.b16 %v7182, %v7174
    %v7847 = vpack.c.b16 %v7183, %v7175
    %v7848 = vpack.c.b16 %v7184, %v7176
    %v7849 = vpack.c.b16 %v7193, %v7185
    %v7850 = vpack.c.b16 %v7194, %v7186
    %v7851 = vpack.c.b16 %v7195, %v7187
    %v7852 = vpack.c.b16 %v7196, %v7188
    %v7853 = vpack.c.b16 %v7197, %v7189
    %v7854 = vpack.c.b16 %v7198, %v7190
    %v7855 = vpack.c.b16 %v7199, %v7191
    %v7856 = vpack.c.b16 %v7200, %v7192
    %v7857 = vpack.c.b16 %v7209, %v7201
    %v7858 = vpack.c.b16 %v7210, %v7202
    %v7859 = vpack.c.b16 %v7211, %v7203
    %v7860 = vpack.c.b16 %v7212, %v7204
    %v7861 = vpack.c.b16 %v7213, %v7205
    %v7862 = vpack.c.b16 %v7214, %v7206
    %v7863 = vpack.c.b16 %v7215, %v7207
    %v7864 = vpack.c.b16 %v7216, %v7208
    %v7865 = vpack.c.b16 %v7225, %v7217
    %v7866 = vpack.c.b16 %v7226, %v7218
    %v7867 = vpack.c.b16 %v7227, %v7219
    %v7868 = vpack.c.b16 %v7228, %v7220
    %v7869 = vpack.c.b16 %v7229, %v7221
    %v7870 = vpack.c.b16 %v7230, %v7222
    %v7871 = vpack.c.b16 %v7231, %v7223
    %v7872 = vpack.c.b16 %v7232, %v7224
    %v7873 = vpack.c.b16 %v7241, %v7233
    %v7874 = vpack.c.b16 %v7242, %v7234
    %v7875 = vpack.c.b16 %v7243, %v7235
    %v7876 = vpack.c.b16 %v7244, %v7236
    %v7877 = vpack.c.b16 %v7245, %v7237
    %v7878 = vpack.c.b16 %v7246, %v7238
    %v7879 = vpack.c.b16 %v7247, %v7239
    %v7880 = vpack.c.b16 %v7248, %v7240
    %v7881 = vpack.c.b16 %v7257, %v7249
    %v7882 = vpack.c.b16 %v7258, %v7250
    %v7883 = vpack.c.b16 %v7259, %v7251
    %v7884 = vpack.c.b16 %v7260, %v7252
    %v7885 = vpack.c.b16 %v7261, %v7253
    %v7886 = vpack.c.b16 %v7262, %v7254
    %v7887 = vpack.c.b16 %v7263, %v7255
    %v7888 = vpack.c.b16 %v7264, %v7256
    %v7889 = vpack.c.b16 %v7273, %v7265
    %v7890 = vpack.c.b16 %v7274, %v7266
    %v7891 = vpack.c.b16 %v7275, %v7267
    %v7892 = vpack.c.b16 %v7276, %v7268
    %v7893 = vpack.c.b16 %v7277, %v7269
    %v7894 = vpack.c.b16 %v7278, %v7270
    %v7895 = vpack.c.b16 %v7279, %v7271
    %v7896 = vpack.c.b16 %v7280, %v7272
    %v7897 = vpack.c.b16 %v7289, %v7281
    %v7898 = vpack.c.b16 %v7290, %v7282
    %v7899 = vpack.c.b16 %v7291, %v7283
    %v7900 = vpack.c.b16 %v7292, %v7284
    %v7901 = vpack.c.b16 %v7293, %v7285
    %v7902 = vpack.c.b16 %v7294, %v7286
    %v7903 = vpack.c.b16 %v7295, %v7287
    %v7904 = vpack.c.b16 %v7296, %v7288
    %v7905 = vpack.c.b16 %v7305, %v7297
    %v7906 = vpack.c.b16 %v7306, %v7298
    %v7907 = vpack.c.b16 %v7307, %v7299
    %v7908 = vpack.c.b16 %v7308, %v7300
    %v7909 = vpack.c.b16 %v7309, %v7301
    %v7910 = vpack.c.b16 %v7310, %v7302
    %v7911 = vpack.c.b16 %v7311, %v7303
    %v7912 = vpack.c.b16 %v7312, %v7304
    %v7913 = vpack.c.b16 %v7321, %v7313
    %v7914 = vpack.c.b16 %v7322, %v7314
    %v7915 = vpack.c.b16 %v7323, %v7315
    %v7916 = vpack.c.b16 %v7324, %v7316
    %v7917 = vpack.c.b16 %v7325, %v7317
    %v7918 = vpack.c.b16 %v7326, %v7318
    %v7919 = vpack.c.b16 %v7327, %v7319
    %v7920 = vpack.c.b16 %v7328, %v7320
    %v7921 = vpack.c.b16 %v7337, %v7329
    %v7922 = vpack.c.b16 %v7338, %v7330
    %v7923 = vpack.c.b16 %v7339, %v7331
    %v7924 = vpack.c.b16 %v7340, %v7332
    %v7925 = vpack.c.b16 %v7341, %v7333
    %v7926 = vpack.c.b16 %v7342, %v7334
    %v7927 = vpack.c.b16 %v7343, %v7335
    %v7928 = vpack.c.b16 %v7344, %v7336
    %v7929 = vpack.c.b16 %v7353, %v7345
    %v7930 = vpack.c.b16 %v7354, %v7346
    %v7931 = vpack.c.b16 %v7355, %v7347
    %v7932 = vpack.c.b16 %v7356, %v7348
    %v7933 = vpack.c.b16 %v7357, %v7349
    %v7934 = vpack.c.b16 %v7358, %v7350
    %v7935 = vpack.c.b16 %v7359, %v7351
    %v7936 = vpack.c.b16 %v7360, %v7352
    %v7937 = vpack.c.b16 %v7369, %v7361
    %v7938 = vpack.c.b16 %v7370, %v7362
    %v7939 = vpack.c.b16 %v7371, %v7363
    %v7940 = vpack.c.b16 %v7372, %v7364
    %v7941 = vpack.c.b16 %v7373, %v7365
    %v7942 = vpack.c.b16 %v7374, %v7366
    %v7943 = vpack.c.b16 %v7375, %v7367
    %v7944 = vpack.c.b16 %v7376, %v7368
    %v7945 = vpack.c.b16 %v7385, %v7377
    %v7946 = vpack.c.b16 %v7386, %v7378
    %v7947 = vpack.c.b16 %v7387, %v7379
    %v7948 = vpack.c.b16 %v7388, %v7380
    %v7949 = vpack.c.b16 %v7389, %v7381
    %v7950 = vpack.c.b16 %v7390, %v7382
    %v7951 = vpack.c.b16 %v7391, %v7383
    %v7952 = vpack.c.b16 %v7392, %v7384
    %v7953 = vpack.c.b16 %v7401, %v7393
    %v7954 = vpack.c.b16 %v7402, %v7394
    %v7955 = vpack.c.b16 %v7403, %v7395
    %v7956 = vpack.c.b16 %v7404, %v7396
    %v7957 = vpack.c.b16 %v7405, %v7397
    %v7958 = vpack.c.b16 %v7406, %v7398
    %v7959 = vpack.c.b16 %v7407, %v7399
    %v7960 = vpack.c.b16 %v7408, %v7400
    %v7961 = vpack.c.b16 %v7417, %v7409
    %v7962 = vpack.c.b16 %v7418, %v7410
    %v7963 = vpack.c.b16 %v7419, %v7411
    %v7964 = vpack.c.b16 %v7420, %v7412
    %v7965 = vpack.c.b16 %v7421, %v7413
    %v7966 = vpack.c.b16 %v7422, %v7414
    %v7967 = vpack.c.b16 %v7423, %v7415
    %v7968 = vpack.c.b16 %v7424, %v7416
    %v7969 = vpack.c.b16 %v7433, %v7425
    %v7970 = vpack.c.b16 %v7434, %v7426
    %v7971 = vpack.c.b16 %v7435, %v7427
    %v7972 = vpack.c.b16 %v7436, %v7428
    %v7973 = vpack.c.b16 %v7437, %v7429
    %v7974 = vpack.c.b16 %v7438, %v7430
    %v7975 = vpack.c.b16 %v7439, %v7431
    %v7976 = vpack.c.b16 %v7440, %v7432
    %v7977 = vpack.c.b16 %v7449, %v7441
    %v7978 = vpack.c.b16 %v7450, %v7442
    %v7979 = vpack.c.b16 %v7451, %v7443
    %v7980 = vpack.c.b16 %v7452, %v7444
    %v7981 = vpack.c.b16 %v7453, %v7445
    %v7982 = vpack.c.b16 %v7454, %v7446
    %v7983 = vpack.c.b16 %v7455, %v7447
    %v7984 = vpack.c.b16 %v7456, %v7448
    %v7985 = vpack.c.b16 %v7465, %v7457
    %v7986 = vpack.c.b16 %v7466, %v7458
    %v7987 = vpack.c.b16 %v7467, %v7459
    %v7988 = vpack.c.b16 %v7468, %v7460
    %v7989 = vpack.c.b16 %v7469, %v7461
    %v7990 = vpack.c.b16 %v7470, %v7462
    %v7991 = vpack.c.b16 %v7471, %v7463
    %v7992 = vpack.c.b16 %v7472, %v7464
    %v7993 = vpack.c.b16 %v7481, %v7473
    %v7994 = vpack.c.b16 %v7482, %v7474
    %v7995 = vpack.c.b16 %v7483, %v7475
    %v7996 = vpack.c.b16 %v7484, %v7476
    %v7997 = vpack.c.b16 %v7485, %v7477
    %v7998 = vpack.c.b16 %v7486, %v7478
    %v7999 = vpack.c.b16 %v7487, %v7479
    %v8000 = vpack.c.b16 %v7488, %v7480
    %v8001 = vpack.c.b16 %v7497, %v7489
    %v8002 = vpack.c.b16 %v7498, %v7490
    %v8003 = vpack.c.b16 %v7499, %v7491
    %v8004 = vpack.c.b16 %v7500, %v7492
    %v8005 = vpack.c.b16 %v7501, %v7493
    %v8006 = vpack.c.b16 %v7502, %v7494
    %v8007 = vpack.c.b16 %v7503, %v7495
    %v8008 = vpack.c.b16 %v7504, %v7496
    %v8009 = vpack.c.b16 %v7513, %v7505
    %v8010 = vpack.c.b16 %v7514, %v7506
    %v8011 = vpack.c.b16 %v7515, %v7507
    %v8012 = vpack.c.b16 %v7516, %v7508
    %v8013 = vpack.c.b16 %v7517, %v7509
    %v8014 = vpack.c.b16 %v7518, %v7510
    %v8015 = vpack.c.b16 %v7519, %v7511
    %v8016 = vpack.c.b16 %v7520, %v7512
    %v8017 = vpack.c.b16 %v7529, %v7521
    %v8018 = vpack.c.b16 %v7530, %v7522
    %v8019 = vpack.c.b16 %v7531, %v7523
    %v8020 = vpack.c.b16 %v7532, %v7524
    %v8021 = vpack.c.b16 %v7533, %v7525
    %v8022 = vpack.c.b16 %v7534, %v7526
    %v8023 = vpack.c.b16 %v7535, %v7527
    %v8024 = vpack.c.b16 %v7536, %v7528
    %v8025 = vpack.c.b16 %v7545, %v7537
    %v8026 = vpack.c.b16 %v7546, %v7538
    %v8027 = vpack.c.b16 %v7547, %v7539
    %v8028 = vpack.c.b16 %v7548, %v7540
    %v8029 = vpack.c.b16 %v7549, %v7541
    %v8030 = vpack.c.b16 %v7550, %v7542
    %v8031 = vpack.c.b16 %v7551, %v7543
    %v8032 = vpack.c.b16 %v7552, %v7544
    %v8033 = vpack.c.b16 %v7561, %v7553
    %v8034 = vpack.c.b16 %v7562, %v7554
    %v8035 = vpack.c.b16 %v7563, %v7555
    %v8036 = vpack.c.b16 %v7564, %v7556
    %v8037 = vpack.c.b16 %v7565, %v7557
    %v8038 = vpack.c.b16 %v7566, %v7558
    %v8039 = vpack.c.b16 %v7567, %v7559
    %v8040 = vpack.c.b16 %v7568, %v7560
    %v8041 = vpack.c.b16 %v7577, %v7569
    %v8042 = vpack.c.b16 %v7578, %v7570
    %v8043 = vpack.c.b16 %v7579, %v7571
    %v8044 = vpack.c.b16 %v7580, %v7572
    %v8045 = vpack.c.b16 %v7581, %v7573
    %v8046 = vpack.c.b16 %v7582, %v7574
    %v8047 = vpack.c.b16 %v7583, %v7575
    %v8048 = vpack.c.b16 %v7584, %v7576
    %v8049 = vpack.c.b16 %v7593, %v7585
    %v8050 = vpack.c.b16 %v7594, %v7586
    %v8051 = vpack.c.b16 %v7595, %v7587
    %v8052 = vpack.c.b16 %v7596, %v7588
    %v8053 = vpack.c.b16 %v7597, %v7589
    %v8054 = vpack.c.b16 %v7598, %v7590
    %v8055 = vpack.c.b16 %v7599, %v7591
    %v8056 = vpack.c.b16 %v7600, %v7592
    %v8057 = vpack.c.b16 %v7609, %v7601
    %v8058 = vpack.c.b16 %v7610, %v7602
    %v8059 = vpack.c.b16 %v7611, %v7603
    %v8060 = vpack.c.b16 %v7612, %v7604
    %v8061 = vpack.c.b16 %v7613, %v7605
    %v8062 = vpack.c.b16 %v7614, %v7606
    %v8063 = vpack.c.b16 %v7615, %v7607
    %v8064 = vpack.c.b16 %v7616, %v7608
    %v8065 = vpack.c.b16 %v7625, %v7617
    %v8066 = vpack.c.b16 %v7626, %v7618
    %v8067 = vpack.c.b16 %v7627, %v7619
    %v8068 = vpack.c.b16 %v7628, %v7620
    %v8069 = vpack.c.b16 %v7629, %v7621
    %v8070 = vpack.c.b16 %v7630, %v7622
    %v8071 = vpack.c.b16 %v7631, %v7623
    %v8072 = vpack.c.b16 %v7632, %v7624
    %v8073 = vpack.c.b16 %v7641, %v7633
    %v8074 = vpack.c.b16 %v7642, %v7634
    %v8075 = vpack.c.b16 %v7643, %v7635
    %v8076 = vpack.c.b16 %v7644, %v7636
    %v8077 = vpack.c.b16 %v7645, %v7637
    %v8078 = vpack.c.b16 %v7646, %v7638
    %v8079 = vpack.c.b16 %v7647, %v7639
    %v8080 = vpack.c.b16 %v7648, %v7640
    %v8081 = vpack.c.b16 %v7657, %v7649
    %v8082 = vpack.c.b16 %v7658, %v7650
    %v8083 = vpack.c.b16 %v7659, %v7651
    %v8084 = vpack.c.b16 %v7660, %v7652
    %v8085 = vpack.c.b16 %v7661, %v7653
    %v8086 = vpack.c.b16 %v7662, %v7654
    %v8087 = vpack.c.b16 %v7663, %v7655
    %v8088 = vpack.c.b16 %v7664, %v7656
    %v8089 = vpack.c.b16 %v7673, %v7665
    %v8090 = vpack.c.b16 %v7674, %v7666
    %v8091 = vpack.c.b16 %v7675, %v7667
    %v8092 = vpack.c.b16 %v7676, %v7668
    %v8093 = vpack.c.b16 %v7677, %v7669
    %v8094 = vpack.c.b16 %v7678, %v7670
    %v8095 = vpack.c.b16 %v7679, %v7671
    %v8096 = vpack.c.b16 %v7680, %v7672
    %v8097 = vpack.c.b16 %v7689, %v7681
    %v8098 = vpack.c.b16 %v7690, %v7682
    %v8099 = vpack.c.b16 %v7691, %v7683
    %v8100 = vpack.c.b16 %v7692, %v7684
    %v8101 = vpack.c.b16 %v7693, %v7685
    %v8102 = vpack.c.b16 %v7694, %v7686
    %v8103 = vpack.c.b16 %v7695, %v7687
    %v8104 = vpack.c.b16 %v7696, %v7688
    %v8105 = vpack.c.b16 %v7705, %v7697
    %v8106 = vpack.c.b16 %v7706, %v7698
    %v8107 = vpack.c.b16 %v7707, %v7699
    %v8108 = vpack.c.b16 %v7708, %v7700
    %v8109 = vpack.c.b16 %v7709, %v7701
    %v8110 = vpack.c.b16 %v7710, %v7702
    %v8111 = vpack.c.b16 %v7711, %v7703
    %v8112 = vpack.c.b16 %v7712, %v7704
    %v8113 = vpack.c.b16 %v7721, %v7713
    %v8114 = vpack.c.b16 %v7722, %v7714
    %v8115 = vpack.c.b16 %v7723, %v7715
    %v8116 = vpack.c.b16 %v7724, %v7716
    %v8117 = vpack.c.b16 %v7725, %v7717
    %v8118 = vpack.c.b16 %v7726, %v7718
    %v8119 = vpack.c.b16 %v7727, %v7719
    %v8120 = vpack.c.b16 %v7728, %v7720
    %v8121 = vpack.c.b16 %v7737, %v7729
    %v8122 = vpack.c.b16 %v7738, %v7730
    %v8123 = vpack.c.b16 %v7739, %v7731
    %v8124 = vpack.c.b16 %v7740, %v7732
    %v8125 = vpack.c.b16 %v7741, %v7733
    %v8126 = vpack.c.b16 %v7742, %v7734
    %v8127 = vpack.c.b16 %v7743, %v7735
    %v8128 = vpack.c.b16 %v7744, %v7736
    %8513 = vmatprep.subr.bf16.mxu0 %v7746
    %8514 = vmatpush1.bf16.msra.mxu0 %v7745
    %8515 = vmatprep.subr.bf16.mxu0 %v7754
    %8516 = vmatpush1.bf16.msra.mxu0 %v7753
    %8517 = vmatprep.subr.bf16.mxu0 %v7762
    %8518 = vmatpush1.bf16.msra.mxu0 %v7761
    %8519 = vmatprep.subr.bf16.mxu0 %v7770
    %8520 = vmatpush1.bf16.msra.mxu0 %v7769
    %8521 = vmatprep.subr.bf16.mxu0 %v7778
    %8522 = vmatpush1.bf16.msra.mxu0 %v7777
    %8523 = vmatprep.subr.bf16.mxu0 %v7786
    %8524 = vmatpush1.bf16.msra.mxu0 %v7785
    %8525 = vmatprep.subr.bf16.mxu0 %v7794
    %8526 = vmatpush1.bf16.msra.mxu0 %v7793
    %8527 = vmatprep.subr.bf16.mxu0 %v7802
    %8528 = vmatpush1.bf16.msra.mxu0 %v7801
    %8529 = vmatprep.subr.bf16.mxu0 %v7810
    %8530 = vmatpush1.bf16.msra.mxu0 %v7809
    %8531 = vmatprep.subr.bf16.mxu0 %v7818
    %8532 = vmatpush1.bf16.msra.mxu0 %v7817
    %8533 = vmatprep.subr.bf16.mxu0 %v7826
    %8534 = vmatpush1.bf16.msra.mxu0 %v7825
    %8535 = vmatprep.subr.bf16.mxu0 %v7834
    %8536 = vmatpush1.bf16.msra.mxu0 %v7833
    %8537 = vmatprep.subr.bf16.mxu0 %v7842
    %8538 = vmatpush1.bf16.msra.mxu0 %v7841
    %8539 = vmatprep.subr.bf16.mxu0 %v7850
    %8540 = vmatpush1.bf16.msra.mxu0 %v7849
    %8541 = vmatprep.subr.bf16.mxu0 %v7858
    %8542 = vmatpush1.bf16.msra.mxu0 %v7857
    %8543 = vmatprep.subr.bf16.mxu0 %v7866
    %8544 = vmatpush1.bf16.msra.mxu0 %v7865
    %8545 = vmatprep.mubr.bf16.mxu0 %v6162
    %8546 = vmatmul.mubr.bf16.gmra.mrb[0].mxu0 %v6161
    %v8547 = vpop.f32.mrb[0].mxu0
    %v8548 = vadd.f32 %v6556, %v8547
    %v8549 = vpop.f32.mrb[0].mxu0
    %v8550 = vadd.f32 %v6560, %v8549
    %v8551 = vpop.f32.mrb[0].mxu0
    %v8552 = vpop.f32.mrb[0].mxu0
    %8553 = vdwg.mxu0
    %8554 = vmatprep.subr.bf16.mxu0 %v7874
    %8555 = vmatpush1.bf16.msra.mxu0 %v7873
    %8556 = vmatprep.subr.bf16.mxu0 %v7882
    %8557 = vmatpush1.bf16.msra.mxu0 %v7881
    %8558 = vmatprep.subr.bf16.mxu0 %v7890
    %8559 = vmatpush1.bf16.msra.mxu0 %v7889
    %8560 = vmatprep.subr.bf16.mxu0 %v7898
    %8561 = vmatpush1.bf16.msra.mxu0 %v7897
    %8562 = vmatprep.subr.bf16.mxu0 %v7906
    %8563 = vmatpush1.bf16.msra.mxu0 %v7905
    %8564 = vmatprep.subr.bf16.mxu0 %v7914
    %8565 = vmatpush1.bf16.msra.mxu0 %v7913
    %8566 = vmatprep.subr.bf16.mxu0 %v7922
    %8567 = vmatpush1.bf16.msra.mxu0 %v7921
    %8568 = vmatprep.subr.bf16.mxu0 %v7930
    %8569 = vmatpush1.bf16.msra.mxu0 %v7929
    %8570 = vmatprep.subr.bf16.mxu0 %v7938
    %8571 = vmatpush1.bf16.msra.mxu0 %v7937
    %8572 = vmatprep.subr.bf16.mxu0 %v7946
    %8573 = vmatpush1.bf16.msra.mxu0 %v7945
    %8574 = vmatprep.subr.bf16.mxu0 %v7954
    %8575 = vmatpush1.bf16.msra.mxu0 %v7953
    %8576 = vmatprep.subr.bf16.mxu0 %v7962
    %8577 = vmatpush1.bf16.msra.mxu0 %v7961
    %8578 = vmatprep.subr.bf16.mxu0 %v7970
    %8579 = vmatpush1.bf16.msra.mxu0 %v7969
    %8580 = vmatprep.subr.bf16.mxu0 %v7978
    %8581 = vmatpush1.bf16.msra.mxu0 %v7977
    %8582 = vmatprep.subr.bf16.mxu0 %v7986
    %8583 = vmatpush1.bf16.msra.mxu0 %v7985
    %8584 = vmatprep.subr.bf16.mxu0 %v7994
    %8585 = vmatpush1.bf16.msra.mxu0 %v7993
    %8586 = vmatprep.mubr.bf16.mxu0 %v6164
    %8587 = vmatmul.mubr.bf16.gmra.mrb[0].mxu0 %v6163
    %v8588 = vpop.f32.mrb[0].mxu0
    %v8589 = vadd.f32 %v8548, %v8588
    %v8590 = vpop.f32.mrb[0].mxu0
    %v8591 = vadd.f32 %v8550, %v8590
    %v8592 = vpop.f32.mrb[0].mxu0
    %v8593 = vpop.f32.mrb[0].mxu0
    %8594 = vdwg.mxu0
    %8595 = vmatprep.subr.bf16.mxu0 %v8002
    %8596 = vmatpush1.bf16.msra.mxu0 %v8001
    %8597 = vmatprep.subr.bf16.mxu0 %v8010
    %8598 = vmatpush1.bf16.msra.mxu0 %v8009
    %8599 = vmatprep.subr.bf16.mxu0 %v8018
    %8600 = vmatpush1.bf16.msra.mxu0 %v8017
    %8601 = vmatprep.subr.bf16.mxu0 %v8026
    %8602 = vmatpush1.bf16.msra.mxu0 %v8025
    %8603 = vmatprep.subr.bf16.mxu0 %v8034
    %8604 = vmatpush1.bf16.msra.mxu0 %v8033
    %8605 = vmatprep.subr.bf16.mxu0 %v8042
    %8606 = vmatpush1.bf16.msra.mxu0 %v8041
    %8607 = vmatprep.subr.bf16.mxu0 %v8050
    %8608 = vmatpush1.bf16.msra.mxu0 %v8049
    %8609 = vmatprep.subr.bf16.mxu0 %v8058
    %8610 = vmatpush1.bf16.msra.mxu0 %v8057
    %8611 = vmatprep.subr.bf16.mxu0 %v8066
    %8612 = vmatpush1.bf16.msra.mxu0 %v8065
    %8613 = vmatprep.subr.bf16.mxu0 %v8074
    %8614 = vmatpush1.bf16.msra.mxu0 %v8073
    %8615 = vmatprep.subr.bf16.mxu0 %v8082
    %8616 = vmatpush1.bf16.msra.mxu0 %v8081
    %8617 = vmatprep.subr.bf16.mxu0 %v8090
    %8618 = vmatpush1.bf16.msra.mxu0 %v8089
    %8619 = vmatprep.subr.bf16.mxu0 %v8098
    %8620 = vmatpush1.bf16.msra.mxu0 %v8097
    %8621 = vmatprep.subr.bf16.mxu0 %v8106
    %8622 = vmatpush1.bf16.msra.mxu0 %v8105
    %8623 = vmatprep.subr.bf16.mxu0 %v8114
    %8624 = vmatpush1.bf16.msra.mxu0 %v8113
    %8625 = vmatprep.subr.bf16.mxu0 %v8122
    %8626 = vmatpush1.bf16.msra.mxu0 %v8121
    %8627 = vmatprep.mubr.bf16.mxu0 %v6166
    %8628 = vmatmul.mubr.bf16.gmra.mrb[0].mxu0 %v6165
    %v8629 = vpop.f32.mrb[0].mxu0
    %v8630 = vadd.f32 %v8589, %v8629
    %v8631 = vpop.f32.mrb[0].mxu0
    %v8632 = vadd.f32 %v8591, %v8631
    %v8633 = vpop.f32.mrb[0].mxu0
    %v8634 = vpop.f32.mrb[0].mxu0
    %8635 = vdwg.mxu0
    %8636 = vmatprep.subr.bf16.mxu0 %v7748
    %8637 = vmatpush1.bf16.msra.mxu0 %v7747
    %8638 = vmatprep.subr.bf16.mxu0 %v7756
    %8639 = vmatpush1.bf16.msra.mxu0 %v7755
    %8640 = vmatprep.subr.bf16.mxu0 %v7764
    %8641 = vmatpush1.bf16.msra.mxu0 %v7763
    %8642 = vmatprep.subr.bf16.mxu0 %v7772
    %8643 = vmatpush1.bf16.msra.mxu0 %v7771
    %8644 = vmatprep.subr.bf16.mxu0 %v7780
    %8645 = vmatpush1.bf16.msra.mxu0 %v7779
    %8646 = vmatprep.subr.bf16.mxu0 %v7788
    %8647 = vmatpush1.bf16.msra.mxu0 %v7787
    %8648 = vmatprep.subr.bf16.mxu0 %v7796
    %8649 = vmatpush1.bf16.msra.mxu0 %v7795
    %8650 = vmatprep.subr.bf16.mxu0 %v7804
    %8651 = vmatpush1.bf16.msra.mxu0 %v7803
    %8652 = vmatprep.subr.bf16.mxu0 %v7812
    %8653 = vmatpush1.bf16.msra.mxu0 %v7811
    %8654 = vmatprep.subr.bf16.mxu0 %v7820
    %8655 = vmatpush1.bf16.msra.mxu0 %v7819
    %8656 = vmatprep.subr.bf16.mxu0 %v7828
    %8657 = vmatpush1.bf16.msra.mxu0 %v7827
    %8658 = vmatprep.subr.bf16.mxu0 %v7836
    %8659 = vmatpush1.bf16.msra.mxu0 %v7835
    %8660 = vmatprep.subr.bf16.mxu0 %v7844
    %8661 = vmatpush1.bf16.msra.mxu0 %v7843
    %8662 = vmatprep.subr.bf16.mxu0 %v7852
    %8663 = vmatpush1.bf16.msra.mxu0 %v7851
    %8664 = vmatprep.subr.bf16.mxu0 %v7860
    %8665 = vmatpush1.bf16.msra.mxu0 %v7859
    %8666 = vmatprep.subr.bf16.mxu0 %v7868
    %8667 = vmatpush1.bf16.msra.mxu0 %v7867
    %8668 = vmatprep.mubr.bf16.mxu0 %v6162
    %8669 = vmatmul.mubr.bf16.gmra.mrb[0].mxu0 %v6161
    %v8670 = vpop.f32.mrb[0].mxu0
    %v8671 = vadd.f32 %v6564, %v8670
    %v8672 = vpop.f32.mrb[0].mxu0
    %v8673 = vadd.f32 %v6568, %v8672
    %v8674 = vpop.f32.mrb[0].mxu0
    %v8675 = vpop.f32.mrb[0].mxu0
    %8676 = vdwg.mxu0
    %8677 = vmatprep.subr.bf16.mxu0 %v7876
    %8678 = vmatpush1.bf16.msra.mxu0 %v7875
    %8679 = vmatprep.subr.bf16.mxu0 %v7884
    %8680 = vmatpush1.bf16.msra.mxu0 %v7883
    %8681 = vmatprep.subr.bf16.mxu0 %v7892
    %8682 = vmatpush1.bf16.msra.mxu0 %v7891
    %8683 = vmatprep.subr.bf16.mxu0 %v7900
    %8684 = vmatpush1.bf16.msra.mxu0 %v7899
    %8685 = vmatprep.subr.bf16.mxu0 %v7908
    %8686 = vmatpush1.bf16.msra.mxu0 %v7907
    %8687 = vmatprep.subr.bf16.mxu0 %v7916
    %8688 = vmatpush1.bf16.msra.mxu0 %v7915
    %8689 = vmatprep.subr.bf16.mxu0 %v7924
    %8690 = vmatpush1.bf16.msra.mxu0 %v7923
    %8691 = vmatprep.subr.bf16.mxu0 %v7932
    %8692 = vmatpush1.bf16.msra.mxu0 %v7931
    %8693 = vmatprep.subr.bf16.mxu0 %v7940
    %8694 = vmatpush1.bf16.msra.mxu0 %v7939
    %8695 = vmatprep.subr.bf16.mxu0 %v7948
    %8696 = vmatpush1.bf16.msra.mxu0 %v7947
    %8697 = vmatprep.subr.bf16.mxu0 %v7956
    %8698 = vmatpush1.bf16.msra.mxu0 %v7955
    %8699 = vmatprep.subr.bf16.mxu0 %v7964
    %8700 = vmatpush1.bf16.msra.mxu0 %v7963
    %8701 = vmatprep.subr.bf16.mxu0 %v7972
    %8702 = vmatpush1.bf16.msra.mxu0 %v7971
    %8703 = vmatprep.subr.bf16.mxu0 %v7980
    %8704 = vmatpush1.bf16.msra.mxu0 %v7979
    %8705 = vmatprep.subr.bf16.mxu0 %v7988
    %8706 = vmatpush1.bf16.msra.mxu0 %v7987
    %8707 = vmatprep.subr.bf16.mxu0 %v7996
    %8708 = vmatpush1.bf16.msra.mxu0 %v7995
    %8709 = vmatprep.mubr.bf16.mxu0 %v6164
    %8710 = vmatmul.mubr.bf16.gmra.mrb[0].mxu0 %v6163
    %v8711 = vpop.f32.mrb[0].mxu0
    %v8712 = vadd.f32 %v8671, %v8711
    %v8713 = vpop.f32.mrb[0].mxu0
    %v8714 = vadd.f32 %v8673, %v8713
    %v8715 = vpop.f32.mrb[0].mxu0
    %v8716 = vpop.f32.mrb[0].mxu0
    %8717 = vdwg.mxu0
    %8718 = vmatprep.subr.bf16.mxu0 %v8004
    %8719 = vmatpush1.bf16.msra.mxu0 %v8003
    %8720 = vmatprep.subr.bf16.mxu0 %v8012
    %8721 = vmatpush1.bf16.msra.mxu0 %v8011
    %8722 = vmatprep.subr.bf16.mxu0 %v8020
    %8723 = vmatpush1.bf16.msra.mxu0 %v8019
    %8724 = vmatprep.subr.bf16.mxu0 %v8028
    %8725 = vmatpush1.bf16.msra.mxu0 %v8027
    %8726 = vmatprep.subr.bf16.mxu0 %v8036
    %8727 = vmatpush1.bf16.msra.mxu0 %v8035
    %8728 = vmatprep.subr.bf16.mxu0 %v8044
    %8729 = vmatpush1.bf16.msra.mxu0 %v8043
    %8730 = vmatprep.subr.bf16.mxu0 %v8052
    %8731 = vmatpush1.bf16.msra.mxu0 %v8051
    %8732 = vmatprep.subr.bf16.mxu0 %v8060
    %8733 = vmatpush1.bf16.msra.mxu0 %v8059
    %8734 = vmatprep.subr.bf16.mxu0 %v8068
    %8735 = vmatpush1.bf16.msra.mxu0 %v8067
    %8736 = vmatprep.subr.bf16.mxu0 %v8076
    %8737 = vmatpush1.bf16.msra.mxu0 %v8075
    %8738 = vmatprep.subr.bf16.mxu0 %v8084
    %8739 = vmatpush1.bf16.msra.mxu0 %v8083
    %8740 = vmatprep.subr.bf16.mxu0 %v8092
    %8741 = vmatpush1.bf16.msra.mxu0 %v8091
    %8742 = vmatprep.subr.bf16.mxu0 %v8100
    %8743 = vmatpush1.bf16.msra.mxu0 %v8099
    %8744 = vmatprep.subr.bf16.mxu0 %v8108
    %8745 = vmatpush1.bf16.msra.mxu0 %v8107
    %8746 = vmatprep.subr.bf16.mxu0 %v8116
    %8747 = vmatpush1.bf16.msra.mxu0 %v8115
    %8748 = vmatprep.subr.bf16.mxu0 %v8124
    %8749 = vmatpush1.bf16.msra.mxu0 %v8123
    %8750 = vmatprep.mubr.bf16.mxu0 %v6166
    %8751 = vmatmul.mubr.bf16.gmra.mrb[0].mxu0 %v6165
    %v8752 = vpop.f32.mrb[0].mxu0
    %v8753 = vadd.f32 %v8712, %v8752
    %v8754 = vpop.f32.mrb[0].mxu0
    %v8755 = vadd.f32 %v8714, %v8754
    %v8756 = vpop.f32.mrb[0].mxu0
    %v8757 = vpop.f32.mrb[0].mxu0
    %8758 = vdwg.mxu0
    %8759 = vmatprep.subr.bf16.mxu0 %v7750
    %8760 = vmatpush1.bf16.msra.mxu0 %v7749
    %8761 = vmatprep.subr.bf16.mxu0 %v7758
    %8762 = vmatpush1.bf16.msra.mxu0 %v7757
    %8763 = vmatprep.subr.bf16.mxu0 %v7766
    %8764 = vmatpush1.bf16.msra.mxu0 %v7765
    %8765 = vmatprep.subr.bf16.mxu0 %v7774
    %8766 = vmatpush1.bf16.msra.mxu0 %v7773
    %8767 = vmatprep.subr.bf16.mxu0 %v7782
    %8768 = vmatpush1.bf16.msra.mxu0 %v7781
    %8769 = vmatprep.subr.bf16.mxu0 %v7790
    %8770 = vmatpush1.bf16.msra.mxu0 %v7789
    %8771 = vmatprep.subr.bf16.mxu0 %v7798
    %8772 = vmatpush1.bf16.msra.mxu0 %v7797
    %8773 = vmatprep.subr.bf16.mxu0 %v7806
    %8774 = vmatpush1.bf16.msra.mxu0 %v7805
    %8775 = vmatprep.subr.bf16.mxu0 %v7814
    %8776 = vmatpush1.bf16.msra.mxu0 %v7813
    %8777 = vmatprep.subr.bf16.mxu0 %v7822
    %8778 = vmatpush1.bf16.msra.mxu0 %v7821
    %8779 = vmatprep.subr.bf16.mxu0 %v7830
    %8780 = vmatpush1.bf16.msra.mxu0 %v7829
    %8781 = vmatprep.subr.bf16.mxu0 %v7838
    %8782 = vmatpush1.bf16.msra.mxu0 %v7837
    %8783 = vmatprep.subr.bf16.mxu0 %v7846
    %8784 = vmatpush1.bf16.msra.mxu0 %v7845
    %8785 = vmatprep.subr.bf16.mxu0 %v7854
    %8786 = vmatpush1.bf16.msra.mxu0 %v7853
    %8787 = vmatprep.subr.bf16.mxu0 %v7862
    %8788 = vmatpush1.bf16.msra.mxu0 %v7861
    %8789 = vmatprep.subr.bf16.mxu0 %v7870
    %8790 = vmatpush1.bf16.msra.mxu0 %v7869
    %8791 = vmatprep.mubr.bf16.mxu0 %v6162
    %8792 = vmatmul.mubr.bf16.gmra.mrb[0].mxu0 %v6161
    %v8793 = vpop.f32.mrb[0].mxu0
    %v8794 = vadd.f32 %v6572, %v8793
    %v8795 = vpop.f32.mrb[0].mxu0
    %v8796 = vadd.f32 %v6576, %v8795
    %v8797 = vpop.f32.mrb[0].mxu0
    %v8798 = vpop.f32.mrb[0].mxu0
    %8799 = vdwg.mxu0
    %8800 = vmatprep.subr.bf16.mxu0 %v7878
    %8801 = vmatpush1.bf16.msra.mxu0 %v7877
    %8802 = vmatprep.subr.bf16.mxu0 %v7886
    %8803 = vmatpush1.bf16.msra.mxu0 %v7885
    %8804 = vmatprep.subr.bf16.mxu0 %v7894
    %8805 = vmatpush1.bf16.msra.mxu0 %v7893
    %8806 = vmatprep.subr.bf16.mxu0 %v7902
    %8807 = vmatpush1.bf16.msra.mxu0 %v7901
    %8808 = vmatprep.subr.bf16.mxu0 %v7910
    %8809 = vmatpush1.bf16.msra.mxu0 %v7909
    %8810 = vmatprep.subr.bf16.mxu0 %v7918
    %8811 = vmatpush1.bf16.msra.mxu0 %v7917
    %8812 = vmatprep.subr.bf16.mxu0 %v7926
    %8813 = vmatpush1.bf16.msra.mxu0 %v7925
    %8814 = vmatprep.subr.bf16.mxu0 %v7934
    %8815 = vmatpush1.bf16.msra.mxu0 %v7933
    %8816 = vmatprep.subr.bf16.mxu0 %v7942
    %8817 = vmatpush1.bf16.msra.mxu0 %v7941
    %8818 = vmatprep.subr.bf16.mxu0 %v7950
    %8819 = vmatpush1.bf16.msra.mxu0 %v7949
    %8820 = vmatprep.subr.bf16.mxu0 %v7958
    %8821 = vmatpush1.bf16.msra.mxu0 %v7957
    %8822 = vmatprep.subr.bf16.mxu0 %v7966
    %8823 = vmatpush1.bf16.msra.mxu0 %v7965
    %8824 = vmatprep.subr.bf16.mxu0 %v7974
    %8825 = vmatpush1.bf16.msra.mxu0 %v7973
    %8826 = vmatprep.subr.bf16.mxu0 %v7982
    %8827 = vmatpush1.bf16.msra.mxu0 %v7981
    %8828 = vmatprep.subr.bf16.mxu0 %v7990
    %8829 = vmatpush1.bf16.msra.mxu0 %v7989
    %8830 = vmatprep.subr.bf16.mxu0 %v7998
    %8831 = vmatpush1.bf16.msra.mxu0 %v7997
    %8832 = vmatprep.mubr.bf16.mxu0 %v6164
    %8833 = vmatmul.mubr.bf16.gmra.mrb[0].mxu0 %v6163
    %v8834 = vpop.f32.mrb[0].mxu0
    %v8835 = vadd.f32 %v8794, %v8834
    %v8836 = vpop.f32.mrb[0].mxu0
    %v8837 = vadd.f32 %v8796, %v8836
    %v8838 = vpop.f32.mrb[0].mxu0
    %v8839 = vpop.f32.mrb[0].mxu0
    %8840 = vdwg.mxu0
    %8841 = vmatprep.subr.bf16.mxu0 %v8006
    %8842 = vmatpush1.bf16.msra.mxu0 %v8005
    %8843 = vmatprep.subr.bf16.mxu0 %v8014
    %8844 = vmatpush1.bf16.msra.mxu0 %v8013
    %8845 = vmatprep.subr.bf16.mxu0 %v8022
    %8846 = vmatpush1.bf16.msra.mxu0 %v8021
    %8847 = vmatprep.subr.bf16.mxu0 %v8030
    %8848 = vmatpush1.bf16.msra.mxu0 %v8029
    %8849 = vmatprep.subr.bf16.mxu0 %v8038
    %8850 = vmatpush1.bf16.msra.mxu0 %v8037
    %8851 = vmatprep.subr.bf16.mxu0 %v8046
    %8852 = vmatpush1.bf16.msra.mxu0 %v8045
    %8853 = vmatprep.subr.bf16.mxu0 %v8054
    %8854 = vmatpush1.bf16.msra.mxu0 %v8053
    %8855 = vmatprep.subr.bf16.mxu0 %v8062
    %8856 = vmatpush1.bf16.msra.mxu0 %v8061
    %8857 = vmatprep.subr.bf16.mxu0 %v8070
    %8858 = vmatpush1.bf16.msra.mxu0 %v8069
    %8859 = vmatprep.subr.bf16.mxu0 %v8078
    %8860 = vmatpush1.bf16.msra.mxu0 %v8077
    %8861 = vmatprep.subr.bf16.mxu0 %v8086
    %8862 = vmatpush1.bf16.msra.mxu0 %v8085
    %8863 = vmatprep.subr.bf16.mxu0 %v8094
    %8864 = vmatpush1.bf16.msra.mxu0 %v8093
    %8865 = vmatprep.subr.bf16.mxu0 %v8102
    %8866 = vmatpush1.bf16.msra.mxu0 %v8101
    %8867 = vmatprep.subr.bf16.mxu0 %v8110
    %8868 = vmatpush1.bf16.msra.mxu0 %v8109
    %8869 = vmatprep.subr.bf16.mxu0 %v8118
    %8870 = vmatpush1.bf16.msra.mxu0 %v8117
    %8871 = vmatprep.subr.bf16.mxu0 %v8126
    %8872 = vmatpush1.bf16.msra.mxu0 %v8125
    %8873 = vmatprep.mubr.bf16.mxu0 %v6166
    %8874 = vmatmul.mubr.bf16.gmra.mrb[0].mxu0 %v6165
    %v8875 = vpop.f32.mrb[0].mxu0
    %v8876 = vadd.f32 %v8835, %v8875
    %v8877 = vpop.f32.mrb[0].mxu0
    %v8878 = vadd.f32 %v8837, %v8877
    %v8879 = vpop.f32.mrb[0].mxu0
    %v8880 = vpop.f32.mrb[0].mxu0
    %8881 = vdwg.mxu0
    %8882 = vmatprep.subr.bf16.mxu0 %v7752
    %8883 = vmatpush1.bf16.msra.mxu0 %v7751
    %8884 = vmatprep.subr.bf16.mxu0 %v7760
    %8885 = vmatpush1.bf16.msra.mxu0 %v7759
    %8886 = vmatprep.subr.bf16.mxu0 %v7768
    %8887 = vmatpush1.bf16.msra.mxu0 %v7767
    %8888 = vmatprep.subr.bf16.mxu0 %v7776
    %8889 = vmatpush1.bf16.msra.mxu0 %v7775
    %8890 = vmatprep.subr.bf16.mxu0 %v7784
    %8891 = vmatpush1.bf16.msra.mxu0 %v7783
    %8892 = vmatprep.subr.bf16.mxu0 %v7792
    %8893 = vmatpush1.bf16.msra.mxu0 %v7791
    %8894 = vmatprep.subr.bf16.mxu0 %v7800
    %8895 = vmatpush1.bf16.msra.mxu0 %v7799
    %8896 = vmatprep.subr.bf16.mxu0 %v7808
    %8897 = vmatpush1.bf16.msra.mxu0 %v7807
    %8898 = vmatprep.subr.bf16.mxu0 %v7816
    %8899 = vmatpush1.bf16.msra.mxu0 %v7815
    %8900 = vmatprep.subr.bf16.mxu0 %v7824
    %8901 = vmatpush1.bf16.msra.mxu0 %v7823
    %8902 = vmatprep.subr.bf16.mxu0 %v7832
    %8903 = vmatpush1.bf16.msra.mxu0 %v7831
    %8904 = vmatprep.subr.bf16.mxu0 %v7840
    %8905 = vmatpush1.bf16.msra.mxu0 %v7839
    %8906 = vmatprep.subr.bf16.mxu0 %v7848
    %8907 = vmatpush1.bf16.msra.mxu0 %v7847
    %8908 = vmatprep.subr.bf16.mxu0 %v7856
    %8909 = vmatpush1.bf16.msra.mxu0 %v7855
    %8910 = vmatprep.subr.bf16.mxu0 %v7864
    %8911 = vmatpush1.bf16.msra.mxu0 %v7863
    %8912 = vmatprep.subr.bf16.mxu0 %v7872
    %8913 = vmatpush1.bf16.msra.mxu0 %v7871
    %8914 = vmatprep.mubr.bf16.mxu0 %v6162
    %8915 = vmatmul.mubr.bf16.gmra.mrb[0].mxu0 %v6161
    %v8916 = vpop.f32.mrb[0].mxu0
    %v8917 = vadd.f32 %v6580, %v8916
    %v8918 = vpop.f32.mrb[0].mxu0
    %v8919 = vadd.f32 %v6584, %v8918
    %v8920 = vpop.f32.mrb[0].mxu0
    %v8921 = vpop.f32.mrb[0].mxu0
    %8922 = vdwg.mxu0
    %8923 = vmatprep.subr.bf16.mxu0 %v7880
    %8924 = vmatpush1.bf16.msra.mxu0 %v7879
    %8925 = vmatprep.subr.bf16.mxu0 %v7888
    %8926 = vmatpush1.bf16.msra.mxu0 %v7887
    %8927 = vmatprep.subr.bf16.mxu0 %v7896
    %8928 = vmatpush1.bf16.msra.mxu0 %v7895
    %8929 = vmatprep.subr.bf16.mxu0 %v7904
    %8930 = vmatpush1.bf16.msra.mxu0 %v7903
    %8931 = vmatprep.subr.bf16.mxu0 %v7912
    %8932 = vmatpush1.bf16.msra.mxu0 %v7911
    %8933 = vmatprep.subr.bf16.mxu0 %v7920
    %8934 = vmatpush1.bf16.msra.mxu0 %v7919
    %8935 = vmatprep.subr.bf16.mxu0 %v7928
    %8936 = vmatpush1.bf16.msra.mxu0 %v7927
    %8937 = vmatprep.subr.bf16.mxu0 %v7936
    %8938 = vmatpush1.bf16.msra.mxu0 %v7935
    %8939 = vmatprep.subr.bf16.mxu0 %v7944
    %8940 = vmatpush1.bf16.msra.mxu0 %v7943
    %8941 = vmatprep.subr.bf16.mxu0 %v7952
    %8942 = vmatpush1.bf16.msra.mxu0 %v7951
    %8943 = vmatprep.subr.bf16.mxu0 %v7960
    %8944 = vmatpush1.bf16.msra.mxu0 %v7959
    %8945 = vmatprep.subr.bf16.mxu0 %v7968
    %8946 = vmatpush1.bf16.msra.mxu0 %v7967
    %8947 = vmatprep.subr.bf16.mxu0 %v7976
    %8948 = vmatpush1.bf16.msra.mxu0 %v7975
    %8949 = vmatprep.subr.bf16.mxu0 %v7984
    %8950 = vmatpush1.bf16.msra.mxu0 %v7983
    %8951 = vmatprep.subr.bf16.mxu0 %v7992
    %8952 = vmatpush1.bf16.msra.mxu0 %v7991
    %8953 = vmatprep.subr.bf16.mxu0 %v8000
    %8954 = vmatpush1.bf16.msra.mxu0 %v7999
    %8955 = vmatprep.mubr.bf16.mxu0 %v6164
    %8956 = vmatmul.mubr.bf16.gmra.mrb[0].mxu0 %v6163
    %v8957 = vpop.f32.mrb[0].mxu0
    %v8958 = vadd.f32 %v8917, %v8957
    %v8959 = vpop.f32.mrb[0].mxu0
    %v8960 = vadd.f32 %v8919, %v8959
    %v8961 = vpop.f32.mrb[0].mxu0
    %v8962 = vpop.f32.mrb[0].mxu0
    %8963 = vdwg.mxu0
    %8964 = vmatprep.subr.bf16.mxu0 %v8008
    %8965 = vmatpush1.bf16.msra.mxu0 %v8007
    %8966 = vmatprep.subr.bf16.mxu0 %v8016
    %8967 = vmatpush1.bf16.msra.mxu0 %v8015
    %8968 = vmatprep.subr.bf16.mxu0 %v8024
    %8969 = vmatpush1.bf16.msra.mxu0 %v8023
    %8970 = vmatprep.subr.bf16.mxu0 %v8032
    %8971 = vmatpush1.bf16.msra.mxu0 %v8031
    %8972 = vmatprep.subr.bf16.mxu0 %v8040
    %8973 = vmatpush1.bf16.msra.mxu0 %v8039
    %8974 = vmatprep.subr.bf16.mxu0 %v8048
    %8975 = vmatpush1.bf16.msra.mxu0 %v8047
    %8976 = vmatprep.subr.bf16.mxu0 %v8056
    %8977 = vmatpush1.bf16.msra.mxu0 %v8055
    %8978 = vmatprep.subr.bf16.mxu0 %v8064
    %8979 = vmatpush1.bf16.msra.mxu0 %v8063
    %8980 = vmatprep.subr.bf16.mxu0 %v8072
    %8981 = vmatpush1.bf16.msra.mxu0 %v8071
    %8982 = vmatprep.subr.bf16.mxu0 %v8080
    %8983 = vmatpush1.bf16.msra.mxu0 %v8079
    %8984 = vmatprep.subr.bf16.mxu0 %v8088
    %8985 = vmatpush1.bf16.msra.mxu0 %v8087
    %8986 = vmatprep.subr.bf16.mxu0 %v8096
    %8987 = vmatpush1.bf16.msra.mxu0 %v8095
    %8988 = vmatprep.subr.bf16.mxu0 %v8104
    %8989 = vmatpush1.bf16.msra.mxu0 %v8103
    %8990 = vmatprep.subr.bf16.mxu0 %v8112
    %8991 = vmatpush1.bf16.msra.mxu0 %v8111
    %8992 = vmatprep.subr.bf16.mxu0 %v8120
    %8993 = vmatpush1.bf16.msra.mxu0 %v8119
    %8994 = vmatprep.subr.bf16.mxu0 %v8128
    %8995 = vmatpush1.bf16.msra.mxu0 %v8127
    %8996 = vmatprep.mubr.bf16.mxu0 %v6166
    %8997 = vmatmul.mubr.bf16.gmra.mrb[0].mxu0 %v6165
    %v8998 = vpop.f32.mrb[0].mxu0
    %v8999 = vadd.f32 %v8958, %v8998
    %v9000 = vpop.f32.mrb[0].mxu0
    %v9001 = vadd.f32 %v8960, %v9000
    %v9002 = vpop.f32.mrb[0].mxu0
    %v9003 = vpop.f32.mrb[0].mxu0
    %9004 = vdwg.mxu0
    %v9005 = vld [vmem:[#allocation9] sm:$0xff]
    %v9007 = vlaneseq
    %v9008 = vshrl.u32 %v9007, 7
    %v9009 = vsub.s32 0, %v9008
    %v9010 = vrot.slane %v9005, %v9009
    %v9011 = vlaneseq
    %v9012 = vshrl.u32 %v9011, 7
    %v9013 = vsub.s32 1, %v9012
    %v9014 = vrot.slane %v9005, %v9013
    %v9015 = vlaneseq
    %v9016 = vshrl.u32 %v9015, 7
    %v9017 = vsub.s32 2, %v9016
    %v9018 = vrot.slane %v9005, %v9017
    %v9019 = vlaneseq
    %v9020 = vshrl.u32 %v9019, 7
    %v9021 = vsub.s32 3, %v9020
    %v9022 = vrot.slane %v9005, %v9021
    %v9023 = vlaneseq
    %v9024 = vshrl.u32 %v9023, 7
    %v9025 = vsub.s32 4, %v9024
    %v9026 = vrot.slane %v9005, %v9025
    %v9027 = vlaneseq
    %v9028 = vshrl.u32 %v9027, 7
    %v9029 = vsub.s32 5, %v9028
    %v9030 = vrot.slane %v9005, %v9029
    %v9031 = vlaneseq
    %v9032 = vshrl.u32 %v9031, 7
    %v9033 = vsub.s32 6, %v9032
    %v9034 = vrot.slane %v9005, %v9033
    %v9035 = vlaneseq
    %v9036 = vshrl.u32 %v9035, 7
    %v9037 = vsub.s32 7, %v9036
    %v9038 = vrot.slane %v9005, %v9037
    %v9047 = vmul.f32 %v8630, %v9010
    %v9048 = vmul.f32 %v8632, %v9014
    %v9049 = vmul.f32 %v8753, %v9018
    %v9050 = vmul.f32 %v8755, %v9022
    %v9051 = vmul.f32 %v8876, %v9026
    %v9052 = vmul.f32 %v8878, %v9030
    %v9053 = vmul.f32 %v8999, %v9034
    %v9054 = vmul.f32 %v9001, %v9038
    %v9055 = vld [vmem:[#allocation10] sm:$0xff]
    %v9057 = vlaneseq
    %v9058 = vshrl.u32 %v9057, 7
    %v9059 = vsub.s32 0, %v9058
    %v9060 = vrot.slane %v9055, %v9059
    %v9061 = vlaneseq
    %v9062 = vshrl.u32 %v9061, 7
    %v9063 = vsub.s32 1, %v9062
    %v9064 = vrot.slane %v9055, %v9063
    %v9065 = vlaneseq
    %v9066 = vshrl.u32 %v9065, 7
    %v9067 = vsub.s32 2, %v9066
    %v9068 = vrot.slane %v9055, %v9067
    %v9069 = vlaneseq
    %v9070 = vshrl.u32 %v9069, 7
    %v9071 = vsub.s32 3, %v9070
    %v9072 = vrot.slane %v9055, %v9071
    %v9073 = vlaneseq
    %v9074 = vshrl.u32 %v9073, 7
    %v9075 = vsub.s32 4, %v9074
    %v9076 = vrot.slane %v9055, %v9075
    %v9077 = vlaneseq
    %v9078 = vshrl.u32 %v9077, 7
    %v9079 = vsub.s32 5, %v9078
    %v9080 = vrot.slane %v9055, %v9079
    %v9081 = vlaneseq
    %v9082 = vshrl.u32 %v9081, 7
    %v9083 = vsub.s32 6, %v9082
    %v9084 = vrot.slane %v9055, %v9083
    %v9085 = vlaneseq
    %v9086 = vshrl.u32 %v9085, 7
    %v9087 = vsub.s32 7, %v9086
    %v9088 = vrot.slane %v9055, %v9087
    %v9097 = vadd.f32 %v9047, %v9060
    %v9098 = vadd.f32 %v9048, %v9064
    %v9099 = vadd.f32 %v9049, %v9068
    %v9100 = vadd.f32 %v9050, %v9072
    %v9101 = vadd.f32 %v9051, %v9076
    %v9102 = vadd.f32 %v9052, %v9080
    %v9103 = vadd.f32 %v9053, %v9084
    %v9104 = vadd.f32 %v9054, %v9088
    %vm9105 = vcmp.ge.f32.partialorder %v9097, 0.0
    %vm9106 = vcmp.ge.f32.partialorder %v9098, 0.0
    %vm9107 = vcmp.ge.f32.partialorder %v9099, 0.0
    %vm9108 = vcmp.ge.f32.partialorder %v9100, 0.0
    %vm9109 = vcmp.ge.f32.partialorder %v9101, 0.0
    %vm9110 = vcmp.ge.f32.partialorder %v9102, 0.0
    %vm9111 = vcmp.ge.f32.partialorder %v9103, 0.0
    %vm9112 = vcmp.ge.f32.partialorder %v9104, 0.0
    %v9113 = vmul.f32 %v9097, 0.2
    %v9114 = vmul.f32 %v9098, 0.2
    %v9115 = vmul.f32 %v9099, 0.2
    %v9116 = vmul.f32 %v9100, 0.2
    %v9117 = vmul.f32 %v9101, 0.2
    %v9118 = vmul.f32 %v9102, 0.2
    %v9119 = vmul.f32 %v9103, 0.2
    %v9120 = vmul.f32 %v9104, 0.2
    %v9121 = vsel %vm9105, %v9097, %v9113
    %v9122 = vsel %vm9106, %v9098, %v9114
    %v9123 = vsel %vm9107, %v9099, %v9115
    %v9124 = vsel %vm9108, %v9100, %v9116
    %v9125 = vsel %vm9109, %v9101, %v9117
    %v9126 = vsel %vm9110, %v9102, %v9118
    %v9127 = vsel %vm9111, %v9103, %v9119
    %v9128 = vsel %vm9112, %v9104, %v9120
    %v9129 = vpack.c.bf16 %v9121, %v9121
    %v9130 = vpack.c.bf16 %v9122, %v9122
    %v9131 = vpack.c.bf16 %v9123, %v9123
    %v9132 = vpack.c.bf16 %v9124, %v9124
    %v9133 = vpack.c.bf16 %v9125, %v9125
    %v9134 = vpack.c.bf16 %v9126, %v9126
    %v9135 = vpack.c.bf16 %v9127, %v9127
    %v9136 = vpack.c.bf16 %v9128, %v9128
    %v9137 = vld [vmem:[%s9] sm:$0xff]
    %v9138 = vld [vmem:[%s9 + $0x8] sm:$0xff]
    %v9139 = vld [vmem:[%s9 + $0x10] sm:$0xff]
    %v9140 = vld [vmem:[%s9 + $0x18] sm:$0xff]
    %v9141 = vld [vmem:[%s9 + $0x20] sm:$0xff]
    %v9142 = vld [vmem:[%s9 + $0x28] sm:$0xff]
    %v9143 = vld [vmem:[%s9 + $0x30] sm:$0xff]
    %v9144 = vld [vmem:[%s9 + $0x38] sm:$0xff]
    %v9145 = vld [vmem:[%s9 + $0x40] sm:$0xff]
    %v9146 = vld [vmem:[%s9 + $0x48] sm:$0xff]
    %v9147 = vld [vmem:[%s9 + $0x50] sm:$0xff]
    %v9148 = vld [vmem:[%s9 + $0x58] sm:$0xff]
    %v9149 = vld [vmem:[%s9 + $0x60] sm:$0xff]
    %v9150 = vld [vmem:[%s9 + $0x68] sm:$0xff]
    %v9151 = vld [vmem:[%s9 + $0x70] sm:$0xff]
    %v9152 = vld [vmem:[%s9 + $0x78] sm:$0xff]
    %v9153 = vld [vmem:[%s9 + $0x80] sm:$0xff]
    %v9154 = vld [vmem:[%s9 + $0x88] sm:$0xff]
    %v9155 = vld [vmem:[%s9 + $0x90] sm:$0xff]
    %v9156 = vld [vmem:[%s9 + $0x98] sm:$0xff]
    %v9157 = vld [vmem:[%s9 + $0xa0] sm:$0xff]
    %v9158 = vld [vmem:[%s9 + $0xa8] sm:$0xff]
    %v9159 = vld [vmem:[%s9 + $0xb0] sm:$0xff]
    %v9160 = vld [vmem:[%s9 + $0xb8] sm:$0xff]
    %v9161 = vld [vmem:[%s9 + $0xc0] sm:$0xff]
    %v9162 = vld [vmem:[%s9 + $0xc8] sm:$0xff]
    %v9163 = vld [vmem:[%s9 + $0xd0] sm:$0xff]
    %v9164 = vld [vmem:[%s9 + $0xd8] sm:$0xff]
    %v9165 = vld [vmem:[%s9 + $0xe0] sm:$0xff]
    %v9166 = vld [vmem:[%s9 + $0xe8] sm:$0xff]
    %v9167 = vld [vmem:[%s9 + $0xf0] sm:$0xff]
    %v9168 = vld [vmem:[%s9 + $0xf8] sm:$0xff]
    %v9169 = vld [vmem:[%s9 + $0x100] sm:$0xff]
    %v9170 = vld [vmem:[%s9 + $0x108] sm:$0xff]
    %v9171 = vld [vmem:[%s9 + $0x110] sm:$0xff]
    %v9172 = vld [vmem:[%s9 + $0x118] sm:$0xff]
    %v9173 = vld [vmem:[%s9 + $0x120] sm:$0xff]
    %v9174 = vld [vmem:[%s9 + $0x128] sm:$0xff]
    %v9175 = vld [vmem:[%s9 + $0x130] sm:$0xff]
    %v9176 = vld [vmem:[%s9 + $0x138] sm:$0xff]
    %v9177 = vld [vmem:[%s9 + $0x140] sm:$0xff]
    %v9178 = vld [vmem:[%s9 + $0x148] sm:$0xff]
    %v9179 = vld [vmem:[%s9 + $0x150] sm:$0xff]
    %v9180 = vld [vmem:[%s9 + $0x158] sm:$0xff]
    %v9181 = vld [vmem:[%s9 + $0x160] sm:$0xff]
    %v9182 = vld [vmem:[%s9 + $0x168] sm:$0xff]
    %v9183 = vld [vmem:[%s9 + $0x170] sm:$0xff]
    %v9184 = vld [vmem:[%s9 + $0x178] sm:$0xff]
    %v9185 = vld [vmem:[%s9 + $0x180] sm:$0xff]
    %v9186 = vld [vmem:[%s9 + $0x188] sm:$0xff]
    %v9187 = vld [vmem:[%s9 + $0x190] sm:$0xff]
    %v9188 = vld [vmem:[%s9 + $0x198] sm:$0xff]
    %v9189 = vld [vmem:[%s9 + $0x1a0] sm:$0xff]
    %v9190 = vld [vmem:[%s9 + $0x1a8] sm:$0xff]
    %v9191 = vld [vmem:[%s9 + $0x1b0] sm:$0xff]
    %v9192 = vld [vmem:[%s9 + $0x1b8] sm:$0xff]
    %v9193 = vld [vmem:[%s9 + $0x1c0] sm:$0xff]
    %v9194 = vld [vmem:[%s9 + $0x1c8] sm:$0xff]
    %v9195 = vld [vmem:[%s9 + $0x1d0] sm:$0xff]
    %v9196 = vld [vmem:[%s9 + $0x1d8] sm:$0xff]
    %v9197 = vld [vmem:[%s9 + $0x1e0] sm:$0xff]
    %v9198 = vld [vmem:[%s9 + $0x1e8] sm:$0xff]
    %v9199 = vld [vmem:[%s9 + $0x1f0] sm:$0xff]
    %v9200 = vld [vmem:[%s9 + $0x1f8] sm:$0xff]
    %v9201 = vld [vmem:[%s9 + $0x200] sm:$0xff]
    %v9202 = vld [vmem:[%s9 + $0x208] sm:$0xff]
    %v9203 = vld [vmem:[%s9 + $0x210] sm:$0xff]
    %v9204 = vld [vmem:[%s9 + $0x218] sm:$0xff]
    %v9205 = vld [vmem:[%s9 + $0x220] sm:$0xff]
    %v9206 = vld [vmem:[%s9 + $0x228] sm:$0xff]
    %v9207 = vld [vmem:[%s9 + $0x230] sm:$0xff]
    %v9208 = vld [vmem:[%s9 + $0x238] sm:$0xff]
    %v9209 = vld [vmem:[%s9 + $0x240] sm:$0xff]
    %v9210 = vld [vmem:[%s9 + $0x248] sm:$0xff]
    %v9211 = vld [vmem:[%s9 + $0x250] sm:$0xff]
    %v9212 = vld [vmem:[%s9 + $0x258] sm:$0xff]
    %v9213 = vld [vmem:[%s9 + $0x260] sm:$0xff]
    %v9214 = vld [vmem:[%s9 + $0x268] sm:$0xff]
    %v9215 = vld [vmem:[%s9 + $0x270] sm:$0xff]
    %v9216 = vld [vmem:[%s9 + $0x278] sm:$0xff]
    %v9217 = vld [vmem:[%s9 + $0x280] sm:$0xff]
    %v9218 = vld [vmem:[%s9 + $0x288] sm:$0xff]
    %v9219 = vld [vmem:[%s9 + $0x290] sm:$0xff]
    %v9220 = vld [vmem:[%s9 + $0x298] sm:$0xff]
    %v9221 = vld [vmem:[%s9 + $0x2a0] sm:$0xff]
    %v9222 = vld [vmem:[%s9 + $0x2a8] sm:$0xff]
    %v9223 = vld [vmem:[%s9 + $0x2b0] sm:$0xff]
    %v9224 = vld [vmem:[%s9 + $0x2b8] sm:$0xff]
    %v9225 = vld [vmem:[%s9 + $0x2c0] sm:$0xff]
    %v9226 = vld [vmem:[%s9 + $0x2c8] sm:$0xff]
    %v9227 = vld [vmem:[%s9 + $0x2d0] sm:$0xff]
    %v9228 = vld [vmem:[%s9 + $0x2d8] sm:$0xff]
    %v9229 = vld [vmem:[%s9 + $0x2e0] sm:$0xff]
    %v9230 = vld [vmem:[%s9 + $0x2e8] sm:$0xff]
    %v9231 = vld [vmem:[%s9 + $0x2f0] sm:$0xff]
    %v9232 = vld [vmem:[%s9 + $0x2f8] sm:$0xff]
    %v9233 = vld [vmem:[%s9 + $0x300] sm:$0xff]
    %v9234 = vld [vmem:[%s9 + $0x308] sm:$0xff]
    %v9235 = vld [vmem:[%s9 + $0x310] sm:$0xff]
    %v9236 = vld [vmem:[%s9 + $0x318] sm:$0xff]
    %v9237 = vld [vmem:[%s9 + $0x320] sm:$0xff]
    %v9238 = vld [vmem:[%s9 + $0x328] sm:$0xff]
    %v9239 = vld [vmem:[%s9 + $0x330] sm:$0xff]
    %v9240 = vld [vmem:[%s9 + $0x338] sm:$0xff]
    %v9241 = vld [vmem:[%s9 + $0x340] sm:$0xff]
    %v9242 = vld [vmem:[%s9 + $0x348] sm:$0xff]
    %v9243 = vld [vmem:[%s9 + $0x350] sm:$0xff]
    %v9244 = vld [vmem:[%s9 + $0x358] sm:$0xff]
    %v9245 = vld [vmem:[%s9 + $0x360] sm:$0xff]
    %v9246 = vld [vmem:[%s9 + $0x368] sm:$0xff]
    %v9247 = vld [vmem:[%s9 + $0x370] sm:$0xff]
    %v9248 = vld [vmem:[%s9 + $0x378] sm:$0xff]
    %v9249 = vld [vmem:[%s9 + $0x380] sm:$0xff]
    %v9250 = vld [vmem:[%s9 + $0x388] sm:$0xff]
    %v9251 = vld [vmem:[%s9 + $0x390] sm:$0xff]
    %v9252 = vld [vmem:[%s9 + $0x398] sm:$0xff]
    %v9253 = vld [vmem:[%s9 + $0x3a0] sm:$0xff]
    %v9254 = vld [vmem:[%s9 + $0x3a8] sm:$0xff]
    %v9255 = vld [vmem:[%s9 + $0x3b0] sm:$0xff]
    %v9256 = vld [vmem:[%s9 + $0x3b8] sm:$0xff]
    %v9257 = vld [vmem:[%s9 + $0x3c0] sm:$0xff]
    %v9258 = vld [vmem:[%s9 + $0x3c8] sm:$0xff]
    %v9259 = vld [vmem:[%s9 + $0x3d0] sm:$0xff]
    %v9260 = vld [vmem:[%s9 + $0x3d8] sm:$0xff]
    %v9261 = vld [vmem:[%s9 + $0x3e0] sm:$0xff]
    %v9262 = vld [vmem:[%s9 + $0x3e8] sm:$0xff]
    %v9263 = vld [vmem:[%s9 + $0x3f0] sm:$0xff]
    %v9264 = vld [vmem:[%s9 + $0x3f8] sm:$0xff]
    %v9265 = vld [vmem:[%s9 + $0x400] sm:$0xff]
    %v9266 = vld [vmem:[%s9 + $0x408] sm:$0xff]
    %v9267 = vld [vmem:[%s9 + $0x410] sm:$0xff]
    %v9268 = vld [vmem:[%s9 + $0x418] sm:$0xff]
    %v9269 = vld [vmem:[%s9 + $0x420] sm:$0xff]
    %v9270 = vld [vmem:[%s9 + $0x428] sm:$0xff]
    %v9271 = vld [vmem:[%s9 + $0x430] sm:$0xff]
    %v9272 = vld [vmem:[%s9 + $0x438] sm:$0xff]
    %v9273 = vld [vmem:[%s9 + $0x440] sm:$0xff]
    %v9274 = vld [vmem:[%s9 + $0x448] sm:$0xff]
    %v9275 = vld [vmem:[%s9 + $0x450] sm:$0xff]
    %v9276 = vld [vmem:[%s9 + $0x458] sm:$0xff]
    %v9277 = vld [vmem:[%s9 + $0x460] sm:$0xff]
    %v9278 = vld [vmem:[%s9 + $0x468] sm:$0xff]
    %v9279 = vld [vmem:[%s9 + $0x470] sm:$0xff]
    %v9280 = vld [vmem:[%s9 + $0x478] sm:$0xff]
    %v9281 = vld [vmem:[%s9 + $0x480] sm:$0xff]
    %v9282 = vld [vmem:[%s9 + $0x488] sm:$0xff]
    %v9283 = vld [vmem:[%s9 + $0x490] sm:$0xff]
    %v9284 = vld [vmem:[%s9 + $0x498] sm:$0xff]
    %v9285 = vld [vmem:[%s9 + $0x4a0] sm:$0xff]
    %v9286 = vld [vmem:[%s9 + $0x4a8] sm:$0xff]
    %v9287 = vld [vmem:[%s9 + $0x4b0] sm:$0xff]
    %v9288 = vld [vmem:[%s9 + $0x4b8] sm:$0xff]
    %v9289 = vld [vmem:[%s9 + $0x4c0] sm:$0xff]
    %v9290 = vld [vmem:[%s9 + $0x4c8] sm:$0xff]
    %v9291 = vld [vmem:[%s9 + $0x4d0] sm:$0xff]
    %v9292 = vld [vmem:[%s9 + $0x4d8] sm:$0xff]
    %v9293 = vld [vmem:[%s9 + $0x4e0] sm:$0xff]
    %v9294 = vld [vmem:[%s9 + $0x4e8] sm:$0xff]
    %v9295 = vld [vmem:[%s9 + $0x4f0] sm:$0xff]
    %v9296 = vld [vmem:[%s9 + $0x4f8] sm:$0xff]
    %v9297 = vld [vmem:[%s9 + $0x500] sm:$0xff]
    %v9298 = vld [vmem:[%s9 + $0x508] sm:$0xff]
    %v9299 = vld [vmem:[%s9 + $0x510] sm:$0xff]
    %v9300 = vld [vmem:[%s9 + $0x518] sm:$0xff]
    %v9301 = vld [vmem:[%s9 + $0x520] sm:$0xff]
    %v9302 = vld [vmem:[%s9 + $0x528] sm:$0xff]
    %v9303 = vld [vmem:[%s9 + $0x530] sm:$0xff]
    %v9304 = vld [vmem:[%s9 + $0x538] sm:$0xff]
    %v9305 = vld [vmem:[%s9 + $0x540] sm:$0xff]
    %v9306 = vld [vmem:[%s9 + $0x548] sm:$0xff]
    %v9307 = vld [vmem:[%s9 + $0x550] sm:$0xff]
    %v9308 = vld [vmem:[%s9 + $0x558] sm:$0xff]
    %v9309 = vld [vmem:[%s9 + $0x560] sm:$0xff]
    %v9310 = vld [vmem:[%s9 + $0x568] sm:$0xff]
    %v9311 = vld [vmem:[%s9 + $0x570] sm:$0xff]
    %v9312 = vld [vmem:[%s9 + $0x578] sm:$0xff]
    %v9313 = vld [vmem:[%s9 + $0x580] sm:$0xff]
    %v9314 = vld [vmem:[%s9 + $0x588] sm:$0xff]
    %v9315 = vld [vmem:[%s9 + $0x590] sm:$0xff]
    %v9316 = vld [vmem:[%s9 + $0x598] sm:$0xff]
    %v9317 = vld [vmem:[%s9 + $0x5a0] sm:$0xff]
    %v9318 = vld [vmem:[%s9 + $0x5a8] sm:$0xff]
    %v9319 = vld [vmem:[%s9 + $0x5b0] sm:$0xff]
    %v9320 = vld [vmem:[%s9 + $0x5b8] sm:$0xff]
    %v9321 = vld [vmem:[%s9 + $0x5c0] sm:$0xff]
    %v9322 = vld [vmem:[%s9 + $0x5c8] sm:$0xff]
    %v9323 = vld [vmem:[%s9 + $0x5d0] sm:$0xff]
    %v9324 = vld [vmem:[%s9 + $0x5d8] sm:$0xff]
    %v9325 = vld [vmem:[%s9 + $0x5e0] sm:$0xff]
    %v9326 = vld [vmem:[%s9 + $0x5e8] sm:$0xff]
    %v9327 = vld [vmem:[%s9 + $0x5f0] sm:$0xff]
    %v9328 = vld [vmem:[%s9 + $0x5f8] sm:$0xff]
    %v9329 = vld [vmem:[%s9 + $0x600] sm:$0xff]
    %v9330 = vld [vmem:[%s9 + $0x608] sm:$0xff]
    %v9331 = vld [vmem:[%s9 + $0x610] sm:$0xff]
    %v9332 = vld [vmem:[%s9 + $0x618] sm:$0xff]
    %v9333 = vld [vmem:[%s9 + $0x620] sm:$0xff]
    %v9334 = vld [vmem:[%s9 + $0x628] sm:$0xff]
    %v9335 = vld [vmem:[%s9 + $0x630] sm:$0xff]
    %v9336 = vld [vmem:[%s9 + $0x638] sm:$0xff]
    %v9337 = vld [vmem:[%s9 + $0x640] sm:$0xff]
    %v9338 = vld [vmem:[%s9 + $0x648] sm:$0xff]
    %v9339 = vld [vmem:[%s9 + $0x650] sm:$0xff]
    %v9340 = vld [vmem:[%s9 + $0x658] sm:$0xff]
    %v9341 = vld [vmem:[%s9 + $0x660] sm:$0xff]
    %v9342 = vld [vmem:[%s9 + $0x668] sm:$0xff]
    %v9343 = vld [vmem:[%s9 + $0x670] sm:$0xff]
    %v9344 = vld [vmem:[%s9 + $0x678] sm:$0xff]
    %v9345 = vld [vmem:[%s9 + $0x680] sm:$0xff]
    %v9346 = vld [vmem:[%s9 + $0x688] sm:$0xff]
    %v9347 = vld [vmem:[%s9 + $0x690] sm:$0xff]
    %v9348 = vld [vmem:[%s9 + $0x698] sm:$0xff]
    %v9349 = vld [vmem:[%s9 + $0x6a0] sm:$0xff]
    %v9350 = vld [vmem:[%s9 + $0x6a8] sm:$0xff]
    %v9351 = vld [vmem:[%s9 + $0x6b0] sm:$0xff]
    %v9352 = vld [vmem:[%s9 + $0x6b8] sm:$0xff]
    %v9353 = vld [vmem:[%s9 + $0x6c0] sm:$0xff]
    %v9354 = vld [vmem:[%s9 + $0x6c8] sm:$0xff]
    %v9355 = vld [vmem:[%s9 + $0x6d0] sm:$0xff]
    %v9356 = vld [vmem:[%s9 + $0x6d8] sm:$0xff]
    %v9357 = vld [vmem:[%s9 + $0x6e0] sm:$0xff]
    %v9358 = vld [vmem:[%s9 + $0x6e8] sm:$0xff]
    %v9359 = vld [vmem:[%s9 + $0x6f0] sm:$0xff]
    %v9360 = vld [vmem:[%s9 + $0x6f8] sm:$0xff]
    %v9361 = vld [vmem:[%s9 + $0x700] sm:$0xff]
    %v9362 = vld [vmem:[%s9 + $0x708] sm:$0xff]
    %v9363 = vld [vmem:[%s9 + $0x710] sm:$0xff]
    %v9364 = vld [vmem:[%s9 + $0x718] sm:$0xff]
    %v9365 = vld [vmem:[%s9 + $0x720] sm:$0xff]
    %v9366 = vld [vmem:[%s9 + $0x728] sm:$0xff]
    %v9367 = vld [vmem:[%s9 + $0x730] sm:$0xff]
    %v9368 = vld [vmem:[%s9 + $0x738] sm:$0xff]
    %v9369 = vld [vmem:[%s9 + $0x740] sm:$0xff]
    %v9370 = vld [vmem:[%s9 + $0x748] sm:$0xff]
    %v9371 = vld [vmem:[%s9 + $0x750] sm:$0xff]
    %v9372 = vld [vmem:[%s9 + $0x758] sm:$0xff]
    %v9373 = vld [vmem:[%s9 + $0x760] sm:$0xff]
    %v9374 = vld [vmem:[%s9 + $0x768] sm:$0xff]
    %v9375 = vld [vmem:[%s9 + $0x770] sm:$0xff]
    %v9376 = vld [vmem:[%s9 + $0x778] sm:$0xff]
    %v9377 = vld [vmem:[%s9 + $0x780] sm:$0xff]
    %v9378 = vld [vmem:[%s9 + $0x788] sm:$0xff]
    %v9379 = vld [vmem:[%s9 + $0x790] sm:$0xff]
    %v9380 = vld [vmem:[%s9 + $0x798] sm:$0xff]
    %v9381 = vld [vmem:[%s9 + $0x7a0] sm:$0xff]
    %v9382 = vld [vmem:[%s9 + $0x7a8] sm:$0xff]
    %v9383 = vld [vmem:[%s9 + $0x7b0] sm:$0xff]
    %v9384 = vld [vmem:[%s9 + $0x7b8] sm:$0xff]
    %v9385 = vld [vmem:[%s9 + $0x7c0] sm:$0xff]
    %v9386 = vld [vmem:[%s9 + $0x7c8] sm:$0xff]
    %v9387 = vld [vmem:[%s9 + $0x7d0] sm:$0xff]
    %v9388 = vld [vmem:[%s9 + $0x7d8] sm:$0xff]
    %v9389 = vld [vmem:[%s9 + $0x7e0] sm:$0xff]
    %v9390 = vld [vmem:[%s9 + $0x7e8] sm:$0xff]
    %v9391 = vld [vmem:[%s9 + $0x7f0] sm:$0xff]
    %v9392 = vld [vmem:[%s9 + $0x7f8] sm:$0xff]
    %v9393 = vld [vmem:[#allocation12] sm:$0xf]
    %v9395 = vlaneseq
    %v9396 = vshrl.u32 %v9395, 7
    %v9397 = vsub.s32 0, %v9396
    %v9398 = vrot.slane %v9393, %v9397
    %v9399 = vlaneseq
    %v9400 = vshrl.u32 %v9399, 7
    %v9401 = vsub.s32 1, %v9400
    %v9402 = vrot.slane %v9393, %v9401
    %v9403 = vlaneseq
    %v9404 = vshrl.u32 %v9403, 7
    %v9405 = vsub.s32 2, %v9404
    %v9406 = vrot.slane %v9393, %v9405
    %v9407 = vlaneseq
    %v9408 = vshrl.u32 %v9407, 7
    %v9409 = vsub.s32 3, %v9408
    %v9410 = vrot.slane %v9393, %v9409
    %v9671 = vunpack.c.l.b16 %v9137
    %v9672 = vunpack.c.h.b16 %v9137
    %v9673 = vunpack.c.l.b16 %v9138
    %v9674 = vunpack.c.h.b16 %v9138
    %v9675 = vunpack.c.l.b16 %v9139
    %v9676 = vunpack.c.h.b16 %v9139
    %v9677 = vunpack.c.l.b16 %v9140
    %v9678 = vunpack.c.h.b16 %v9140
    %v9679 = vunpack.c.l.b16 %v9141
    %v9680 = vunpack.c.h.b16 %v9141
    %v9681 = vunpack.c.l.b16 %v9142
    %v9682 = vunpack.c.h.b16 %v9142
    %v9683 = vunpack.c.l.b16 %v9143
    %v9684 = vunpack.c.h.b16 %v9143
    %v9685 = vunpack.c.l.b16 %v9144
    %v9686 = vunpack.c.h.b16 %v9144
    %v9687 = vunpack.c.l.b16 %v9145
    %v9688 = vunpack.c.h.b16 %v9145
    %v9689 = vunpack.c.l.b16 %v9146
    %v9690 = vunpack.c.h.b16 %v9146
    %v9691 = vunpack.c.l.b16 %v9147
    %v9692 = vunpack.c.h.b16 %v9147
    %v9693 = vunpack.c.l.b16 %v9148
    %v9694 = vunpack.c.h.b16 %v9148
    %v9695 = vunpack.c.l.b16 %v9149
    %v9696 = vunpack.c.h.b16 %v9149
    %v9697 = vunpack.c.l.b16 %v9150
    %v9698 = vunpack.c.h.b16 %v9150
    %v9699 = vunpack.c.l.b16 %v9151
    %v9700 = vunpack.c.h.b16 %v9151
    %v9701 = vunpack.c.l.b16 %v9152
    %v9702 = vunpack.c.h.b16 %v9152
    %v9703 = vunpack.c.l.b16 %v9153
    %v9704 = vunpack.c.h.b16 %v9153
    %v9705 = vunpack.c.l.b16 %v9154
    %v9706 = vunpack.c.h.b16 %v9154
    %v9707 = vunpack.c.l.b16 %v9155
    %v9708 = vunpack.c.h.b16 %v9155
    %v9709 = vunpack.c.l.b16 %v9156
    %v9710 = vunpack.c.h.b16 %v9156
    %v9711 = vunpack.c.l.b16 %v9157
    %v9712 = vunpack.c.h.b16 %v9157
    %v9713 = vunpack.c.l.b16 %v9158
    %v9714 = vunpack.c.h.b16 %v9158
    %v9715 = vunpack.c.l.b16 %v9159
    %v9716 = vunpack.c.h.b16 %v9159
    %v9717 = vunpack.c.l.b16 %v9160
    %v9718 = vunpack.c.h.b16 %v9160
    %v9719 = vunpack.c.l.b16 %v9161
    %v9720 = vunpack.c.h.b16 %v9161
    %v9721 = vunpack.c.l.b16 %v9162
    %v9722 = vunpack.c.h.b16 %v9162
    %v9723 = vunpack.c.l.b16 %v9163
    %v9724 = vunpack.c.h.b16 %v9163
    %v9725 = vunpack.c.l.b16 %v9164
    %v9726 = vunpack.c.h.b16 %v9164
    %v9727 = vunpack.c.l.b16 %v9165
    %v9728 = vunpack.c.h.b16 %v9165
    %v9729 = vunpack.c.l.b16 %v9166
    %v9730 = vunpack.c.h.b16 %v9166
    %v9731 = vunpack.c.l.b16 %v9167
    %v9732 = vunpack.c.h.b16 %v9167
    %v9733 = vunpack.c.l.b16 %v9168
    %v9734 = vunpack.c.h.b16 %v9168
    %v9735 = vunpack.c.l.b16 %v9169
    %v9736 = vunpack.c.h.b16 %v9169
    %v9737 = vunpack.c.l.b16 %v9170
    %v9738 = vunpack.c.h.b16 %v9170
    %v9739 = vunpack.c.l.b16 %v9171
    %v9740 = vunpack.c.h.b16 %v9171
    %v9741 = vunpack.c.l.b16 %v9172
    %v9742 = vunpack.c.h.b16 %v9172
    %v9743 = vunpack.c.l.b16 %v9173
    %v9744 = vunpack.c.h.b16 %v9173
    %v9745 = vunpack.c.l.b16 %v9174
    %v9746 = vunpack.c.h.b16 %v9174
    %v9747 = vunpack.c.l.b16 %v9175
    %v9748 = vunpack.c.h.b16 %v9175
    %v9749 = vunpack.c.l.b16 %v9176
    %v9750 = vunpack.c.h.b16 %v9176
    %v9751 = vunpack.c.l.b16 %v9177
    %v9752 = vunpack.c.h.b16 %v9177
    %v9753 = vunpack.c.l.b16 %v9178
    %v9754 = vunpack.c.h.b16 %v9178
    %v9755 = vunpack.c.l.b16 %v9179
    %v9756 = vunpack.c.h.b16 %v9179
    %v9757 = vunpack.c.l.b16 %v9180
    %v9758 = vunpack.c.h.b16 %v9180
    %v9759 = vunpack.c.l.b16 %v9181
    %v9760 = vunpack.c.h.b16 %v9181
    %v9761 = vunpack.c.l.b16 %v9182
    %v9762 = vunpack.c.h.b16 %v9182
    %v9763 = vunpack.c.l.b16 %v9183
    %v9764 = vunpack.c.h.b16 %v9183
    %v9765 = vunpack.c.l.b16 %v9184
    %v9766 = vunpack.c.h.b16 %v9184
    %v9767 = vunpack.c.l.b16 %v9185
    %v9768 = vunpack.c.h.b16 %v9185
    %v9769 = vunpack.c.l.b16 %v9186
    %v9770 = vunpack.c.h.b16 %v9186
    %v9771 = vunpack.c.l.b16 %v9187
    %v9772 = vunpack.c.h.b16 %v9187
    %v9773 = vunpack.c.l.b16 %v9188
    %v9774 = vunpack.c.h.b16 %v9188
    %v9775 = vunpack.c.l.b16 %v9189
    %v9776 = vunpack.c.h.b16 %v9189
    %v9777 = vunpack.c.l.b16 %v9190
    %v9778 = vunpack.c.h.b16 %v9190
    %v9779 = vunpack.c.l.b16 %v9191
    %v9780 = vunpack.c.h.b16 %v9191
    %v9781 = vunpack.c.l.b16 %v9192
    %v9782 = vunpack.c.h.b16 %v9192
    %v9783 = vunpack.c.l.b16 %v9193
    %v9784 = vunpack.c.h.b16 %v9193
    %v9785 = vunpack.c.l.b16 %v9194
    %v9786 = vunpack.c.h.b16 %v9194
    %v9787 = vunpack.c.l.b16 %v9195
    %v9788 = vunpack.c.h.b16 %v9195
    %v9789 = vunpack.c.l.b16 %v9196
    %v9790 = vunpack.c.h.b16 %v9196
    %v9791 = vunpack.c.l.b16 %v9197
    %v9792 = vunpack.c.h.b16 %v9197
    %v9793 = vunpack.c.l.b16 %v9198
    %v9794 = vunpack.c.h.b16 %v9198
    %v9795 = vunpack.c.l.b16 %v9199
    %v9796 = vunpack.c.h.b16 %v9199
    %v9797 = vunpack.c.l.b16 %v9200
    %v9798 = vunpack.c.h.b16 %v9200
    %v9799 = vunpack.c.l.b16 %v9201
    %v9800 = vunpack.c.h.b16 %v9201
    %v9801 = vunpack.c.l.b16 %v9202
    %v9802 = vunpack.c.h.b16 %v9202
    %v9803 = vunpack.c.l.b16 %v9203
    %v9804 = vunpack.c.h.b16 %v9203
    %v9805 = vunpack.c.l.b16 %v9204
    %v9806 = vunpack.c.h.b16 %v9204
    %v9807 = vunpack.c.l.b16 %v9205
    %v9808 = vunpack.c.h.b16 %v9205
    %v9809 = vunpack.c.l.b16 %v9206
    %v9810 = vunpack.c.h.b16 %v9206
    %v9811 = vunpack.c.l.b16 %v9207
    %v9812 = vunpack.c.h.b16 %v9207
    %v9813 = vunpack.c.l.b16 %v9208
    %v9814 = vunpack.c.h.b16 %v9208
    %v9815 = vunpack.c.l.b16 %v9209
    %v9816 = vunpack.c.h.b16 %v9209
    %v9817 = vunpack.c.l.b16 %v9210
    %v9818 = vunpack.c.h.b16 %v9210
    %v9819 = vunpack.c.l.b16 %v9211
    %v9820 = vunpack.c.h.b16 %v9211
    %v9821 = vunpack.c.l.b16 %v9212
    %v9822 = vunpack.c.h.b16 %v9212
    %v9823 = vunpack.c.l.b16 %v9213
    %v9824 = vunpack.c.h.b16 %v9213
    %v9825 = vunpack.c.l.b16 %v9214
    %v9826 = vunpack.c.h.b16 %v9214
    %v9827 = vunpack.c.l.b16 %v9215
    %v9828 = vunpack.c.h.b16 %v9215
    %v9829 = vunpack.c.l.b16 %v9216
    %v9830 = vunpack.c.h.b16 %v9216
    %v9831 = vunpack.c.l.b16 %v9217
    %v9832 = vunpack.c.h.b16 %v9217
    %v9833 = vunpack.c.l.b16 %v9218
    %v9834 = vunpack.c.h.b16 %v9218
    %v9835 = vunpack.c.l.b16 %v9219
    %v9836 = vunpack.c.h.b16 %v9219
    %v9837 = vunpack.c.l.b16 %v9220
    %v9838 = vunpack.c.h.b16 %v9220
    %v9839 = vunpack.c.l.b16 %v9221
    %v9840 = vunpack.c.h.b16 %v9221
    %v9841 = vunpack.c.l.b16 %v9222
    %v9842 = vunpack.c.h.b16 %v9222
    %v9843 = vunpack.c.l.b16 %v9223
    %v9844 = vunpack.c.h.b16 %v9223
    %v9845 = vunpack.c.l.b16 %v9224
    %v9846 = vunpack.c.h.b16 %v9224
    %v9847 = vunpack.c.l.b16 %v9225
    %v9848 = vunpack.c.h.b16 %v9225
    %v9849 = vunpack.c.l.b16 %v9226
    %v9850 = vunpack.c.h.b16 %v9226
    %v9851 = vunpack.c.l.b16 %v9227
    %v9852 = vunpack.c.h.b16 %v9227
    %v9853 = vunpack.c.l.b16 %v9228
    %v9854 = vunpack.c.h.b16 %v9228
    %v9855 = vunpack.c.l.b16 %v9229
    %v9856 = vunpack.c.h.b16 %v9229
    %v9857 = vunpack.c.l.b16 %v9230
    %v9858 = vunpack.c.h.b16 %v9230
    %v9859 = vunpack.c.l.b16 %v9231
    %v9860 = vunpack.c.h.b16 %v9231
    %v9861 = vunpack.c.l.b16 %v9232
    %v9862 = vunpack.c.h.b16 %v9232
    %v9863 = vunpack.c.l.b16 %v9233
    %v9864 = vunpack.c.h.b16 %v9233
    %v9865 = vunpack.c.l.b16 %v9234
    %v9866 = vunpack.c.h.b16 %v9234
    %v9867 = vunpack.c.l.b16 %v9235
    %v9868 = vunpack.c.h.b16 %v9235
    %v9869 = vunpack.c.l.b16 %v9236
    %v9870 = vunpack.c.h.b16 %v9236
    %v9871 = vunpack.c.l.b16 %v9237
    %v9872 = vunpack.c.h.b16 %v9237
    %v9873 = vunpack.c.l.b16 %v9238
    %v9874 = vunpack.c.h.b16 %v9238
    %v9875 = vunpack.c.l.b16 %v9239
    %v9876 = vunpack.c.h.b16 %v9239
    %v9877 = vunpack.c.l.b16 %v9240
    %v9878 = vunpack.c.h.b16 %v9240
    %v9879 = vunpack.c.l.b16 %v9241
    %v9880 = vunpack.c.h.b16 %v9241
    %v9881 = vunpack.c.l.b16 %v9242
    %v9882 = vunpack.c.h.b16 %v9242
    %v9883 = vunpack.c.l.b16 %v9243
    %v9884 = vunpack.c.h.b16 %v9243
    %v9885 = vunpack.c.l.b16 %v9244
    %v9886 = vunpack.c.h.b16 %v9244
    %v9887 = vunpack.c.l.b16 %v9245
    %v9888 = vunpack.c.h.b16 %v9245
    %v9889 = vunpack.c.l.b16 %v9246
    %v9890 = vunpack.c.h.b16 %v9246
    %v9891 = vunpack.c.l.b16 %v9247
    %v9892 = vunpack.c.h.b16 %v9247
    %v9893 = vunpack.c.l.b16 %v9248
    %v9894 = vunpack.c.h.b16 %v9248
    %v9895 = vunpack.c.l.b16 %v9249
    %v9896 = vunpack.c.h.b16 %v9249
    %v9897 = vunpack.c.l.b16 %v9250
    %v9898 = vunpack.c.h.b16 %v9250
    %v9899 = vunpack.c.l.b16 %v9251
    %v9900 = vunpack.c.h.b16 %v9251
    %v9901 = vunpack.c.l.b16 %v9252
    %v9902 = vunpack.c.h.b16 %v9252
    %v9903 = vunpack.c.l.b16 %v9253
    %v9904 = vunpack.c.h.b16 %v9253
    %v9905 = vunpack.c.l.b16 %v9254
    %v9906 = vunpack.c.h.b16 %v9254
    %v9907 = vunpack.c.l.b16 %v9255
    %v9908 = vunpack.c.h.b16 %v9255
    %v9909 = vunpack.c.l.b16 %v9256
    %v9910 = vunpack.c.h.b16 %v9256
    %v9911 = vunpack.c.l.b16 %v9257
    %v9912 = vunpack.c.h.b16 %v9257
    %v9913 = vunpack.c.l.b16 %v9258
    %v9914 = vunpack.c.h.b16 %v9258
    %v9915 = vunpack.c.l.b16 %v9259
    %v9916 = vunpack.c.h.b16 %v9259
    %v9917 = vunpack.c.l.b16 %v9260
    %v9918 = vunpack.c.h.b16 %v9260
    %v9919 = vunpack.c.l.b16 %v9261
    %v9920 = vunpack.c.h.b16 %v9261
    %v9921 = vunpack.c.l.b16 %v9262
    %v9922 = vunpack.c.h.b16 %v9262
    %v9923 = vunpack.c.l.b16 %v9263
    %v9924 = vunpack.c.h.b16 %v9263
    %v9925 = vunpack.c.l.b16 %v9264
    %v9926 = vunpack.c.h.b16 %v9264
    %v9927 = vunpack.c.l.b16 %v9265
    %v9928 = vunpack.c.h.b16 %v9265
    %v9929 = vunpack.c.l.b16 %v9266
    %v9930 = vunpack.c.h.b16 %v9266
    %v9931 = vunpack.c.l.b16 %v9267
    %v9932 = vunpack.c.h.b16 %v9267
    %v9933 = vunpack.c.l.b16 %v9268
    %v9934 = vunpack.c.h.b16 %v9268
    %v9935 = vunpack.c.l.b16 %v9269
    %v9936 = vunpack.c.h.b16 %v9269
    %v9937 = vunpack.c.l.b16 %v9270
    %v9938 = vunpack.c.h.b16 %v9270
    %v9939 = vunpack.c.l.b16 %v9271
    %v9940 = vunpack.c.h.b16 %v9271
    %v9941 = vunpack.c.l.b16 %v9272
    %v9942 = vunpack.c.h.b16 %v9272
    %v9943 = vunpack.c.l.b16 %v9273
    %v9944 = vunpack.c.h.b16 %v9273
    %v9945 = vunpack.c.l.b16 %v9274
    %v9946 = vunpack.c.h.b16 %v9274
    %v9947 = vunpack.c.l.b16 %v9275
    %v9948 = vunpack.c.h.b16 %v9275
    %v9949 = vunpack.c.l.b16 %v9276
    %v9950 = vunpack.c.h.b16 %v9276
    %v9951 = vunpack.c.l.b16 %v9277
    %v9952 = vunpack.c.h.b16 %v9277
    %v9953 = vunpack.c.l.b16 %v9278
    %v9954 = vunpack.c.h.b16 %v9278
    %v9955 = vunpack.c.l.b16 %v9279
    %v9956 = vunpack.c.h.b16 %v9279
    %v9957 = vunpack.c.l.b16 %v9280
    %v9958 = vunpack.c.h.b16 %v9280
    %v9959 = vunpack.c.l.b16 %v9281
    %v9960 = vunpack.c.h.b16 %v9281
    %v9961 = vunpack.c.l.b16 %v9282
    %v9962 = vunpack.c.h.b16 %v9282
    %v9963 = vunpack.c.l.b16 %v9283
    %v9964 = vunpack.c.h.b16 %v9283
    %v9965 = vunpack.c.l.b16 %v9284
    %v9966 = vunpack.c.h.b16 %v9284
    %v9967 = vunpack.c.l.b16 %v9285
    %v9968 = vunpack.c.h.b16 %v9285
    %v9969 = vunpack.c.l.b16 %v9286
    %v9970 = vunpack.c.h.b16 %v9286
    %v9971 = vunpack.c.l.b16 %v9287
    %v9972 = vunpack.c.h.b16 %v9287
    %v9973 = vunpack.c.l.b16 %v9288
    %v9974 = vunpack.c.h.b16 %v9288
    %v9975 = vunpack.c.l.b16 %v9289
    %v9976 = vunpack.c.h.b16 %v9289
    %v9977 = vunpack.c.l.b16 %v9290
    %v9978 = vunpack.c.h.b16 %v9290
    %v9979 = vunpack.c.l.b16 %v9291
    %v9980 = vunpack.c.h.b16 %v9291
    %v9981 = vunpack.c.l.b16 %v9292
    %v9982 = vunpack.c.h.b16 %v9292
    %v9983 = vunpack.c.l.b16 %v9293
    %v9984 = vunpack.c.h.b16 %v9293
    %v9985 = vunpack.c.l.b16 %v9294
    %v9986 = vunpack.c.h.b16 %v9294
    %v9987 = vunpack.c.l.b16 %v9295
    %v9988 = vunpack.c.h.b16 %v9295
    %v9989 = vunpack.c.l.b16 %v9296
    %v9990 = vunpack.c.h.b16 %v9296
    %v9991 = vunpack.c.l.b16 %v9297
    %v9992 = vunpack.c.h.b16 %v9297
    %v9993 = vunpack.c.l.b16 %v9298
    %v9994 = vunpack.c.h.b16 %v9298
    %v9995 = vunpack.c.l.b16 %v9299
    %v9996 = vunpack.c.h.b16 %v9299
    %v9997 = vunpack.c.l.b16 %v9300
    %v9998 = vunpack.c.h.b16 %v9300
    %v9999 = vunpack.c.l.b16 %v9301
    %v10000 = vunpack.c.h.b16 %v9301
    %v10001 = vunpack.c.l.b16 %v9302
    %v10002 = vunpack.c.h.b16 %v9302
    %v10003 = vunpack.c.l.b16 %v9303
    %v10004 = vunpack.c.h.b16 %v9303
    %v10005 = vunpack.c.l.b16 %v9304
    %v10006 = vunpack.c.h.b16 %v9304
    %v10007 = vunpack.c.l.b16 %v9305
    %v10008 = vunpack.c.h.b16 %v9305
    %v10009 = vunpack.c.l.b16 %v9306
    %v10010 = vunpack.c.h.b16 %v9306
    %v10011 = vunpack.c.l.b16 %v9307
    %v10012 = vunpack.c.h.b16 %v9307
    %v10013 = vunpack.c.l.b16 %v9308
    %v10014 = vunpack.c.h.b16 %v9308
    %v10015 = vunpack.c.l.b16 %v9309
    %v10016 = vunpack.c.h.b16 %v9309
    %v10017 = vunpack.c.l.b16 %v9310
    %v10018 = vunpack.c.h.b16 %v9310
    %v10019 = vunpack.c.l.b16 %v9311
    %v10020 = vunpack.c.h.b16 %v9311
    %v10021 = vunpack.c.l.b16 %v9312
    %v10022 = vunpack.c.h.b16 %v9312
    %v10023 = vunpack.c.l.b16 %v9313
    %v10024 = vunpack.c.h.b16 %v9313
    %v10025 = vunpack.c.l.b16 %v9314
    %v10026 = vunpack.c.h.b16 %v9314
    %v10027 = vunpack.c.l.b16 %v9315
    %v10028 = vunpack.c.h.b16 %v9315
    %v10029 = vunpack.c.l.b16 %v9316
    %v10030 = vunpack.c.h.b16 %v9316
    %v10031 = vunpack.c.l.b16 %v9317
    %v10032 = vunpack.c.h.b16 %v9317
    %v10033 = vunpack.c.l.b16 %v9318
    %v10034 = vunpack.c.h.b16 %v9318
    %v10035 = vunpack.c.l.b16 %v9319
    %v10036 = vunpack.c.h.b16 %v9319
    %v10037 = vunpack.c.l.b16 %v9320
    %v10038 = vunpack.c.h.b16 %v9320
    %v10039 = vunpack.c.l.b16 %v9321
    %v10040 = vunpack.c.h.b16 %v9321
    %v10041 = vunpack.c.l.b16 %v9322
    %v10042 = vunpack.c.h.b16 %v9322
    %v10043 = vunpack.c.l.b16 %v9323
    %v10044 = vunpack.c.h.b16 %v9323
    %v10045 = vunpack.c.l.b16 %v9324
    %v10046 = vunpack.c.h.b16 %v9324
    %v10047 = vunpack.c.l.b16 %v9325
    %v10048 = vunpack.c.h.b16 %v9325
    %v10049 = vunpack.c.l.b16 %v9326
    %v10050 = vunpack.c.h.b16 %v9326
    %v10051 = vunpack.c.l.b16 %v9327
    %v10052 = vunpack.c.h.b16 %v9327
    %v10053 = vunpack.c.l.b16 %v9328
    %v10054 = vunpack.c.h.b16 %v9328
    %v10055 = vunpack.c.l.b16 %v9329
    %v10056 = vunpack.c.h.b16 %v9329
    %v10057 = vunpack.c.l.b16 %v9330
    %v10058 = vunpack.c.h.b16 %v9330
    %v10059 = vunpack.c.l.b16 %v9331
    %v10060 = vunpack.c.h.b16 %v9331
    %v10061 = vunpack.c.l.b16 %v9332
    %v10062 = vunpack.c.h.b16 %v9332
    %v10063 = vunpack.c.l.b16 %v9333
    %v10064 = vunpack.c.h.b16 %v9333
    %v10065 = vunpack.c.l.b16 %v9334
    %v10066 = vunpack.c.h.b16 %v9334
    %v10067 = vunpack.c.l.b16 %v9335
    %v10068 = vunpack.c.h.b16 %v9335
    %v10069 = vunpack.c.l.b16 %v9336
    %v10070 = vunpack.c.h.b16 %v9336
    %v10071 = vunpack.c.l.b16 %v9337
    %v10072 = vunpack.c.h.b16 %v9337
    %v10073 = vunpack.c.l.b16 %v9338
    %v10074 = vunpack.c.h.b16 %v9338
    %v10075 = vunpack.c.l.b16 %v9339
    %v10076 = vunpack.c.h.b16 %v9339
    %v10077 = vunpack.c.l.b16 %v9340
    %v10078 = vunpack.c.h.b16 %v9340
    %v10079 = vunpack.c.l.b16 %v9341
    %v10080 = vunpack.c.h.b16 %v9341
    %v10081 = vunpack.c.l.b16 %v9342
    %v10082 = vunpack.c.h.b16 %v9342
    %v10083 = vunpack.c.l.b16 %v9343
    %v10084 = vunpack.c.h.b16 %v9343
    %v10085 = vunpack.c.l.b16 %v9344
    %v10086 = vunpack.c.h.b16 %v9344
    %v10087 = vunpack.c.l.b16 %v9345
    %v10088 = vunpack.c.h.b16 %v9345
    %v10089 = vunpack.c.l.b16 %v9346
    %v10090 = vunpack.c.h.b16 %v9346
    %v10091 = vunpack.c.l.b16 %v9347
    %v10092 = vunpack.c.h.b16 %v9347
    %v10093 = vunpack.c.l.b16 %v9348
    %v10094 = vunpack.c.h.b16 %v9348
    %v10095 = vunpack.c.l.b16 %v9349
    %v10096 = vunpack.c.h.b16 %v9349
    %v10097 = vunpack.c.l.b16 %v9350
    %v10098 = vunpack.c.h.b16 %v9350
    %v10099 = vunpack.c.l.b16 %v9351
    %v10100 = vunpack.c.h.b16 %v9351
    %v10101 = vunpack.c.l.b16 %v9352
    %v10102 = vunpack.c.h.b16 %v9352
    %v10103 = vunpack.c.l.b16 %v9353
    %v10104 = vunpack.c.h.b16 %v9353
    %v10105 = vunpack.c.l.b16 %v9354
    %v10106 = vunpack.c.h.b16 %v9354
    %v10107 = vunpack.c.l.b16 %v9355
    %v10108 = vunpack.c.h.b16 %v9355
    %v10109 = vunpack.c.l.b16 %v9356
    %v10110 = vunpack.c.h.b16 %v9356
    %v10111 = vunpack.c.l.b16 %v9357
    %v10112 = vunpack.c.h.b16 %v9357
    %v10113 = vunpack.c.l.b16 %v9358
    %v10114 = vunpack.c.h.b16 %v9358
    %v10115 = vunpack.c.l.b16 %v9359
    %v10116 = vunpack.c.h.b16 %v9359
    %v10117 = vunpack.c.l.b16 %v9360
    %v10118 = vunpack.c.h.b16 %v9360
    %v10119 = vunpack.c.l.b16 %v9361
    %v10120 = vunpack.c.h.b16 %v9361
    %v10121 = vunpack.c.l.b16 %v9362
    %v10122 = vunpack.c.h.b16 %v9362
    %v10123 = vunpack.c.l.b16 %v9363
    %v10124 = vunpack.c.h.b16 %v9363
    %v10125 = vunpack.c.l.b16 %v9364
    %v10126 = vunpack.c.h.b16 %v9364
    %v10127 = vunpack.c.l.b16 %v9365
    %v10128 = vunpack.c.h.b16 %v9365
    %v10129 = vunpack.c.l.b16 %v9366
    %v10130 = vunpack.c.h.b16 %v9366
    %v10131 = vunpack.c.l.b16 %v9367
    %v10132 = vunpack.c.h.b16 %v9367
    %v10133 = vunpack.c.l.b16 %v9368
    %v10134 = vunpack.c.h.b16 %v9368
    %v10135 = vunpack.c.l.b16 %v9369
    %v10136 = vunpack.c.h.b16 %v9369
    %v10137 = vunpack.c.l.b16 %v9370
    %v10138 = vunpack.c.h.b16 %v9370
    %v10139 = vunpack.c.l.b16 %v9371
    %v10140 = vunpack.c.h.b16 %v9371
    %v10141 = vunpack.c.l.b16 %v9372
    %v10142 = vunpack.c.h.b16 %v9372
    %v10143 = vunpack.c.l.b16 %v9373
    %v10144 = vunpack.c.h.b16 %v9373
    %v10145 = vunpack.c.l.b16 %v9374
    %v10146 = vunpack.c.h.b16 %v9374
    %v10147 = vunpack.c.l.b16 %v9375
    %v10148 = vunpack.c.h.b16 %v9375
    %v10149 = vunpack.c.l.b16 %v9376
    %v10150 = vunpack.c.h.b16 %v9376
    %v10151 = vunpack.c.l.b16 %v9377
    %v10152 = vunpack.c.h.b16 %v9377
    %v10153 = vunpack.c.l.b16 %v9378
    %v10154 = vunpack.c.h.b16 %v9378
    %v10155 = vunpack.c.l.b16 %v9379
    %v10156 = vunpack.c.h.b16 %v9379
    %v10157 = vunpack.c.l.b16 %v9380
    %v10158 = vunpack.c.h.b16 %v9380
    %v10159 = vunpack.c.l.b16 %v9381
    %v10160 = vunpack.c.h.b16 %v9381
    %v10161 = vunpack.c.l.b16 %v9382
    %v10162 = vunpack.c.h.b16 %v9382
    %v10163 = vunpack.c.l.b16 %v9383
    %v10164 = vunpack.c.h.b16 %v9383
    %v10165 = vunpack.c.l.b16 %v9384
    %v10166 = vunpack.c.h.b16 %v9384
    %v10167 = vunpack.c.l.b16 %v9385
    %v10168 = vunpack.c.h.b16 %v9385
    %v10169 = vunpack.c.l.b16 %v9386
    %v10170 = vunpack.c.h.b16 %v9386
    %v10171 = vunpack.c.l.b16 %v9387
    %v10172 = vunpack.c.h.b16 %v9387
    %v10173 = vunpack.c.l.b16 %v9388
    %v10174 = vunpack.c.h.b16 %v9388
    %v10175 = vunpack.c.l.b16 %v9389
    %v10176 = vunpack.c.h.b16 %v9389
    %v10177 = vunpack.c.l.b16 %v9390
    %v10178 = vunpack.c.h.b16 %v9390
    %v10179 = vunpack.c.l.b16 %v9391
    %v10180 = vunpack.c.h.b16 %v9391
    %v10181 = vunpack.c.l.b16 %v9392
    %v10182 = vunpack.c.h.b16 %v9392
    %v10183 = vpack.c.b16 %v9675, %v9671
    %v10184 = vpack.c.b16 %v9676, %v9672
    %v10185 = vpack.c.b16 %v9677, %v9673
    %v10186 = vpack.c.b16 %v9678, %v9674
    %v10187 = vpack.c.b16 %v9683, %v9679
    %v10188 = vpack.c.b16 %v9684, %v9680
    %v10189 = vpack.c.b16 %v9685, %v9681
    %v10190 = vpack.c.b16 %v9686, %v9682
    %v10191 = vpack.c.b16 %v9691, %v9687
    %v10192 = vpack.c.b16 %v9692, %v9688
    %v10193 = vpack.c.b16 %v9693, %v9689
    %v10194 = vpack.c.b16 %v9694, %v9690
    %v10195 = vpack.c.b16 %v9699, %v9695
    %v10196 = vpack.c.b16 %v9700, %v9696
    %v10197 = vpack.c.b16 %v9701, %v9697
    %v10198 = vpack.c.b16 %v9702, %v9698
    %v10199 = vpack.c.b16 %v9707, %v9703
    %v10200 = vpack.c.b16 %v9708, %v9704
    %v10201 = vpack.c.b16 %v9709, %v9705
    %v10202 = vpack.c.b16 %v9710, %v9706
    %v10203 = vpack.c.b16 %v9715, %v9711
    %v10204 = vpack.c.b16 %v9716, %v9712
    %v10205 = vpack.c.b16 %v9717, %v9713
    %v10206 = vpack.c.b16 %v9718, %v9714
    %v10207 = vpack.c.b16 %v9723, %v9719
    %v10208 = vpack.c.b16 %v9724, %v9720
    %v10209 = vpack.c.b16 %v9725, %v9721
    %v10210 = vpack.c.b16 %v9726, %v9722
    %v10211 = vpack.c.b16 %v9731, %v9727
    %v10212 = vpack.c.b16 %v9732, %v9728
    %v10213 = vpack.c.b16 %v9733, %v9729
    %v10214 = vpack.c.b16 %v9734, %v9730
    %v10215 = vpack.c.b16 %v9739, %v9735
    %v10216 = vpack.c.b16 %v9740, %v9736
    %v10217 = vpack.c.b16 %v9741, %v9737
    %v10218 = vpack.c.b16 %v9742, %v9738
    %v10219 = vpack.c.b16 %v9747, %v9743
    %v10220 = vpack.c.b16 %v9748, %v9744
    %v10221 = vpack.c.b16 %v9749, %v9745
    %v10222 = vpack.c.b16 %v9750, %v9746
    %v10223 = vpack.c.b16 %v9755, %v9751
    %v10224 = vpack.c.b16 %v9756, %v9752
    %v10225 = vpack.c.b16 %v9757, %v9753
    %v10226 = vpack.c.b16 %v9758, %v9754
    %v10227 = vpack.c.b16 %v9763, %v9759
    %v10228 = vpack.c.b16 %v9764, %v9760
    %v10229 = vpack.c.b16 %v9765, %v9761
    %v10230 = vpack.c.b16 %v9766, %v9762
    %v10231 = vpack.c.b16 %v9771, %v9767
    %v10232 = vpack.c.b16 %v9772, %v9768
    %v10233 = vpack.c.b16 %v9773, %v9769
    %v10234 = vpack.c.b16 %v9774, %v9770
    %v10235 = vpack.c.b16 %v9779, %v9775
    %v10236 = vpack.c.b16 %v9780, %v9776
    %v10237 = vpack.c.b16 %v9781, %v9777
    %v10238 = vpack.c.b16 %v9782, %v9778
    %v10239 = vpack.c.b16 %v9787, %v9783
    %v10240 = vpack.c.b16 %v9788, %v9784
    %v10241 = vpack.c.b16 %v9789, %v9785
    %v10242 = vpack.c.b16 %v9790, %v9786
    %v10243 = vpack.c.b16 %v9795, %v9791
    %v10244 = vpack.c.b16 %v9796, %v9792
    %v10245 = vpack.c.b16 %v9797, %v9793
    %v10246 = vpack.c.b16 %v9798, %v9794
    %v10247 = vpack.c.b16 %v9803, %v9799
    %v10248 = vpack.c.b16 %v9804, %v9800
    %v10249 = vpack.c.b16 %v9805, %v9801
    %v10250 = vpack.c.b16 %v9806, %v9802
    %v10251 = vpack.c.b16 %v9811, %v9807
    %v10252 = vpack.c.b16 %v9812, %v9808
    %v10253 = vpack.c.b16 %v9813, %v9809
    %v10254 = vpack.c.b16 %v9814, %v9810
    %v10255 = vpack.c.b16 %v9819, %v9815
    %v10256 = vpack.c.b16 %v9820, %v9816
    %v10257 = vpack.c.b16 %v9821, %v9817
    %v10258 = vpack.c.b16 %v9822, %v9818
    %v10259 = vpack.c.b16 %v9827, %v9823
    %v10260 = vpack.c.b16 %v9828, %v9824
    %v10261 = vpack.c.b16 %v9829, %v9825
    %v10262 = vpack.c.b16 %v9830, %v9826
    %v10263 = vpack.c.b16 %v9835, %v9831
    %v10264 = vpack.c.b16 %v9836, %v9832
    %v10265 = vpack.c.b16 %v9837, %v9833
    %v10266 = vpack.c.b16 %v9838, %v9834
    %v10267 = vpack.c.b16 %v9843, %v9839
    %v10268 = vpack.c.b16 %v9844, %v9840
    %v10269 = vpack.c.b16 %v9845, %v9841
    %v10270 = vpack.c.b16 %v9846, %v9842
    %v10271 = vpack.c.b16 %v9851, %v9847
    %v10272 = vpack.c.b16 %v9852, %v9848
    %v10273 = vpack.c.b16 %v9853, %v9849
    %v10274 = vpack.c.b16 %v9854, %v9850
    %v10275 = vpack.c.b16 %v9859, %v9855
    %v10276 = vpack.c.b16 %v9860, %v9856
    %v10277 = vpack.c.b16 %v9861, %v9857
    %v10278 = vpack.c.b16 %v9862, %v9858
    %v10279 = vpack.c.b16 %v9867, %v9863
    %v10280 = vpack.c.b16 %v9868, %v9864
    %v10281 = vpack.c.b16 %v9869, %v9865
    %v10282 = vpack.c.b16 %v9870, %v9866
    %v10283 = vpack.c.b16 %v9875, %v9871
    %v10284 = vpack.c.b16 %v9876, %v9872
    %v10285 = vpack.c.b16 %v9877, %v9873
    %v10286 = vpack.c.b16 %v9878, %v9874
    %v10287 = vpack.c.b16 %v9883, %v9879
    %v10288 = vpack.c.b16 %v9884, %v9880
    %v10289 = vpack.c.b16 %v9885, %v9881
    %v10290 = vpack.c.b16 %v9886, %v9882
    %v10291 = vpack.c.b16 %v9891, %v9887
    %v10292 = vpack.c.b16 %v9892, %v9888
    %v10293 = vpack.c.b16 %v9893, %v9889
    %v10294 = vpack.c.b16 %v9894, %v9890
    %v10295 = vpack.c.b16 %v9899, %v9895
    %v10296 = vpack.c.b16 %v9900, %v9896
    %v10297 = vpack.c.b16 %v9901, %v9897
    %v10298 = vpack.c.b16 %v9902, %v9898
    %v10299 = vpack.c.b16 %v9907, %v9903
    %v10300 = vpack.c.b16 %v9908, %v9904
    %v10301 = vpack.c.b16 %v9909, %v9905
    %v10302 = vpack.c.b16 %v9910, %v9906
    %v10303 = vpack.c.b16 %v9915, %v9911
    %v10304 = vpack.c.b16 %v9916, %v9912
    %v10305 = vpack.c.b16 %v9917, %v9913
    %v10306 = vpack.c.b16 %v9918, %v9914
    %v10307 = vpack.c.b16 %v9923, %v9919
    %v10308 = vpack.c.b16 %v9924, %v9920
    %v10309 = vpack.c.b16 %v9925, %v9921
    %v10310 = vpack.c.b16 %v9926, %v9922
    %v10311 = vpack.c.b16 %v9931, %v9927
    %v10312 = vpack.c.b16 %v9932, %v9928
    %v10313 = vpack.c.b16 %v9933, %v9929
    %v10314 = vpack.c.b16 %v9934, %v9930
    %v10315 = vpack.c.b16 %v9939, %v9935
    %v10316 = vpack.c.b16 %v9940, %v9936
    %v10317 = vpack.c.b16 %v9941, %v9937
    %v10318 = vpack.c.b16 %v9942, %v9938
    %v10319 = vpack.c.b16 %v9947, %v9943
    %v10320 = vpack.c.b16 %v9948, %v9944
    %v10321 = vpack.c.b16 %v9949, %v9945
    %v10322 = vpack.c.b16 %v9950, %v9946
    %v10323 = vpack.c.b16 %v9955, %v9951
    %v10324 = vpack.c.b16 %v9956, %v9952
    %v10325 = vpack.c.b16 %v9957, %v9953
    %v10326 = vpack.c.b16 %v9958, %v9954
    %v10327 = vpack.c.b16 %v9963, %v9959
    %v10328 = vpack.c.b16 %v9964, %v9960
    %v10329 = vpack.c.b16 %v9965, %v9961
    %v10330 = vpack.c.b16 %v9966, %v9962
    %v10331 = vpack.c.b16 %v9971, %v9967
    %v10332 = vpack.c.b16 %v9972, %v9968
    %v10333 = vpack.c.b16 %v9973, %v9969
    %v10334 = vpack.c.b16 %v9974, %v9970
    %v10335 = vpack.c.b16 %v9979, %v9975
    %v10336 = vpack.c.b16 %v9980, %v9976
    %v10337 = vpack.c.b16 %v9981, %v9977
    %v10338 = vpack.c.b16 %v9982, %v9978
    %v10339 = vpack.c.b16 %v9987, %v9983
    %v10340 = vpack.c.b16 %v9988, %v9984
    %v10341 = vpack.c.b16 %v9989, %v9985
    %v10342 = vpack.c.b16 %v9990, %v9986
    %v10343 = vpack.c.b16 %v9995, %v9991
    %v10344 = vpack.c.b16 %v9996, %v9992
    %v10345 = vpack.c.b16 %v9997, %v9993
    %v10346 = vpack.c.b16 %v9998, %v9994
    %v10347 = vpack.c.b16 %v10003, %v9999
    %v10348 = vpack.c.b16 %v10004, %v10000
    %v10349 = vpack.c.b16 %v10005, %v10001
    %v10350 = vpack.c.b16 %v10006, %v10002
    %v10351 = vpack.c.b16 %v10011, %v10007
    %v10352 = vpack.c.b16 %v10012, %v10008
    %v10353 = vpack.c.b16 %v10013, %v10009
    %v10354 = vpack.c.b16 %v10014, %v10010
    %v10355 = vpack.c.b16 %v10019, %v10015
    %v10356 = vpack.c.b16 %v10020, %v10016
    %v10357 = vpack.c.b16 %v10021, %v10017
    %v10358 = vpack.c.b16 %v10022, %v10018
    %v10359 = vpack.c.b16 %v10027, %v10023
    %v10360 = vpack.c.b16 %v10028, %v10024
    %v10361 = vpack.c.b16 %v10029, %v10025
    %v10362 = vpack.c.b16 %v10030, %v10026
    %v10363 = vpack.c.b16 %v10035, %v10031
    %v10364 = vpack.c.b16 %v10036, %v10032
    %v10365 = vpack.c.b16 %v10037, %v10033
    %v10366 = vpack.c.b16 %v10038, %v10034
    %v10367 = vpack.c.b16 %v10043, %v10039
    %v10368 = vpack.c.b16 %v10044, %v10040
    %v10369 = vpack.c.b16 %v10045, %v10041
    %v10370 = vpack.c.b16 %v10046, %v10042
    %v10371 = vpack.c.b16 %v10051, %v10047
    %v10372 = vpack.c.b16 %v10052, %v10048
    %v10373 = vpack.c.b16 %v10053, %v10049
    %v10374 = vpack.c.b16 %v10054, %v10050
    %v10375 = vpack.c.b16 %v10059, %v10055
    %v10376 = vpack.c.b16 %v10060, %v10056
    %v10377 = vpack.c.b16 %v10061, %v10057
    %v10378 = vpack.c.b16 %v10062, %v10058
    %v10379 = vpack.c.b16 %v10067, %v10063
    %v10380 = vpack.c.b16 %v10068, %v10064
    %v10381 = vpack.c.b16 %v10069, %v10065
    %v10382 = vpack.c.b16 %v10070, %v10066
    %v10383 = vpack.c.b16 %v10075, %v10071
    %v10384 = vpack.c.b16 %v10076, %v10072
    %v10385 = vpack.c.b16 %v10077, %v10073
    %v10386 = vpack.c.b16 %v10078, %v10074
    %v10387 = vpack.c.b16 %v10083, %v10079
    %v10388 = vpack.c.b16 %v10084, %v10080
    %v10389 = vpack.c.b16 %v10085, %v10081
    %v10390 = vpack.c.b16 %v10086, %v10082
    %v10391 = vpack.c.b16 %v10091, %v10087
    %v10392 = vpack.c.b16 %v10092, %v10088
    %v10393 = vpack.c.b16 %v10093, %v10089
    %v10394 = vpack.c.b16 %v10094, %v10090
    %v10395 = vpack.c.b16 %v10099, %v10095
    %v10396 = vpack.c.b16 %v10100, %v10096
    %v10397 = vpack.c.b16 %v10101, %v10097
    %v10398 = vpack.c.b16 %v10102, %v10098
    %v10399 = vpack.c.b16 %v10107, %v10103
    %v10400 = vpack.c.b16 %v10108, %v10104
    %v10401 = vpack.c.b16 %v10109, %v10105
    %v10402 = vpack.c.b16 %v10110, %v10106
    %v10403 = vpack.c.b16 %v10115, %v10111
    %v10404 = vpack.c.b16 %v10116, %v10112
    %v10405 = vpack.c.b16 %v10117, %v10113
    %v10406 = vpack.c.b16 %v10118, %v10114
    %v10407 = vpack.c.b16 %v10123, %v10119
    %v10408 = vpack.c.b16 %v10124, %v10120
    %v10409 = vpack.c.b16 %v10125, %v10121
    %v10410 = vpack.c.b16 %v10126, %v10122
    %v10411 = vpack.c.b16 %v10131, %v10127
    %v10412 = vpack.c.b16 %v10132, %v10128
    %v10413 = vpack.c.b16 %v10133, %v10129
    %v10414 = vpack.c.b16 %v10134, %v10130
    %v10415 = vpack.c.b16 %v10139, %v10135
    %v10416 = vpack.c.b16 %v10140, %v10136
    %v10417 = vpack.c.b16 %v10141, %v10137
    %v10418 = vpack.c.b16 %v10142, %v10138
    %v10419 = vpack.c.b16 %v10147, %v10143
    %v10420 = vpack.c.b16 %v10148, %v10144
    %v10421 = vpack.c.b16 %v10149, %v10145
    %v10422 = vpack.c.b16 %v10150, %v10146
    %v10423 = vpack.c.b16 %v10155, %v10151
    %v10424 = vpack.c.b16 %v10156, %v10152
    %v10425 = vpack.c.b16 %v10157, %v10153
    %v10426 = vpack.c.b16 %v10158, %v10154
    %v10427 = vpack.c.b16 %v10163, %v10159
    %v10428 = vpack.c.b16 %v10164, %v10160
    %v10429 = vpack.c.b16 %v10165, %v10161
    %v10430 = vpack.c.b16 %v10166, %v10162
    %v10431 = vpack.c.b16 %v10171, %v10167
    %v10432 = vpack.c.b16 %v10172, %v10168
    %v10433 = vpack.c.b16 %v10173, %v10169
    %v10434 = vpack.c.b16 %v10174, %v10170
    %v10435 = vpack.c.b16 %v10179, %v10175
    %v10436 = vpack.c.b16 %v10180, %v10176
    %v10437 = vpack.c.b16 %v10181, %v10177
    %v10438 = vpack.c.b16 %v10182, %v10178
    %10695 = vmatprep.subr.bf16.mxu0 %v10184
    %10696 = vmatpush1.bf16.msra.mxu0 %v10183
    %10697 = vmatprep.subr.bf16.mxu0 %v10188
    %10698 = vmatpush1.bf16.msra.mxu0 %v10187
    %10699 = vmatprep.subr.bf16.mxu0 %v10192
    %10700 = vmatpush1.bf16.msra.mxu0 %v10191
    %10701 = vmatprep.subr.bf16.mxu0 %v10196
    %10702 = vmatpush1.bf16.msra.mxu0 %v10195
    %10703 = vmatprep.subr.bf16.mxu0 %v10200
    %10704 = vmatpush1.bf16.msra.mxu0 %v10199
    %10705 = vmatprep.subr.bf16.mxu0 %v10204
    %10706 = vmatpush1.bf16.msra.mxu0 %v10203
    %10707 = vmatprep.subr.bf16.mxu0 %v10208
    %10708 = vmatpush1.bf16.msra.mxu0 %v10207
    %10709 = vmatprep.subr.bf16.mxu0 %v10212
    %10710 = vmatpush1.bf16.msra.mxu0 %v10211
    %10711 = vmatprep.subr.bf16.mxu0 %v10216
    %10712 = vmatpush1.bf16.msra.mxu0 %v10215
    %10713 = vmatprep.subr.bf16.mxu0 %v10220
    %10714 = vmatpush1.bf16.msra.mxu0 %v10219
    %10715 = vmatprep.subr.bf16.mxu0 %v10224
    %10716 = vmatpush1.bf16.msra.mxu0 %v10223
    %10717 = vmatprep.subr.bf16.mxu0 %v10228
    %10718 = vmatpush1.bf16.msra.mxu0 %v10227
    %10719 = vmatprep.subr.bf16.mxu0 %v10232
    %10720 = vmatpush1.bf16.msra.mxu0 %v10231
    %10721 = vmatprep.subr.bf16.mxu0 %v10236
    %10722 = vmatpush1.bf16.msra.mxu0 %v10235
    %10723 = vmatprep.subr.bf16.mxu0 %v10240
    %10724 = vmatpush1.bf16.msra.mxu0 %v10239
    %10725 = vmatprep.subr.bf16.mxu0 %v10244
    %10726 = vmatpush1.bf16.msra.mxu0 %v10243
    %10727 = vmatprep.mubr.bf16.mxu0 %v9130
    %10728 = vmatmul.mubr.bf16.gmra.mrb[0].mxu0 %v9129
    %v10729 = vpop.f32.mrb[0].mxu0
    %v10730 = vadd.f32 %v9398, %v10729
    %v10731 = vpop.f32.mrb[0].mxu0
    %v10732 = vadd.f32 %v9402, %v10731
    %v10733 = vpop.f32.mrb[0].mxu0
    %v10734 = vpop.f32.mrb[0].mxu0
    %10735 = vdwg.mxu0
    %10736 = vmatprep.subr.bf16.mxu0 %v10248
    %10737 = vmatpush1.bf16.msra.mxu0 %v10247
    %10738 = vmatprep.subr.bf16.mxu0 %v10252
    %10739 = vmatpush1.bf16.msra.mxu0 %v10251
    %10740 = vmatprep.subr.bf16.mxu0 %v10256
    %10741 = vmatpush1.bf16.msra.mxu0 %v10255
    %10742 = vmatprep.subr.bf16.mxu0 %v10260
    %10743 = vmatpush1.bf16.msra.mxu0 %v10259
    %10744 = vmatprep.subr.bf16.mxu0 %v10264
    %10745 = vmatpush1.bf16.msra.mxu0 %v10263
    %10746 = vmatprep.subr.bf16.mxu0 %v10268
    %10747 = vmatpush1.bf16.msra.mxu0 %v10267
    %10748 = vmatprep.subr.bf16.mxu0 %v10272
    %10749 = vmatpush1.bf16.msra.mxu0 %v10271
    %10750 = vmatprep.subr.bf16.mxu0 %v10276
    %10751 = vmatpush1.bf16.msra.mxu0 %v10275
    %10752 = vmatprep.subr.bf16.mxu0 %v10280
    %10753 = vmatpush1.bf16.msra.mxu0 %v10279
    %10754 = vmatprep.subr.bf16.mxu0 %v10284
    %10755 = vmatpush1.bf16.msra.mxu0 %v10283
    %10756 = vmatprep.subr.bf16.mxu0 %v10288
    %10757 = vmatpush1.bf16.msra.mxu0 %v10287
    %10758 = vmatprep.subr.bf16.mxu0 %v10292
    %10759 = vmatpush1.bf16.msra.mxu0 %v10291
    %10760 = vmatprep.subr.bf16.mxu0 %v10296
    %10761 = vmatpush1.bf16.msra.mxu0 %v10295
    %10762 = vmatprep.subr.bf16.mxu0 %v10300
    %10763 = vmatpush1.bf16.msra.mxu0 %v10299
    %10764 = vmatprep.subr.bf16.mxu0 %v10304
    %10765 = vmatpush1.bf16.msra.mxu0 %v10303
    %10766 = vmatprep.subr.bf16.mxu0 %v10308
    %10767 = vmatpush1.bf16.msra.mxu0 %v10307
    %10768 = vmatprep.mubr.bf16.mxu0 %v9132
    %10769 = vmatmul.mubr.bf16.gmra.mrb[0].mxu0 %v9131
    %v10770 = vpop.f32.mrb[0].mxu0
    %v10771 = vadd.f32 %v10730, %v10770
    %v10772 = vpop.f32.mrb[0].mxu0
    %v10773 = vadd.f32 %v10732, %v10772
    %v10774 = vpop.f32.mrb[0].mxu0
    %v10775 = vpop.f32.mrb[0].mxu0
    %10776 = vdwg.mxu0
    %10777 = vmatprep.subr.bf16.mxu0 %v10312
    %10778 = vmatpush1.bf16.msra.mxu0 %v10311
    %10779 = vmatprep.subr.bf16.mxu0 %v10316
    %10780 = vmatpush1.bf16.msra.mxu0 %v10315
    %10781 = vmatprep.subr.bf16.mxu0 %v10320
    %10782 = vmatpush1.bf16.msra.mxu0 %v10319
    %10783 = vmatprep.subr.bf16.mxu0 %v10324
    %10784 = vmatpush1.bf16.msra.mxu0 %v10323
    %10785 = vmatprep.subr.bf16.mxu0 %v10328
    %10786 = vmatpush1.bf16.msra.mxu0 %v10327
    %10787 = vmatprep.subr.bf16.mxu0 %v10332
    %10788 = vmatpush1.bf16.msra.mxu0 %v10331
    %10789 = vmatprep.subr.bf16.mxu0 %v10336
    %10790 = vmatpush1.bf16.msra.mxu0 %v10335
    %10791 = vmatprep.subr.bf16.mxu0 %v10340
    %10792 = vmatpush1.bf16.msra.mxu0 %v10339
    %10793 = vmatprep.subr.bf16.mxu0 %v10344
    %10794 = vmatpush1.bf16.msra.mxu0 %v10343
    %10795 = vmatprep.subr.bf16.mxu0 %v10348
    %10796 = vmatpush1.bf16.msra.mxu0 %v10347
    %10797 = vmatprep.subr.bf16.mxu0 %v10352
    %10798 = vmatpush1.bf16.msra.mxu0 %v10351
    %10799 = vmatprep.subr.bf16.mxu0 %v10356
    %10800 = vmatpush1.bf16.msra.mxu0 %v10355
    %10801 = vmatprep.subr.bf16.mxu0 %v10360
    %10802 = vmatpush1.bf16.msra.mxu0 %v10359
    %10803 = vmatprep.subr.bf16.mxu0 %v10364
    %10804 = vmatpush1.bf16.msra.mxu0 %v10363
    %10805 = vmatprep.subr.bf16.mxu0 %v10368
    %10806 = vmatpush1.bf16.msra.mxu0 %v10367
    %10807 = vmatprep.subr.bf16.mxu0 %v10372
    %10808 = vmatpush1.bf16.msra.mxu0 %v10371
    %10809 = vmatprep.mubr.bf16.mxu0 %v9134
    %10810 = vmatmul.mubr.bf16.gmra.mrb[0].mxu0 %v9133
    %v10811 = vpop.f32.mrb[0].mxu0
    %v10812 = vadd.f32 %v10771, %v10811
    %v10813 = vpop.f32.mrb[0].mxu0
    %v10814 = vadd.f32 %v10773, %v10813
    %v10815 = vpop.f32.mrb[0].mxu0
    %v10816 = vpop.f32.mrb[0].mxu0
    %10817 = vdwg.mxu0
    %10818 = vmatprep.subr.bf16.mxu0 %v10376
    %10819 = vmatpush1.bf16.msra.mxu0 %v10375
    %10820 = vmatprep.subr.bf16.mxu0 %v10380
    %10821 = vmatpush1.bf16.msra.mxu0 %v10379
    %10822 = vmatprep.subr.bf16.mxu0 %v10384
    %10823 = vmatpush1.bf16.msra.mxu0 %v10383
    %10824 = vmatprep.subr.bf16.mxu0 %v10388
    %10825 = vmatpush1.bf16.msra.mxu0 %v10387
    %10826 = vmatprep.subr.bf16.mxu0 %v10392
    %10827 = vmatpush1.bf16.msra.mxu0 %v10391
    %10828 = vmatprep.subr.bf16.mxu0 %v10396
    %10829 = vmatpush1.bf16.msra.mxu0 %v10395
    %10830 = vmatprep.subr.bf16.mxu0 %v10400
    %10831 = vmatpush1.bf16.msra.mxu0 %v10399
    %10832 = vmatprep.subr.bf16.mxu0 %v10404
    %10833 = vmatpush1.bf16.msra.mxu0 %v10403
    %10834 = vmatprep.subr.bf16.mxu0 %v10408
    %10835 = vmatpush1.bf16.msra.mxu0 %v10407
    %10836 = vmatprep.subr.bf16.mxu0 %v10412
    %10837 = vmatpush1.bf16.msra.mxu0 %v10411
    %10838 = vmatprep.subr.bf16.mxu0 %v10416
    %10839 = vmatpush1.bf16.msra.mxu0 %v10415
    %10840 = vmatprep.subr.bf16.mxu0 %v10420
    %10841 = vmatpush1.bf16.msra.mxu0 %v10419
    %10842 = vmatprep.subr.bf16.mxu0 %v10424
    %10843 = vmatpush1.bf16.msra.mxu0 %v10423
    %10844 = vmatprep.subr.bf16.mxu0 %v10428
    %10845 = vmatpush1.bf16.msra.mxu0 %v10427
    %10846 = vmatprep.subr.bf16.mxu0 %v10432
    %10847 = vmatpush1.bf16.msra.mxu0 %v10431
    %10848 = vmatprep.subr.bf16.mxu0 %v10436
    %10849 = vmatpush1.bf16.msra.mxu0 %v10435
    %10850 = vmatprep.mubr.bf16.mxu0 %v9136
    %10851 = vmatmul.mubr.bf16.gmra.mrb[0].mxu0 %v9135
    %v10852 = vpop.f32.mrb[0].mxu0
    %v10853 = vadd.f32 %v10812, %v10852
    %v10854 = vpop.f32.mrb[0].mxu0
    %v10855 = vadd.f32 %v10814, %v10854
    %v10856 = vpop.f32.mrb[0].mxu0
    %v10857 = vpop.f32.mrb[0].mxu0
    %10858 = vdwg.mxu0
    %10859 = vmatprep.subr.bf16.mxu0 %v10186
    %10860 = vmatpush1.bf16.msra.mxu0 %v10185
    %10861 = vmatprep.subr.bf16.mxu0 %v10190
    %10862 = vmatpush1.bf16.msra.mxu0 %v10189
    %10863 = vmatprep.subr.bf16.mxu0 %v10194
    %10864 = vmatpush1.bf16.msra.mxu0 %v10193
    %10865 = vmatprep.subr.bf16.mxu0 %v10198
    %10866 = vmatpush1.bf16.msra.mxu0 %v10197
    %10867 = vmatprep.subr.bf16.mxu0 %v10202
    %10868 = vmatpush1.bf16.msra.mxu0 %v10201
    %10869 = vmatprep.subr.bf16.mxu0 %v10206
    %10870 = vmatpush1.bf16.msra.mxu0 %v10205
    %10871 = vmatprep.subr.bf16.mxu0 %v10210
    %10872 = vmatpush1.bf16.msra.mxu0 %v10209
    %10873 = vmatprep.subr.bf16.mxu0 %v10214
    %10874 = vmatpush1.bf16.msra.mxu0 %v10213
    %10875 = vmatprep.subr.bf16.mxu0 %v10218
    %10876 = vmatpush1.bf16.msra.mxu0 %v10217
    %10877 = vmatprep.subr.bf16.mxu0 %v10222
    %10878 = vmatpush1.bf16.msra.mxu0 %v10221
    %10879 = vmatprep.subr.bf16.mxu0 %v10226
    %10880 = vmatpush1.bf16.msra.mxu0 %v10225
    %10881 = vmatprep.subr.bf16.mxu0 %v10230
    %10882 = vmatpush1.bf16.msra.mxu0 %v10229
    %10883 = vmatprep.subr.bf16.mxu0 %v10234
    %10884 = vmatpush1.bf16.msra.mxu0 %v10233
    %10885 = vmatprep.subr.bf16.mxu0 %v10238
    %10886 = vmatpush1.bf16.msra.mxu0 %v10237
    %10887 = vmatprep.subr.bf16.mxu0 %v10242
    %10888 = vmatpush1.bf16.msra.mxu0 %v10241
    %10889 = vmatprep.subr.bf16.mxu0 %v10246
    %10890 = vmatpush1.bf16.msra.mxu0 %v10245
    %10891 = vmatprep.mubr.bf16.mxu0 %v9130
    %10892 = vmatmul.mubr.bf16.gmra.mrb[0].mxu0 %v9129
    %v10893 = vpop.f32.mrb[0].mxu0
    %v10894 = vadd.f32 %v9406, %v10893
    %v10895 = vpop.f32.mrb[0].mxu0
    %v10896 = vadd.f32 %v9410, %v10895
    %v10897 = vpop.f32.mrb[0].mxu0
    %v10898 = vpop.f32.mrb[0].mxu0
    %10899 = vdwg.mxu0
    %10900 = vmatprep.subr.bf16.mxu0 %v10250
    %10901 = vmatpush1.bf16.msra.mxu0 %v10249
    %10902 = vmatprep.subr.bf16.mxu0 %v10254
    %10903 = vmatpush1.bf16.msra.mxu0 %v10253
    %10904 = vmatprep.subr.bf16.mxu0 %v10258
    %10905 = vmatpush1.bf16.msra.mxu0 %v10257
    %10906 = vmatprep.subr.bf16.mxu0 %v10262
    %10907 = vmatpush1.bf16.msra.mxu0 %v10261
    %10908 = vmatprep.subr.bf16.mxu0 %v10266
    %10909 = vmatpush1.bf16.msra.mxu0 %v10265
    %10910 = vmatprep.subr.bf16.mxu0 %v10270
    %10911 = vmatpush1.bf16.msra.mxu0 %v10269
    %10912 = vmatprep.subr.bf16.mxu0 %v10274
    %10913 = vmatpush1.bf16.msra.mxu0 %v10273
    %10914 = vmatprep.subr.bf16.mxu0 %v10278
    %10915 = vmatpush1.bf16.msra.mxu0 %v10277
    %10916 = vmatprep.subr.bf16.mxu0 %v10282
    %10917 = vmatpush1.bf16.msra.mxu0 %v10281
    %10918 = vmatprep.subr.bf16.mxu0 %v10286
    %10919 = vmatpush1.bf16.msra.mxu0 %v10285
    %10920 = vmatprep.subr.bf16.mxu0 %v10290
    %10921 = vmatpush1.bf16.msra.mxu0 %v10289
    %10922 = vmatprep.subr.bf16.mxu0 %v10294
    %10923 = vmatpush1.bf16.msra.mxu0 %v10293
    %10924 = vmatprep.subr.bf16.mxu0 %v10298
    %10925 = vmatpush1.bf16.msra.mxu0 %v10297
    %10926 = vmatprep.subr.bf16.mxu0 %v10302
    %10927 = vmatpush1.bf16.msra.mxu0 %v10301
    %10928 = vmatprep.subr.bf16.mxu0 %v10306
    %10929 = vmatpush1.bf16.msra.mxu0 %v10305
    %10930 = vmatprep.subr.bf16.mxu0 %v10310
    %10931 = vmatpush1.bf16.msra.mxu0 %v10309
    %10932 = vmatprep.mubr.bf16.mxu0 %v9132
    %10933 = vmatmul.mubr.bf16.gmra.mrb[0].mxu0 %v9131
    %v10934 = vpop.f32.mrb[0].mxu0
    %v10935 = vadd.f32 %v10894, %v10934
    %v10936 = vpop.f32.mrb[0].mxu0
    %v10937 = vadd.f32 %v10896, %v10936
    %v10938 = vpop.f32.mrb[0].mxu0
    %v10939 = vpop.f32.mrb[0].mxu0
    %10940 = vdwg.mxu0
    %10941 = vmatprep.subr.bf16.mxu0 %v10314
    %10942 = vmatpush1.bf16.msra.mxu0 %v10313
    %10943 = vmatprep.subr.bf16.mxu0 %v10318
    %10944 = vmatpush1.bf16.msra.mxu0 %v10317
    %10945 = vmatprep.subr.bf16.mxu0 %v10322
    %10946 = vmatpush1.bf16.msra.mxu0 %v10321
    %10947 = vmatprep.subr.bf16.mxu0 %v10326
    %10948 = vmatpush1.bf16.msra.mxu0 %v10325
    %10949 = vmatprep.subr.bf16.mxu0 %v10330
    %10950 = vmatpush1.bf16.msra.mxu0 %v10329
    %10951 = vmatprep.subr.bf16.mxu0 %v10334
    %10952 = vmatpush1.bf16.msra.mxu0 %v10333
    %10953 = vmatprep.subr.bf16.mxu0 %v10338
    %10954 = vmatpush1.bf16.msra.mxu0 %v10337
    %10955 = vmatprep.subr.bf16.mxu0 %v10342
    %10956 = vmatpush1.bf16.msra.mxu0 %v10341
    %10957 = vmatprep.subr.bf16.mxu0 %v10346
    %10958 = vmatpush1.bf16.msra.mxu0 %v10345
    %10959 = vmatprep.subr.bf16.mxu0 %v10350
    %10960 = vmatpush1.bf16.msra.mxu0 %v10349
    %10961 = vmatprep.subr.bf16.mxu0 %v10354
    %10962 = vmatpush1.bf16.msra.mxu0 %v10353
    %10963 = vmatprep.subr.bf16.mxu0 %v10358
    %10964 = vmatpush1.bf16.msra.mxu0 %v10357
    %10965 = vmatprep.subr.bf16.mxu0 %v10362
    %10966 = vmatpush1.bf16.msra.mxu0 %v10361
    %10967 = vmatprep.subr.bf16.mxu0 %v10366
    %10968 = vmatpush1.bf16.msra.mxu0 %v10365
    %10969 = vmatprep.subr.bf16.mxu0 %v10370
    %10970 = vmatpush1.bf16.msra.mxu0 %v10369
    %10971 = vmatprep.subr.bf16.mxu0 %v10374
    %10972 = vmatpush1.bf16.msra.mxu0 %v10373
    %10973 = vmatprep.mubr.bf16.mxu0 %v9134
    %10974 = vmatmul.mubr.bf16.gmra.mrb[0].mxu0 %v9133
    %v10975 = vpop.f32.mrb[0].mxu0
    %v10976 = vadd.f32 %v10935, %v10975
    %v10977 = vpop.f32.mrb[0].mxu0
    %v10978 = vadd.f32 %v10937, %v10977
    %v10979 = vpop.f32.mrb[0].mxu0
    %v10980 = vpop.f32.mrb[0].mxu0
    %10981 = vdwg.mxu0
    %10982 = vmatprep.subr.bf16.mxu0 %v10378
    %10983 = vmatpush1.bf16.msra.mxu0 %v10377
    %10984 = vmatprep.subr.bf16.mxu0 %v10382
    %10985 = vmatpush1.bf16.msra.mxu0 %v10381
    %10986 = vmatprep.subr.bf16.mxu0 %v10386
    %10987 = vmatpush1.bf16.msra.mxu0 %v10385
    %10988 = vmatprep.subr.bf16.mxu0 %v10390
    %10989 = vmatpush1.bf16.msra.mxu0 %v10389
    %10990 = vmatprep.subr.bf16.mxu0 %v10394
    %10991 = vmatpush1.bf16.msra.mxu0 %v10393
    %10992 = vmatprep.subr.bf16.mxu0 %v10398
    %10993 = vmatpush1.bf16.msra.mxu0 %v10397
    %10994 = vmatprep.subr.bf16.mxu0 %v10402
    %10995 = vmatpush1.bf16.msra.mxu0 %v10401
    %10996 = vmatprep.subr.bf16.mxu0 %v10406
    %10997 = vmatpush1.bf16.msra.mxu0 %v10405
    %10998 = vmatprep.subr.bf16.mxu0 %v10410
    %10999 = vmatpush1.bf16.msra.mxu0 %v10409
    %11000 = vmatprep.subr.bf16.mxu0 %v10414
    %11001 = vmatpush1.bf16.msra.mxu0 %v10413
    %11002 = vmatprep.subr.bf16.mxu0 %v10418
    %11003 = vmatpush1.bf16.msra.mxu0 %v10417
    %11004 = vmatprep.subr.bf16.mxu0 %v10422
    %11005 = vmatpush1.bf16.msra.mxu0 %v10421
    %11006 = vmatprep.subr.bf16.mxu0 %v10426
    %11007 = vmatpush1.bf16.msra.mxu0 %v10425
    %11008 = vmatprep.subr.bf16.mxu0 %v10430
    %11009 = vmatpush1.bf16.msra.mxu0 %v10429
    %11010 = vmatprep.subr.bf16.mxu0 %v10434
    %11011 = vmatpush1.bf16.msra.mxu0 %v10433
    %11012 = vmatprep.subr.bf16.mxu0 %v10438
    %11013 = vmatpush1.bf16.msra.mxu0 %v10437
    %11014 = vmatprep.mubr.bf16.mxu0 %v9136
    %11015 = vmatmul.mubr.bf16.gmra.mrb[0].mxu0 %v9135
    %v11016 = vpop.f32.mrb[0].mxu0
    %v11017 = vadd.f32 %v10976, %v11016
    %v11018 = vpop.f32.mrb[0].mxu0
    %v11019 = vadd.f32 %v10978, %v11018
    %v11020 = vpop.f32.mrb[0].mxu0
    %v11021 = vpop.f32.mrb[0].mxu0
    %11022 = vdwg.mxu0
    %v11023 = vld [vmem:[#allocation13] sm:$0xf]
    %v11025 = vlaneseq
    %v11026 = vshrl.u32 %v11025, 7
    %v11027 = vsub.s32 0, %v11026
    %v11028 = vrot.slane %v11023, %v11027
    %v11029 = vlaneseq
    %v11030 = vshrl.u32 %v11029, 7
    %v11031 = vsub.s32 1, %v11030
    %v11032 = vrot.slane %v11023, %v11031
    %v11033 = vlaneseq
    %v11034 = vshrl.u32 %v11033, 7
    %v11035 = vsub.s32 2, %v11034
    %v11036 = vrot.slane %v11023, %v11035
    %v11037 = vlaneseq
    %v11038 = vshrl.u32 %v11037, 7
    %v11039 = vsub.s32 3, %v11038
    %v11040 = vrot.slane %v11023, %v11039
    %v11045 = vmul.f32 %v10853, %v11028
    %v11046 = vmul.f32 %v10855, %v11032
    %v11047 = vmul.f32 %v11017, %v11036
    %v11048 = vmul.f32 %v11019, %v11040
    %v11049 = vld [vmem:[#allocation15] sm:$0xf]
    %v11051 = vlaneseq
    %v11052 = vshrl.u32 %v11051, 7
    %v11053 = vsub.s32 0, %v11052
    %v11054 = vrot.slane %v11049, %v11053
    %v11055 = vlaneseq
    %v11056 = vshrl.u32 %v11055, 7
    %v11057 = vsub.s32 1, %v11056
    %v11058 = vrot.slane %v11049, %v11057
    %v11059 = vlaneseq
    %v11060 = vshrl.u32 %v11059, 7
    %v11061 = vsub.s32 2, %v11060
    %v11062 = vrot.slane %v11049, %v11061
    %v11063 = vlaneseq
    %v11064 = vshrl.u32 %v11063, 7
    %v11065 = vsub.s32 3, %v11064
    %v11066 = vrot.slane %v11049, %v11065
    %v11071 = vadd.f32 %v11045, %v11054
    %v11072 = vadd.f32 %v11046, %v11058
    %v11073 = vadd.f32 %v11047, %v11062
    %v11074 = vadd.f32 %v11048, %v11066
    %vm11075 = vcmp.ge.f32.partialorder %v11071, 0.0
    %vm11076 = vcmp.ge.f32.partialorder %v11072, 0.0
    %vm11077 = vcmp.ge.f32.partialorder %v11073, 0.0
    %vm11078 = vcmp.ge.f32.partialorder %v11074, 0.0
    %v11079 = vmul.f32 %v11071, 0.2
    %v11080 = vmul.f32 %v11072, 0.2
    %v11081 = vmul.f32 %v11073, 0.2
    %v11082 = vmul.f32 %v11074, 0.2
    %v11083 = vsel %vm11075, %v11071, %v11079
    %v11084 = vsel %vm11076, %v11072, %v11080
    %v11085 = vsel %vm11077, %v11073, %v11081
    %v11086 = vsel %vm11078, %v11074, %v11082
    %v11087 = vpack.c.bf16 %v11083, %v11083
    %v11088 = vpack.c.bf16 %v11084, %v11084
    %v11089 = vpack.c.bf16 %v11085, %v11085
    %v11090 = vpack.c.bf16 %v11086, %v11086
    %v11091 = vld [vmem:[#allocation16] sm:$0xf]
    %v11092 = vld [vmem:[#allocation16 + $0x4] sm:$0xf]
    %v11093 = vld [vmem:[#allocation16 + $0x8] sm:$0xf]
    %v11094 = vld [vmem:[#allocation16 + $0xc] sm:$0xf]
    %v11095 = vld [vmem:[#allocation16 + $0x10] sm:$0xf]
    %v11096 = vld [vmem:[#allocation16 + $0x14] sm:$0xf]
    %v11097 = vld [vmem:[#allocation16 + $0x18] sm:$0xf]
    %v11098 = vld [vmem:[#allocation16 + $0x1c] sm:$0xf]
    %v11099 = vld [vmem:[#allocation16 + $0x20] sm:$0xf]
    %v11100 = vld [vmem:[#allocation16 + $0x24] sm:$0xf]
    %v11101 = vld [vmem:[#allocation16 + $0x28] sm:$0xf]
    %v11102 = vld [vmem:[#allocation16 + $0x2c] sm:$0xf]
    %v11103 = vld [vmem:[#allocation16 + $0x30] sm:$0xf]
    %v11104 = vld [vmem:[#allocation16 + $0x34] sm:$0xf]
    %v11105 = vld [vmem:[#allocation16 + $0x38] sm:$0xf]
    %v11106 = vld [vmem:[#allocation16 + $0x3c] sm:$0xf]
    %v11107 = vld [vmem:[#allocation16 + $0x40] sm:$0xf]
    %v11108 = vld [vmem:[#allocation16 + $0x44] sm:$0xf]
    %v11109 = vld [vmem:[#allocation16 + $0x48] sm:$0xf]
    %v11110 = vld [vmem:[#allocation16 + $0x4c] sm:$0xf]
    %v11111 = vld [vmem:[#allocation16 + $0x50] sm:$0xf]
    %v11112 = vld [vmem:[#allocation16 + $0x54] sm:$0xf]
    %v11113 = vld [vmem:[#allocation16 + $0x58] sm:$0xf]
    %v11114 = vld [vmem:[#allocation16 + $0x5c] sm:$0xf]
    %v11115 = vld [vmem:[#allocation16 + $0x60] sm:$0xf]
    %v11116 = vld [vmem:[#allocation16 + $0x64] sm:$0xf]
    %v11117 = vld [vmem:[#allocation16 + $0x68] sm:$0xf]
    %v11118 = vld [vmem:[#allocation16 + $0x6c] sm:$0xf]
    %v11119 = vld [vmem:[#allocation16 + $0x70] sm:$0xf]
    %v11120 = vld [vmem:[#allocation16 + $0x74] sm:$0xf]
    %v11121 = vld [vmem:[#allocation16 + $0x78] sm:$0xf]
    %v11122 = vld [vmem:[#allocation16 + $0x7c] sm:$0xf]
    %v11123 = vld [vmem:[#allocation16 + $0x80] sm:$0xf]
    %v11124 = vld [vmem:[#allocation16 + $0x84] sm:$0xf]
    %v11125 = vld [vmem:[#allocation16 + $0x88] sm:$0xf]
    %v11126 = vld [vmem:[#allocation16 + $0x8c] sm:$0xf]
    %v11127 = vld [vmem:[#allocation16 + $0x90] sm:$0xf]
    %v11128 = vld [vmem:[#allocation16 + $0x94] sm:$0xf]
    %v11129 = vld [vmem:[#allocation16 + $0x98] sm:$0xf]
    %v11130 = vld [vmem:[#allocation16 + $0x9c] sm:$0xf]
    %v11131 = vld [vmem:[#allocation16 + $0xa0] sm:$0xf]
    %v11132 = vld [vmem:[#allocation16 + $0xa4] sm:$0xf]
    %v11133 = vld [vmem:[#allocation16 + $0xa8] sm:$0xf]
    %v11134 = vld [vmem:[#allocation16 + $0xac] sm:$0xf]
    %v11135 = vld [vmem:[#allocation16 + $0xb0] sm:$0xf]
    %v11136 = vld [vmem:[#allocation16 + $0xb4] sm:$0xf]
    %v11137 = vld [vmem:[#allocation16 + $0xb8] sm:$0xf]
    %v11138 = vld [vmem:[#allocation16 + $0xbc] sm:$0xf]
    %v11139 = vld [vmem:[#allocation16 + $0xc0] sm:$0xf]
    %v11140 = vld [vmem:[#allocation16 + $0xc4] sm:$0xf]
    %v11141 = vld [vmem:[#allocation16 + $0xc8] sm:$0xf]
    %v11142 = vld [vmem:[#allocation16 + $0xcc] sm:$0xf]
    %v11143 = vld [vmem:[#allocation16 + $0xd0] sm:$0xf]
    %v11144 = vld [vmem:[#allocation16 + $0xd4] sm:$0xf]
    %v11145 = vld [vmem:[#allocation16 + $0xd8] sm:$0xf]
    %v11146 = vld [vmem:[#allocation16 + $0xdc] sm:$0xf]
    %v11147 = vld [vmem:[#allocation16 + $0xe0] sm:$0xf]
    %v11148 = vld [vmem:[#allocation16 + $0xe4] sm:$0xf]
    %v11149 = vld [vmem:[#allocation16 + $0xe8] sm:$0xf]
    %v11150 = vld [vmem:[#allocation16 + $0xec] sm:$0xf]
    %v11151 = vld [vmem:[#allocation16 + $0xf0] sm:$0xf]
    %v11152 = vld [vmem:[#allocation16 + $0xf4] sm:$0xf]
    %v11153 = vld [vmem:[#allocation16 + $0xf8] sm:$0xf]
    %v11154 = vld [vmem:[#allocation16 + $0xfc] sm:$0xf]
    %v11155 = vld [vmem:[#allocation18] sm:$0x1]
    %v11157 = vlaneseq
    %v11158 = vshrl.u32 %v11157, 7
    %v11159 = vsub.s32 0, %v11158
    %v11160 = vrot.slane %v11155, %v11159
    %v11226 = vunpack.c.l.b16 %v11091
    %v11227 = vunpack.c.l.b16 %v11092
    %v11228 = vunpack.c.l.b16 %v11093
    %v11229 = vunpack.c.l.b16 %v11094
    %v11230 = vunpack.c.l.b16 %v11095
    %v11231 = vunpack.c.l.b16 %v11096
    %v11232 = vunpack.c.l.b16 %v11097
    %v11233 = vunpack.c.l.b16 %v11098
    %v11234 = vunpack.c.l.b16 %v11099
    %v11235 = vunpack.c.l.b16 %v11100
    %v11236 = vunpack.c.l.b16 %v11101
    %v11237 = vunpack.c.l.b16 %v11102
    %v11238 = vunpack.c.l.b16 %v11103
    %v11239 = vunpack.c.l.b16 %v11104
    %v11240 = vunpack.c.l.b16 %v11105
    %v11241 = vunpack.c.l.b16 %v11106
    %v11242 = vunpack.c.l.b16 %v11107
    %v11243 = vunpack.c.l.b16 %v11108
    %v11244 = vunpack.c.l.b16 %v11109
    %v11245 = vunpack.c.l.b16 %v11110
    %v11246 = vunpack.c.l.b16 %v11111
    %v11247 = vunpack.c.l.b16 %v11112
    %v11248 = vunpack.c.l.b16 %v11113
    %v11249 = vunpack.c.l.b16 %v11114
    %v11250 = vunpack.c.l.b16 %v11115
    %v11251 = vunpack.c.l.b16 %v11116
    %v11252 = vunpack.c.l.b16 %v11117
    %v11253 = vunpack.c.l.b16 %v11118
    %v11254 = vunpack.c.l.b16 %v11119
    %v11255 = vunpack.c.l.b16 %v11120
    %v11256 = vunpack.c.l.b16 %v11121
    %v11257 = vunpack.c.l.b16 %v11122
    %v11258 = vunpack.c.l.b16 %v11123
    %v11259 = vunpack.c.l.b16 %v11124
    %v11260 = vunpack.c.l.b16 %v11125
    %v11261 = vunpack.c.l.b16 %v11126
    %v11262 = vunpack.c.l.b16 %v11127
    %v11263 = vunpack.c.l.b16 %v11128
    %v11264 = vunpack.c.l.b16 %v11129
    %v11265 = vunpack.c.l.b16 %v11130
    %v11266 = vunpack.c.l.b16 %v11131
    %v11267 = vunpack.c.l.b16 %v11132
    %v11268 = vunpack.c.l.b16 %v11133
    %v11269 = vunpack.c.l.b16 %v11134
    %v11270 = vunpack.c.l.b16 %v11135
    %v11271 = vunpack.c.l.b16 %v11136
    %v11272 = vunpack.c.l.b16 %v11137
    %v11273 = vunpack.c.l.b16 %v11138
    %v11274 = vunpack.c.l.b16 %v11139
    %v11275 = vunpack.c.l.b16 %v11140
    %v11276 = vunpack.c.l.b16 %v11141
    %v11277 = vunpack.c.l.b16 %v11142
    %v11278 = vunpack.c.l.b16 %v11143
    %v11279 = vunpack.c.l.b16 %v11144
    %v11280 = vunpack.c.l.b16 %v11145
    %v11281 = vunpack.c.l.b16 %v11146
    %v11282 = vunpack.c.l.b16 %v11147
    %v11283 = vunpack.c.l.b16 %v11148
    %v11284 = vunpack.c.l.b16 %v11149
    %v11285 = vunpack.c.l.b16 %v11150
    %v11286 = vunpack.c.l.b16 %v11151
    %v11287 = vunpack.c.l.b16 %v11152
    %v11288 = vunpack.c.l.b16 %v11153
    %v11289 = vunpack.c.l.b16 %v11154
    %v11290 = vpack.c.b16 %v11227, %v11226
    %v11291 = vpack.c.b16 %v11229, %v11228
    %v11292 = vpack.c.b16 %v11231, %v11230
    %v11293 = vpack.c.b16 %v11233, %v11232
    %v11294 = vpack.c.b16 %v11235, %v11234
    %v11295 = vpack.c.b16 %v11237, %v11236
    %v11296 = vpack.c.b16 %v11239, %v11238
    %v11297 = vpack.c.b16 %v11241, %v11240
    %v11298 = vpack.c.b16 %v11243, %v11242
    %v11299 = vpack.c.b16 %v11245, %v11244
    %v11300 = vpack.c.b16 %v11247, %v11246
    %v11301 = vpack.c.b16 %v11249, %v11248
    %v11302 = vpack.c.b16 %v11251, %v11250
    %v11303 = vpack.c.b16 %v11253, %v11252
    %v11304 = vpack.c.b16 %v11255, %v11254
    %v11305 = vpack.c.b16 %v11257, %v11256
    %v11306 = vpack.c.b16 %v11259, %v11258
    %v11307 = vpack.c.b16 %v11261, %v11260
    %v11308 = vpack.c.b16 %v11263, %v11262
    %v11309 = vpack.c.b16 %v11265, %v11264
    %v11310 = vpack.c.b16 %v11267, %v11266
    %v11311 = vpack.c.b16 %v11269, %v11268
    %v11312 = vpack.c.b16 %v11271, %v11270
    %v11313 = vpack.c.b16 %v11273, %v11272
    %v11314 = vpack.c.b16 %v11275, %v11274
    %v11315 = vpack.c.b16 %v11277, %v11276
    %v11316 = vpack.c.b16 %v11279, %v11278
    %v11317 = vpack.c.b16 %v11281, %v11280
    %v11318 = vpack.c.b16 %v11283, %v11282
    %v11319 = vpack.c.b16 %v11285, %v11284
    %v11320 = vpack.c.b16 %v11287, %v11286
    %v11321 = vpack.c.b16 %v11289, %v11288
    %11354 = vmatprep.subr.bf16.mxu0 0
    %11355 = vmatpush1.bf16.msra.mxu0 %v11290
    %11356 = vmatprep.subr.bf16.mxu0 0
    %11357 = vmatpush1.bf16.msra.mxu0 %v11291
    %11358 = vmatprep.subr.bf16.mxu0 0
    %11359 = vmatpush1.bf16.msra.mxu0 %v11292
    %11360 = vmatprep.subr.bf16.mxu0 0
    %11361 = vmatpush1.bf16.msra.mxu0 %v11293
    %11362 = vmatprep.subr.bf16.mxu0 0
    %11363 = vmatpush1.bf16.msra.mxu0 %v11294
    %11364 = vmatprep.subr.bf16.mxu0 0
    %11365 = vmatpush1.bf16.msra.mxu0 %v11295
    %11366 = vmatprep.subr.bf16.mxu0 0
    %11367 = vmatpush1.bf16.msra.mxu0 %v11296
    %11368 = vmatprep.subr.bf16.mxu0 0
    %11369 = vmatpush1.bf16.msra.mxu0 %v11297
    %11370 = vmatprep.subr.bf16.mxu0 0
    %11371 = vmatpush1.bf16.msra.mxu0 %v11298
    %11372 = vmatprep.subr.bf16.mxu0 0
    %11373 = vmatpush1.bf16.msra.mxu0 %v11299
    %11374 = vmatprep.subr.bf16.mxu0 0
    %11375 = vmatpush1.bf16.msra.mxu0 %v11300
    %11376 = vmatprep.subr.bf16.mxu0 0
    %11377 = vmatpush1.bf16.msra.mxu0 %v11301
    %11378 = vmatprep.subr.bf16.mxu0 0
    %11379 = vmatpush1.bf16.msra.mxu0 %v11302
    %11380 = vmatprep.subr.bf16.mxu0 0
    %11381 = vmatpush1.bf16.msra.mxu0 %v11303
    %11382 = vmatprep.subr.bf16.mxu0 0
    %11383 = vmatpush1.bf16.msra.mxu0 %v11304
    %11384 = vmatprep.subr.bf16.mxu0 0
    %11385 = vmatpush1.bf16.msra.mxu0 %v11305
    %11386 = vmatprep.mubr.bf16.mxu0 %v11088
    %11387 = vmatmul.mubr.bf16.gmra.mrb[0].mxu0 %v11087
    %v11388 = vpop.f32.mrb[0].mxu0
    %v11389 = vadd.f32 %v11160, %v11388
    %v11390 = vpop.f32.mrb[0].mxu0
    %v11391 = vpop.f32.mrb[0].mxu0
    %v11392 = vpop.f32.mrb[0].mxu0
    %11393 = vdwg.mxu0
    %11394 = vmatprep.subr.bf16.mxu0 0
    %11395 = vmatpush1.bf16.msra.mxu0 %v11306
    %11396 = vmatprep.subr.bf16.mxu0 0
    %11397 = vmatpush1.bf16.msra.mxu0 %v11307
    %11398 = vmatprep.subr.bf16.mxu0 0
    %11399 = vmatpush1.bf16.msra.mxu0 %v11308
    %11400 = vmatprep.subr.bf16.mxu0 0
    %11401 = vmatpush1.bf16.msra.mxu0 %v11309
    %11402 = vmatprep.subr.bf16.mxu0 0
    %11403 = vmatpush1.bf16.msra.mxu0 %v11310
    %11404 = vmatprep.subr.bf16.mxu0 0
    %11405 = vmatpush1.bf16.msra.mxu0 %v11311
    %11406 = vmatprep.subr.bf16.mxu0 0
    %11407 = vmatpush1.bf16.msra.mxu0 %v11312
    %11408 = vmatprep.subr.bf16.mxu0 0
    %11409 = vmatpush1.bf16.msra.mxu0 %v11313
    %11410 = vmatprep.subr.bf16.mxu0 0
    %11411 = vmatpush1.bf16.msra.mxu0 %v11314
    %11412 = vmatprep.subr.bf16.mxu0 0
    %11413 = vmatpush1.bf16.msra.mxu0 %v11315
    %11414 = vmatprep.subr.bf16.mxu0 0
    %11415 = vmatpush1.bf16.msra.mxu0 %v11316
    %11416 = vmatprep.subr.bf16.mxu0 0
    %11417 = vmatpush1.bf16.msra.mxu0 %v11317
    %11418 = vmatprep.subr.bf16.mxu0 0
    %11419 = vmatpush1.bf16.msra.mxu0 %v11318
    %11420 = vmatprep.subr.bf16.mxu0 0
    %11421 = vmatpush1.bf16.msra.mxu0 %v11319
    %11422 = vmatprep.subr.bf16.mxu0 0
    %11423 = vmatpush1.bf16.msra.mxu0 %v11320
    %11424 = vmatprep.subr.bf16.mxu0 0
    %11425 = vmatpush1.bf16.msra.mxu0 %v11321
    %11426 = vmatprep.mubr.bf16.mxu0 %v11090
    %11427 = vmatmul.mubr.bf16.gmra.mrb[0].mxu0 %v11089
    %v11428 = vpop.f32.mrb[0].mxu0
    %v11429 = vadd.f32 %v11389, %v11428
    %v11430 = vpop.f32.mrb[0].mxu0
    %v11431 = vpop.f32.mrb[0].mxu0
    %v11432 = vpop.f32.mrb[0].mxu0
    %11433 = vdwg.mxu0
    %v11434 = vld [vmem:[#allocation19] sm:$0x1]
    %v11436 = vlaneseq
    %v11437 = vshrl.u32 %v11436, 7
    %v11438 = vsub.s32 0, %v11437
    %v11439 = vrot.slane %v11434, %v11438
    %v11441 = vmul.f32 %v11429, %v11439
    %v11442 = vld [vmem:[#allocation21] sm:$0x1]
    %v11444 = vlaneseq
    %v11445 = vshrl.u32 %v11444, 7
    %v11446 = vsub.s32 0, %v11445
    %v11447 = vrot.slane %v11442, %v11446
    %v11449 = vadd.f32 %v11441, %v11447
    %vm11450 = vcmp.ge.f32.partialorder %v11449, 0.0
    %v11451 = vmul.f32 %v11449, 0.2
    %v11452 = vsel %vm11450, %v11449, %v11451
    %v11453 = vpack.c.bf16 %v11452, %v11452
    %v11454 = vld [vmem:[%s17] sm:$0xf]
    %v11455 = vld [vmem:[%s17 + $0x4] sm:$0xf]
    %v11456 = vld [vmem:[%s17 + $0x8] sm:$0xf]
    %v11457 = vld [vmem:[%s17 + $0xc] sm:$0xf]
    %v11458 = vld [vmem:[%s17 + $0x10] sm:$0xf]
    %v11459 = vld [vmem:[%s17 + $0x14] sm:$0xf]
    %v11460 = vld [vmem:[%s17 + $0x18] sm:$0xf]
    %v11461 = vld [vmem:[%s17 + $0x1c] sm:$0xf]
    %v11462 = vld [vmem:[%s17 + $0x20] sm:$0xf]
    %v11463 = vld [vmem:[%s17 + $0x24] sm:$0xf]
    %v11464 = vld [vmem:[%s17 + $0x28] sm:$0xf]
    %v11465 = vld [vmem:[%s17 + $0x2c] sm:$0xf]
    %v11466 = vld [vmem:[%s17 + $0x30] sm:$0xf]
    %v11467 = vld [vmem:[%s17 + $0x34] sm:$0xf]
    %v11468 = vld [vmem:[%s17 + $0x38] sm:$0xf]
    %v11469 = vld [vmem:[%s17 + $0x3c] sm:$0xf]
    %v11470 = vld [vmem:[#allocation22] sm:$0x1]
    %v11472 = vlaneseq
    %v11473 = vshrl.u32 %v11472, 7
    %v11474 = vsub.s32 0, %v11473
    %v11475 = vrot.slane %v11470, %v11474
    %v11493 = vunpack.c.l.b16 %v11454
    %v11494 = vunpack.c.l.b16 %v11455
    %v11495 = vunpack.c.l.b16 %v11456
    %v11496 = vunpack.c.l.b16 %v11457
    %v11497 = vunpack.c.l.b16 %v11458
    %v11498 = vunpack.c.l.b16 %v11459
    %v11499 = vunpack.c.l.b16 %v11460
    %v11500 = vunpack.c.l.b16 %v11461
    %v11501 = vunpack.c.l.b16 %v11462
    %v11502 = vunpack.c.l.b16 %v11463
    %v11503 = vunpack.c.l.b16 %v11464
    %v11504 = vunpack.c.l.b16 %v11465
    %v11505 = vunpack.c.l.b16 %v11466
    %v11506 = vunpack.c.l.b16 %v11467
    %v11507 = vunpack.c.l.b16 %v11468
    %v11508 = vunpack.c.l.b16 %v11469
    %v11509 = vpack.c.b16 %v11494, %v11493
    %v11510 = vpack.c.b16 %v11496, %v11495
    %v11511 = vpack.c.b16 %v11498, %v11497
    %v11512 = vpack.c.b16 %v11500, %v11499
    %v11513 = vpack.c.b16 %v11502, %v11501
    %v11514 = vpack.c.b16 %v11504, %v11503
    %v11515 = vpack.c.b16 %v11506, %v11505
    %v11516 = vpack.c.b16 %v11508, %v11507
    %11525 = vmatprep.subr.bf16.mxu0 0
    %11526 = vmatpush1.bf16.msra.mxu0 %v11509
    %11527 = vmatprep.subr.bf16.mxu0 0
    %11528 = vmatpush1.bf16.msra.mxu0 %v11510
    %11529 = vmatprep.subr.bf16.mxu0 0
    %11530 = vmatpush1.bf16.msra.mxu0 %v11511
    %11531 = vmatprep.subr.bf16.mxu0 0
    %11532 = vmatpush1.bf16.msra.mxu0 %v11512
    %11533 = vmatprep.subr.bf16.mxu0 0
    %11534 = vmatpush1.bf16.msra.mxu0 %v11513
    %11535 = vmatprep.subr.bf16.mxu0 0
    %11536 = vmatpush1.bf16.msra.mxu0 %v11514
    %11537 = vmatprep.subr.bf16.mxu0 0
    %11538 = vmatpush1.bf16.msra.mxu0 %v11515
    %11539 = vmatprep.subr.bf16.mxu0 0
    %11540 = vmatpush1.bf16.msra.mxu0 %v11516
    %11541 = vmatprep.subr.bf16.mxu0 0
    %11542 = vmatpush1.bf16.msra.mxu0 0
    %11543 = vmatprep.subr.bf16.mxu0 0
    %11544 = vmatpush1.bf16.msra.mxu0 0
    %11545 = vmatprep.subr.bf16.mxu0 0
    %11546 = vmatpush1.bf16.msra.mxu0 0
    %11547 = vmatprep.subr.bf16.mxu0 0
    %11548 = vmatpush1.bf16.msra.mxu0 0
    %11549 = vmatprep.subr.bf16.mxu0 0
    %11550 = vmatpush1.bf16.msra.mxu0 0
    %11551 = vmatprep.subr.bf16.mxu0 0
    %11552 = vmatpush1.bf16.msra.mxu0 0
    %11553 = vmatprep.subr.bf16.mxu0 0
    %11554 = vmatpush1.bf16.msra.mxu0 0
    %11555 = vmatprep.subr.bf16.mxu0 0
    %11556 = vmatpush1.bf16.msra.mxu0 0
    %11557 = vmatprep.mubr.bf16.mxu0 0
    %11558 = vmatmul.mubr.bf16.gmra.mrb[0].mxu0 %v11453
    %v11559 = vpop.f32.mrb[0].mxu0
    %v11560 = vadd.f32 %v11475, %v11559
    %v11561 = vpop.f32.mrb[0].mxu0
    %v11562 = vpop.f32.mrb[0].mxu0
    %v11563 = vpop.f32.mrb[0].mxu0
    %11564 = vdwg.mxu0
    %vm11565 = vcmask 15360
    %11566 = vst.msk [vmem:[%s19] sm:$0xff] %vm11565, %v11560
    // Predicated region
    $region130: #{att_my_multiquery_video_forward.1} parent=1 // pred_check
      _
    $region131: #{att_my_multiquery_video_forward.1} parent=1 // pred_check_branch
      %11568 = sbr.rel (0) target = $region133
    $region132: #{att_my_multiquery_video_forward.1} parent=1 // pred_region
      _
    $region133: #{att_my_multiquery_video_forward.1} parent=1 // pred_fallthru
      _
    // Predicated region
    $region134: #{att_my_multiquery_video_forward.1} parent=1 // pred_check
      _
    $region135: #{att_my_multiquery_video_forward.1} parent=1 // pred_check_branch
      %11570 = sbr.rel (0) target = $region137
    $region136: #{att_my_multiquery_video_forward.1} parent=1 // pred_region
      _
    $region137: #{att_my_multiquery_video_forward.1} parent=1 // pred_fallthru
      _
    %11571 = vsyncpa [#allocation4], 1
    %11572 = vsyncpa [#allocation8], 1
    %11573 = vsyncpa [#allocation11], 1
    %11574 = vsyncpa [#allocation14], 1
    %11575 = vsyncpa [#allocation17], 1
    %11576 = vsyncpa [#allocation20], 1
    %11577 = vsyncpa [#allocation23], 1
    %11578 = vsyncpa [#allocation5], 1

</llo_original>
